<compile_context>
chip_gen: v7x
topology: tpu7x:2x2x1
jax: 0.10.0
libtpu: 0.0.40
codegen_flags: <defaults>
</compile_context>

<pallas_src>
import functools

import jax
import jax.numpy as jnp
from jax import lax
from jax.experimental import pallas as pl
from jax.experimental.pallas import tpu as pltpu


# --------------------------------------------------------------------------
# Pallas kernels
# --------------------------------------------------------------------------
def _make_mapping_affine_kernel(n_mapping):
    """z -> mapping (n_mapping x Linear+ReLU) -> one big matmul for all six
    affine heads concatenated along N (lane-dense output)."""
    def kernel(*refs):
        z_ref = refs[0]
        wa_ref, ba_ref, o_ref = refs[-3], refs[-2], refs[-1]
        z = z_ref[...]
        for i in range(n_mapping):
            w = refs[1 + 2 * i][...]
            b = refs[2 + 2 * i][...]
            z = jnp.maximum(
                jnp.dot(z, w, preferred_element_type=jnp.float32) + b, 0.0)
        o_ref[...] = (jnp.dot(z, wa_ref[...],
                              preferred_element_type=jnp.float32) + ba_ref[...])
    return kernel


def _adain(x, ys, yb):
    # instance norm over the flattened spatial (lane) axis, then per-pixel affine.
    mean = jnp.mean(x, axis=1, keepdims=True)
    var = jnp.mean((x - mean) ** 2, axis=1, keepdims=True)
    return ys * ((x - mean) * lax.rsqrt(var + 1e-5)) + yb


def _level5_kernel(xc_ref, nz_ref, wt_ref, bt_ref, ys_ref, yb_ref, o_ref):
    # x5 = adain(affine5(z), x5_const + tonoise5(n5)) ; all (C, HW) lane-dense.
    x = xc_ref[0] + jnp.dot(wt_ref[...], nz_ref[0],
                            preferred_element_type=jnp.float32) + bt_ref[...]
    o_ref[0] = _adain(x, ys_ref[0], yb_ref[0])


def _make_level_kernel(final):
    """One full resolution level fused: 3x3 conv (+bias+ReLU, 2x NN upsample
    folded into patches) + tonoise 1x1 conv + residual + AdaIN, and for the
    last level also conv0 + sigmoid.  All math on (C, HW) with HW on lanes."""
    def kernel(pat_ref, wc_ref, bc_ref, nz_ref, wt_ref, bt_ref,
               ys_ref, yb_ref, *rest):
        if final:
            w0_ref, b0_ref, o_ref = rest
        else:
            (o_ref,) = rest
        # conv3x3 + bias + ReLU (upsample already folded into the patches)
        x = jnp.dot(wc_ref[...], pat_ref[0],
                    preferred_element_type=jnp.float32) + bc_ref[...]
        x = jnp.maximum(x, 0.0)
        # tonoise 1x1 conv + residual add
        x = x + jnp.dot(wt_ref[...], nz_ref[0],
                        preferred_element_type=jnp.float32) + bt_ref[...]
        # AdaIN
        x = _adain(x, ys_ref[0], yb_ref[0])
        if final:
            x = jnp.dot(w0_ref[...], x,
                        preferred_element_type=jnp.float32) + b0_ref[...]
            x = jax.nn.sigmoid(x)
        o_ref[0] = x
    return kernel


# --------------------------------------------------------------------------
# pallas_call wrappers
# --------------------------------------------------------------------------
def _shared_spec(shape):
    return pl.BlockSpec(tuple(shape), lambda b: (0,) * len(shape))


def _batch_spec(shape):
    return pl.BlockSpec((1,) + tuple(shape[1:]),
                        lambda b: (b,) + (0,) * (len(shape) - 1))


def run_mapping_affine(z, mapping_params, wa, ba):
    B, _ = z.shape
    ntot = wa.shape[1]
    inputs, specs = [z], [_shared_spec(z.shape)]
    for w, b in mapping_params:
        inputs += [w, b]
        specs += [_shared_spec(w.shape), _shared_spec(b.shape)]
    inputs += [wa, ba]
    specs += [_shared_spec(wa.shape), _shared_spec(ba.shape)]
    return pl.pallas_call(
        _make_mapping_affine_kernel(len(mapping_params)),
        grid=(1,),
        in_specs=specs,
        out_specs=_shared_spec((B, ntot)),
        out_shape=jax.ShapeDtypeStruct((B, ntot), jnp.float32),
    )(*inputs)


def run_level5(xc, nz, ys, yb, wt, bt):
    B = nz.shape[0]
    C, HW = xc.shape[1], xc.shape[2]
    return pl.pallas_call(
        _level5_kernel,
        grid=(B,),
        in_specs=[_shared_spec(xc.shape), _batch_spec(nz.shape),
                  _shared_spec(wt.shape), _shared_spec(bt.shape),
                  _batch_spec(ys.shape), _batch_spec(yb.shape)],
        out_specs=_batch_spec((B, C, HW)),
        out_shape=jax.ShapeDtypeStruct((B, C, HW), jnp.float32),
        compiler_params=pltpu.CompilerParams(dimension_semantics=("parallel",)),
    )(xc, nz, wt, bt, ys, yb)


def run_level(pat, nz, ys, yb, wc, bc, wt, bt, cout, hw, final_wb=None):
    B = pat.shape[0]
    inputs = [pat, wc, bc, nz, wt, bt, ys, yb]
    specs = [_batch_spec(pat.shape), _shared_spec(wc.shape), _shared_spec(bc.shape),
             _batch_spec(nz.shape), _shared_spec(wt.shape), _shared_spec(bt.shape),
             _batch_spec(ys.shape), _batch_spec(yb.shape)]
    if final_wb is not None:
        w0, b0 = final_wb
        inputs += [w0, b0]
        specs += [_shared_spec(w0.shape), _shared_spec(b0.shape)]
    return pl.pallas_call(
        _make_level_kernel(final_wb is not None),
        grid=(B,),
        in_specs=specs,
        out_specs=_batch_spec((B, cout, hw)),
        out_shape=jax.ShapeDtypeStruct((B, cout, hw), jnp.float32),
        compiler_params=pltpu.CompilerParams(dimension_semantics=("parallel",)),
    )(*inputs)


# --------------------------------------------------------------------------
# JAX glue: im2col with the 2x nearest upsample folded in (tiny tensors)
# --------------------------------------------------------------------------
def conv_patches_up2(x, k=3):
    """x: (B, Cin, H, W).  Returns im2col patches for a 'same' kxk conv with
    the 2x nearest upsample pre-applied, so the level kernel's single matmul
    directly produces relu-able upsampled conv output: (B, k*k*Cin, (2H)*(2W))."""
    B, Cin, H, W = x.shape
    p = k // 2
    xp = jnp.pad(x, ((0, 0), (0, 0), (p, p), (p, p)))
    wins = [xp[:, :, kh:kh + H, kw:kw + W] for kh in range(k) for kw in range(k)]
    pat = jnp.stack(wins, axis=1)                             # (B, k*k, Cin, H, W)
    pat = jnp.repeat(jnp.repeat(pat, 2, axis=3), 2, axis=4)   # fold 2x NN upsample
    return pat.reshape(B, k * k * Cin, (2 * H) * (2 * W))


# --------------------------------------------------------------------------
# Level metadata (order 5 -> 0) and parameters
# --------------------------------------------------------------------------
def level_meta(out_size, channels, zchannels):
    c, h, w = out_size
    c1, c2, c3, c4, c5 = channels
    z0, z1, z2, z3, z4, z5 = zchannels
    lv = [(c5, h // 32, w // 32, z5),
          (c4, h // 16, w // 16, z4),
          (c3, h // 8,  w // 8,  z3),
          (c2, h // 4,  w // 4,  z2),
          (c1, h // 2,  w // 2,  z1),
          (c,  h,       w,       z0)]
    meta, off = [], 0
    for (C, H, W, Z) in lv:
        meta.append((C, H, W, Z, off))
        off += 2 * C * H * W
    return meta, off


def init_params(seed, out_size, channels, zchannels, zs, k=3, n_mapping=3):
    c, h, w = out_size
    c1, c2, c3, c4, c5 = channels
    z0, z1, z2, z3, z4, z5 = zchannels
    key = jax.random.PRNGKey(seed)
    ctr = [0]

    def nk():
        ctr[0] += 1
        return jax.random.fold_in(key, ctr[0])

    def linear(cin, cout):  # x @ W convention: (in, out)
        return (jax.random.normal(nk(), (cin, cout), jnp.float32) / jnp.sqrt(cin),
                0.01 * jax.random.normal(nk(), (cout,), jnp.float32))

    def conv3(cin, cout):   # PyTorch OIHW
        return (jax.random.normal(nk(), (cout, cin, k, k), jnp.float32)
                / jnp.sqrt(k * k * cin),
                0.01 * jax.random.normal(nk(), (cout,), jnp.float32))

    def conv1(cin, cout):   # 1x1 conv as (Cout, Cin)
        return (jax.random.normal(nk(), (cout, cin), jnp.float32) / jnp.sqrt(cin),
                0.01 * jax.random.normal(nk(), (cout,), jnp.float32))

    p = {}
    p["mapping"] = [linear(zs, zs) for _ in range(n_mapping)]
    p["affine5"] = linear(zs, 2 * c5 * (h // 32) * (w // 32))
    p["affine4"] = linear(zs, 2 * c4 * (h // 16) * (w // 16))
    p["affine3"] = linear(zs, 2 * c3 * (h // 8) * (w // 8))
    p["affine2"] = linear(zs, 2 * c2 * (h // 4) * (w // 4))
    p["affine1"] = linear(zs, 2 * c1 * (h // 2) * (w // 2))
    p["affine0"] = linear(zs, 2 * c * h * w)
    p["tonoise5"] = conv1(z5, c5)
    p["tonoise4"] = conv1(z4, c4)
    p["tonoise3"] = conv1(z3, c3)
    p["tonoise2"] = conv1(z2, c2)
    p["tonoise1"] = conv1(z1, c1)
    p["tonoise0"] = conv1(z0, c)
    p["block5"] = conv3(c5, c4)
    p["block4"] = conv3(c4, c3)
    p["block3"] = conv3(c3, c2)
    p["block2"] = conv3(c2, c1)
    p["block1"] = conv3(c1, c)
    p["conv0"] = conv1(c, c)
    p["x5"] = jax.random.normal(nk(), (1, c5, h // 32, w // 32), jnp.float32)
    return p


def prepare_params(params, out_size, channels, zchannels, k=3):
    """One-time re-layout: concatenate affine heads along N, reshape conv
    weights to (Cout, k*k*Cin) matching the patch order, biases to (C, 1)."""
    meta, _ = level_meta(out_size, channels, zchannels)
    prep = {}
    prep["mapping"] = [(w, b.reshape(1, -1)) for (w, b) in params["mapping"]]
    prep["wa"] = jnp.concatenate(
        [params[f"affine{L}"][0] for L in (5, 4, 3, 2, 1, 0)], axis=1)
    prep["ba"] = jnp.concatenate(
        [params[f"affine{L}"][1] for L in (5, 4, 3, 2, 1, 0)], axis=0).reshape(1, -1)
    prep["tonoise"] = []
    for L in (5, 4, 3, 2, 1, 0):
        w, b = params[f"tonoise{L}"]                   # (Cout, Zin)
        prep["tonoise"].append((w, b.reshape(-1, 1)))
    prep["convs"] = []
    for name in ("block5", "block4", "block3", "block2", "block1"):
        w, b = params[name]                            # (Cout, Cin, k, k)
        cout, cin = w.shape[0], w.shape[1]
        wmat = jnp.transpose(w, (0, 2, 3, 1)).reshape(cout, k * k * cin)
        prep["convs"].append((wmat, b.reshape(-1, 1)))
    w0, b0 = params["conv0"]
    prep["w0"], prep["b0"] = w0, b0.reshape(-1, 1)
    c5, h5, w5 = meta[0][0], meta[0][1], meta[0][2]
    prep["x5"] = params["x5"].reshape(1, c5, h5 * w5)
    return prep


# --------------------------------------------------------------------------
# StyleDecoder forward (all noise levels present, full-depth path)
# --------------------------------------------------------------------------
def style_decoder_forward(prep, z, n0, n1, n2, n3, n4, n5, *,
                          out_size, channels, zchannels, k=3):
    meta, _ = level_meta(out_size, channels, zchannels)
    c, h, w = out_size
    B = z.shape[0]
    noises = [n5, n4, n3, n2, n1, n0]

    # mapping network + all six affine heads, one fused lane-dense matmul
    y_all = run_mapping_affine(z.astype(jnp.float32),
                               prep["mapping"], prep["wa"], prep["ba"])

    def ys_yb(i):
        C, H, W, _, off = meta[i]
        sz = C * H * W
        ys = y_all[:, off:off + sz].reshape(B, C, H * W)
        yb = y_all[:, off + sz:off + 2 * sz].reshape(B, C, H * W)
        return ys, yb

    # level 5: x5 = adain(affine5(z), x5_const + tonoise5(n5))
    C5, H5, W5, Z5, _ = meta[0]
    ys, yb = ys_yb(0)
    wt, bt = prep["tonoise"][0]
    x = run_level5(prep["x5"],
                   noises[0].reshape(B, Z5, H5 * W5).astype(jnp.float32),
                   ys, yb, wt, bt)

    # levels 4..0: fused conv3x3+ReLU (+2x upsample) + tonoise + residual + AdaIN
    for i in range(1, 6):
        Cp, Hp, Wp = meta[i - 1][0], meta[i - 1][1], meta[i - 1][2]
        C, H, W, Z, _ = meta[i]
        pat = conv_patches_up2(x.reshape(B, Cp, Hp, Wp), k=k)   # (B, k*k*Cp, H*W)
        nz = noises[i].reshape(B, Z, H * W).astype(jnp.float32)
        ys, yb = ys_yb(i)
        wc, bc = prep["convs"][i - 1]
        wt, bt = prep["tonoise"][i]
        final_wb = (prep["w0"], prep["b0"]) if i == 5 else None  # conv0+sigmoid fused
        x = run_level(pat, nz, ys, yb, wc, bc, wt, bt, C, H * W, final_wb)

    return x.reshape(B, c, h, w)   # NCHW, same as PyTorch


# --------------------------------------------------------------------------
if __name__ == "__main__":
    out_size = (3, 32, 32)                 # (c, h, w)
    channels = (4, 4, 8, 8, 8)             # (c1..c5)
    zchannels = (3, 4, 4, 8, 8, 8)         # (z0..z5)
    zs = 64
    B = 2
    c, h, w = out_size
    z0, z1, z2, z3, z4, z5 = zchannels

    params = init_params(0, out_size, channels, zchannels, zs)
    prep = prepare_params(params, out_size, channels, zchannels)

    key = jax.random.PRNGKey(0)
    ks = jax.random.split(key, 7)
    z = jax.random.normal(ks[0], (B, zs), jnp.float32)
    n0 = jax.random.normal(ks[1], (B, z0, h, w), jnp.float32)
    n1 = jax.random.normal(ks[2], (B, z1, h // 2, w // 2), jnp.float32)
    n2 = jax.random.normal(ks[3], (B, z2, h // 4, w // 4), jnp.float32)
    n3 = jax.random.normal(ks[4], (B, z3, h // 8, w // 8), jnp.float32)
    n4 = jax.random.normal(ks[5], (B, z4, h // 16, w // 16), jnp.float32)
    n5 = jax.random.normal(ks[6], (B, z5, h // 32, w // 32), jnp.float32)

    fwd = jax.jit(functools.partial(style_decoder_forward, out_size=out_size,
                                    channels=channels, zchannels=zchannels))
    out = fwd(prep, z, n0, n1, n2, n3, n4, n5)
    out = jax.block_until_ready(out)

    assert out.shape == (B, c, h, w), out.shape
    assert bool(jnp.all(jnp.isfinite(out)))
    assert bool(jnp.all((out >= 0.0) & (out <= 1.0)))   # sigmoid output
    print("KERNEL_OK")
</pallas_src>

<mosaic_0001>
module attributes {stable_mosaic.version = 11 : i64} {
  func.func @kernel(%arg0: i32, %arg1: memref<2x64xf32, #tpu.memory_space<vmem>>, %arg2: memref<64x64xf32, #tpu.memory_space<vmem>>, %arg3: memref<1x64xf32, #tpu.memory_space<vmem>>, %arg4: memref<64x64xf32, #tpu.memory_space<vmem>>, %arg5: memref<1x64xf32, #tpu.memory_space<vmem>>, %arg6: memref<64x64xf32, #tpu.memory_space<vmem>>, %arg7: memref<1x64xf32, #tpu.memory_space<vmem>>, %arg8: memref<64x9040xf32, #tpu.memory_space<vmem>>, %arg9: memref<1x9040xf32, #tpu.memory_space<vmem>>, %arg10: memref<2x9040xf32, #tpu.memory_space<vmem>>) attributes {dimension_semantics = [#tpu.dimension_semantics<arbitrary>], iteration_bounds = array<i64: 1>, scalar_prefetch = 0 : i64, scratch_operands = 0 : i64, tpu.core_type = #tpu.core_type<tc>, window_params = [{pipeline_mode = #tpu.pipeline_mode<synchronous>, transform_indices = @transform_0, window_bounds = array<i64: 2, 64>}, {pipeline_mode = #tpu.pipeline_mode<synchronous>, transform_indices = @transform_1, window_bounds = array<i64: 64, 64>}, {pipeline_mode = #tpu.pipeline_mode<synchronous>, transform_indices = @transform_2, window_bounds = array<i64: 1, 64>}, {pipeline_mode = #tpu.pipeline_mode<synchronous>, transform_indices = @transform_3, window_bounds = array<i64: 64, 64>}, {pipeline_mode = #tpu.pipeline_mode<synchronous>, transform_indices = @transform_4, window_bounds = array<i64: 1, 64>}, {pipeline_mode = #tpu.pipeline_mode<synchronous>, transform_indices = @transform_5, window_bounds = array<i64: 64, 64>}, {pipeline_mode = #tpu.pipeline_mode<synchronous>, transform_indices = @transform_6, window_bounds = array<i64: 1, 64>}, {pipeline_mode = #tpu.pipeline_mode<synchronous>, transform_indices = @transform_7, window_bounds = array<i64: 64, 9040>}, {pipeline_mode = #tpu.pipeline_mode<synchronous>, transform_indices = @transform_8, window_bounds = array<i64: 1, 9040>}, {pipeline_mode = #tpu.pipeline_mode<synchronous>, transform_indices = @transform_9, window_bounds = array<i64: 2, 9040>}]} {
    %c0 = arith.constant 0 : index
    %c0_0 = arith.constant 0 : index
    %0 = vector.load %arg1[%c0, %c0_0] : memref<2x64xf32, #tpu.memory_space<vmem>>, vector<2x64xf32>
    %c0_1 = arith.constant 0 : index
    %c0_2 = arith.constant 0 : index
    %1 = vector.load %arg2[%c0_1, %c0_2] : memref<64x64xf32, #tpu.memory_space<vmem>>, vector<64x64xf32>
    %c0_3 = arith.constant 0 : index
    %c0_4 = arith.constant 0 : index
    %2 = vector.load %arg3[%c0_3, %c0_4] : memref<1x64xf32, #tpu.memory_space<vmem>>, vector<1x64xf32>
    %cst = arith.constant dense<0.000000e+00> : vector<2x64xf32>
    %3 = tpu.matmul %0, %1, %cst {dimension_numbers = #tpu.dot_dimension_numbers<[1], [0], [0], [1], [0, 0, 1, 1], [], []>} : vector<2x64xf32>, vector<64x64xf32>, vector<2x64xf32> -> vector<2x64xf32>
    %4 = vector.broadcast %2 : vector<1x64xf32> to vector<2x64xf32>
    %5 = arith.addf %3, %4 : vector<2x64xf32>
    %cst_5 = arith.constant 0.000000e+00 : f32
    %6 = vector.broadcast %cst_5 : f32 to vector<2x64xf32>
    %7 = arith.maximumf %5, %6 : vector<2x64xf32>
    %c0_6 = arith.constant 0 : index
    %c0_7 = arith.constant 0 : index
    %8 = vector.load %arg4[%c0_6, %c0_7] : memref<64x64xf32, #tpu.memory_space<vmem>>, vector<64x64xf32>
    %c0_8 = arith.constant 0 : index
    %c0_9 = arith.constant 0 : index
    %9 = vector.load %arg5[%c0_8, %c0_9] : memref<1x64xf32, #tpu.memory_space<vmem>>, vector<1x64xf32>
    %cst_10 = arith.constant dense<0.000000e+00> : vector<2x64xf32>
    %10 = tpu.matmul %7, %8, %cst_10 {dimension_numbers = #tpu.dot_dimension_numbers<[1], [0], [0], [1], [0, 0, 1, 1], [], []>} : vector<2x64xf32>, vector<64x64xf32>, vector<2x64xf32> -> vector<2x64xf32>
    %11 = vector.broadcast %9 : vector<1x64xf32> to vector<2x64xf32>
    %12 = arith.addf %10, %11 : vector<2x64xf32>
    %cst_11 = arith.constant 0.000000e+00 : f32
    %13 = vector.broadcast %cst_11 : f32 to vector<2x64xf32>
    %14 = arith.maximumf %12, %13 : vector<2x64xf32>
    %c0_12 = arith.constant 0 : index
    %c0_13 = arith.constant 0 : index
    %15 = vector.load %arg6[%c0_12, %c0_13] : memref<64x64xf32, #tpu.memory_space<vmem>>, vector<64x64xf32>
    %c0_14 = arith.constant 0 : index
    %c0_15 = arith.constant 0 : index
    %16 = vector.load %arg7[%c0_14, %c0_15] : memref<1x64xf32, #tpu.memory_space<vmem>>, vector<1x64xf32>
    %cst_16 = arith.constant dense<0.000000e+00> : vector<2x64xf32>
    %17 = tpu.matmul %14, %15, %cst_16 {dimension_numbers = #tpu.dot_dimension_numbers<[1], [0], [0], [1], [0, 0, 1, 1], [], []>} : vector<2x64xf32>, vector<64x64xf32>, vector<2x64xf32> -> vector<2x64xf32>
    %18 = vector.broadcast %16 : vector<1x64xf32> to vector<2x64xf32>
    %19 = arith.addf %17, %18 : vector<2x64xf32>
    %cst_17 = arith.constant 0.000000e+00 : f32
    %20 = vector.broadcast %cst_17 : f32 to vector<2x64xf32>
    %21 = arith.maximumf %19, %20 : vector<2x64xf32>
    %c0_18 = arith.constant 0 : index
    %c0_19 = arith.constant 0 : index
    %22 = vector.load %arg8[%c0_18, %c0_19] : memref<64x9040xf32, #tpu.memory_space<vmem>>, vector<64x9040xf32>
    %cst_20 = arith.constant dense<0.000000e+00> : vector<2x9040xf32>
    %23 = tpu.matmul %21, %22, %cst_20 {dimension_numbers = #tpu.dot_dimension_numbers<[1], [0], [0], [1], [0, 0, 1, 1], [], []>} : vector<2x64xf32>, vector<64x9040xf32>, vector<2x9040xf32> -> vector<2x9040xf32>
    %c0_21 = arith.constant 0 : index
    %c0_22 = arith.constant 0 : index
    %24 = vector.load %arg9[%c0_21, %c0_22] : memref<1x9040xf32, #tpu.memory_space<vmem>>, vector<1x9040xf32>
    %25 = vector.broadcast %24 : vector<1x9040xf32> to vector<2x9040xf32>
    %26 = arith.addf %23, %25 : vector<2x9040xf32>
    %c0_23 = arith.constant 0 : index
    %c0_24 = arith.constant 0 : index
    %27 = vector.load %arg10[%c0_23, %c0_24] : memref<2x9040xf32, #tpu.memory_space<vmem>>, vector<2x9040xf32>
    tpu.vector_store %arg10[%c0_23, %c0_24], %26 {strides = array<i32>} : memref<2x9040xf32, #tpu.memory_space<vmem>>, vector<2x9040xf32>,
    return
  }
  func.func @transform_0(%arg0: i32) -> (i32, i32) {
    %c0_i32 = arith.constant 0 : i32
    %c0_i32_0 = arith.constant 0 : i32
    %c0_i32_1 = arith.constant 0 : i32
    return %c0_i32, %c0_i32_0 : i32, i32
  }
  func.func @transform_1(%arg0: i32) -> (i32, i32) {
    %c0_i32 = arith.constant 0 : i32
    %c0_i32_0 = arith.constant 0 : i32
    %c0_i32_1 = arith.constant 0 : i32
    return %c0_i32, %c0_i32_0 : i32, i32
  }
  func.func @transform_2(%arg0: i32) -> (i32, i32) {
    %c0_i32 = arith.constant 0 : i32
    %c0_i32_0 = arith.constant 0 : i32
    %c0_i32_1 = arith.constant 0 : i32
    return %c0_i32, %c0_i32_0 : i32, i32
  }
  func.func @transform_3(%arg0: i32) -> (i32, i32) {
    %c0_i32 = arith.constant 0 : i32
    %c0_i32_0 = arith.constant 0 : i32
    %c0_i32_1 = arith.constant 0 : i32
    return %c0_i32, %c0_i32_0 : i32, i32
  }
  func.func @transform_4(%arg0: i32) -> (i32, i32) {
    %c0_i32 = arith.constant 0 : i32
    %c0_i32_0 = arith.constant 0 : i32
    %c0_i32_1 = arith.constant 0 : i32
    return %c0_i32, %c0_i32_0 : i32, i32
  }
  func.func @transform_5(%arg0: i32) -> (i32, i32) {
    %c0_i32 = arith.constant 0 : i32
    %c0_i32_0 = arith.constant 0 : i32
    %c0_i32_1 = arith.constant 0 : i32
    return %c0_i32, %c0_i32_0 : i32, i32
  }
  func.func @transform_6(%arg0: i32) -> (i32, i32) {
    %c0_i32 = arith.constant 0 : i32
    %c0_i32_0 = arith.constant 0 : i32
    %c0_i32_1 = arith.constant 0 : i32
    return %c0_i32, %c0_i32_0 : i32, i32
  }
  func.func @transform_7(%arg0: i32) -> (i32, i32) {
    %c0_i32 = arith.constant 0 : i32
    %c0_i32_0 = arith.constant 0 : i32
    %c0_i32_1 = arith.constant 0 : i32
    return %c0_i32, %c0_i32_0 : i32, i32
  }
  func.func @transform_8(%arg0: i32) -> (i32, i32) {
    %c0_i32 = arith.constant 0 : i32
    %c0_i32_0 = arith.constant 0 : i32
    %c0_i32_1 = arith.constant 0 : i32
    return %c0_i32, %c0_i32_0 : i32, i32
  }
  func.func @transform_9(%arg0: i32) -> (i32, i32) {
    %c0_i32 = arith.constant 0 : i32
    %c0_i32_0 = arith.constant 0 : i32
    %c0_i32_1 = arith.constant 0 : i32
    return %c0_i32, %c0_i32_0 : i32, i32
  }
}

module attributes {stable_mosaic.version = 11 : i64} {
  func.func @_level5_kernel(%arg0: i32, %arg1: memref<1x8x1xf32, #tpu.memory_space<vmem>>, %arg2: memref<1x8x1xf32, #tpu.memory_space<vmem>>, %arg3: memref<8x8xf32, #tpu.memory_space<vmem>>, %arg4: memref<8x1xf32, #tpu.memory_space<vmem>>, %arg5: memref<1x8x1xf32, #tpu.memory_space<vmem>>, %arg6: memref<1x8x1xf32, #tpu.memory_space<vmem>>, %arg7: memref<1x8x1xf32, #tpu.memory_space<vmem>>) attributes {dimension_semantics = [#tpu.dimension_semantics<parallel>], iteration_bounds = array<i64: 2>, scalar_prefetch = 0 : i64, scratch_operands = 0 : i64, tpu.core_type = #tpu.core_type<tc>, window_params = [{pipeline_mode = #tpu.pipeline_mode<synchronous>, transform_indices = @transform_0, window_bounds = array<i64: 1, 8, 1>}, {transform_indices = @transform_1, window_bounds = array<i64: 1, 8, 1>}, {pipeline_mode = #tpu.pipeline_mode<synchronous>, transform_indices = @transform_2, window_bounds = array<i64: 8, 8>}, {pipeline_mode = #tpu.pipeline_mode<synchronous>, transform_indices = @transform_3, window_bounds = array<i64: 8, 1>}, {transform_indices = @transform_4, window_bounds = array<i64: 1, 8, 1>}, {transform_indices = @transform_5, window_bounds = array<i64: 1, 8, 1>}, {transform_indices = @transform_6, window_bounds = array<i64: 1, 8, 1>}]} {
    %c0 = arith.constant 0 : index
    %c0_0 = arith.constant 0 : index
    %c0_1 = arith.constant 0 : index
    %0 = vector.load %arg1[%c0, %c0_0, %c0_1] : memref<1x8x1xf32, #tpu.memory_space<vmem>>, vector<1x8x1xf32>
    %1 = vector.shape_cast %0 : vector<1x8x1xf32> to vector<8x1xf32>
    %c0_2 = arith.constant 0 : index
    %c0_3 = arith.constant 0 : index
    %2 = vector.load %arg3[%c0_2, %c0_3] : memref<8x8xf32, #tpu.memory_space<vmem>>, vector<8x8xf32>
    %c0_4 = arith.constant 0 : index
    %c0_5 = arith.constant 0 : index
    %c0_6 = arith.constant 0 : index
    %3 = vector.load %arg2[%c0_4, %c0_5, %c0_6] : memref<1x8x1xf32, #tpu.memory_space<vmem>>, vector<1x8x1xf32>
    %4 = vector.shape_cast %3 : vector<1x8x1xf32> to vector<8x1xf32>
    %cst = arith.constant dense<0.000000e+00> : vector<8x1xf32>
    %5 = tpu.matmul %2, %4, %cst {dimension_numbers = #tpu.dot_dimension_numbers<[1], [0], [0], [1], [0, 0, 1, 1], [], []>} : vector<8x8xf32>, vector<8x1xf32>, vector<8x1xf32> -> vector<8x1xf32>
    %6 = arith.addf %1, %5 : vector<8x1xf32>
    %c0_7 = arith.constant 0 : index
    %c0_8 = arith.constant 0 : index
    %7 = vector.load %arg4[%c0_7, %c0_8] : memref<8x1xf32, #tpu.memory_space<vmem>>, vector<8x1xf32>
    %8 = arith.addf %6, %7 : vector<8x1xf32>
    %c0_9 = arith.constant 0 : index
    %c0_10 = arith.constant 0 : index
    %c0_11 = arith.constant 0 : index
    %9 = vector.load %arg5[%c0_9, %c0_10, %c0_11] : memref<1x8x1xf32, #tpu.memory_space<vmem>>, vector<1x8x1xf32>
    %10 = vector.shape_cast %9 : vector<1x8x1xf32> to vector<8x1xf32>
    %c0_12 = arith.constant 0 : index
    %c0_13 = arith.constant 0 : index
    %c0_14 = arith.constant 0 : index
    %11 = vector.load %arg6[%c0_12, %c0_13, %c0_14] : memref<1x8x1xf32, #tpu.memory_space<vmem>>, vector<1x8x1xf32>
    %12 = vector.shape_cast %11 : vector<1x8x1xf32> to vector<8x1xf32>
    %cst_15 = arith.constant dense<0.000000e+00> : vector<8xf32>
    %13 = vector.multi_reduction <add>, %8, %cst_15 [1] : vector<8x1xf32> to vector<8xf32>
    %14 = vector.shape_cast %13 : vector<8xf32> to vector<8x1xf32>
    %cst_16 = arith.constant 1.000000e+00 : f32
    %15 = vector.broadcast %cst_16 : f32 to vector<8x1xf32>
    %16 = arith.divf %14, %15 : vector<8x1xf32>
    %17 = arith.subf %8, %16 : vector<8x1xf32>
    %18 = arith.mulf %17, %17 : vector<8x1xf32>
    %cst_17 = arith.constant dense<0.000000e+00> : vector<8xf32>
    %19 = vector.multi_reduction <add>, %18, %cst_17 [1] : vector<8x1xf32> to vector<8xf32>
    %20 = vector.shape_cast %19 : vector<8xf32> to vector<8x1xf32>
    %cst_18 = arith.constant 1.000000e+00 : f32
    %21 = vector.broadcast %cst_18 : f32 to vector<8x1xf32>
    %22 = arith.divf %20, %21 : vector<8x1xf32>
    %23 = arith.subf %8, %16 : vector<8x1xf32>
    %cst_19 = arith.constant 9.99999974E-6 : f32
    %24 = vector.broadcast %cst_19 : f32 to vector<8x1xf32>
    %25 = arith.addf %22, %24 : vector<8x1xf32>
    %26 = math.rsqrt %25 : vector<8x1xf32>
    %27 = arith.mulf %23, %26 : vector<8x1xf32>
    %28 = arith.mulf %10, %27 : vector<8x1xf32>
    %29 = arith.addf %28, %12 : vector<8x1xf32>
    %c0_20 = arith.constant 0 : index
    %c0_21 = arith.constant 0 : index
    %c0_22 = arith.constant 0 : index
    %30 = vector.load %arg7[%c0_20, %c0_21, %c0_22] : memref<1x8x1xf32, #tpu.memory_space<vmem>>, vector<1x8x1xf32>
    %31 = vector.shape_cast %30 : vector<1x8x1xf32> to vector<8x1xf32>
    %32 = vector.shape_cast %29 : vector<8x1xf32> to vector<1x8x1xf32>
    tpu.vector_store %arg7[%c0_20, %c0_21, %c0_22], %32 {strides = array<i32>} : memref<1x8x1xf32, #tpu.memory_space<vmem>>, vector<1x8x1xf32>,
    return
  }
  func.func @transform_0(%arg0: i32) -> (i32, i32, i32) {
    %c0_i32 = arith.constant 0 : i32
    %c0_i32_0 = arith.constant 0 : i32
    %c0_i32_1 = arith.constant 0 : i32
    %c0_i32_2 = arith.constant 0 : i32
    return %c0_i32, %c0_i32_0, %c0_i32_1 : i32, i32, i32
  }
  func.func @transform_1(%arg0: i32) -> (i32, i32, i32) {
    %c0_i32 = arith.constant 0 : i32
    %c0_i32_0 = arith.constant 0 : i32
    %c0_i32_1 = arith.constant 0 : i32
    return %arg0, %c0_i32, %c0_i32_0 : i32, i32, i32
  }
  func.func @transform_2(%arg0: i32) -> (i32, i32) {
    %c0_i32 = arith.constant 0 : i32
    %c0_i32_0 = arith.constant 0 : i32
    %c0_i32_1 = arith.constant 0 : i32
    return %c0_i32, %c0_i32_0 : i32, i32
  }
  func.func @transform_3(%arg0: i32) -> (i32, i32) {
    %c0_i32 = arith.constant 0 : i32
    %c0_i32_0 = arith.constant 0 : i32
    %c0_i32_1 = arith.constant 0 : i32
    return %c0_i32, %c0_i32_0 : i32, i32
  }
  func.func @transform_4(%arg0: i32) -> (i32, i32, i32) {
    %c0_i32 = arith.constant 0 : i32
    %c0_i32_0 = arith.constant 0 : i32
    %c0_i32_1 = arith.constant 0 : i32
    return %arg0, %c0_i32, %c0_i32_0 : i32, i32, i32
  }
  func.func @transform_5(%arg0: i32) -> (i32, i32, i32) {
    %c0_i32 = arith.constant 0 : i32
    %c0_i32_0 = arith.constant 0 : i32
    %c0_i32_1 = arith.constant 0 : i32
    return %arg0, %c0_i32, %c0_i32_0 : i32, i32, i32
  }
  func.func @transform_6(%arg0: i32) -> (i32, i32, i32) {
    %c0_i32 = arith.constant 0 : i32
    %c0_i32_0 = arith.constant 0 : i32
    %c0_i32_1 = arith.constant 0 : i32
    return %arg0, %c0_i32, %c0_i32_0 : i32, i32, i32
  }
}

module attributes {stable_mosaic.version = 11 : i64} {
  func.func @kernel(%arg0: i32, %arg1: memref<1x72x4xf32, #tpu.memory_space<vmem>>, %arg2: memref<8x72xf32, #tpu.memory_space<vmem>>, %arg3: memref<8x1xf32, #tpu.memory_space<vmem>>, %arg4: memref<1x8x4xf32, #tpu.memory_space<vmem>>, %arg5: memref<8x8xf32, #tpu.memory_space<vmem>>, %arg6: memref<8x1xf32, #tpu.memory_space<vmem>>, %arg7: memref<1x8x4xf32, #tpu.memory_space<vmem>>, %arg8: memref<1x8x4xf32, #tpu.memory_space<vmem>>, %arg9: memref<1x8x4xf32, #tpu.memory_space<vmem>>) attributes {dimension_semantics = [#tpu.dimension_semantics<parallel>], iteration_bounds = array<i64: 2>, scalar_prefetch = 0 : i64, scratch_operands = 0 : i64, tpu.core_type = #tpu.core_type<tc>, window_params = [{transform_indices = @transform_0, window_bounds = array<i64: 1, 72, 4>}, {pipeline_mode = #tpu.pipeline_mode<synchronous>, transform_indices = @transform_1, window_bounds = array<i64: 8, 72>}, {pipeline_mode = #tpu.pipeline_mode<synchronous>, transform_indices = @transform_2, window_bounds = array<i64: 8, 1>}, {transform_indices = @transform_3, window_bounds = array<i64: 1, 8, 4>}, {pipeline_mode = #tpu.pipeline_mode<synchronous>, transform_indices = @transform_4, window_bounds = array<i64: 8, 8>}, {pipeline_mode = #tpu.pipeline_mode<synchronous>, transform_indices = @transform_5, window_bounds = array<i64: 8, 1>}, {transform_indices = @transform_6, window_bounds = array<i64: 1, 8, 4>}, {transform_indices = @transform_7, window_bounds = array<i64: 1, 8, 4>}, {transform_indices = @transform_8, window_bounds = array<i64: 1, 8, 4>}]} {
    %c0 = arith.constant 0 : index
    %c0_0 = arith.constant 0 : index
    %0 = vector.load %arg2[%c0, %c0_0] : memref<8x72xf32, #tpu.memory_space<vmem>>, vector<8x72xf32>
    %c0_1 = arith.constant 0 : index
    %c0_2 = arith.constant 0 : index
    %c0_3 = arith.constant 0 : index
    %1 = vector.load %arg1[%c0_1, %c0_2, %c0_3] : memref<1x72x4xf32, #tpu.memory_space<vmem>>, vector<1x72x4xf32>
    %2 = vector.shape_cast %1 : vector<1x72x4xf32> to vector<72x4xf32>
    %cst = arith.constant dense<0.000000e+00> : vector<8x4xf32>
    %3 = tpu.matmul %0, %2, %cst {dimension_numbers = #tpu.dot_dimension_numbers<[1], [0], [0], [1], [0, 0, 1, 1], [], []>} : vector<8x72xf32>, vector<72x4xf32>, vector<8x4xf32> -> vector<8x4xf32>
    %c0_4 = arith.constant 0 : index
    %c0_5 = arith.constant 0 : index
    %4 = vector.load %arg3[%c0_4, %c0_5] : memref<8x1xf32, #tpu.memory_space<vmem>>, vector<8x1xf32>
    %5 = vector.broadcast %4 : vector<8x1xf32> to vector<8x4xf32>
    %6 = arith.addf %3, %5 : vector<8x4xf32>
    %cst_6 = arith.constant 0.000000e+00 : f32
    %7 = vector.broadcast %cst_6 : f32 to vector<8x4xf32>
    %8 = arith.maximumf %6, %7 : vector<8x4xf32>
    %c0_7 = arith.constant 0 : index
    %c0_8 = arith.constant 0 : index
    %9 = vector.load %arg5[%c0_7, %c0_8] : memref<8x8xf32, #tpu.memory_space<vmem>>, vector<8x8xf32>
    %c0_9 = arith.constant 0 : index
    %c0_10 = arith.constant 0 : index
    %c0_11 = arith.constant 0 : index
    %10 = vector.load %arg4[%c0_9, %c0_10, %c0_11] : memref<1x8x4xf32, #tpu.memory_space<vmem>>, vector<1x8x4xf32>
    %11 = vector.shape_cast %10 : vector<1x8x4xf32> to vector<8x4xf32>
    %cst_12 = arith.constant dense<0.000000e+00> : vector<8x4xf32>
    %12 = tpu.matmul %9, %11, %cst_12 {dimension_numbers = #tpu.dot_dimension_numbers<[1], [0], [0], [1], [0, 0, 1, 1], [], []>} : vector<8x8xf32>, vector<8x4xf32>, vector<8x4xf32> -> vector<8x4xf32>
    %13 = arith.addf %8, %12 : vector<8x4xf32>
    %c0_13 = arith.constant 0 : index
    %c0_14 = arith.constant 0 : index
    %14 = vector.load %arg6[%c0_13, %c0_14] : memref<8x1xf32, #tpu.memory_space<vmem>>, vector<8x1xf32>
    %15 = vector.broadcast %14 : vector<8x1xf32> to vector<8x4xf32>
    %16 = arith.addf %13, %15 : vector<8x4xf32>
    %c0_15 = arith.constant 0 : index
    %c0_16 = arith.constant 0 : index
    %c0_17 = arith.constant 0 : index
    %17 = vector.load %arg7[%c0_15, %c0_16, %c0_17] : memref<1x8x4xf32, #tpu.memory_space<vmem>>, vector<1x8x4xf32>
    %18 = vector.shape_cast %17 : vector<1x8x4xf32> to vector<8x4xf32>
    %c0_18 = arith.constant 0 : index
    %c0_19 = arith.constant 0 : index
    %c0_20 = arith.constant 0 : index
    %19 = vector.load %arg8[%c0_18, %c0_19, %c0_20] : memref<1x8x4xf32, #tpu.memory_space<vmem>>, vector<1x8x4xf32>
    %20 = vector.shape_cast %19 : vector<1x8x4xf32> to vector<8x4xf32>
    %cst_21 = arith.constant dense<0.000000e+00> : vector<8xf32>
    %21 = vector.multi_reduction <add>, %16, %cst_21 [1] : vector<8x4xf32> to vector<8xf32>
    %22 = vector.shape_cast %21 : vector<8xf32> to vector<8x1xf32>
    %cst_22 = arith.constant 4.000000e+00 : f32
    %23 = vector.broadcast %cst_22 : f32 to vector<8x1xf32>
    %24 = arith.divf %22, %23 : vector<8x1xf32>
    %25 = vector.broadcast %24 : vector<8x1xf32> to vector<8x4xf32>
    %26 = arith.subf %16, %25 : vector<8x4xf32>
    %27 = arith.mulf %26, %26 : vector<8x4xf32>
    %cst_23 = arith.constant dense<0.000000e+00> : vector<8xf32>
    %28 = vector.multi_reduction <add>, %27, %cst_23 [1] : vector<8x4xf32> to vector<8xf32>
    %29 = vector.shape_cast %28 : vector<8xf32> to vector<8x1xf32>
    %cst_24 = arith.constant 4.000000e+00 : f32
    %30 = vector.broadcast %cst_24 : f32 to vector<8x1xf32>
    %31 = arith.divf %29, %30 : vector<8x1xf32>
    %32 = vector.broadcast %24 : vector<8x1xf32> to vector<8x4xf32>
    %33 = arith.subf %16, %32 : vector<8x4xf32>
    %cst_25 = arith.constant 9.99999974E-6 : f32
    %34 = vector.broadcast %cst_25 : f32 to vector<8x1xf32>
    %35 = arith.addf %31, %34 : vector<8x1xf32>
    %36 = math.rsqrt %35 : vector<8x1xf32>
    %37 = vector.broadcast %36 : vector<8x1xf32> to vector<8x4xf32>
    %38 = arith.mulf %33, %37 : vector<8x4xf32>
    %39 = arith.mulf %18, %38 : vector<8x4xf32>
    %40 = arith.addf %39, %20 : vector<8x4xf32>
    %c0_26 = arith.constant 0 : index
    %c0_27 = arith.constant 0 : index
    %c0_28 = arith.constant 0 : index
    %41 = vector.load %arg9[%c0_26, %c0_27, %c0_28] : memref<1x8x4xf32, #tpu.memory_space<vmem>>, vector<1x8x4xf32>
    %42 = vector.shape_cast %41 : vector<1x8x4xf32> to vector<8x4xf32>
    %43 = vector.shape_cast %40 : vector<8x4xf32> to vector<1x8x4xf32>
    tpu.vector_store %arg9[%c0_26, %c0_27, %c0_28], %43 {strides = array<i32>} : memref<1x8x4xf32, #tpu.memory_space<vmem>>, vector<1x8x4xf32>,
    return
  }
  func.func @transform_0(%arg0: i32) -> (i32, i32, i32) {
    %c0_i32 = arith.constant 0 : i32
    %c0_i32_0 = arith.constant 0 : i32
    %c0_i32_1 = arith.constant 0 : i32
    return %arg0, %c0_i32, %c0_i32_0 : i32, i32, i32
  }
  func.func @transform_1(%arg0: i32) -> (i32, i32) {
    %c0_i32 = arith.constant 0 : i32
    %c0_i32_0 = arith.constant 0 : i32
    %c0_i32_1 = arith.constant 0 : i32
    return %c0_i32, %c0_i32_0 : i32, i32
  }
  func.func @transform_2(%arg0: i32) -> (i32, i32) {
    %c0_i32 = arith.constant 0 : i32
    %c0_i32_0 = arith.constant 0 : i32
    %c0_i32_1 = arith.constant 0 : i32
    return %c0_i32, %c0_i32_0 : i32, i32
  }
  func.func @transform_3(%arg0: i32) -> (i32, i32, i32) {
    %c0_i32 = arith.constant 0 : i32
    %c0_i32_0 = arith.constant 0 : i32
    %c0_i32_1 = arith.constant 0 : i32
    return %arg0, %c0_i32, %c0_i32_0 : i32, i32, i32
  }
  func.func @transform_4(%arg0: i32) -> (i32, i32) {
    %c0_i32 = arith.constant 0 : i32
    %c0_i32_0 = arith.constant 0 : i32
    %c0_i32_1 = arith.constant 0 : i32
    return %c0_i32, %c0_i32_0 : i32, i32
  }
  func.func @transform_5(%arg0: i32) -> (i32, i32) {
    %c0_i32 = arith.constant 0 : i32
    %c0_i32_0 = arith.constant 0 : i32
    %c0_i32_1 = arith.constant 0 : i32
    return %c0_i32, %c0_i32_0 : i32, i32
  }
  func.func @transform_6(%arg0: i32) -> (i32, i32, i32) {
    %c0_i32 = arith.constant 0 : i32
    %c0_i32_0 = arith.constant 0 : i32
    %c0_i32_1 = arith.constant 0 : i32
    return %arg0, %c0_i32, %c0_i32_0 : i32, i32, i32
  }
  func.func @transform_7(%arg0: i32) -> (i32, i32, i32) {
    %c0_i32 = arith.constant 0 : i32
    %c0_i32_0 = arith.constant 0 : i32
    %c0_i32_1 = arith.constant 0 : i32
    return %arg0, %c0_i32, %c0_i32_0 : i32, i32, i32
  }
  func.func @transform_8(%arg0: i32) -> (i32, i32, i32) {
    %c0_i32 = arith.constant 0 : i32
    %c0_i32_0 = arith.constant 0 : i32
    %c0_i32_1 = arith.constant 0 : i32
    return %arg0, %c0_i32, %c0_i32_0 : i32, i32, i32
  }
}

module attributes {stable_mosaic.version = 11 : i64} {
  func.func @kernel(%arg0: i32, %arg1: memref<1x72x16xf32, #tpu.memory_space<vmem>>, %arg2: memref<8x72xf32, #tpu.memory_space<vmem>>, %arg3: memref<8x1xf32, #tpu.memory_space<vmem>>, %arg4: memref<1x8x16xf32, #tpu.memory_space<vmem>>, %arg5: memref<8x8xf32, #tpu.memory_space<vmem>>, %arg6: memref<8x1xf32, #tpu.memory_space<vmem>>, %arg7: memref<1x8x16xf32, #tpu.memory_space<vmem>>, %arg8: memref<1x8x16xf32, #tpu.memory_space<vmem>>, %arg9: memref<1x8x16xf32, #tpu.memory_space<vmem>>) attributes {dimension_semantics = [#tpu.dimension_semantics<parallel>], iteration_bounds = array<i64: 2>, scalar_prefetch = 0 : i64, scratch_operands = 0 : i64, tpu.core_type = #tpu.core_type<tc>, window_params = [{transform_indices = @transform_0, window_bounds = array<i64: 1, 72, 16>}, {pipeline_mode = #tpu.pipeline_mode<synchronous>, transform_indices = @transform_1, window_bounds = array<i64: 8, 72>}, {pipeline_mode = #tpu.pipeline_mode<synchronous>, transform_indices = @transform_2, window_bounds = array<i64: 8, 1>}, {transform_indices = @transform_3, window_bounds = array<i64: 1, 8, 16>}, {pipeline_mode = #tpu.pipeline_mode<synchronous>, transform_indices = @transform_4, window_bounds = array<i64: 8, 8>}, {pipeline_mode = #tpu.pipeline_mode<synchronous>, transform_indices = @transform_5, window_bounds = array<i64: 8, 1>}, {transform_indices = @transform_6, window_bounds = array<i64: 1, 8, 16>}, {transform_indices = @transform_7, window_bounds = array<i64: 1, 8, 16>}, {transform_indices = @transform_8, window_bounds = array<i64: 1, 8, 16>}]} {
    %c0 = arith.constant 0 : index
    %c0_0 = arith.constant 0 : index
    %0 = vector.load %arg2[%c0, %c0_0] : memref<8x72xf32, #tpu.memory_space<vmem>>, vector<8x72xf32>
    %c0_1 = arith.constant 0 : index
    %c0_2 = arith.constant 0 : index
    %c0_3 = arith.constant 0 : index
    %1 = vector.load %arg1[%c0_1, %c0_2, %c0_3] : memref<1x72x16xf32, #tpu.memory_space<vmem>>, vector<1x72x16xf32>
    %2 = vector.shape_cast %1 : vector<1x72x16xf32> to vector<72x16xf32>
    %cst = arith.constant dense<0.000000e+00> : vector<8x16xf32>
    %3 = tpu.matmul %0, %2, %cst {dimension_numbers = #tpu.dot_dimension_numbers<[1], [0], [0], [1], [0, 0, 1, 1], [], []>} : vector<8x72xf32>, vector<72x16xf32>, vector<8x16xf32> -> vector<8x16xf32>
    %c0_4 = arith.constant 0 : index
    %c0_5 = arith.constant 0 : index
    %4 = vector.load %arg3[%c0_4, %c0_5] : memref<8x1xf32, #tpu.memory_space<vmem>>, vector<8x1xf32>
    %5 = vector.broadcast %4 : vector<8x1xf32> to vector<8x16xf32>
    %6 = arith.addf %3, %5 : vector<8x16xf32>
    %cst_6 = arith.constant 0.000000e+00 : f32
    %7 = vector.broadcast %cst_6 : f32 to vector<8x16xf32>
    %8 = arith.maximumf %6, %7 : vector<8x16xf32>
    %c0_7 = arith.constant 0 : index
    %c0_8 = arith.constant 0 : index
    %9 = vector.load %arg5[%c0_7, %c0_8] : memref<8x8xf32, #tpu.memory_space<vmem>>, vector<8x8xf32>
    %c0_9 = arith.constant 0 : index
    %c0_10 = arith.constant 0 : index
    %c0_11 = arith.constant 0 : index
    %10 = vector.load %arg4[%c0_9, %c0_10, %c0_11] : memref<1x8x16xf32, #tpu.memory_space<vmem>>, vector<1x8x16xf32>
    %11 = vector.shape_cast %10 : vector<1x8x16xf32> to vector<8x16xf32>
    %cst_12 = arith.constant dense<0.000000e+00> : vector<8x16xf32>
    %12 = tpu.matmul %9, %11, %cst_12 {dimension_numbers = #tpu.dot_dimension_numbers<[1], [0], [0], [1], [0, 0, 1, 1], [], []>} : vector<8x8xf32>, vector<8x16xf32>, vector<8x16xf32> -> vector<8x16xf32>
    %13 = arith.addf %8, %12 : vector<8x16xf32>
    %c0_13 = arith.constant 0 : index
    %c0_14 = arith.constant 0 : index
    %14 = vector.load %arg6[%c0_13, %c0_14] : memref<8x1xf32, #tpu.memory_space<vmem>>, vector<8x1xf32>
    %15 = vector.broadcast %14 : vector<8x1xf32> to vector<8x16xf32>
    %16 = arith.addf %13, %15 : vector<8x16xf32>
    %c0_15 = arith.constant 0 : index
    %c0_16 = arith.constant 0 : index
    %c0_17 = arith.constant 0 : index
    %17 = vector.load %arg7[%c0_15, %c0_16, %c0_17] : memref<1x8x16xf32, #tpu.memory_space<vmem>>, vector<1x8x16xf32>
    %18 = vector.shape_cast %17 : vector<1x8x16xf32> to vector<8x16xf32>
    %c0_18 = arith.constant 0 : index
    %c0_19 = arith.constant 0 : index
    %c0_20 = arith.constant 0 : index
    %19 = vector.load %arg8[%c0_18, %c0_19, %c0_20] : memref<1x8x16xf32, #tpu.memory_space<vmem>>, vector<1x8x16xf32>
    %20 = vector.shape_cast %19 : vector<1x8x16xf32> to vector<8x16xf32>
    %cst_21 = arith.constant dense<0.000000e+00> : vector<8xf32>
    %21 = vector.multi_reduction <add>, %16, %cst_21 [1] : vector<8x16xf32> to vector<8xf32>
    %22 = vector.shape_cast %21 : vector<8xf32> to vector<8x1xf32>
    %cst_22 = arith.constant 1.600000e+01 : f32
    %23 = vector.broadcast %cst_22 : f32 to vector<8x1xf32>
    %24 = arith.divf %22, %23 : vector<8x1xf32>
    %25 = vector.broadcast %24 : vector<8x1xf32> to vector<8x16xf32>
    %26 = arith.subf %16, %25 : vector<8x16xf32>
    %27 = arith.mulf %26, %26 : vector<8x16xf32>
    %cst_23 = arith.constant dense<0.000000e+00> : vector<8xf32>
    %28 = vector.multi_reduction <add>, %27, %cst_23 [1] : vector<8x16xf32> to vector<8xf32>
    %29 = vector.shape_cast %28 : vector<8xf32> to vector<8x1xf32>
    %cst_24 = arith.constant 1.600000e+01 : f32
    %30 = vector.broadcast %cst_24 : f32 to vector<8x1xf32>
    %31 = arith.divf %29, %30 : vector<8x1xf32>
    %32 = vector.broadcast %24 : vector<8x1xf32> to vector<8x16xf32>
    %33 = arith.subf %16, %32 : vector<8x16xf32>
    %cst_25 = arith.constant 9.99999974E-6 : f32
    %34 = vector.broadcast %cst_25 : f32 to vector<8x1xf32>
    %35 = arith.addf %31, %34 : vector<8x1xf32>
    %36 = math.rsqrt %35 : vector<8x1xf32>
    %37 = vector.broadcast %36 : vector<8x1xf32> to vector<8x16xf32>
    %38 = arith.mulf %33, %37 : vector<8x16xf32>
    %39 = arith.mulf %18, %38 : vector<8x16xf32>
    %40 = arith.addf %39, %20 : vector<8x16xf32>
    %c0_26 = arith.constant 0 : index
    %c0_27 = arith.constant 0 : index
    %c0_28 = arith.constant 0 : index
    %41 = vector.load %arg9[%c0_26, %c0_27, %c0_28] : memref<1x8x16xf32, #tpu.memory_space<vmem>>, vector<1x8x16xf32>
    %42 = vector.shape_cast %41 : vector<1x8x16xf32> to vector<8x16xf32>
    %43 = vector.shape_cast %40 : vector<8x16xf32> to vector<1x8x16xf32>
    tpu.vector_store %arg9[%c0_26, %c0_27, %c0_28], %43 {strides = array<i32>} : memref<1x8x16xf32, #tpu.memory_space<vmem>>, vector<1x8x16xf32>,
    return
  }
  func.func @transform_0(%arg0: i32) -> (i32, i32, i32) {
    %c0_i32 = arith.constant 0 : i32
    %c0_i32_0 = arith.constant 0 : i32
    %c0_i32_1 = arith.constant 0 : i32
    return %arg0, %c0_i32, %c0_i32_0 : i32, i32, i32
  }
  func.func @transform_1(%arg0: i32) -> (i32, i32) {
    %c0_i32 = arith.constant 0 : i32
    %c0_i32_0 = arith.constant 0 : i32
    %c0_i32_1 = arith.constant 0 : i32
    return %c0_i32, %c0_i32_0 : i32, i32
  }
  func.func @transform_2(%arg0: i32) -> (i32, i32) {
    %c0_i32 = arith.constant 0 : i32
    %c0_i32_0 = arith.constant 0 : i32
    %c0_i32_1 = arith.constant 0 : i32
    return %c0_i32, %c0_i32_0 : i32, i32
  }
  func.func @transform_3(%arg0: i32) -> (i32, i32, i32) {
    %c0_i32 = arith.constant 0 : i32
    %c0_i32_0 = arith.constant 0 : i32
    %c0_i32_1 = arith.constant 0 : i32
    return %arg0, %c0_i32, %c0_i32_0 : i32, i32, i32
  }
  func.func @transform_4(%arg0: i32) -> (i32, i32) {
    %c0_i32 = arith.constant 0 : i32
    %c0_i32_0 = arith.constant 0 : i32
    %c0_i32_1 = arith.constant 0 : i32
    return %c0_i32, %c0_i32_0 : i32, i32
  }
  func.func @transform_5(%arg0: i32) -> (i32, i32) {
    %c0_i32 = arith.constant 0 : i32
    %c0_i32_0 = arith.constant 0 : i32
    %c0_i32_1 = arith.constant 0 : i32
    return %c0_i32, %c0_i32_0 : i32, i32
  }
  func.func @transform_6(%arg0: i32) -> (i32, i32, i32) {
    %c0_i32 = arith.constant 0 : i32
    %c0_i32_0 = arith.constant 0 : i32
    %c0_i32_1 = arith.constant 0 : i32
    return %arg0, %c0_i32, %c0_i32_0 : i32, i32, i32
  }
  func.func @transform_7(%arg0: i32) -> (i32, i32, i32) {
    %c0_i32 = arith.constant 0 : i32
    %c0_i32_0 = arith.constant 0 : i32
    %c0_i32_1 = arith.constant 0 : i32
    return %arg0, %c0_i32, %c0_i32_0 : i32, i32, i32
  }
  func.func @transform_8(%arg0: i32) -> (i32, i32, i32) {
    %c0_i32 = arith.constant 0 : i32
    %c0_i32_0 = arith.constant 0 : i32
    %c0_i32_1 = arith.constant 0 : i32
    return %arg0, %c0_i32, %c0_i32_0 : i32, i32, i32
  }
}

module attributes {stable_mosaic.version = 11 : i64} {
  func.func @kernel(%arg0: i32, %arg1: memref<1x72x64xf32, #tpu.memory_space<vmem>>, %arg2: memref<4x72xf32, #tpu.memory_space<vmem>>, %arg3: memref<4x1xf32, #tpu.memory_space<vmem>>, %arg4: memref<1x4x64xf32, #tpu.memory_space<vmem>>, %arg5: memref<4x4xf32, #tpu.memory_space<vmem>>, %arg6: memref<4x1xf32, #tpu.memory_space<vmem>>, %arg7: memref<1x4x64xf32, #tpu.memory_space<vmem>>, %arg8: memref<1x4x64xf32, #tpu.memory_space<vmem>>, %arg9: memref<1x4x64xf32, #tpu.memory_space<vmem>>) attributes {dimension_semantics = [#tpu.dimension_semantics<parallel>], iteration_bounds = array<i64: 2>, scalar_prefetch = 0 : i64, scratch_operands = 0 : i64, tpu.core_type = #tpu.core_type<tc>, window_params = [{transform_indices = @transform_0, window_bounds = array<i64: 1, 72, 64>}, {pipeline_mode = #tpu.pipeline_mode<synchronous>, transform_indices = @transform_1, window_bounds = array<i64: 4, 72>}, {pipeline_mode = #tpu.pipeline_mode<synchronous>, transform_indices = @transform_2, window_bounds = array<i64: 4, 1>}, {transform_indices = @transform_3, window_bounds = array<i64: 1, 4, 64>}, {pipeline_mode = #tpu.pipeline_mode<synchronous>, transform_indices = @transform_4, window_bounds = array<i64: 4, 4>}, {pipeline_mode = #tpu.pipeline_mode<synchronous>, transform_indices = @transform_5, window_bounds = array<i64: 4, 1>}, {transform_indices = @transform_6, window_bounds = array<i64: 1, 4, 64>}, {transform_indices = @transform_7, window_bounds = array<i64: 1, 4, 64>}, {transform_indices = @transform_8, window_bounds = array<i64: 1, 4, 64>}]} {
    %c0 = arith.constant 0 : index
    %c0_0 = arith.constant 0 : index
    %0 = vector.load %arg2[%c0, %c0_0] : memref<4x72xf32, #tpu.memory_space<vmem>>, vector<4x72xf32>
    %c0_1 = arith.constant 0 : index
    %c0_2 = arith.constant 0 : index
    %c0_3 = arith.constant 0 : index
    %1 = vector.load %arg1[%c0_1, %c0_2, %c0_3] : memref<1x72x64xf32, #tpu.memory_space<vmem>>, vector<1x72x64xf32>
    %2 = vector.shape_cast %1 : vector<1x72x64xf32> to vector<72x64xf32>
    %cst = arith.constant dense<0.000000e+00> : vector<4x64xf32>
    %3 = tpu.matmul %0, %2, %cst {dimension_numbers = #tpu.dot_dimension_numbers<[1], [0], [0], [1], [0, 0, 1, 1], [], []>} : vector<4x72xf32>, vector<72x64xf32>, vector<4x64xf32> -> vector<4x64xf32>
    %c0_4 = arith.constant 0 : index
    %c0_5 = arith.constant 0 : index
    %4 = vector.load %arg3[%c0_4, %c0_5] : memref<4x1xf32, #tpu.memory_space<vmem>>, vector<4x1xf32>
    %5 = vector.broadcast %4 : vector<4x1xf32> to vector<4x64xf32>
    %6 = arith.addf %3, %5 : vector<4x64xf32>
    %cst_6 = arith.constant 0.000000e+00 : f32
    %7 = vector.broadcast %cst_6 : f32 to vector<4x64xf32>
    %8 = arith.maximumf %6, %7 : vector<4x64xf32>
    %c0_7 = arith.constant 0 : index
    %c0_8 = arith.constant 0 : index
    %9 = vector.load %arg5[%c0_7, %c0_8] : memref<4x4xf32, #tpu.memory_space<vmem>>, vector<4x4xf32>
    %c0_9 = arith.constant 0 : index
    %c0_10 = arith.constant 0 : index
    %c0_11 = arith.constant 0 : index
    %10 = vector.load %arg4[%c0_9, %c0_10, %c0_11] : memref<1x4x64xf32, #tpu.memory_space<vmem>>, vector<1x4x64xf32>
    %11 = vector.shape_cast %10 : vector<1x4x64xf32> to vector<4x64xf32>
    %cst_12 = arith.constant dense<0.000000e+00> : vector<4x64xf32>
    %12 = tpu.matmul %9, %11, %cst_12 {dimension_numbers = #tpu.dot_dimension_numbers<[1], [0], [0], [1], [0, 0, 1, 1], [], []>} : vector<4x4xf32>, vector<4x64xf32>, vector<4x64xf32> -> vector<4x64xf32>
    %13 = arith.addf %8, %12 : vector<4x64xf32>
    %c0_13 = arith.constant 0 : index
    %c0_14 = arith.constant 0 : index
    %14 = vector.load %arg6[%c0_13, %c0_14] : memref<4x1xf32, #tpu.memory_space<vmem>>, vector<4x1xf32>
    %15 = vector.broadcast %14 : vector<4x1xf32> to vector<4x64xf32>
    %16 = arith.addf %13, %15 : vector<4x64xf32>
    %c0_15 = arith.constant 0 : index
    %c0_16 = arith.constant 0 : index
    %c0_17 = arith.constant 0 : index
    %17 = vector.load %arg7[%c0_15, %c0_16, %c0_17] : memref<1x4x64xf32, #tpu.memory_space<vmem>>, vector<1x4x64xf32>
    %18 = vector.shape_cast %17 : vector<1x4x64xf32> to vector<4x64xf32>
    %c0_18 = arith.constant 0 : index
    %c0_19 = arith.constant 0 : index
    %c0_20 = arith.constant 0 : index
    %19 = vector.load %arg8[%c0_18, %c0_19, %c0_20] : memref<1x4x64xf32, #tpu.memory_space<vmem>>, vector<1x4x64xf32>
    %20 = vector.shape_cast %19 : vector<1x4x64xf32> to vector<4x64xf32>
    %cst_21 = arith.constant dense<0.000000e+00> : vector<4xf32>
    %21 = vector.multi_reduction <add>, %16, %cst_21 [1] : vector<4x64xf32> to vector<4xf32>
    %22 = vector.shape_cast %21 : vector<4xf32> to vector<4x1xf32>
    %cst_22 = arith.constant 6.400000e+01 : f32
    %23 = vector.broadcast %cst_22 : f32 to vector<4x1xf32>
    %24 = arith.divf %22, %23 : vector<4x1xf32>
    %25 = vector.broadcast %24 : vector<4x1xf32> to vector<4x64xf32>
    %26 = arith.subf %16, %25 : vector<4x64xf32>
    %27 = arith.mulf %26, %26 : vector<4x64xf32>
    %cst_23 = arith.constant dense<0.000000e+00> : vector<4xf32>
    %28 = vector.multi_reduction <add>, %27, %cst_23 [1] : vector<4x64xf32> to vector<4xf32>
    %29 = vector.shape_cast %28 : vector<4xf32> to vector<4x1xf32>
    %cst_24 = arith.constant 6.400000e+01 : f32
    %30 = vector.broadcast %cst_24 : f32 to vector<4x1xf32>
    %31 = arith.divf %29, %30 : vector<4x1xf32>
    %32 = vector.broadcast %24 : vector<4x1xf32> to vector<4x64xf32>
    %33 = arith.subf %16, %32 : vector<4x64xf32>
    %cst_25 = arith.constant 9.99999974E-6 : f32
    %34 = vector.broadcast %cst_25 : f32 to vector<4x1xf32>
    %35 = arith.addf %31, %34 : vector<4x1xf32>
    %36 = math.rsqrt %35 : vector<4x1xf32>
    %37 = vector.broadcast %36 : vector<4x1xf32> to vector<4x64xf32>
    %38 = arith.mulf %33, %37 : vector<4x64xf32>
    %39 = arith.mulf %18, %38 : vector<4x64xf32>
    %40 = arith.addf %39, %20 : vector<4x64xf32>
    %c0_26 = arith.constant 0 : index
    %c0_27 = arith.constant 0 : index
    %c0_28 = arith.constant 0 : index
    %41 = vector.load %arg9[%c0_26, %c0_27, %c0_28] : memref<1x4x64xf32, #tpu.memory_space<vmem>>, vector<1x4x64xf32>
    %42 = vector.shape_cast %41 : vector<1x4x64xf32> to vector<4x64xf32>
    %43 = vector.shape_cast %40 : vector<4x64xf32> to vector<1x4x64xf32>
    tpu.vector_store %arg9[%c0_26, %c0_27, %c0_28], %43 {strides = array<i32>} : memref<1x4x64xf32, #tpu.memory_space<vmem>>, vector<1x4x64xf32>,
    return
  }
  func.func @transform_0(%arg0: i32) -> (i32, i32, i32) {
    %c0_i32 = arith.constant 0 : i32
    %c0_i32_0 = arith.constant 0 : i32
    %c0_i32_1 = arith.constant 0 : i32
    return %arg0, %c0_i32, %c0_i32_0 : i32, i32, i32
  }
  func.func @transform_1(%arg0: i32) -> (i32, i32) {
    %c0_i32 = arith.constant 0 : i32
    %c0_i32_0 = arith.constant 0 : i32
    %c0_i32_1 = arith.constant 0 : i32
    return %c0_i32, %c0_i32_0 : i32, i32
  }
  func.func @transform_2(%arg0: i32) -> (i32, i32) {
    %c0_i32 = arith.constant 0 : i32
    %c0_i32_0 = arith.constant 0 : i32
    %c0_i32_1 = arith.constant 0 : i32
    return %c0_i32, %c0_i32_0 : i32, i32
  }
  func.func @transform_3(%arg0: i32) -> (i32, i32, i32) {
    %c0_i32 = arith.constant 0 : i32
    %c0_i32_0 = arith.constant 0 : i32
    %c0_i32_1 = arith.constant 0 : i32
    return %arg0, %c0_i32, %c0_i32_0 : i32, i32, i32
  }
  func.func @transform_4(%arg0: i32) -> (i32, i32) {
    %c0_i32 = arith.constant 0 : i32
    %c0_i32_0 = arith.constant 0 : i32
    %c0_i32_1 = arith.constant 0 : i32
    return %c0_i32, %c0_i32_0 : i32, i32
  }
  func.func @transform_5(%arg0: i32) -> (i32, i32) {
    %c0_i32 = arith.constant 0 : i32
    %c0_i32_0 = arith.constant 0 : i32
    %c0_i32_1 = arith.constant 0 : i32
    return %c0_i32, %c0_i32_0 : i32, i32
  }
  func.func @transform_6(%arg0: i32) -> (i32, i32, i32) {
    %c0_i32 = arith.constant 0 : i32
    %c0_i32_0 = arith.constant 0 : i32
    %c0_i32_1 = arith.constant 0 : i32
    return %arg0, %c0_i32, %c0_i32_0 : i32, i32, i32
  }
  func.func @transform_7(%arg0: i32) -> (i32, i32, i32) {
    %c0_i32 = arith.constant 0 : i32
    %c0_i32_0 = arith.constant 0 : i32
    %c0_i32_1 = arith.constant 0 : i32
    return %arg0, %c0_i32, %c0_i32_0 : i32, i32, i32
  }
  func.func @transform_8(%arg0: i32) -> (i32, i32, i32) {
    %c0_i32 = arith.constant 0 : i32
    %c0_i32_0 = arith.constant 0 : i32
    %c0_i32_1 = arith.constant 0 : i32
    return %arg0, %c0_i32, %c0_i32_0 : i32, i32, i32
  }
}

module attributes {stable_mosaic.version = 11 : i64} {
  func.func @kernel(%arg0: i32, %arg1: memref<1x36x256xf32, #tpu.memory_space<vmem>>, %arg2: memref<4x36xf32, #tpu.memory_space<vmem>>, %arg3: memref<4x1xf32, #tpu.memory_space<vmem>>, %arg4: memref<1x4x256xf32, #tpu.memory_space<vmem>>, %arg5: memref<4x4xf32, #tpu.memory_space<vmem>>, %arg6: memref<4x1xf32, #tpu.memory_space<vmem>>, %arg7: memref<1x4x256xf32, #tpu.memory_space<vmem>>, %arg8: memref<1x4x256xf32, #tpu.memory_space<vmem>>, %arg9: memref<1x4x256xf32, #tpu.memory_space<vmem>>) attributes {dimension_semantics = [#tpu.dimension_semantics<parallel>], iteration_bounds = array<i64: 2>, scalar_prefetch = 0 : i64, scratch_operands = 0 : i64, tpu.core_type = #tpu.core_type<tc>, window_params = [{transform_indices = @transform_0, window_bounds = array<i64: 1, 36, 256>}, {pipeline_mode = #tpu.pipeline_mode<synchronous>, transform_indices = @transform_1, window_bounds = array<i64: 4, 36>}, {pipeline_mode = #tpu.pipeline_mode<synchronous>, transform_indices = @transform_2, window_bounds = array<i64: 4, 1>}, {transform_indices = @transform_3, window_bounds = array<i64: 1, 4, 256>}, {pipeline_mode = #tpu.pipeline_mode<synchronous>, transform_indices = @transform_4, window_bounds = array<i64: 4, 4>}, {pipeline_mode = #tpu.pipeline_mode<synchronous>, transform_indices = @transform_5, window_bounds = array<i64: 4, 1>}, {transform_indices = @transform_6, window_bounds = array<i64: 1, 4, 256>}, {transform_indices = @transform_7, window_bounds = array<i64: 1, 4, 256>}, {transform_indices = @transform_8, window_bounds = array<i64: 1, 4, 256>}]} {
    %c0 = arith.constant 0 : index
    %c0_0 = arith.constant 0 : index
    %0 = vector.load %arg2[%c0, %c0_0] : memref<4x36xf32, #tpu.memory_space<vmem>>, vector<4x36xf32>
    %c0_1 = arith.constant 0 : index
    %c0_2 = arith.constant 0 : index
    %c0_3 = arith.constant 0 : index
    %1 = vector.load %arg1[%c0_1, %c0_2, %c0_3] : memref<1x36x256xf32, #tpu.memory_space<vmem>>, vector<1x36x256xf32>
    %2 = vector.shape_cast %1 : vector<1x36x256xf32> to vector<36x256xf32>
    %cst = arith.constant dense<0.000000e+00> : vector<4x256xf32>
    %3 = tpu.matmul %0, %2, %cst {dimension_numbers = #tpu.dot_dimension_numbers<[1], [0], [0], [1], [0, 0, 1, 1], [], []>} : vector<4x36xf32>, vector<36x256xf32>, vector<4x256xf32> -> vector<4x256xf32>
    %c0_4 = arith.constant 0 : index
    %c0_5 = arith.constant 0 : index
    %4 = vector.load %arg3[%c0_4, %c0_5] : memref<4x1xf32, #tpu.memory_space<vmem>>, vector<4x1xf32>
    %5 = vector.broadcast %4 : vector<4x1xf32> to vector<4x256xf32>
    %6 = arith.addf %3, %5 : vector<4x256xf32>
    %cst_6 = arith.constant 0.000000e+00 : f32
    %7 = vector.broadcast %cst_6 : f32 to vector<4x256xf32>
    %8 = arith.maximumf %6, %7 : vector<4x256xf32>
    %c0_7 = arith.constant 0 : index
    %c0_8 = arith.constant 0 : index
    %9 = vector.load %arg5[%c0_7, %c0_8] : memref<4x4xf32, #tpu.memory_space<vmem>>, vector<4x4xf32>
    %c0_9 = arith.constant 0 : index
    %c0_10 = arith.constant 0 : index
    %c0_11 = arith.constant 0 : index
    %10 = vector.load %arg4[%c0_9, %c0_10, %c0_11] : memref<1x4x256xf32, #tpu.memory_space<vmem>>, vector<1x4x256xf32>
    %11 = vector.shape_cast %10 : vector<1x4x256xf32> to vector<4x256xf32>
    %cst_12 = arith.constant dense<0.000000e+00> : vector<4x256xf32>
    %12 = tpu.matmul %9, %11, %cst_12 {dimension_numbers = #tpu.dot_dimension_numbers<[1], [0], [0], [1], [0, 0, 1, 1], [], []>} : vector<4x4xf32>, vector<4x256xf32>, vector<4x256xf32> -> vector<4x256xf32>
    %13 = arith.addf %8, %12 : vector<4x256xf32>
    %c0_13 = arith.constant 0 : index
    %c0_14 = arith.constant 0 : index
    %14 = vector.load %arg6[%c0_13, %c0_14] : memref<4x1xf32, #tpu.memory_space<vmem>>, vector<4x1xf32>
    %15 = vector.broadcast %14 : vector<4x1xf32> to vector<4x256xf32>
    %16 = arith.addf %13, %15 : vector<4x256xf32>
    %c0_15 = arith.constant 0 : index
    %c0_16 = arith.constant 0 : index
    %c0_17 = arith.constant 0 : index
    %17 = vector.load %arg7[%c0_15, %c0_16, %c0_17] : memref<1x4x256xf32, #tpu.memory_space<vmem>>, vector<1x4x256xf32>
    %18 = vector.shape_cast %17 : vector<1x4x256xf32> to vector<4x256xf32>
    %c0_18 = arith.constant 0 : index
    %c0_19 = arith.constant 0 : index
    %c0_20 = arith.constant 0 : index
    %19 = vector.load %arg8[%c0_18, %c0_19, %c0_20] : memref<1x4x256xf32, #tpu.memory_space<vmem>>, vector<1x4x256xf32>
    %20 = vector.shape_cast %19 : vector<1x4x256xf32> to vector<4x256xf32>
    %cst_21 = arith.constant dense<0.000000e+00> : vector<4xf32>
    %21 = vector.multi_reduction <add>, %16, %cst_21 [1] : vector<4x256xf32> to vector<4xf32>
    %22 = vector.shape_cast %21 : vector<4xf32> to vector<4x1xf32>
    %cst_22 = arith.constant 2.560000e+02 : f32
    %23 = vector.broadcast %cst_22 : f32 to vector<4x1xf32>
    %24 = arith.divf %22, %23 : vector<4x1xf32>
    %25 = vector.broadcast %24 : vector<4x1xf32> to vector<4x256xf32>
    %26 = arith.subf %16, %25 : vector<4x256xf32>
    %27 = arith.mulf %26, %26 : vector<4x256xf32>
    %cst_23 = arith.constant dense<0.000000e+00> : vector<4xf32>
    %28 = vector.multi_reduction <add>, %27, %cst_23 [1] : vector<4x256xf32> to vector<4xf32>
    %29 = vector.shape_cast %28 : vector<4xf32> to vector<4x1xf32>
    %cst_24 = arith.constant 2.560000e+02 : f32
    %30 = vector.broadcast %cst_24 : f32 to vector<4x1xf32>
    %31 = arith.divf %29, %30 : vector<4x1xf32>
    %32 = vector.broadcast %24 : vector<4x1xf32> to vector<4x256xf32>
    %33 = arith.subf %16, %32 : vector<4x256xf32>
    %cst_25 = arith.constant 9.99999974E-6 : f32
    %34 = vector.broadcast %cst_25 : f32 to vector<4x1xf32>
    %35 = arith.addf %31, %34 : vector<4x1xf32>
    %36 = math.rsqrt %35 : vector<4x1xf32>
    %37 = vector.broadcast %36 : vector<4x1xf32> to vector<4x256xf32>
    %38 = arith.mulf %33, %37 : vector<4x256xf32>
    %39 = arith.mulf %18, %38 : vector<4x256xf32>
    %40 = arith.addf %39, %20 : vector<4x256xf32>
    %c0_26 = arith.constant 0 : index
    %c0_27 = arith.constant 0 : index
    %c0_28 = arith.constant 0 : index
    %41 = vector.load %arg9[%c0_26, %c0_27, %c0_28] : memref<1x4x256xf32, #tpu.memory_space<vmem>>, vector<1x4x256xf32>
    %42 = vector.shape_cast %41 : vector<1x4x256xf32> to vector<4x256xf32>
    %43 = vector.shape_cast %40 : vector<4x256xf32> to vector<1x4x256xf32>
    tpu.vector_store %arg9[%c0_26, %c0_27, %c0_28], %43 {strides = array<i32>} : memref<1x4x256xf32, #tpu.memory_space<vmem>>, vector<1x4x256xf32>,
    return
  }
  func.func @transform_0(%arg0: i32) -> (i32, i32, i32) {
    %c0_i32 = arith.constant 0 : i32
    %c0_i32_0 = arith.constant 0 : i32
    %c0_i32_1 = arith.constant 0 : i32
    return %arg0, %c0_i32, %c0_i32_0 : i32, i32, i32
  }
  func.func @transform_1(%arg0: i32) -> (i32, i32) {
    %c0_i32 = arith.constant 0 : i32
    %c0_i32_0 = arith.constant 0 : i32
    %c0_i32_1 = arith.constant 0 : i32
    return %c0_i32, %c0_i32_0 : i32, i32
  }
  func.func @transform_2(%arg0: i32) -> (i32, i32) {
    %c0_i32 = arith.constant 0 : i32
    %c0_i32_0 = arith.constant 0 : i32
    %c0_i32_1 = arith.constant 0 : i32
    return %c0_i32, %c0_i32_0 : i32, i32
  }
  func.func @transform_3(%arg0: i32) -> (i32, i32, i32) {
    %c0_i32 = arith.constant 0 : i32
    %c0_i32_0 = arith.constant 0 : i32
    %c0_i32_1 = arith.constant 0 : i32
    return %arg0, %c0_i32, %c0_i32_0 : i32, i32, i32
  }
  func.func @transform_4(%arg0: i32) -> (i32, i32) {
    %c0_i32 = arith.constant 0 : i32
    %c0_i32_0 = arith.constant 0 : i32
    %c0_i32_1 = arith.constant 0 : i32
    return %c0_i32, %c0_i32_0 : i32, i32
  }
  func.func @transform_5(%arg0: i32) -> (i32, i32) {
    %c0_i32 = arith.constant 0 : i32
    %c0_i32_0 = arith.constant 0 : i32
    %c0_i32_1 = arith.constant 0 : i32
    return %c0_i32, %c0_i32_0 : i32, i32
  }
  func.func @transform_6(%arg0: i32) -> (i32, i32, i32) {
    %c0_i32 = arith.constant 0 : i32
    %c0_i32_0 = arith.constant 0 : i32
    %c0_i32_1 = arith.constant 0 : i32
    return %arg0, %c0_i32, %c0_i32_0 : i32, i32, i32
  }
  func.func @transform_7(%arg0: i32) -> (i32, i32, i32) {
    %c0_i32 = arith.constant 0 : i32
    %c0_i32_0 = arith.constant 0 : i32
    %c0_i32_1 = arith.constant 0 : i32
    return %arg0, %c0_i32, %c0_i32_0 : i32, i32, i32
  }
  func.func @transform_8(%arg0: i32) -> (i32, i32, i32) {
    %c0_i32 = arith.constant 0 : i32
    %c0_i32_0 = arith.constant 0 : i32
    %c0_i32_1 = arith.constant 0 : i32
    return %arg0, %c0_i32, %c0_i32_0 : i32, i32, i32
  }
}

module attributes {stable_mosaic.version = 11 : i64} {
  func.func @kernel(%arg0: i32, %arg1: memref<1x36x1024xf32, #tpu.memory_space<vmem>>, %arg2: memref<3x36xf32, #tpu.memory_space<vmem>>, %arg3: memref<3x1xf32, #tpu.memory_space<vmem>>, %arg4: memref<1x3x1024xf32, #tpu.memory_space<vmem>>, %arg5: memref<3x3xf32, #tpu.memory_space<vmem>>, %arg6: memref<3x1xf32, #tpu.memory_space<vmem>>, %arg7: memref<1x3x1024xf32, #tpu.memory_space<vmem>>, %arg8: memref<1x3x1024xf32, #tpu.memory_space<vmem>>, %arg9: memref<3x3xf32, #tpu.memory_space<vmem>>, %arg10: memref<3x1xf32, #tpu.memory_space<vmem>>, %arg11: memref<1x3x1024xf32, #tpu.memory_space<vmem>>) attributes {dimension_semantics = [#tpu.dimension_semantics<parallel>], iteration_bounds = array<i64: 2>, scalar_prefetch = 0 : i64, scratch_operands = 0 : i64, tpu.core_type = #tpu.core_type<tc>, window_params = [{transform_indices = @transform_0, window_bounds = array<i64: 1, 36, 1024>}, {pipeline_mode = #tpu.pipeline_mode<synchronous>, transform_indices = @transform_1, window_bounds = array<i64: 3, 36>}, {pipeline_mode = #tpu.pipeline_mode<synchronous>, transform_indices = @transform_2, window_bounds = array<i64: 3, 1>}, {transform_indices = @transform_3, window_bounds = array<i64: 1, 3, 1024>}, {pipeline_mode = #tpu.pipeline_mode<synchronous>, transform_indices = @transform_4, window_bounds = array<i64: 3, 3>}, {pipeline_mode = #tpu.pipeline_mode<synchronous>, transform_indices = @transform_5, window_bounds = array<i64: 3, 1>}, {transform_indices = @transform_6, window_bounds = array<i64: 1, 3, 1024>}, {transform_indices = @transform_7, window_bounds = array<i64: 1, 3, 1024>}, {pipeline_mode = #tpu.pipeline_mode<synchronous>, transform_indices = @transform_8, window_bounds = array<i64: 3, 3>}, {pipeline_mode = #tpu.pipeline_mode<synchronous>, transform_indices = @transform_9, window_bounds = array<i64: 3, 1>}, {transform_indices = @transform_10, window_bounds = array<i64: 1, 3, 1024>}]} {
    %c0 = arith.constant 0 : index
    %c0_0 = arith.constant 0 : index
    %0 = vector.load %arg2[%c0, %c0_0] : memref<3x36xf32, #tpu.memory_space<vmem>>, vector<3x36xf32>
    %c0_1 = arith.constant 0 : index
    %c0_2 = arith.constant 0 : index
    %c0_3 = arith.constant 0 : index
    %1 = vector.load %arg1[%c0_1, %c0_2, %c0_3] : memref<1x36x1024xf32, #tpu.memory_space<vmem>>, vector<1x36x1024xf32>
    %2 = vector.shape_cast %1 : vector<1x36x1024xf32> to vector<36x1024xf32>
    %cst = arith.constant dense<0.000000e+00> : vector<3x1024xf32>
    %3 = tpu.matmul %0, %2, %cst {dimension_numbers = #tpu.dot_dimension_numbers<[1], [0], [0], [1], [0, 0, 1, 1], [], []>} : vector<3x36xf32>, vector<36x1024xf32>, vector<3x1024xf32> -> vector<3x1024xf32>
    %c0_4 = arith.constant 0 : index
    %c0_5 = arith.constant 0 : index
    %4 = vector.load %arg3[%c0_4, %c0_5] : memref<3x1xf32, #tpu.memory_space<vmem>>, vector<3x1xf32>
    %5 = vector.broadcast %4 : vector<3x1xf32> to vector<3x1024xf32>
    %6 = arith.addf %3, %5 : vector<3x1024xf32>
    %cst_6 = arith.constant 0.000000e+00 : f32
    %7 = vector.broadcast %cst_6 : f32 to vector<3x1024xf32>
    %8 = arith.maximumf %6, %7 : vector<3x1024xf32>
    %c0_7 = arith.constant 0 : index
    %c0_8 = arith.constant 0 : index
    %9 = vector.load %arg5[%c0_7, %c0_8] : memref<3x3xf32, #tpu.memory_space<vmem>>, vector<3x3xf32>
    %c0_9 = arith.constant 0 : index
    %c0_10 = arith.constant 0 : index
    %c0_11 = arith.constant 0 : index
    %10 = vector.load %arg4[%c0_9, %c0_10, %c0_11] : memref<1x3x1024xf32, #tpu.memory_space<vmem>>, vector<1x3x1024xf32>
    %11 = vector.shape_cast %10 : vector<1x3x1024xf32> to vector<3x1024xf32>
    %cst_12 = arith.constant dense<0.000000e+00> : vector<3x1024xf32>
    %12 = tpu.matmul %9, %11, %cst_12 {dimension_numbers = #tpu.dot_dimension_numbers<[1], [0], [0], [1], [0, 0, 1, 1], [], []>} : vector<3x3xf32>, vector<3x1024xf32>, vector<3x1024xf32> -> vector<3x1024xf32>
    %13 = arith.addf %8, %12 : vector<3x1024xf32>
    %c0_13 = arith.constant 0 : index
    %c0_14 = arith.constant 0 : index
    %14 = vector.load %arg6[%c0_13, %c0_14] : memref<3x1xf32, #tpu.memory_space<vmem>>, vector<3x1xf32>
    %15 = vector.broadcast %14 : vector<3x1xf32> to vector<3x1024xf32>
    %16 = arith.addf %13, %15 : vector<3x1024xf32>
    %c0_15 = arith.constant 0 : index
    %c0_16 = arith.constant 0 : index
    %c0_17 = arith.constant 0 : index
    %17 = vector.load %arg7[%c0_15, %c0_16, %c0_17] : memref<1x3x1024xf32, #tpu.memory_space<vmem>>, vector<1x3x1024xf32>
    %18 = vector.shape_cast %17 : vector<1x3x1024xf32> to vector<3x1024xf32>
    %c0_18 = arith.constant 0 : index
    %c0_19 = arith.constant 0 : index
    %c0_20 = arith.constant 0 : index
    %19 = vector.load %arg8[%c0_18, %c0_19, %c0_20] : memref<1x3x1024xf32, #tpu.memory_space<vmem>>, vector<1x3x1024xf32>
    %20 = vector.shape_cast %19 : vector<1x3x1024xf32> to vector<3x1024xf32>
    %cst_21 = arith.constant dense<0.000000e+00> : vector<3xf32>
    %21 = vector.multi_reduction <add>, %16, %cst_21 [1] : vector<3x1024xf32> to vector<3xf32>
    %22 = vector.shape_cast %21 : vector<3xf32> to vector<3x1xf32>
    %cst_22 = arith.constant 1.024000e+03 : f32
    %23 = vector.broadcast %cst_22 : f32 to vector<3x1xf32>
    %24 = arith.divf %22, %23 : vector<3x1xf32>
    %25 = vector.broadcast %24 : vector<3x1xf32> to vector<3x1024xf32>
    %26 = arith.subf %16, %25 : vector<3x1024xf32>
    %27 = arith.mulf %26, %26 : vector<3x1024xf32>
    %cst_23 = arith.constant dense<0.000000e+00> : vector<3xf32>
    %28 = vector.multi_reduction <add>, %27, %cst_23 [1] : vector<3x1024xf32> to vector<3xf32>
    %29 = vector.shape_cast %28 : vector<3xf32> to vector<3x1xf32>
    %cst_24 = arith.constant 1.024000e+03 : f32
    %30 = vector.broadcast %cst_24 : f32 to vector<3x1xf32>
    %31 = arith.divf %29, %30 : vector<3x1xf32>
    %32 = vector.broadcast %24 : vector<3x1xf32> to vector<3x1024xf32>
    %33 = arith.subf %16, %32 : vector<3x1024xf32>
    %cst_25 = arith.constant 9.99999974E-6 : f32
    %34 = vector.broadcast %cst_25 : f32 to vector<3x1xf32>
    %35 = arith.addf %31, %34 : vector<3x1xf32>
    %36 = math.rsqrt %35 : vector<3x1xf32>
    %37 = vector.broadcast %36 : vector<3x1xf32> to vector<3x1024xf32>
    %38 = arith.mulf %33, %37 : vector<3x1024xf32>
    %39 = arith.mulf %18, %38 : vector<3x1024xf32>
    %40 = arith.addf %39, %20 : vector<3x1024xf32>
    %c0_26 = arith.constant 0 : index
    %c0_27 = arith.constant 0 : index
    %41 = vector.load %arg9[%c0_26, %c0_27] : memref<3x3xf32, #tpu.memory_space<vmem>>, vector<3x3xf32>
    %cst_28 = arith.constant dense<0.000000e+00> : vector<3x1024xf32>
    %42 = tpu.matmul %41, %40, %cst_28 {dimension_numbers = #tpu.dot_dimension_numbers<[1], [0], [0], [1], [0, 0, 1, 1], [], []>} : vector<3x3xf32>, vector<3x1024xf32>, vector<3x1024xf32> -> vector<3x1024xf32>
    %c0_29 = arith.constant 0 : index
    %c0_30 = arith.constant 0 : index
    %43 = vector.load %arg10[%c0_29, %c0_30] : memref<3x1xf32, #tpu.memory_space<vmem>>, vector<3x1xf32>
    %44 = vector.broadcast %43 : vector<3x1xf32> to vector<3x1024xf32>
    %45 = arith.addf %42, %44 : vector<3x1024xf32>
    %46 = arith.negf %45 : vector<3x1024xf32>
    %47 = math.exp %46 : vector<3x1024xf32>
    %cst_31 = arith.constant 1.000000e+00 : f32
    %48 = vector.broadcast %cst_31 : f32 to vector<3x1024xf32>
    %49 = arith.addf %48, %47 : vector<3x1024xf32>
    %50 = arith.divf %48, %49 : vector<3x1024xf32>
    %c0_32 = arith.constant 0 : index
    %c0_33 = arith.constant 0 : index
    %c0_34 = arith.constant 0 : index
    %51 = vector.load %arg11[%c0_32, %c0_33, %c0_34] : memref<1x3x1024xf32, #tpu.memory_space<vmem>>, vector<1x3x1024xf32>
    %52 = vector.shape_cast %51 : vector<1x3x1024xf32> to vector<3x1024xf32>
    %53 = vector.shape_cast %50 : vector<3x1024xf32> to vector<1x3x1024xf32>
    tpu.vector_store %arg11[%c0_32, %c0_33, %c0_34], %53 {strides = array<i32>} : memref<1x3x1024xf32, #tpu.memory_space<vmem>>, vector<1x3x1024xf32>,
    return
  }
  func.func @transform_0(%arg0: i32) -> (i32, i32, i32) {
    %c0_i32 = arith.constant 0 : i32
    %c0_i32_0 = arith.constant 0 : i32
    %c0_i32_1 = arith.constant 0 : i32
    return %arg0, %c0_i32, %c0_i32_0 : i32, i32, i32
  }
  func.func @transform_1(%arg0: i32) -> (i32, i32) {
    %c0_i32 = arith.constant 0 : i32
    %c0_i32_0 = arith.constant 0 : i32
    %c0_i32_1 = arith.constant 0 : i32
    return %c0_i32, %c0_i32_0 : i32, i32
  }
  func.func @transform_2(%arg0: i32) -> (i32, i32) {
    %c0_i32 = arith.constant 0 : i32
    %c0_i32_0 = arith.constant 0 : i32
    %c0_i32_1 = arith.constant 0 : i32
    return %c0_i32, %c0_i32_0 : i32, i32
  }
  func.func @transform_3(%arg0: i32) -> (i32, i32, i32) {
    %c0_i32 = arith.constant 0 : i32
    %c0_i32_0 = arith.constant 0 : i32
    %c0_i32_1 = arith.constant 0 : i32
    return %arg0, %c0_i32, %c0_i32_0 : i32, i32, i32
  }
  func.func @transform_4(%arg0: i32) -> (i32, i32) {
    %c0_i32 = arith.constant 0 : i32
    %c0_i32_0 = arith.constant 0 : i32
    %c0_i32_1 = arith.constant 0 : i32
    return %c0_i32, %c0_i32_0 : i32, i32
  }
  func.func @transform_5(%arg0: i32) -> (i32, i32) {
    %c0_i32 = arith.constant 0 : i32
    %c0_i32_0 = arith.constant 0 : i32
    %c0_i32_1 = arith.constant 0 : i32
    return %c0_i32, %c0_i32_0 : i32, i32
  }
  func.func @transform_6(%arg0: i32) -> (i32, i32, i32) {
    %c0_i32 = arith.constant 0 : i32
    %c0_i32_0 = arith.constant 0 : i32
    %c0_i32_1 = arith.constant 0 : i32
    return %arg0, %c0_i32, %c0_i32_0 : i32, i32, i32
  }
  func.func @transform_7(%arg0: i32) -> (i32, i32, i32) {
    %c0_i32 = arith.constant 0 : i32
    %c0_i32_0 = arith.constant 0 : i32
    %c0_i32_1 = arith.constant 0 : i32
    return %arg0, %c0_i32, %c0_i32_0 : i32, i32, i32
  }
  func.func @transform_8(%arg0: i32) -> (i32, i32) {
    %c0_i32 = arith.constant 0 : i32
    %c0_i32_0 = arith.constant 0 : i32
    %c0_i32_1 = arith.constant 0 : i32
    return %c0_i32, %c0_i32_0 : i32, i32
  }
  func.func @transform_9(%arg0: i32) -> (i32, i32) {
    %c0_i32 = arith.constant 0 : i32
    %c0_i32_0 = arith.constant 0 : i32
    %c0_i32_1 = arith.constant 0 : i32
    return %c0_i32, %c0_i32_0 : i32, i32
  }
  func.func @transform_10(%arg0: i32) -> (i32, i32, i32) {
    %c0_i32 = arith.constant 0 : i32
    %c0_i32_0 = arith.constant 0 : i32
    %c0_i32_1 = arith.constant 0 : i32
    return %arg0, %c0_i32, %c0_i32_0 : i32, i32, i32
  }
}

</mosaic_0001>

<llo_original>
// kernel: style_decoder_forward.8
$region0: #{style_decoder_forward.8}
  #allocation0 [shape = 'u32[]', space=smem, size = 0x4, offset = 0x4, fixed_abs, tag = 'smem constant byte address 0x4 - core index']
  #allocation1 [shape = 'u32[144,128]{1,0:T(1,128)}', space=vmem, size = 0x12000, scoped, tag = 'internal scratch']
  %s0 = inlined_call_operand.vmem [shape: f32[1,8,1], index: 0, kind: input, shape index: {}]
  %s1 = inlined_call_operand.vmem [shape: f32[2,8,1], index: 1, kind: input, shape index: {}]
  %s2 = inlined_call_operand.hbm [shape: f32[8,8], index: 2, kind: input, shape index: {}]
  %s3 = inlined_call_operand.vmem [shape: f32[8,1], index: 3, kind: input, shape index: {}]
  %s4 = inlined_call_operand.vmem [shape: f32[2,8,1], index: 4, kind: input, shape index: {}]
  %s5 = inlined_call_operand.vmem [shape: f32[2,8,1], index: 5, kind: input, shape index: {}]
  %s6 = inlined_call_operand.vmem [shape: f32[2,8,1], index: 6, kind: output, shape index: {}]
  %s7 = sld [smem:[#allocation0]]
  $region61: #{style_decoder_forward.8} parent=0
    _
  %s9 = ssub.s32 1, %s7
  %s10 = scalar_select 0, %s9, %s7
  $region1: #{style_decoder_forward.8} parent=0
    #allocation2 [shape = 'u8[4096]{0}', space=vmem, size = 0x1000, scoped, tag = 'input window, operand 2, single buffered']
    #allocation3 [shape = 's32[2]{0}', space=sflag, size = 0x8, scoped, tag = 'scoped memory for style_decoder_forward.8']
    %11 = vsyncpa [#allocation3], 0
    loop: start=0, step=1, limit=4
    $region2: #{style_decoder_forward.8} parent=1 // loop_pre_header
      _
    $region3: #{style_decoder_forward.8} parent=1 // loop_header
      %s13 = sphi 0, %s17
      %p14 = scmp.ge.s32.totalorder %s13, 4
      %s21 = sphi 0, %s21
      %s23 = sphi 0, %s21
      %s24 = sphi 0, %s23
      %s38 = sphi 0, %s24
      %s44 = sphi 0, %s46
      %s47 = sphi 0, %s44
      %s48 = sphi 0, %s47
      %s64 = sphi 0, %s48
      %s68 = sphi 0, %s68
      %s70 = sphi 0, %s68
      %s71 = sphi 0, %s70
      %s85 = sphi 0, %s71
      %s89 = sphi 0, %s89
      %s91 = sphi 0, %s89
      %s92 = sphi 0, %s91
      %s106 = sphi 0, %s92
      %s112 = sphi 0, %s114
      %s115 = sphi 0, %s112
      %s116 = sphi 0, %s115
      %s132 = sphi 0, %s116
      %s138 = sphi 0, %s140
      %s141 = sphi 0, %s138
      %s142 = sphi 0, %s141
      %s158 = sphi 0, %s142
      %s164 = sphi 0, %s166
      %s167 = sphi 0, %s164
      %s168 = sphi 0, %s167
      %s184 = sphi 0, %s168
    $region4: #{style_decoder_forward.8} parent=1 // loop_header_branch
      %16 = sbr.rel (%p14) target = $region8
    $region5: #{style_decoder_forward.8} parent=1 // loop_body
      %s18 = ssub.s32 %s13, 1
      %s19 = ssub.s32 %s13, 2
      %s20 = sadd.s32 %s13, 1
      %s22 = sadd.s32 %s21, 1
      %p25 = scmp.eq.s32.totalorder %s13, 1
      %p26 = scmp.ne.s32.totalorder %s21, %s23
      %p27 = scmp.eq.s32.totalorder %s13, 0
      %p28 = por %p26, %p27
      %p29 = scmp.ne.s32.totalorder %s21, %s23
      %p30 = scmp.eq.s32.totalorder %s18, 1
      %p31 = por %p29, %p30
      %p32 = scmp.ne.s32.totalorder %s23, %s24
      %p33 = scmp.eq.s32.totalorder %s18, 0
      %p34 = por %p32, %p33
      %p35 = scmp.ne.s32.totalorder %s23, %s24
      %p36 = scmp.eq.s32.totalorder %s19, 1
      %p37 = por %p35, %p36
      %p39 = scmp.ne.s32.totalorder %s24, %s38
      %p40 = scmp.eq.s32.totalorder %s19, 0
      %p41 = por %p39, %p40
      %s42 = ssub.s32 %s13, %s20
      %p43 = scmp.eq.s32.totalorder %s42, 0
      %s45 = sadd.s32 %s44, 1
      %s46 = scalar_select %p43, %s44, %s45
      %p49 = pneg %p43
      %p50 = scmp.eq.s32.totalorder %s13, 1
      %p51 = por %p49, %p50
      %p52 = scmp.ne.s32.totalorder %s44, %s47
      %p53 = scmp.eq.s32.totalorder %s13, 0
      %p54 = por %p52, %p53
      %p55 = scmp.ne.s32.totalorder %s44, %s47
      %p56 = scmp.eq.s32.totalorder %s18, 1
      %p57 = por %p55, %p56
      %p58 = scmp.ne.s32.totalorder %s47, %s48
      %p59 = scmp.eq.s32.totalorder %s18, 0
      %p60 = por %p58, %p59
      %p61 = scmp.ne.s32.totalorder %s47, %s48
      %p62 = scmp.eq.s32.totalorder %s19, 1
      %p63 = por %p61, %p62
      %p65 = scmp.ne.s32.totalorder %s48, %s64
      %p66 = scmp.eq.s32.totalorder %s19, 0
      %p67 = por %p65, %p66
      %s69 = sadd.s32 %s68, 1
      %p72 = scmp.eq.s32.totalorder %s13, 1
      %p73 = scmp.ne.s32.totalorder %s68, %s70
      %p74 = scmp.eq.s32.totalorder %s13, 0
      %p75 = por %p73, %p74
      %p76 = scmp.ne.s32.totalorder %s68, %s70
      %p77 = scmp.eq.s32.totalorder %s18, 1
      %p78 = por %p76, %p77
      %p79 = scmp.ne.s32.totalorder %s70, %s71
      %p80 = scmp.eq.s32.totalorder %s18, 0
      %p81 = por %p79, %p80
      %p82 = scmp.ne.s32.totalorder %s70, %s71
      %p83 = scmp.eq.s32.totalorder %s19, 1
      %p84 = por %p82, %p83
      %p86 = scmp.ne.s32.totalorder %s71, %s85
      %p87 = scmp.eq.s32.totalorder %s19, 0
      %p88 = por %p86, %p87
      %s90 = sadd.s32 %s89, 1
      %p93 = scmp.eq.s32.totalorder %s13, 1
      %p94 = scmp.ne.s32.totalorder %s89, %s91
      %p95 = scmp.eq.s32.totalorder %s13, 0
      %p96 = por %p94, %p95
      %p97 = scmp.ne.s32.totalorder %s89, %s91
      %p98 = scmp.eq.s32.totalorder %s18, 1
      %p99 = por %p97, %p98
      %p100 = scmp.ne.s32.totalorder %s91, %s92
      %p101 = scmp.eq.s32.totalorder %s18, 0
      %p102 = por %p100, %p101
      %p103 = scmp.ne.s32.totalorder %s91, %s92
      %p104 = scmp.eq.s32.totalorder %s19, 1
      %p105 = por %p103, %p104
      %p107 = scmp.ne.s32.totalorder %s92, %s106
      %p108 = scmp.eq.s32.totalorder %s19, 0
      %p109 = por %p107, %p108
      %s110 = ssub.s32 %s13, %s20
      %p111 = scmp.eq.s32.totalorder %s110, 0
      %s113 = sadd.s32 %s112, 1
      %s114 = scalar_select %p111, %s112, %s113
      %p117 = pneg %p111
      %p118 = scmp.eq.s32.totalorder %s13, 1
      %p119 = por %p117, %p118
      %p120 = scmp.ne.s32.totalorder %s112, %s115
      %p121 = scmp.eq.s32.totalorder %s13, 0
      %p122 = por %p120, %p121
      %p123 = scmp.ne.s32.totalorder %s112, %s115
      %p124 = scmp.eq.s32.totalorder %s18, 1
      %p125 = por %p123, %p124
      %p126 = scmp.ne.s32.totalorder %s115, %s116
      %p127 = scmp.eq.s32.totalorder %s18, 0
      %p128 = por %p126, %p127
      %p129 = scmp.ne.s32.totalorder %s115, %s116
      %p130 = scmp.eq.s32.totalorder %s19, 1
      %p131 = por %p129, %p130
      %p133 = scmp.ne.s32.totalorder %s116, %s132
      %p134 = scmp.eq.s32.totalorder %s19, 0
      %p135 = por %p133, %p134
      %s136 = ssub.s32 %s13, %s20
      %p137 = scmp.eq.s32.totalorder %s136, 0
      %s139 = sadd.s32 %s138, 1
      %s140 = scalar_select %p137, %s138, %s139
      %p143 = pneg %p137
      %p144 = scmp.eq.s32.totalorder %s13, 1
      %p145 = por %p143, %p144
      %p146 = scmp.ne.s32.totalorder %s138, %s141
      %p147 = scmp.eq.s32.totalorder %s13, 0
      %p148 = por %p146, %p147
      %p149 = scmp.ne.s32.totalorder %s138, %s141
      %p150 = scmp.eq.s32.totalorder %s18, 1
      %p151 = por %p149, %p150
      %p152 = scmp.ne.s32.totalorder %s141, %s142
      %p153 = scmp.eq.s32.totalorder %s18, 0
      %p154 = por %p152, %p153
      %p155 = scmp.ne.s32.totalorder %s141, %s142
      %p156 = scmp.eq.s32.totalorder %s19, 1
      %p157 = por %p155, %p156
      %p159 = scmp.ne.s32.totalorder %s142, %s158
      %p160 = scmp.eq.s32.totalorder %s19, 0
      %p161 = por %p159, %p160
      %s162 = ssub.s32 %s13, %s20
      %p163 = scmp.eq.s32.totalorder %s162, 0
      %s165 = sadd.s32 %s164, 1
      %s166 = scalar_select %p163, %s164, %s165
      %p169 = pneg %p163
      %p170 = scmp.eq.s32.totalorder %s13, 1
      %p171 = por %p169, %p170
      %p172 = scmp.ne.s32.totalorder %s164, %s167
      %p173 = scmp.eq.s32.totalorder %s13, 0
      %p174 = por %p172, %p173
      %p175 = scmp.ne.s32.totalorder %s164, %s167
      %p176 = scmp.eq.s32.totalorder %s18, 1
      %p177 = por %p175, %p176
      %p178 = scmp.ne.s32.totalorder %s167, %s168
      %p179 = scmp.eq.s32.totalorder %s18, 0
      %p180 = por %p178, %p179
      %p181 = scmp.ne.s32.totalorder %s167, %s168
      %p182 = scmp.eq.s32.totalorder %s19, 1
      %p183 = por %p181, %p182
      %p185 = scmp.ne.s32.totalorder %s168, %s184
      %p186 = scmp.eq.s32.totalorder %s19, 0
      %p187 = por %p185, %p186
      %p188 = scmp.le.s32.totalorder 1, %s13
      %p189 = scmp.lt.s32.totalorder %s13, 3
      %p190 = pnand %p188, %p189
      %p191 = pneg %p190
      // Predicated region
      $region9: #{style_decoder_forward.8} parent=5 // pred_check
        _
      $region10: #{style_decoder_forward.8} parent=5 // pred_check_branch
        %193 = sbr.rel (%p190) target = $region12
      $region11: #{style_decoder_forward.8} parent=5 // pred_region
        %s194 = ssub.s32 %s13, 1
        // Predicated region
        $region13: #{style_decoder_forward.8} parent=11 // pred_check
          %p195 = pneg %p34
        $region14: #{style_decoder_forward.8} parent=11 // pred_check_branch
          %197 = sbr.rel (%p195) target = $region16
        $region15: #{style_decoder_forward.8} parent=11 // pred_region
          _
        $region16: #{style_decoder_forward.8} parent=11 // pred_fallthru
          _
        // Predicated region
        $region17: #{style_decoder_forward.8} parent=11 // pred_check
          %p198 = pneg %p81
        $region18: #{style_decoder_forward.8} parent=11 // pred_check_branch
          %200 = sbr.rel (%p198) target = $region20
        $region19: #{style_decoder_forward.8} parent=11 // pred_region
          %s202 = ssub.s32 128, 128
          %203 = vsyncadd [#allocation3], %s202
          %s205 = sshll.u32 [#allocation2], 4
          %s206 = int_to_ptr.vmem [resolvable:$true] %s205
          %208 = dma.hbm_to_vmem [thread:$0]  %s2, 128, %s206, [#allocation3]
        $region20: #{style_decoder_forward.8} parent=11 // pred_fallthru
          _
        // Predicated region
        $region21: #{style_decoder_forward.8} parent=11 // pred_check
          %p209 = pneg %p102
        $region22: #{style_decoder_forward.8} parent=11 // pred_check_branch
          %211 = sbr.rel (%p209) target = $region24
        $region23: #{style_decoder_forward.8} parent=11 // pred_region
          _
        $region24: #{style_decoder_forward.8} parent=11 // pred_fallthru
          _
      $region12: #{style_decoder_forward.8} parent=5 // pred_fallthru
        _
      %p212 = scmp.lt.s32.totalorder %s13, 2
      // Predicated region
      $region25: #{style_decoder_forward.8} parent=5 // pred_check
        %p213 = pneg %p212
      $region26: #{style_decoder_forward.8} parent=5 // pred_check_branch
        %215 = sbr.rel (%p213) target = $region28
      $region27: #{style_decoder_forward.8} parent=5 // pred_region
        // Predicated region
        $region29: #{style_decoder_forward.8} parent=27 // pred_check
          %p216 = pneg %p54
        $region30: #{style_decoder_forward.8} parent=27 // pred_check_branch
          %218 = sbr.rel (%p216) target = $region32
        $region31: #{style_decoder_forward.8} parent=27 // pred_region
          %p219 = scmp.lt.s32.totalorder %s13, 1
          %s220 = scalar_select %p219, %s13, 1
          %s221 = smul.addr %s220, 8
          %s222 = scalar_lea.vmem %s1, %s221
        $region32: #{style_decoder_forward.8} parent=27 // pred_fallthru
          _
        // Predicated region
        $region33: #{style_decoder_forward.8} parent=27 // pred_check
          %p223 = pneg %p122
        $region34: #{style_decoder_forward.8} parent=27 // pred_check_branch
          %225 = sbr.rel (%p223) target = $region36
        $region35: #{style_decoder_forward.8} parent=27 // pred_region
          %p226 = scmp.lt.s32.totalorder %s13, 1
          %s227 = scalar_select %p226, %s13, 1
          %s228 = smul.addr %s227, 8
          %s229 = scalar_lea.vmem %s4, %s228
        $region36: #{style_decoder_forward.8} parent=27 // pred_fallthru
          _
        // Predicated region
        $region37: #{style_decoder_forward.8} parent=27 // pred_check
          %p230 = pneg %p148
        $region38: #{style_decoder_forward.8} parent=27 // pred_check_branch
          %232 = sbr.rel (%p230) target = $region40
        $region39: #{style_decoder_forward.8} parent=27 // pred_region
          %p233 = scmp.lt.s32.totalorder %s13, 1
          %s234 = scalar_select %p233, %s13, 1
          %s235 = smul.addr %s234, 8
          %s236 = scalar_lea.vmem %s5, %s235
        $region40: #{style_decoder_forward.8} parent=27 // pred_fallthru
          _
      $region28: #{style_decoder_forward.8} parent=5 // pred_fallthru
        _
      %p237 = scmp.le.s32.totalorder 1, %s13
      %p238 = scmp.lt.s32.totalorder %s13, 3
      %p239 = pnand %p237, %p238
      %p240 = pneg %p239
      // Predicated region
      $region41: #{style_decoder_forward.8} parent=5 // pred_check
        _
      $region42: #{style_decoder_forward.8} parent=5 // pred_check_branch
        %242 = sbr.rel (%p239) target = $region44
      $region43: #{style_decoder_forward.8} parent=5 // pred_region
        %s243 = ssub.s32 %s13, 1
        // Predicated region
        $region45: #{style_decoder_forward.8} parent=43 // pred_check
          %p244 = pneg %p81
        $region46: #{style_decoder_forward.8} parent=43 // pred_check_branch
          %246 = sbr.rel (%p244) target = $region48
        $region47: #{style_decoder_forward.8} parent=43 // pred_region
          %247 = dma.done [#allocation3], 128
        $region48: #{style_decoder_forward.8} parent=43 // pred_fallthru
          _
        %p248 = pneg %p34
        %p249 = pneg %p31
        %p250 = scmp.lt.s32.totalorder %s18, 1
        %s251 = scalar_select %p250, %s18, 1
        %s252 = smul.addr %s251, 8
        %s253 = scalar_lea.vmem %s1, %s252
        %p254 = pneg %p60
        %p255 = pneg %p57
        %p256 = pneg %p81
        %p257 = pneg %p78
        %p258 = pneg %p102
        %p259 = pneg %p99
        %p260 = scmp.lt.s32.totalorder %s18, 1
        %s261 = scalar_select %p260, %s18, 1
        %s262 = smul.addr %s261, 8
        %s263 = scalar_lea.vmem %s4, %s262
        %p264 = pneg %p128
        %p265 = pneg %p125
        %p266 = scmp.lt.s32.totalorder %s18, 1
        %s267 = scalar_select %p266, %s18, 1
        %s268 = smul.addr %s267, 8
        %s269 = scalar_lea.vmem %s5, %s268
        %p270 = pneg %p154
        %p271 = pneg %p151
        %p272 = pneg %p180
        %p273 = pneg %p177
        %p274 = scmp.lt.s32.totalorder %s18, 1
        %s275 = scalar_select %p274, %s18, 1
        %s276 = smul.addr %s275, 8
        %s277 = scalar_lea.vmem %s6, %s276
        %p278 = scmp.lt.s32.totalorder %s18, 1
        %s279 = scalar_select %p278, %s18, 1
        %s280 = smul.addr %s279, 8
        %s281 = scalar_lea.vmem %s1, %s280
        %p282 = scmp.lt.s32.totalorder %s18, 1
        %s283 = scalar_select %p282, %s18, 1
        %s284 = smul.addr %s283, 8
        %s285 = scalar_lea.vmem %s4, %s284
        %p286 = scmp.lt.s32.totalorder %s18, 1
        %s287 = scalar_select %p286, %s18, 1
        %s288 = smul.addr %s287, 8
        %s289 = scalar_lea.vmem %s5, %s288
        %p290 = scmp.lt.s32.totalorder %s18, 1
        %s291 = scalar_select %p290, %s18, 1
        %s292 = smul.addr %s291, 8
        %s293 = scalar_lea.vmem %s6, %s292
        %v294 = vld [vmem:[%s0] sm:$0xff]
        %v295 = vld [vmem:[#allocation2] sm:$0xff]
        %v296 = vld [vmem:[%s281] sm:$0xff]
        %vm297 = vcmask 64512
        %v299 = vsel %vm297, %v295, 0
        %301 = vmatprep.subr.mxu0 0.0
        %302 = vmatpush1.msra.mxu0 %v296
        %303 = vmatprep.subr.mxu0 0.0
        %304 = vmatpush1.msra.mxu0 0.0
        %305 = vmatprep.subr.mxu0 0.0
        %306 = vmatpush1.msra.mxu0 0.0
        %307 = vmatprep.subr.mxu0 0.0
        %308 = vmatpush1.msra.mxu0 0.0
        %309 = vmatprep.subr.mxu0 0.0
        %310 = vmatpush1.msra.mxu0 0.0
        %311 = vmatprep.subr.mxu0 0.0
        %312 = vmatpush1.msra.mxu0 0.0
        %313 = vmatprep.subr.mxu0 0.0
        %314 = vmatpush1.msra.mxu0 0.0
        %315 = vmatprep.subr.mxu0 0.0
        %316 = vmatpush1.msra.mxu0 0.0
        %317 = vmatprep.subr.mxu0 0.0
        %318 = vmatpush1.msra.mxu0 0.0
        %319 = vmatprep.subr.mxu0 0.0
        %320 = vmatpush1.msra.mxu0 0.0
        %321 = vmatprep.subr.mxu0 0.0
        %322 = vmatpush1.msra.mxu0 0.0
        %323 = vmatprep.subr.mxu0 0.0
        %324 = vmatpush1.msra.mxu0 0.0
        %325 = vmatprep.subr.mxu0 0.0
        %326 = vmatpush1.msra.mxu0 0.0
        %327 = vmatprep.subr.mxu0 0.0
        %328 = vmatpush1.msra.mxu0 0.0
        %329 = vmatprep.subr.mxu0 0.0
        %330 = vmatpush1.msra.mxu0 0.0
        %331 = vmatprep.subr.mxu0 0.0
        %332 = vmatpush1.msra.mxu0 0.0
        %333 = vmatprep.subr.mxu0 0.0
        %334 = vmatpush1.msra.mxu0 0.0
        %335 = vmatprep.subr.mxu0 0.0
        %336 = vmatpush1.msra.mxu0 0.0
        %337 = vmatprep.subr.mxu0 0.0
        %338 = vmatpush1.msra.mxu0 0.0
        %339 = vmatprep.subr.mxu0 0.0
        %340 = vmatpush1.msra.mxu0 0.0
        %341 = vmatprep.subr.mxu0 0.0
        %342 = vmatpush1.msra.mxu0 0.0
        %343 = vmatprep.subr.mxu0 0.0
        %344 = vmatpush1.msra.mxu0 0.0
        %345 = vmatprep.subr.mxu0 0.0
        %346 = vmatpush1.msra.mxu0 0.0
        %347 = vmatprep.subr.mxu0 0.0
        %348 = vmatpush1.msra.mxu0 0.0
        %349 = vmatprep.subr.mxu0 0.0
        %350 = vmatpush1.msra.mxu0 0.0
        %351 = vmatprep.subr.mxu0 0.0
        %352 = vmatpush1.msra.mxu0 0.0
        %353 = vmatprep.subr.mxu0 0.0
        %354 = vmatpush1.msra.mxu0 0.0
        %355 = vmatprep.subr.mxu0 0.0
        %356 = vmatpush1.msra.mxu0 0.0
        %357 = vmatprep.subr.mxu0 0.0
        %358 = vmatpush1.msra.mxu0 0.0
        %359 = vmatprep.subr.mxu0 0.0
        %360 = vmatpush1.msra.mxu0 0.0
        %361 = vmatprep.subr.mxu0 0.0
        %362 = vmatpush1.msra.mxu0 0.0
        %363 = vmatprep.subr.mxu0 0.0
        %364 = vmatpush1.msra.mxu0 0.0
        %365 = vmatprep.mubr.f32.mxu0 0.0
        %366 = vmatmul.mubr.f32.gmra.mrb[0].mxu0 %v299
        %v367 = vpop.f32.mrb[0].mxu0
        %v368 = vadd.f32 0.0, %v367
        %v369 = vpop.f32.mrb[0].mxu0
        %370 = vdwg.mxu0
        %v371 = vadd.f32 %v294, %v368
        %v372 = vld [vmem:[%s3] sm:$0xff]
        %v373 = vadd.f32 %v371, %v372
        %v374 = vld [vmem:[%s285] sm:$0xff]
        %v375 = vld [vmem:[%s289] sm:$0xff]
        %v376 = vadd.f32 %v373, 0.0
        %v377 = vsub.f32 %v373, %v376
        %v378 = vmul.f32 %v377, %v377
        %v379 = vadd.f32 %v378, 0.0
        %v380 = vadd.f32 %v379, 1e-05
        %v381 = vrsqrt.pop %v380
        %v382 = vmul.f32 %v377, %v381
        %v383 = vmul.f32 %v374, %v382
        %v384 = vadd.f32 %v383, %v375
        %vm385 = vcmask 7168
        %386 = vst.msk [vmem:[%s293] sm:$0xff] %vm385, %v384
        %p387 = scmp.lt.s32.totalorder %s18, 1
        %s388 = scalar_select %p387, %s18, 1
        %s389 = smul.addr %s388, 8
        %s390 = scalar_lea.vmem %s6, %s389
        // Predicated region
        $region49: #{style_decoder_forward.8} parent=43 // pred_check
          %p391 = pneg %p177
        $region50: #{style_decoder_forward.8} parent=43 // pred_check_branch
          %393 = sbr.rel (%p391) target = $region52
        $region51: #{style_decoder_forward.8} parent=43 // pred_region
          _
        $region52: #{style_decoder_forward.8} parent=43 // pred_fallthru
          _
      $region44: #{style_decoder_forward.8} parent=5 // pred_fallthru
        _
      %p394 = scmp.le.s32.totalorder 2, %s13
      // Predicated region
      $region53: #{style_decoder_forward.8} parent=5 // pred_check
        %p395 = pneg %p394
      $region54: #{style_decoder_forward.8} parent=5 // pred_check_branch
        %397 = sbr.rel (%p395) target = $region56
      $region55: #{style_decoder_forward.8} parent=5 // pred_region
        %s398 = ssub.s32 %s13, 2
        // Predicated region
        $region57: #{style_decoder_forward.8} parent=55 // pred_check
          %p399 = pneg %p183
        $region58: #{style_decoder_forward.8} parent=55 // pred_check_branch
          %401 = sbr.rel (%p399) target = $region60
        $region59: #{style_decoder_forward.8} parent=55 // pred_region
          %p402 = scmp.lt.s32.totalorder %s19, 1
          %s403 = scalar_select %p402, %s19, 1
          %s404 = smul.addr %s403, 8
          %s405 = scalar_lea.vmem %s6, %s404
        $region60: #{style_decoder_forward.8} parent=55 // pred_fallthru
          _
      $region56: #{style_decoder_forward.8} parent=5 // pred_fallthru
        _
    $region6: #{style_decoder_forward.8} parent=1 // loop_footer
      %s17 = sadd.s32 1, %s13
    $region7: #{style_decoder_forward.8} parent=1 // loop_footer_branch
      %12 = sbr.rel target = $region3
    $region8: #{style_decoder_forward.8} parent=1 // loop_exit
      _
    %406 = vsyncpa [#allocation3], 1
    %s407 = scalar_lea.sflag [#allocation3], 1
    %408 = vsyncpa %s407, 1

// kernel: style_decoder_forward.9
$region0: #{style_decoder_forward.9}
  #allocation0 [shape = 'u32[]', space=smem, size = 0x4, offset = 0x4, fixed_abs, tag = 'smem constant byte address 0x4 - core index']
  #allocation1 [shape = 'u32[144,128]{1,0:T(1,128)}', space=vmem, size = 0x12000, scoped, tag = 'internal scratch']
  %s0 = inlined_call_operand.vmem [shape: f32[2,72,4], index: 0, kind: input, shape index: {}]
  %s1 = inlined_call_operand.hbm [shape: f32[8,72], index: 1, kind: input, shape index: {}]
  %s2 = inlined_call_operand.vmem [shape: f32[8,1], index: 2, kind: input, shape index: {}]
  %s3 = inlined_call_operand.vmem [shape: f32[2,8,4], index: 3, kind: input, shape index: {}]
  %s4 = inlined_call_operand.hbm [shape: f32[8,8], index: 4, kind: input, shape index: {}]
  %s5 = inlined_call_operand.vmem [shape: f32[8,1], index: 5, kind: input, shape index: {}]
  %s6 = inlined_call_operand.vmem [shape: f32[2,8,4], index: 6, kind: input, shape index: {}]
  %s7 = inlined_call_operand.vmem [shape: f32[2,8,4], index: 7, kind: input, shape index: {}]
  %s8 = inlined_call_operand.vmem [shape: f32[2,8,4], index: 8, kind: output, shape index: {}]
  %s9 = sld [smem:[#allocation0]]
  $region73: #{style_decoder_forward.9} parent=0
    _
  %s11 = ssub.s32 1, %s9
  %s12 = scalar_select 0, %s11, %s9
  $region1: #{style_decoder_forward.9} parent=0
    #allocation2 [shape = 'u8[4096]{0}', space=vmem, size = 0x1000, scoped, tag = 'input window, operand 1, single buffered']
    #allocation3 [shape = 's32[2]{0}', space=sflag, size = 0x8, scoped, tag = 'scoped memory for style_decoder_forward.9']
    #allocation4 [shape = 'u8[4096]{0}', space=vmem, size = 0x1000, scoped, tag = 'input window, operand 4, single buffered']
    #allocation5 [shape = 's32[1]{0}', space=sflag, size = 0x4, scoped, tag = 'scoped memory for style_decoder_forward.9']
    %13 = vsyncpa [#allocation3], 0
    %14 = vsyncpa [#allocation5], 0
    loop: start=0, step=1, limit=4
    $region2: #{style_decoder_forward.9} parent=1 // loop_pre_header
      _
    $region3: #{style_decoder_forward.9} parent=1 // loop_header
      %s16 = sphi 0, %s20
      %p17 = scmp.ge.s32.totalorder %s16, 4
      %s26 = sphi 0, %s28
      %s29 = sphi 0, %s26
      %s30 = sphi 0, %s29
      %s46 = sphi 0, %s30
      %s50 = sphi 0, %s50
      %s52 = sphi 0, %s50
      %s53 = sphi 0, %s52
      %s67 = sphi 0, %s53
      %s71 = sphi 0, %s71
      %s73 = sphi 0, %s71
      %s74 = sphi 0, %s73
      %s88 = sphi 0, %s74
      %s94 = sphi 0, %s96
      %s97 = sphi 0, %s94
      %s98 = sphi 0, %s97
      %s114 = sphi 0, %s98
      %s118 = sphi 0, %s118
      %s120 = sphi 0, %s118
      %s121 = sphi 0, %s120
      %s135 = sphi 0, %s121
      %s139 = sphi 0, %s139
      %s141 = sphi 0, %s139
      %s142 = sphi 0, %s141
      %s156 = sphi 0, %s142
      %s162 = sphi 0, %s164
      %s165 = sphi 0, %s162
      %s166 = sphi 0, %s165
      %s182 = sphi 0, %s166
      %s188 = sphi 0, %s190
      %s191 = sphi 0, %s188
      %s192 = sphi 0, %s191
      %s208 = sphi 0, %s192
      %s214 = sphi 0, %s216
      %s217 = sphi 0, %s214
      %s218 = sphi 0, %s217
      %s234 = sphi 0, %s218
    $region4: #{style_decoder_forward.9} parent=1 // loop_header_branch
      %19 = sbr.rel (%p17) target = $region8
    $region5: #{style_decoder_forward.9} parent=1 // loop_body
      %s21 = ssub.s32 %s16, 1
      %s22 = ssub.s32 %s16, 2
      %s23 = sadd.s32 %s16, 1
      %s24 = ssub.s32 %s16, %s23
      %p25 = scmp.eq.s32.totalorder %s24, 0
      %s27 = sadd.s32 %s26, 1
      %s28 = scalar_select %p25, %s26, %s27
      %p31 = pneg %p25
      %p32 = scmp.eq.s32.totalorder %s16, 1
      %p33 = por %p31, %p32
      %p34 = scmp.ne.s32.totalorder %s26, %s29
      %p35 = scmp.eq.s32.totalorder %s16, 0
      %p36 = por %p34, %p35
      %p37 = scmp.ne.s32.totalorder %s26, %s29
      %p38 = scmp.eq.s32.totalorder %s21, 1
      %p39 = por %p37, %p38
      %p40 = scmp.ne.s32.totalorder %s29, %s30
      %p41 = scmp.eq.s32.totalorder %s21, 0
      %p42 = por %p40, %p41
      %p43 = scmp.ne.s32.totalorder %s29, %s30
      %p44 = scmp.eq.s32.totalorder %s22, 1
      %p45 = por %p43, %p44
      %p47 = scmp.ne.s32.totalorder %s30, %s46
      %p48 = scmp.eq.s32.totalorder %s22, 0
      %p49 = por %p47, %p48
      %s51 = sadd.s32 %s50, 1
      %p54 = scmp.eq.s32.totalorder %s16, 1
      %p55 = scmp.ne.s32.totalorder %s50, %s52
      %p56 = scmp.eq.s32.totalorder %s16, 0
      %p57 = por %p55, %p56
      %p58 = scmp.ne.s32.totalorder %s50, %s52
      %p59 = scmp.eq.s32.totalorder %s21, 1
      %p60 = por %p58, %p59
      %p61 = scmp.ne.s32.totalorder %s52, %s53
      %p62 = scmp.eq.s32.totalorder %s21, 0
      %p63 = por %p61, %p62
      %p64 = scmp.ne.s32.totalorder %s52, %s53
      %p65 = scmp.eq.s32.totalorder %s22, 1
      %p66 = por %p64, %p65
      %p68 = scmp.ne.s32.totalorder %s53, %s67
      %p69 = scmp.eq.s32.totalorder %s22, 0
      %p70 = por %p68, %p69
      %s72 = sadd.s32 %s71, 1
      %p75 = scmp.eq.s32.totalorder %s16, 1
      %p76 = scmp.ne.s32.totalorder %s71, %s73
      %p77 = scmp.eq.s32.totalorder %s16, 0
      %p78 = por %p76, %p77
      %p79 = scmp.ne.s32.totalorder %s71, %s73
      %p80 = scmp.eq.s32.totalorder %s21, 1
      %p81 = por %p79, %p80
      %p82 = scmp.ne.s32.totalorder %s73, %s74
      %p83 = scmp.eq.s32.totalorder %s21, 0
      %p84 = por %p82, %p83
      %p85 = scmp.ne.s32.totalorder %s73, %s74
      %p86 = scmp.eq.s32.totalorder %s22, 1
      %p87 = por %p85, %p86
      %p89 = scmp.ne.s32.totalorder %s74, %s88
      %p90 = scmp.eq.s32.totalorder %s22, 0
      %p91 = por %p89, %p90
      %s92 = ssub.s32 %s16, %s23
      %p93 = scmp.eq.s32.totalorder %s92, 0
      %s95 = sadd.s32 %s94, 1
      %s96 = scalar_select %p93, %s94, %s95
      %p99 = pneg %p93
      %p100 = scmp.eq.s32.totalorder %s16, 1
      %p101 = por %p99, %p100
      %p102 = scmp.ne.s32.totalorder %s94, %s97
      %p103 = scmp.eq.s32.totalorder %s16, 0
      %p104 = por %p102, %p103
      %p105 = scmp.ne.s32.totalorder %s94, %s97
      %p106 = scmp.eq.s32.totalorder %s21, 1
      %p107 = por %p105, %p106
      %p108 = scmp.ne.s32.totalorder %s97, %s98
      %p109 = scmp.eq.s32.totalorder %s21, 0
      %p110 = por %p108, %p109
      %p111 = scmp.ne.s32.totalorder %s97, %s98
      %p112 = scmp.eq.s32.totalorder %s22, 1
      %p113 = por %p111, %p112
      %p115 = scmp.ne.s32.totalorder %s98, %s114
      %p116 = scmp.eq.s32.totalorder %s22, 0
      %p117 = por %p115, %p116
      %s119 = sadd.s32 %s118, 1
      %p122 = scmp.eq.s32.totalorder %s16, 1
      %p123 = scmp.ne.s32.totalorder %s118, %s120
      %p124 = scmp.eq.s32.totalorder %s16, 0
      %p125 = por %p123, %p124
      %p126 = scmp.ne.s32.totalorder %s118, %s120
      %p127 = scmp.eq.s32.totalorder %s21, 1
      %p128 = por %p126, %p127
      %p129 = scmp.ne.s32.totalorder %s120, %s121
      %p130 = scmp.eq.s32.totalorder %s21, 0
      %p131 = por %p129, %p130
      %p132 = scmp.ne.s32.totalorder %s120, %s121
      %p133 = scmp.eq.s32.totalorder %s22, 1
      %p134 = por %p132, %p133
      %p136 = scmp.ne.s32.totalorder %s121, %s135
      %p137 = scmp.eq.s32.totalorder %s22, 0
      %p138 = por %p136, %p137
      %s140 = sadd.s32 %s139, 1
      %p143 = scmp.eq.s32.totalorder %s16, 1
      %p144 = scmp.ne.s32.totalorder %s139, %s141
      %p145 = scmp.eq.s32.totalorder %s16, 0
      %p146 = por %p144, %p145
      %p147 = scmp.ne.s32.totalorder %s139, %s141
      %p148 = scmp.eq.s32.totalorder %s21, 1
      %p149 = por %p147, %p148
      %p150 = scmp.ne.s32.totalorder %s141, %s142
      %p151 = scmp.eq.s32.totalorder %s21, 0
      %p152 = por %p150, %p151
      %p153 = scmp.ne.s32.totalorder %s141, %s142
      %p154 = scmp.eq.s32.totalorder %s22, 1
      %p155 = por %p153, %p154
      %p157 = scmp.ne.s32.totalorder %s142, %s156
      %p158 = scmp.eq.s32.totalorder %s22, 0
      %p159 = por %p157, %p158
      %s160 = ssub.s32 %s16, %s23
      %p161 = scmp.eq.s32.totalorder %s160, 0
      %s163 = sadd.s32 %s162, 1
      %s164 = scalar_select %p161, %s162, %s163
      %p167 = pneg %p161
      %p168 = scmp.eq.s32.totalorder %s16, 1
      %p169 = por %p167, %p168
      %p170 = scmp.ne.s32.totalorder %s162, %s165
      %p171 = scmp.eq.s32.totalorder %s16, 0
      %p172 = por %p170, %p171
      %p173 = scmp.ne.s32.totalorder %s162, %s165
      %p174 = scmp.eq.s32.totalorder %s21, 1
      %p175 = por %p173, %p174
      %p176 = scmp.ne.s32.totalorder %s165, %s166
      %p177 = scmp.eq.s32.totalorder %s21, 0
      %p178 = por %p176, %p177
      %p179 = scmp.ne.s32.totalorder %s165, %s166
      %p180 = scmp.eq.s32.totalorder %s22, 1
      %p181 = por %p179, %p180
      %p183 = scmp.ne.s32.totalorder %s166, %s182
      %p184 = scmp.eq.s32.totalorder %s22, 0
      %p185 = por %p183, %p184
      %s186 = ssub.s32 %s16, %s23
      %p187 = scmp.eq.s32.totalorder %s186, 0
      %s189 = sadd.s32 %s188, 1
      %s190 = scalar_select %p187, %s188, %s189
      %p193 = pneg %p187
      %p194 = scmp.eq.s32.totalorder %s16, 1
      %p195 = por %p193, %p194
      %p196 = scmp.ne.s32.totalorder %s188, %s191
      %p197 = scmp.eq.s32.totalorder %s16, 0
      %p198 = por %p196, %p197
      %p199 = scmp.ne.s32.totalorder %s188, %s191
      %p200 = scmp.eq.s32.totalorder %s21, 1
      %p201 = por %p199, %p200
      %p202 = scmp.ne.s32.totalorder %s191, %s192
      %p203 = scmp.eq.s32.totalorder %s21, 0
      %p204 = por %p202, %p203
      %p205 = scmp.ne.s32.totalorder %s191, %s192
      %p206 = scmp.eq.s32.totalorder %s22, 1
      %p207 = por %p205, %p206
      %p209 = scmp.ne.s32.totalorder %s192, %s208
      %p210 = scmp.eq.s32.totalorder %s22, 0
      %p211 = por %p209, %p210
      %s212 = ssub.s32 %s16, %s23
      %p213 = scmp.eq.s32.totalorder %s212, 0
      %s215 = sadd.s32 %s214, 1
      %s216 = scalar_select %p213, %s214, %s215
      %p219 = pneg %p213
      %p220 = scmp.eq.s32.totalorder %s16, 1
      %p221 = por %p219, %p220
      %p222 = scmp.ne.s32.totalorder %s214, %s217
      %p223 = scmp.eq.s32.totalorder %s16, 0
      %p224 = por %p222, %p223
      %p225 = scmp.ne.s32.totalorder %s214, %s217
      %p226 = scmp.eq.s32.totalorder %s21, 1
      %p227 = por %p225, %p226
      %p228 = scmp.ne.s32.totalorder %s217, %s218
      %p229 = scmp.eq.s32.totalorder %s21, 0
      %p230 = por %p228, %p229
      %p231 = scmp.ne.s32.totalorder %s217, %s218
      %p232 = scmp.eq.s32.totalorder %s22, 1
      %p233 = por %p231, %p232
      %p235 = scmp.ne.s32.totalorder %s218, %s234
      %p236 = scmp.eq.s32.totalorder %s22, 0
      %p237 = por %p235, %p236
      %p238 = scmp.le.s32.totalorder 1, %s16
      %p239 = scmp.lt.s32.totalorder %s16, 3
      %p240 = pnand %p238, %p239
      %p241 = pneg %p240
      // Predicated region
      $region9: #{style_decoder_forward.9} parent=5 // pred_check
        _
      $region10: #{style_decoder_forward.9} parent=5 // pred_check_branch
        %243 = sbr.rel (%p240) target = $region12
      $region11: #{style_decoder_forward.9} parent=5 // pred_region
        %s244 = ssub.s32 %s16, 1
        // Predicated region
        $region13: #{style_decoder_forward.9} parent=11 // pred_check
          %p245 = pneg %p63
        $region14: #{style_decoder_forward.9} parent=11 // pred_check_branch
          %247 = sbr.rel (%p245) target = $region16
        $region15: #{style_decoder_forward.9} parent=11 // pred_region
          %s249 = ssub.s32 128, 128
          %250 = vsyncadd [#allocation3], %s249
          %s252 = sshll.u32 [#allocation2], 4
          %s253 = int_to_ptr.vmem [resolvable:$true] %s252
          %255 = dma.hbm_to_vmem [thread:$0]  %s1, 128, %s253, [#allocation3]
        $region16: #{style_decoder_forward.9} parent=11 // pred_fallthru
          _
        // Predicated region
        $region17: #{style_decoder_forward.9} parent=11 // pred_check
          %p256 = pneg %p84
        $region18: #{style_decoder_forward.9} parent=11 // pred_check_branch
          %258 = sbr.rel (%p256) target = $region20
        $region19: #{style_decoder_forward.9} parent=11 // pred_region
          _
        $region20: #{style_decoder_forward.9} parent=11 // pred_fallthru
          _
        // Predicated region
        $region21: #{style_decoder_forward.9} parent=11 // pred_check
          %p259 = pneg %p131
        $region22: #{style_decoder_forward.9} parent=11 // pred_check_branch
          %261 = sbr.rel (%p259) target = $region24
        $region23: #{style_decoder_forward.9} parent=11 // pred_region
          %s263 = ssub.s32 128, 128
          %264 = vsyncadd [#allocation5], %s263
          %s266 = sshll.u32 [#allocation4], 4
          %s267 = int_to_ptr.vmem [resolvable:$true] %s266
          %269 = dma.hbm_to_vmem [thread:$0]  %s4, 128, %s267, [#allocation5]
        $region24: #{style_decoder_forward.9} parent=11 // pred_fallthru
          _
        // Predicated region
        $region25: #{style_decoder_forward.9} parent=11 // pred_check
          %p270 = pneg %p152
        $region26: #{style_decoder_forward.9} parent=11 // pred_check_branch
          %272 = sbr.rel (%p270) target = $region28
        $region27: #{style_decoder_forward.9} parent=11 // pred_region
          _
        $region28: #{style_decoder_forward.9} parent=11 // pred_fallthru
          _
      $region12: #{style_decoder_forward.9} parent=5 // pred_fallthru
        _
      %p273 = scmp.lt.s32.totalorder %s16, 2
      // Predicated region
      $region29: #{style_decoder_forward.9} parent=5 // pred_check
        %p274 = pneg %p273
      $region30: #{style_decoder_forward.9} parent=5 // pred_check_branch
        %276 = sbr.rel (%p274) target = $region32
      $region31: #{style_decoder_forward.9} parent=5 // pred_region
        // Predicated region
        $region33: #{style_decoder_forward.9} parent=31 // pred_check
          %p277 = pneg %p36
        $region34: #{style_decoder_forward.9} parent=31 // pred_check_branch
          %279 = sbr.rel (%p277) target = $region36
        $region35: #{style_decoder_forward.9} parent=31 // pred_region
          %p280 = scmp.lt.s32.totalorder %s16, 1
          %s281 = scalar_select %p280, %s16, 1
          %s282 = smul.addr %s281, 9
          %s283 = smul.addr %s282, 8
          %s284 = scalar_lea.vmem %s0, %s283
        $region36: #{style_decoder_forward.9} parent=31 // pred_fallthru
          _
        // Predicated region
        $region37: #{style_decoder_forward.9} parent=31 // pred_check
          %p285 = pneg %p104
        $region38: #{style_decoder_forward.9} parent=31 // pred_check_branch
          %287 = sbr.rel (%p285) target = $region40
        $region39: #{style_decoder_forward.9} parent=31 // pred_region
          %p288 = scmp.lt.s32.totalorder %s16, 1
          %s289 = scalar_select %p288, %s16, 1
          %s290 = smul.addr %s289, 8
          %s291 = scalar_lea.vmem %s3, %s290
        $region40: #{style_decoder_forward.9} parent=31 // pred_fallthru
          _
        // Predicated region
        $region41: #{style_decoder_forward.9} parent=31 // pred_check
          %p292 = pneg %p172
        $region42: #{style_decoder_forward.9} parent=31 // pred_check_branch
          %294 = sbr.rel (%p292) target = $region44
        $region43: #{style_decoder_forward.9} parent=31 // pred_region
          %p295 = scmp.lt.s32.totalorder %s16, 1
          %s296 = scalar_select %p295, %s16, 1
          %s297 = smul.addr %s296, 8
          %s298 = scalar_lea.vmem %s6, %s297
        $region44: #{style_decoder_forward.9} parent=31 // pred_fallthru
          _
        // Predicated region
        $region45: #{style_decoder_forward.9} parent=31 // pred_check
          %p299 = pneg %p198
        $region46: #{style_decoder_forward.9} parent=31 // pred_check_branch
          %301 = sbr.rel (%p299) target = $region48
        $region47: #{style_decoder_forward.9} parent=31 // pred_region
          %p302 = scmp.lt.s32.totalorder %s16, 1
          %s303 = scalar_select %p302, %s16, 1
          %s304 = smul.addr %s303, 8
          %s305 = scalar_lea.vmem %s7, %s304
        $region48: #{style_decoder_forward.9} parent=31 // pred_fallthru
          _
      $region32: #{style_decoder_forward.9} parent=5 // pred_fallthru
        _
      %p306 = scmp.le.s32.totalorder 1, %s16
      %p307 = scmp.lt.s32.totalorder %s16, 3
      %p308 = pnand %p306, %p307
      %p309 = pneg %p308
      // Predicated region
      $region49: #{style_decoder_forward.9} parent=5 // pred_check
        _
      $region50: #{style_decoder_forward.9} parent=5 // pred_check_branch
        %311 = sbr.rel (%p308) target = $region52
      $region51: #{style_decoder_forward.9} parent=5 // pred_region
        %s312 = ssub.s32 %s16, 1
        // Predicated region
        $region53: #{style_decoder_forward.9} parent=51 // pred_check
          %p313 = pneg %p63
        $region54: #{style_decoder_forward.9} parent=51 // pred_check_branch
          %315 = sbr.rel (%p313) target = $region56
        $region55: #{style_decoder_forward.9} parent=51 // pred_region
          %316 = dma.done [#allocation3], 128
        $region56: #{style_decoder_forward.9} parent=51 // pred_fallthru
          _
        // Predicated region
        $region57: #{style_decoder_forward.9} parent=51 // pred_check
          %p317 = pneg %p131
        $region58: #{style_decoder_forward.9} parent=51 // pred_check_branch
          %319 = sbr.rel (%p317) target = $region60
        $region59: #{style_decoder_forward.9} parent=51 // pred_region
          %320 = dma.done [#allocation5], 128
        $region60: #{style_decoder_forward.9} parent=51 // pred_fallthru
          _
        %p321 = scmp.lt.s32.totalorder %s21, 1
        %s322 = scalar_select %p321, %s21, 1
        %s323 = smul.addr %s322, 9
        %s324 = smul.addr %s323, 8
        %s325 = scalar_lea.vmem %s0, %s324
        %p326 = pneg %p42
        %p327 = pneg %p39
        %p328 = pneg %p63
        %p329 = pneg %p60
        %p330 = pneg %p84
        %p331 = pneg %p81
        %p332 = scmp.lt.s32.totalorder %s21, 1
        %s333 = scalar_select %p332, %s21, 1
        %s334 = smul.addr %s333, 8
        %s335 = scalar_lea.vmem %s3, %s334
        %p336 = pneg %p110
        %p337 = pneg %p107
        %p338 = pneg %p131
        %p339 = pneg %p128
        %p340 = pneg %p152
        %p341 = pneg %p149
        %p342 = scmp.lt.s32.totalorder %s21, 1
        %s343 = scalar_select %p342, %s21, 1
        %s344 = smul.addr %s343, 8
        %s345 = scalar_lea.vmem %s6, %s344
        %p346 = pneg %p178
        %p347 = pneg %p175
        %p348 = scmp.lt.s32.totalorder %s21, 1
        %s349 = scalar_select %p348, %s21, 1
        %s350 = smul.addr %s349, 8
        %s351 = scalar_lea.vmem %s7, %s350
        %p352 = pneg %p204
        %p353 = pneg %p201
        %p354 = pneg %p230
        %p355 = pneg %p227
        %p356 = scmp.lt.s32.totalorder %s21, 1
        %s357 = scalar_select %p356, %s21, 1
        %s358 = smul.addr %s357, 8
        %s359 = scalar_lea.vmem %s8, %s358
        %p360 = scmp.lt.s32.totalorder %s21, 1
        %s361 = scalar_select %p360, %s21, 1
        %s362 = smul.addr %s361, 9
        %s363 = smul.addr %s362, 8
        %s364 = scalar_lea.vmem %s0, %s363
        %p365 = scmp.lt.s32.totalorder %s21, 1
        %s366 = scalar_select %p365, %s21, 1
        %s367 = smul.addr %s366, 8
        %s368 = scalar_lea.vmem %s3, %s367
        %p369 = scmp.lt.s32.totalorder %s21, 1
        %s370 = scalar_select %p369, %s21, 1
        %s371 = smul.addr %s370, 8
        %s372 = scalar_lea.vmem %s6, %s371
        %p373 = scmp.lt.s32.totalorder %s21, 1
        %s374 = scalar_select %p373, %s21, 1
        %s375 = smul.addr %s374, 8
        %s376 = scalar_lea.vmem %s7, %s375
        %p377 = scmp.lt.s32.totalorder %s21, 1
        %s378 = scalar_select %p377, %s21, 1
        %s379 = smul.addr %s378, 8
        %s380 = scalar_lea.vmem %s8, %s379
        %v381 = vld [vmem:[#allocation2] sm:$0xff]
        %v382 = vld [vmem:[%s364] sm:$0xff]
        %v383 = vld [vmem:[%s364 + $0x8] sm:$0xff]
        %v384 = vld [vmem:[%s364 + $0x10] sm:$0xff]
        %v385 = vld [vmem:[%s364 + $0x18] sm:$0xff]
        %v386 = vld [vmem:[%s364 + $0x20] sm:$0xff]
        %v387 = vld [vmem:[%s364 + $0x28] sm:$0xff]
        %v388 = vld [vmem:[%s364 + $0x30] sm:$0xff]
        %v389 = vld [vmem:[%s364 + $0x38] sm:$0xff]
        %v390 = vld [vmem:[%s364 + $0x40] sm:$0xff]
        %v391 = vld [vmem:[%s2] sm:$0xff]
        %393 = vset.pattern.permute.xlu0 0
        %394 = vperm.xlu0 %393, %v391
        %v395 = vpop.permute.xlu0 %394
        %vm397 = vcmask 588800
        %v399 = vsel %vm397, %v381, 0
        %401 = vmatprep.subr.mxu0 0.0
        %402 = vmatpush1.msra.mxu0 %v382
        %403 = vmatprep.subr.mxu0 0.0
        %404 = vmatpush1.msra.mxu0 %v383
        %405 = vmatprep.subr.mxu0 0.0
        %406 = vmatpush1.msra.mxu0 %v384
        %407 = vmatprep.subr.mxu0 0.0
        %408 = vmatpush1.msra.mxu0 %v385
        %409 = vmatprep.subr.mxu0 0.0
        %410 = vmatpush1.msra.mxu0 %v386
        %411 = vmatprep.subr.mxu0 0.0
        %412 = vmatpush1.msra.mxu0 %v387
        %413 = vmatprep.subr.mxu0 0.0
        %414 = vmatpush1.msra.mxu0 %v388
        %415 = vmatprep.subr.mxu0 0.0
        %416 = vmatpush1.msra.mxu0 %v389
        %417 = vmatprep.subr.mxu0 0.0
        %418 = vmatpush1.msra.mxu0 %v390
        %419 = vmatprep.subr.mxu0 0.0
        %420 = vmatpush1.msra.mxu0 0.0
        %421 = vmatprep.subr.mxu0 0.0
        %422 = vmatpush1.msra.mxu0 0.0
        %423 = vmatprep.subr.mxu0 0.0
        %424 = vmatpush1.msra.mxu0 0.0
        %425 = vmatprep.subr.mxu0 0.0
        %426 = vmatpush1.msra.mxu0 0.0
        %427 = vmatprep.subr.mxu0 0.0
        %428 = vmatpush1.msra.mxu0 0.0
        %429 = vmatprep.subr.mxu0 0.0
        %430 = vmatpush1.msra.mxu0 0.0
        %431 = vmatprep.subr.mxu0 0.0
        %432 = vmatpush1.msra.mxu0 0.0
        %433 = vmatprep.subr.mxu0 0.0
        %434 = vmatpush1.msra.mxu0 0.0
        %435 = vmatprep.subr.mxu0 0.0
        %436 = vmatpush1.msra.mxu0 0.0
        %437 = vmatprep.subr.mxu0 0.0
        %438 = vmatpush1.msra.mxu0 0.0
        %439 = vmatprep.subr.mxu0 0.0
        %440 = vmatpush1.msra.mxu0 0.0
        %441 = vmatprep.subr.mxu0 0.0
        %442 = vmatpush1.msra.mxu0 0.0
        %443 = vmatprep.subr.mxu0 0.0
        %444 = vmatpush1.msra.mxu0 0.0
        %445 = vmatprep.subr.mxu0 0.0
        %446 = vmatpush1.msra.mxu0 0.0
        %447 = vmatprep.subr.mxu0 0.0
        %448 = vmatpush1.msra.mxu0 0.0
        %449 = vmatprep.subr.mxu0 0.0
        %450 = vmatpush1.msra.mxu0 0.0
        %451 = vmatprep.subr.mxu0 0.0
        %452 = vmatpush1.msra.mxu0 0.0
        %453 = vmatprep.subr.mxu0 0.0
        %454 = vmatpush1.msra.mxu0 0.0
        %455 = vmatprep.subr.mxu0 0.0
        %456 = vmatpush1.msra.mxu0 0.0
        %457 = vmatprep.subr.mxu0 0.0
        %458 = vmatpush1.msra.mxu0 0.0
        %459 = vmatprep.subr.mxu0 0.0
        %460 = vmatpush1.msra.mxu0 0.0
        %461 = vmatprep.subr.mxu0 0.0
        %462 = vmatpush1.msra.mxu0 0.0
        %463 = vmatprep.subr.mxu0 0.0
        %464 = vmatpush1.msra.mxu0 0.0
        %465 = vmatprep.mubr.f32.mxu0 0.0
        %466 = vmatmul.mubr.f32.gmra.mrb[0].mxu0 %v399
        %v467 = vpop.f32.mrb[0].mxu0
        %v468 = vadd.f32 %v395, %v467
        %v469 = vpop.f32.mrb[0].mxu0
        %470 = vdwg.mxu0
        %v471 = vmax.f32 %v468, 0.0
        %v472 = vld [vmem:[#allocation4] sm:$0xff]
        %v473 = vld [vmem:[%s368] sm:$0xff]
        %vm474 = vcmask 64512
        %v476 = vsel %vm474, %v472, 0
        %478 = vmatprep.subr.mxu0 0.0
        %479 = vmatpush1.msra.mxu0 %v473
        %480 = vmatprep.subr.mxu0 0.0
        %481 = vmatpush1.msra.mxu0 0.0
        %482 = vmatprep.subr.mxu0 0.0
        %483 = vmatpush1.msra.mxu0 0.0
        %484 = vmatprep.subr.mxu0 0.0
        %485 = vmatpush1.msra.mxu0 0.0
        %486 = vmatprep.subr.mxu0 0.0
        %487 = vmatpush1.msra.mxu0 0.0
        %488 = vmatprep.subr.mxu0 0.0
        %489 = vmatpush1.msra.mxu0 0.0
        %490 = vmatprep.subr.mxu0 0.0
        %491 = vmatpush1.msra.mxu0 0.0
        %492 = vmatprep.subr.mxu0 0.0
        %493 = vmatpush1.msra.mxu0 0.0
        %494 = vmatprep.subr.mxu0 0.0
        %495 = vmatpush1.msra.mxu0 0.0
        %496 = vmatprep.subr.mxu0 0.0
        %497 = vmatpush1.msra.mxu0 0.0
        %498 = vmatprep.subr.mxu0 0.0
        %499 = vmatpush1.msra.mxu0 0.0
        %500 = vmatprep.subr.mxu0 0.0
        %501 = vmatpush1.msra.mxu0 0.0
        %502 = vmatprep.subr.mxu0 0.0
        %503 = vmatpush1.msra.mxu0 0.0
        %504 = vmatprep.subr.mxu0 0.0
        %505 = vmatpush1.msra.mxu0 0.0
        %506 = vmatprep.subr.mxu0 0.0
        %507 = vmatpush1.msra.mxu0 0.0
        %508 = vmatprep.subr.mxu0 0.0
        %509 = vmatpush1.msra.mxu0 0.0
        %510 = vmatprep.subr.mxu0 0.0
        %511 = vmatpush1.msra.mxu0 0.0
        %512 = vmatprep.subr.mxu0 0.0
        %513 = vmatpush1.msra.mxu0 0.0
        %514 = vmatprep.subr.mxu0 0.0
        %515 = vmatpush1.msra.mxu0 0.0
        %516 = vmatprep.subr.mxu0 0.0
        %517 = vmatpush1.msra.mxu0 0.0
        %518 = vmatprep.subr.mxu0 0.0
        %519 = vmatpush1.msra.mxu0 0.0
        %520 = vmatprep.subr.mxu0 0.0
        %521 = vmatpush1.msra.mxu0 0.0
        %522 = vmatprep.subr.mxu0 0.0
        %523 = vmatpush1.msra.mxu0 0.0
        %524 = vmatprep.subr.mxu0 0.0
        %525 = vmatpush1.msra.mxu0 0.0
        %526 = vmatprep.subr.mxu0 0.0
        %527 = vmatpush1.msra.mxu0 0.0
        %528 = vmatprep.subr.mxu0 0.0
        %529 = vmatpush1.msra.mxu0 0.0
        %530 = vmatprep.subr.mxu0 0.0
        %531 = vmatpush1.msra.mxu0 0.0
        %532 = vmatprep.subr.mxu0 0.0
        %533 = vmatpush1.msra.mxu0 0.0
        %534 = vmatprep.subr.mxu0 0.0
        %535 = vmatpush1.msra.mxu0 0.0
        %536 = vmatprep.subr.mxu0 0.0
        %537 = vmatpush1.msra.mxu0 0.0
        %538 = vmatprep.subr.mxu0 0.0
        %539 = vmatpush1.msra.mxu0 0.0
        %540 = vmatprep.subr.mxu0 0.0
        %541 = vmatpush1.msra.mxu0 0.0
        %542 = vmatprep.mubr.f32.mxu0 0.0
        %543 = vmatmul.mubr.f32.gmra.mrb[0].mxu0 %v476
        %v544 = vpop.f32.mrb[0].mxu0
        %v545 = vadd.f32 0.0, %v544
        %v546 = vpop.f32.mrb[0].mxu0
        %547 = vdwg.mxu0
        %v548 = vadd.f32 %v471, %v545
        %v549 = vld [vmem:[%s5] sm:$0xff]
        %551 = vset.pattern.permute.xlu0 0
        %552 = vperm.xlu0 %551, %v549
        %v553 = vpop.permute.xlu0 %552
        %v555 = vadd.f32 %v548, %v553
        %v556 = vld [vmem:[%s372] sm:$0xff]
        %v557 = vld [vmem:[%s376] sm:$0xff]
        %vm558 = vcmask 31744
        %v559 = vsel %vm558, %v555, 0.0
        %560 = vadd.xlane.f32.xlu0 %v559
        %v561 = vpop.xlane.xlu0 %560
        %v562 = vrcp.pop 4.0
        %v563 = vmul.f32 %v561, %v562
        %v564 = vsub.f32 %v555, %v563
        %v565 = vmul.f32 %v564, %v564
        %v566 = vsel %vm558, %v565, 0.0
        %567 = vadd.xlane.f32.xlu0 %v566
        %v568 = vpop.xlane.xlu0 %567
        %v569 = vmul.f32 %v568, %v562
        %v570 = vadd.f32 %v569, 1e-05
        %v571 = vrsqrt.pop %v570
        %v572 = vmul.f32 %v564, %v571
        %v573 = vmul.f32 %v556, %v572
        %v574 = vadd.f32 %v573, %v557
        %575 = vst.msk [vmem:[%s380] sm:$0xff] %vm558, %v574
        %p576 = scmp.lt.s32.totalorder %s21, 1
        %s577 = scalar_select %p576, %s21, 1
        %s578 = smul.addr %s577, 8
        %s579 = scalar_lea.vmem %s8, %s578
        // Predicated region
        $region61: #{style_decoder_forward.9} parent=51 // pred_check
          %p580 = pneg %p227
        $region62: #{style_decoder_forward.9} parent=51 // pred_check_branch
          %582 = sbr.rel (%p580) target = $region64
        $region63: #{style_decoder_forward.9} parent=51 // pred_region
          _
        $region64: #{style_decoder_forward.9} parent=51 // pred_fallthru
          _
      $region52: #{style_decoder_forward.9} parent=5 // pred_fallthru
        _
      %p583 = scmp.le.s32.totalorder 2, %s16
      // Predicated region
      $region65: #{style_decoder_forward.9} parent=5 // pred_check
        %p584 = pneg %p583
      $region66: #{style_decoder_forward.9} parent=5 // pred_check_branch
        %586 = sbr.rel (%p584) target = $region68
      $region67: #{style_decoder_forward.9} parent=5 // pred_region
        %s587 = ssub.s32 %s16, 2
        // Predicated region
        $region69: #{style_decoder_forward.9} parent=67 // pred_check
          %p588 = pneg %p233
        $region70: #{style_decoder_forward.9} parent=67 // pred_check_branch
          %590 = sbr.rel (%p588) target = $region72
        $region71: #{style_decoder_forward.9} parent=67 // pred_region
          %p591 = scmp.lt.s32.totalorder %s22, 1
          %s592 = scalar_select %p591, %s22, 1
          %s593 = smul.addr %s592, 8
          %s594 = scalar_lea.vmem %s8, %s593
        $region72: #{style_decoder_forward.9} parent=67 // pred_fallthru
          _
      $region68: #{style_decoder_forward.9} parent=5 // pred_fallthru
        _
    $region6: #{style_decoder_forward.9} parent=1 // loop_footer
      %s20 = sadd.s32 1, %s16
    $region7: #{style_decoder_forward.9} parent=1 // loop_footer_branch
      %15 = sbr.rel target = $region3
    $region8: #{style_decoder_forward.9} parent=1 // loop_exit
      _
    %595 = vsyncpa [#allocation3], 1
    %s596 = scalar_lea.sflag [#allocation3], 1
    %597 = vsyncpa %s596, 1
    %598 = vsyncpa [#allocation5], 1

// kernel: style_decoder_forward.10
$region0: #{style_decoder_forward.10}
  #allocation0 [shape = 'u32[]', space=smem, size = 0x4, offset = 0x4, fixed_abs, tag = 'smem constant byte address 0x4 - core index']
  #allocation1 [shape = 'u32[144,128]{1,0:T(1,128)}', space=vmem, size = 0x12000, scoped, tag = 'internal scratch']
  %s0 = inlined_call_operand.vmem [shape: f32[2,72,16], index: 0, kind: input, shape index: {}]
  %s1 = inlined_call_operand.vmem [shape: f32[8,72], index: 1, kind: input, shape index: {}]
  %s2 = inlined_call_operand.vmem [shape: f32[8,1], index: 2, kind: input, shape index: {}]
  %s3 = inlined_call_operand.vmem [shape: f32[2,8,16], index: 3, kind: input, shape index: {}]
  %s4 = inlined_call_operand.vmem [shape: f32[8,8], index: 4, kind: input, shape index: {}]
  %s5 = inlined_call_operand.vmem [shape: f32[8,1], index: 5, kind: input, shape index: {}]
  %s6 = inlined_call_operand.vmem [shape: f32[2,8,16], index: 6, kind: input, shape index: {}]
  %s7 = inlined_call_operand.vmem [shape: f32[2,8,16], index: 7, kind: input, shape index: {}]
  %s8 = inlined_call_operand.vmem [shape: f32[2,8,16], index: 8, kind: output, shape index: {}]
  %s9 = sld [smem:[#allocation0]]
  $region65: #{style_decoder_forward.10} parent=0
    _
  %s11 = ssub.s32 1, %s9
  %s12 = scalar_select 0, %s11, %s9
  loop: start=0, step=1, limit=4
  $region2: #{style_decoder_forward.10} parent=0 // loop_pre_header
    _
  $region3: #{style_decoder_forward.10} parent=0 // loop_header
    %s14 = sphi 0, %s18
    %p15 = scmp.ge.s32.totalorder %s14, 4
    %s24 = sphi 0, %s26
    %s27 = sphi 0, %s24
    %s28 = sphi 0, %s27
    %s44 = sphi 0, %s28
    %s48 = sphi 0, %s48
    %s50 = sphi 0, %s48
    %s51 = sphi 0, %s50
    %s65 = sphi 0, %s51
    %s69 = sphi 0, %s69
    %s71 = sphi 0, %s69
    %s72 = sphi 0, %s71
    %s86 = sphi 0, %s72
    %s92 = sphi 0, %s94
    %s95 = sphi 0, %s92
    %s96 = sphi 0, %s95
    %s112 = sphi 0, %s96
    %s116 = sphi 0, %s116
    %s118 = sphi 0, %s116
    %s119 = sphi 0, %s118
    %s133 = sphi 0, %s119
    %s137 = sphi 0, %s137
    %s139 = sphi 0, %s137
    %s140 = sphi 0, %s139
    %s154 = sphi 0, %s140
    %s160 = sphi 0, %s162
    %s163 = sphi 0, %s160
    %s164 = sphi 0, %s163
    %s180 = sphi 0, %s164
    %s186 = sphi 0, %s188
    %s189 = sphi 0, %s186
    %s190 = sphi 0, %s189
    %s206 = sphi 0, %s190
    %s212 = sphi 0, %s214
    %s215 = sphi 0, %s212
    %s216 = sphi 0, %s215
    %s232 = sphi 0, %s216
  $region4: #{style_decoder_forward.10} parent=0 // loop_header_branch
    %17 = sbr.rel (%p15) target = $region8
  $region5: #{style_decoder_forward.10} parent=0 // loop_body
    %s19 = ssub.s32 %s14, 1
    %s20 = ssub.s32 %s14, 2
    %s21 = sadd.s32 %s14, 1
    %s22 = ssub.s32 %s14, %s21
    %p23 = scmp.eq.s32.totalorder %s22, 0
    %s25 = sadd.s32 %s24, 1
    %s26 = scalar_select %p23, %s24, %s25
    %p29 = pneg %p23
    %p30 = scmp.eq.s32.totalorder %s14, 1
    %p31 = por %p29, %p30
    %p32 = scmp.ne.s32.totalorder %s24, %s27
    %p33 = scmp.eq.s32.totalorder %s14, 0
    %p34 = por %p32, %p33
    %p35 = scmp.ne.s32.totalorder %s24, %s27
    %p36 = scmp.eq.s32.totalorder %s19, 1
    %p37 = por %p35, %p36
    %p38 = scmp.ne.s32.totalorder %s27, %s28
    %p39 = scmp.eq.s32.totalorder %s19, 0
    %p40 = por %p38, %p39
    %p41 = scmp.ne.s32.totalorder %s27, %s28
    %p42 = scmp.eq.s32.totalorder %s20, 1
    %p43 = por %p41, %p42
    %p45 = scmp.ne.s32.totalorder %s28, %s44
    %p46 = scmp.eq.s32.totalorder %s20, 0
    %p47 = por %p45, %p46
    %s49 = sadd.s32 %s48, 1
    %p52 = scmp.eq.s32.totalorder %s14, 1
    %p53 = scmp.ne.s32.totalorder %s48, %s50
    %p54 = scmp.eq.s32.totalorder %s14, 0
    %p55 = por %p53, %p54
    %p56 = scmp.ne.s32.totalorder %s48, %s50
    %p57 = scmp.eq.s32.totalorder %s19, 1
    %p58 = por %p56, %p57
    %p59 = scmp.ne.s32.totalorder %s50, %s51
    %p60 = scmp.eq.s32.totalorder %s19, 0
    %p61 = por %p59, %p60
    %p62 = scmp.ne.s32.totalorder %s50, %s51
    %p63 = scmp.eq.s32.totalorder %s20, 1
    %p64 = por %p62, %p63
    %p66 = scmp.ne.s32.totalorder %s51, %s65
    %p67 = scmp.eq.s32.totalorder %s20, 0
    %p68 = por %p66, %p67
    %s70 = sadd.s32 %s69, 1
    %p73 = scmp.eq.s32.totalorder %s14, 1
    %p74 = scmp.ne.s32.totalorder %s69, %s71
    %p75 = scmp.eq.s32.totalorder %s14, 0
    %p76 = por %p74, %p75
    %p77 = scmp.ne.s32.totalorder %s69, %s71
    %p78 = scmp.eq.s32.totalorder %s19, 1
    %p79 = por %p77, %p78
    %p80 = scmp.ne.s32.totalorder %s71, %s72
    %p81 = scmp.eq.s32.totalorder %s19, 0
    %p82 = por %p80, %p81
    %p83 = scmp.ne.s32.totalorder %s71, %s72
    %p84 = scmp.eq.s32.totalorder %s20, 1
    %p85 = por %p83, %p84
    %p87 = scmp.ne.s32.totalorder %s72, %s86
    %p88 = scmp.eq.s32.totalorder %s20, 0
    %p89 = por %p87, %p88
    %s90 = ssub.s32 %s14, %s21
    %p91 = scmp.eq.s32.totalorder %s90, 0
    %s93 = sadd.s32 %s92, 1
    %s94 = scalar_select %p91, %s92, %s93
    %p97 = pneg %p91
    %p98 = scmp.eq.s32.totalorder %s14, 1
    %p99 = por %p97, %p98
    %p100 = scmp.ne.s32.totalorder %s92, %s95
    %p101 = scmp.eq.s32.totalorder %s14, 0
    %p102 = por %p100, %p101
    %p103 = scmp.ne.s32.totalorder %s92, %s95
    %p104 = scmp.eq.s32.totalorder %s19, 1
    %p105 = por %p103, %p104
    %p106 = scmp.ne.s32.totalorder %s95, %s96
    %p107 = scmp.eq.s32.totalorder %s19, 0
    %p108 = por %p106, %p107
    %p109 = scmp.ne.s32.totalorder %s95, %s96
    %p110 = scmp.eq.s32.totalorder %s20, 1
    %p111 = por %p109, %p110
    %p113 = scmp.ne.s32.totalorder %s96, %s112
    %p114 = scmp.eq.s32.totalorder %s20, 0
    %p115 = por %p113, %p114
    %s117 = sadd.s32 %s116, 1
    %p120 = scmp.eq.s32.totalorder %s14, 1
    %p121 = scmp.ne.s32.totalorder %s116, %s118
    %p122 = scmp.eq.s32.totalorder %s14, 0
    %p123 = por %p121, %p122
    %p124 = scmp.ne.s32.totalorder %s116, %s118
    %p125 = scmp.eq.s32.totalorder %s19, 1
    %p126 = por %p124, %p125
    %p127 = scmp.ne.s32.totalorder %s118, %s119
    %p128 = scmp.eq.s32.totalorder %s19, 0
    %p129 = por %p127, %p128
    %p130 = scmp.ne.s32.totalorder %s118, %s119
    %p131 = scmp.eq.s32.totalorder %s20, 1
    %p132 = por %p130, %p131
    %p134 = scmp.ne.s32.totalorder %s119, %s133
    %p135 = scmp.eq.s32.totalorder %s20, 0
    %p136 = por %p134, %p135
    %s138 = sadd.s32 %s137, 1
    %p141 = scmp.eq.s32.totalorder %s14, 1
    %p142 = scmp.ne.s32.totalorder %s137, %s139
    %p143 = scmp.eq.s32.totalorder %s14, 0
    %p144 = por %p142, %p143
    %p145 = scmp.ne.s32.totalorder %s137, %s139
    %p146 = scmp.eq.s32.totalorder %s19, 1
    %p147 = por %p145, %p146
    %p148 = scmp.ne.s32.totalorder %s139, %s140
    %p149 = scmp.eq.s32.totalorder %s19, 0
    %p150 = por %p148, %p149
    %p151 = scmp.ne.s32.totalorder %s139, %s140
    %p152 = scmp.eq.s32.totalorder %s20, 1
    %p153 = por %p151, %p152
    %p155 = scmp.ne.s32.totalorder %s140, %s154
    %p156 = scmp.eq.s32.totalorder %s20, 0
    %p157 = por %p155, %p156
    %s158 = ssub.s32 %s14, %s21
    %p159 = scmp.eq.s32.totalorder %s158, 0
    %s161 = sadd.s32 %s160, 1
    %s162 = scalar_select %p159, %s160, %s161
    %p165 = pneg %p159
    %p166 = scmp.eq.s32.totalorder %s14, 1
    %p167 = por %p165, %p166
    %p168 = scmp.ne.s32.totalorder %s160, %s163
    %p169 = scmp.eq.s32.totalorder %s14, 0
    %p170 = por %p168, %p169
    %p171 = scmp.ne.s32.totalorder %s160, %s163
    %p172 = scmp.eq.s32.totalorder %s19, 1
    %p173 = por %p171, %p172
    %p174 = scmp.ne.s32.totalorder %s163, %s164
    %p175 = scmp.eq.s32.totalorder %s19, 0
    %p176 = por %p174, %p175
    %p177 = scmp.ne.s32.totalorder %s163, %s164
    %p178 = scmp.eq.s32.totalorder %s20, 1
    %p179 = por %p177, %p178
    %p181 = scmp.ne.s32.totalorder %s164, %s180
    %p182 = scmp.eq.s32.totalorder %s20, 0
    %p183 = por %p181, %p182
    %s184 = ssub.s32 %s14, %s21
    %p185 = scmp.eq.s32.totalorder %s184, 0
    %s187 = sadd.s32 %s186, 1
    %s188 = scalar_select %p185, %s186, %s187
    %p191 = pneg %p185
    %p192 = scmp.eq.s32.totalorder %s14, 1
    %p193 = por %p191, %p192
    %p194 = scmp.ne.s32.totalorder %s186, %s189
    %p195 = scmp.eq.s32.totalorder %s14, 0
    %p196 = por %p194, %p195
    %p197 = scmp.ne.s32.totalorder %s186, %s189
    %p198 = scmp.eq.s32.totalorder %s19, 1
    %p199 = por %p197, %p198
    %p200 = scmp.ne.s32.totalorder %s189, %s190
    %p201 = scmp.eq.s32.totalorder %s19, 0
    %p202 = por %p200, %p201
    %p203 = scmp.ne.s32.totalorder %s189, %s190
    %p204 = scmp.eq.s32.totalorder %s20, 1
    %p205 = por %p203, %p204
    %p207 = scmp.ne.s32.totalorder %s190, %s206
    %p208 = scmp.eq.s32.totalorder %s20, 0
    %p209 = por %p207, %p208
    %s210 = ssub.s32 %s14, %s21
    %p211 = scmp.eq.s32.totalorder %s210, 0
    %s213 = sadd.s32 %s212, 1
    %s214 = scalar_select %p211, %s212, %s213
    %p217 = pneg %p211
    %p218 = scmp.eq.s32.totalorder %s14, 1
    %p219 = por %p217, %p218
    %p220 = scmp.ne.s32.totalorder %s212, %s215
    %p221 = scmp.eq.s32.totalorder %s14, 0
    %p222 = por %p220, %p221
    %p223 = scmp.ne.s32.totalorder %s212, %s215
    %p224 = scmp.eq.s32.totalorder %s19, 1
    %p225 = por %p223, %p224
    %p226 = scmp.ne.s32.totalorder %s215, %s216
    %p227 = scmp.eq.s32.totalorder %s19, 0
    %p228 = por %p226, %p227
    %p229 = scmp.ne.s32.totalorder %s215, %s216
    %p230 = scmp.eq.s32.totalorder %s20, 1
    %p231 = por %p229, %p230
    %p233 = scmp.ne.s32.totalorder %s216, %s232
    %p234 = scmp.eq.s32.totalorder %s20, 0
    %p235 = por %p233, %p234
    %p236 = scmp.le.s32.totalorder 1, %s14
    %p237 = scmp.lt.s32.totalorder %s14, 3
    %p238 = pnand %p236, %p237
    %p239 = pneg %p238
    // Predicated region
    $region9: #{style_decoder_forward.10} parent=5 // pred_check
      _
    $region10: #{style_decoder_forward.10} parent=5 // pred_check_branch
      %241 = sbr.rel (%p238) target = $region12
    $region11: #{style_decoder_forward.10} parent=5 // pred_region
      %s242 = ssub.s32 %s14, 1
      // Predicated region
      $region13: #{style_decoder_forward.10} parent=11 // pred_check
        %p243 = pneg %p61
      $region14: #{style_decoder_forward.10} parent=11 // pred_check_branch
        %245 = sbr.rel (%p243) target = $region16
      $region15: #{style_decoder_forward.10} parent=11 // pred_region
        _
      $region16: #{style_decoder_forward.10} parent=11 // pred_fallthru
        _
      // Predicated region
      $region17: #{style_decoder_forward.10} parent=11 // pred_check
        %p246 = pneg %p82
      $region18: #{style_decoder_forward.10} parent=11 // pred_check_branch
        %248 = sbr.rel (%p246) target = $region20
      $region19: #{style_decoder_forward.10} parent=11 // pred_region
        _
      $region20: #{style_decoder_forward.10} parent=11 // pred_fallthru
        _
      // Predicated region
      $region21: #{style_decoder_forward.10} parent=11 // pred_check
        %p249 = pneg %p129
      $region22: #{style_decoder_forward.10} parent=11 // pred_check_branch
        %251 = sbr.rel (%p249) target = $region24
      $region23: #{style_decoder_forward.10} parent=11 // pred_region
        _
      $region24: #{style_decoder_forward.10} parent=11 // pred_fallthru
        _
      // Predicated region
      $region25: #{style_decoder_forward.10} parent=11 // pred_check
        %p252 = pneg %p150
      $region26: #{style_decoder_forward.10} parent=11 // pred_check_branch
        %254 = sbr.rel (%p252) target = $region28
      $region27: #{style_decoder_forward.10} parent=11 // pred_region
        _
      $region28: #{style_decoder_forward.10} parent=11 // pred_fallthru
        _
    $region12: #{style_decoder_forward.10} parent=5 // pred_fallthru
      _
    %p255 = scmp.lt.s32.totalorder %s14, 2
    // Predicated region
    $region29: #{style_decoder_forward.10} parent=5 // pred_check
      %p256 = pneg %p255
    $region30: #{style_decoder_forward.10} parent=5 // pred_check_branch
      %258 = sbr.rel (%p256) target = $region32
    $region31: #{style_decoder_forward.10} parent=5 // pred_region
      // Predicated region
      $region33: #{style_decoder_forward.10} parent=31 // pred_check
        %p259 = pneg %p34
      $region34: #{style_decoder_forward.10} parent=31 // pred_check_branch
        %261 = sbr.rel (%p259) target = $region36
      $region35: #{style_decoder_forward.10} parent=31 // pred_region
        %p262 = scmp.lt.s32.totalorder %s14, 1
        %s263 = scalar_select %p262, %s14, 1
        %s264 = smul.addr %s263, 9
        %s265 = smul.addr %s264, 8
        %s266 = scalar_lea.vmem %s0, %s265
      $region36: #{style_decoder_forward.10} parent=31 // pred_fallthru
        _
      // Predicated region
      $region37: #{style_decoder_forward.10} parent=31 // pred_check
        %p267 = pneg %p102
      $region38: #{style_decoder_forward.10} parent=31 // pred_check_branch
        %269 = sbr.rel (%p267) target = $region40
      $region39: #{style_decoder_forward.10} parent=31 // pred_region
        %p270 = scmp.lt.s32.totalorder %s14, 1
        %s271 = scalar_select %p270, %s14, 1
        %s272 = smul.addr %s271, 8
        %s273 = scalar_lea.vmem %s3, %s272
      $region40: #{style_decoder_forward.10} parent=31 // pred_fallthru
        _
      // Predicated region
      $region41: #{style_decoder_forward.10} parent=31 // pred_check
        %p274 = pneg %p170
      $region42: #{style_decoder_forward.10} parent=31 // pred_check_branch
        %276 = sbr.rel (%p274) target = $region44
      $region43: #{style_decoder_forward.10} parent=31 // pred_region
        %p277 = scmp.lt.s32.totalorder %s14, 1
        %s278 = scalar_select %p277, %s14, 1
        %s279 = smul.addr %s278, 8
        %s280 = scalar_lea.vmem %s6, %s279
      $region44: #{style_decoder_forward.10} parent=31 // pred_fallthru
        _
      // Predicated region
      $region45: #{style_decoder_forward.10} parent=31 // pred_check
        %p281 = pneg %p196
      $region46: #{style_decoder_forward.10} parent=31 // pred_check_branch
        %283 = sbr.rel (%p281) target = $region48
      $region47: #{style_decoder_forward.10} parent=31 // pred_region
        %p284 = scmp.lt.s32.totalorder %s14, 1
        %s285 = scalar_select %p284, %s14, 1
        %s286 = smul.addr %s285, 8
        %s287 = scalar_lea.vmem %s7, %s286
      $region48: #{style_decoder_forward.10} parent=31 // pred_fallthru
        _
    $region32: #{style_decoder_forward.10} parent=5 // pred_fallthru
      _
    %p288 = scmp.le.s32.totalorder 1, %s14
    %p289 = scmp.lt.s32.totalorder %s14, 3
    %p290 = pnand %p288, %p289
    %p291 = pneg %p290
    // Predicated region
    $region49: #{style_decoder_forward.10} parent=5 // pred_check
      _
    $region50: #{style_decoder_forward.10} parent=5 // pred_check_branch
      %293 = sbr.rel (%p290) target = $region52
    $region51: #{style_decoder_forward.10} parent=5 // pred_region
      %s294 = ssub.s32 %s14, 1
      %p295 = scmp.lt.s32.totalorder %s19, 1
      %s296 = scalar_select %p295, %s19, 1
      %s297 = smul.addr %s296, 9
      %s298 = smul.addr %s297, 8
      %s299 = scalar_lea.vmem %s0, %s298
      %p300 = pneg %p40
      %p301 = pneg %p37
      %p302 = pneg %p61
      %p303 = pneg %p58
      %p304 = pneg %p82
      %p305 = pneg %p79
      %p306 = scmp.lt.s32.totalorder %s19, 1
      %s307 = scalar_select %p306, %s19, 1
      %s308 = smul.addr %s307, 8
      %s309 = scalar_lea.vmem %s3, %s308
      %p310 = pneg %p108
      %p311 = pneg %p105
      %p312 = pneg %p129
      %p313 = pneg %p126
      %p314 = pneg %p150
      %p315 = pneg %p147
      %p316 = scmp.lt.s32.totalorder %s19, 1
      %s317 = scalar_select %p316, %s19, 1
      %s318 = smul.addr %s317, 8
      %s319 = scalar_lea.vmem %s6, %s318
      %p320 = pneg %p176
      %p321 = pneg %p173
      %p322 = scmp.lt.s32.totalorder %s19, 1
      %s323 = scalar_select %p322, %s19, 1
      %s324 = smul.addr %s323, 8
      %s325 = scalar_lea.vmem %s7, %s324
      %p326 = pneg %p202
      %p327 = pneg %p199
      %p328 = pneg %p228
      %p329 = pneg %p225
      %p330 = scmp.lt.s32.totalorder %s19, 1
      %s331 = scalar_select %p330, %s19, 1
      %s332 = smul.addr %s331, 8
      %s333 = scalar_lea.vmem %s8, %s332
      %p334 = scmp.lt.s32.totalorder %s19, 1
      %s335 = scalar_select %p334, %s19, 1
      %s336 = smul.addr %s335, 9
      %s337 = smul.addr %s336, 8
      %s338 = scalar_lea.vmem %s0, %s337
      %p339 = scmp.lt.s32.totalorder %s19, 1
      %s340 = scalar_select %p339, %s19, 1
      %s341 = smul.addr %s340, 8
      %s342 = scalar_lea.vmem %s3, %s341
      %p343 = scmp.lt.s32.totalorder %s19, 1
      %s344 = scalar_select %p343, %s19, 1
      %s345 = smul.addr %s344, 8
      %s346 = scalar_lea.vmem %s6, %s345
      %p347 = scmp.lt.s32.totalorder %s19, 1
      %s348 = scalar_select %p347, %s19, 1
      %s349 = smul.addr %s348, 8
      %s350 = scalar_lea.vmem %s7, %s349
      %p351 = scmp.lt.s32.totalorder %s19, 1
      %s352 = scalar_select %p351, %s19, 1
      %s353 = smul.addr %s352, 8
      %s354 = scalar_lea.vmem %s8, %s353
      %v355 = vld [vmem:[%s1] sm:$0xff]
      %v356 = vld [vmem:[%s338] sm:$0xff]
      %v357 = vld [vmem:[%s338 + $0x8] sm:$0xff]
      %v358 = vld [vmem:[%s338 + $0x10] sm:$0xff]
      %v359 = vld [vmem:[%s338 + $0x18] sm:$0xff]
      %v360 = vld [vmem:[%s338 + $0x20] sm:$0xff]
      %v361 = vld [vmem:[%s338 + $0x28] sm:$0xff]
      %v362 = vld [vmem:[%s338 + $0x30] sm:$0xff]
      %v363 = vld [vmem:[%s338 + $0x38] sm:$0xff]
      %v364 = vld [vmem:[%s338 + $0x40] sm:$0xff]
      %v365 = vld [vmem:[%s2] sm:$0xff]
      %367 = vset.pattern.permute.xlu0 0
      %368 = vperm.xlu0 %367, %v365
      %v369 = vpop.permute.xlu0 %368
      %vm371 = vcmask 588800
      %v373 = vsel %vm371, %v355, 0
      %375 = vmatprep.subr.mxu0 0.0
      %376 = vmatpush1.msra.mxu0 %v356
      %377 = vmatprep.subr.mxu0 0.0
      %378 = vmatpush1.msra.mxu0 %v357
      %379 = vmatprep.subr.mxu0 0.0
      %380 = vmatpush1.msra.mxu0 %v358
      %381 = vmatprep.subr.mxu0 0.0
      %382 = vmatpush1.msra.mxu0 %v359
      %383 = vmatprep.subr.mxu0 0.0
      %384 = vmatpush1.msra.mxu0 %v360
      %385 = vmatprep.subr.mxu0 0.0
      %386 = vmatpush1.msra.mxu0 %v361
      %387 = vmatprep.subr.mxu0 0.0
      %388 = vmatpush1.msra.mxu0 %v362
      %389 = vmatprep.subr.mxu0 0.0
      %390 = vmatpush1.msra.mxu0 %v363
      %391 = vmatprep.subr.mxu0 0.0
      %392 = vmatpush1.msra.mxu0 %v364
      %393 = vmatprep.subr.mxu0 0.0
      %394 = vmatpush1.msra.mxu0 0.0
      %395 = vmatprep.subr.mxu0 0.0
      %396 = vmatpush1.msra.mxu0 0.0
      %397 = vmatprep.subr.mxu0 0.0
      %398 = vmatpush1.msra.mxu0 0.0
      %399 = vmatprep.subr.mxu0 0.0
      %400 = vmatpush1.msra.mxu0 0.0
      %401 = vmatprep.subr.mxu0 0.0
      %402 = vmatpush1.msra.mxu0 0.0
      %403 = vmatprep.subr.mxu0 0.0
      %404 = vmatpush1.msra.mxu0 0.0
      %405 = vmatprep.subr.mxu0 0.0
      %406 = vmatpush1.msra.mxu0 0.0
      %407 = vmatprep.subr.mxu0 0.0
      %408 = vmatpush1.msra.mxu0 0.0
      %409 = vmatprep.subr.mxu0 0.0
      %410 = vmatpush1.msra.mxu0 0.0
      %411 = vmatprep.subr.mxu0 0.0
      %412 = vmatpush1.msra.mxu0 0.0
      %413 = vmatprep.subr.mxu0 0.0
      %414 = vmatpush1.msra.mxu0 0.0
      %415 = vmatprep.subr.mxu0 0.0
      %416 = vmatpush1.msra.mxu0 0.0
      %417 = vmatprep.subr.mxu0 0.0
      %418 = vmatpush1.msra.mxu0 0.0
      %419 = vmatprep.subr.mxu0 0.0
      %420 = vmatpush1.msra.mxu0 0.0
      %421 = vmatprep.subr.mxu0 0.0
      %422 = vmatpush1.msra.mxu0 0.0
      %423 = vmatprep.subr.mxu0 0.0
      %424 = vmatpush1.msra.mxu0 0.0
      %425 = vmatprep.subr.mxu0 0.0
      %426 = vmatpush1.msra.mxu0 0.0
      %427 = vmatprep.subr.mxu0 0.0
      %428 = vmatpush1.msra.mxu0 0.0
      %429 = vmatprep.subr.mxu0 0.0
      %430 = vmatpush1.msra.mxu0 0.0
      %431 = vmatprep.subr.mxu0 0.0
      %432 = vmatpush1.msra.mxu0 0.0
      %433 = vmatprep.subr.mxu0 0.0
      %434 = vmatpush1.msra.mxu0 0.0
      %435 = vmatprep.subr.mxu0 0.0
      %436 = vmatpush1.msra.mxu0 0.0
      %437 = vmatprep.subr.mxu0 0.0
      %438 = vmatpush1.msra.mxu0 0.0
      %439 = vmatprep.mubr.f32.mxu0 0.0
      %440 = vmatmul.mubr.f32.gmra.mrb[0].mxu0 %v373
      %v441 = vpop.f32.mrb[0].mxu0
      %v442 = vadd.f32 %v369, %v441
      %v443 = vpop.f32.mrb[0].mxu0
      %444 = vdwg.mxu0
      %v445 = vmax.f32 %v442, 0.0
      %v446 = vld [vmem:[%s4] sm:$0xff]
      %v447 = vld [vmem:[%s342] sm:$0xff]
      %vm448 = vcmask 64512
      %v450 = vsel %vm448, %v446, 0
      %452 = vmatprep.subr.mxu0 0.0
      %453 = vmatpush1.msra.mxu0 %v447
      %454 = vmatprep.subr.mxu0 0.0
      %455 = vmatpush1.msra.mxu0 0.0
      %456 = vmatprep.subr.mxu0 0.0
      %457 = vmatpush1.msra.mxu0 0.0
      %458 = vmatprep.subr.mxu0 0.0
      %459 = vmatpush1.msra.mxu0 0.0
      %460 = vmatprep.subr.mxu0 0.0
      %461 = vmatpush1.msra.mxu0 0.0
      %462 = vmatprep.subr.mxu0 0.0
      %463 = vmatpush1.msra.mxu0 0.0
      %464 = vmatprep.subr.mxu0 0.0
      %465 = vmatpush1.msra.mxu0 0.0
      %466 = vmatprep.subr.mxu0 0.0
      %467 = vmatpush1.msra.mxu0 0.0
      %468 = vmatprep.subr.mxu0 0.0
      %469 = vmatpush1.msra.mxu0 0.0
      %470 = vmatprep.subr.mxu0 0.0
      %471 = vmatpush1.msra.mxu0 0.0
      %472 = vmatprep.subr.mxu0 0.0
      %473 = vmatpush1.msra.mxu0 0.0
      %474 = vmatprep.subr.mxu0 0.0
      %475 = vmatpush1.msra.mxu0 0.0
      %476 = vmatprep.subr.mxu0 0.0
      %477 = vmatpush1.msra.mxu0 0.0
      %478 = vmatprep.subr.mxu0 0.0
      %479 = vmatpush1.msra.mxu0 0.0
      %480 = vmatprep.subr.mxu0 0.0
      %481 = vmatpush1.msra.mxu0 0.0
      %482 = vmatprep.subr.mxu0 0.0
      %483 = vmatpush1.msra.mxu0 0.0
      %484 = vmatprep.subr.mxu0 0.0
      %485 = vmatpush1.msra.mxu0 0.0
      %486 = vmatprep.subr.mxu0 0.0
      %487 = vmatpush1.msra.mxu0 0.0
      %488 = vmatprep.subr.mxu0 0.0
      %489 = vmatpush1.msra.mxu0 0.0
      %490 = vmatprep.subr.mxu0 0.0
      %491 = vmatpush1.msra.mxu0 0.0
      %492 = vmatprep.subr.mxu0 0.0
      %493 = vmatpush1.msra.mxu0 0.0
      %494 = vmatprep.subr.mxu0 0.0
      %495 = vmatpush1.msra.mxu0 0.0
      %496 = vmatprep.subr.mxu0 0.0
      %497 = vmatpush1.msra.mxu0 0.0
      %498 = vmatprep.subr.mxu0 0.0
      %499 = vmatpush1.msra.mxu0 0.0
      %500 = vmatprep.subr.mxu0 0.0
      %501 = vmatpush1.msra.mxu0 0.0
      %502 = vmatprep.subr.mxu0 0.0
      %503 = vmatpush1.msra.mxu0 0.0
      %504 = vmatprep.subr.mxu0 0.0
      %505 = vmatpush1.msra.mxu0 0.0
      %506 = vmatprep.subr.mxu0 0.0
      %507 = vmatpush1.msra.mxu0 0.0
      %508 = vmatprep.subr.mxu0 0.0
      %509 = vmatpush1.msra.mxu0 0.0
      %510 = vmatprep.subr.mxu0 0.0
      %511 = vmatpush1.msra.mxu0 0.0
      %512 = vmatprep.subr.mxu0 0.0
      %513 = vmatpush1.msra.mxu0 0.0
      %514 = vmatprep.subr.mxu0 0.0
      %515 = vmatpush1.msra.mxu0 0.0
      %516 = vmatprep.mubr.f32.mxu0 0.0
      %517 = vmatmul.mubr.f32.gmra.mrb[0].mxu0 %v450
      %v518 = vpop.f32.mrb[0].mxu0
      %v519 = vadd.f32 0.0, %v518
      %v520 = vpop.f32.mrb[0].mxu0
      %521 = vdwg.mxu0
      %v522 = vadd.f32 %v445, %v519
      %v523 = vld [vmem:[%s5] sm:$0xff]
      %525 = vset.pattern.permute.xlu0 0
      %526 = vperm.xlu0 %525, %v523
      %v527 = vpop.permute.xlu0 %526
      %v529 = vadd.f32 %v522, %v527
      %v530 = vld [vmem:[%s346] sm:$0xff]
      %v531 = vld [vmem:[%s350] sm:$0xff]
      %vm532 = vcmask 130048
      %v533 = vsel %vm532, %v529, 0.0
      %534 = vadd.xlane.f32.xlu0 %v533
      %v535 = vpop.xlane.xlu0 %534
      %v536 = vrcp.pop 16.0
      %v537 = vmul.f32 %v535, %v536
      %v538 = vsub.f32 %v529, %v537
      %v539 = vmul.f32 %v538, %v538
      %v540 = vsel %vm532, %v539, 0.0
      %541 = vadd.xlane.f32.xlu0 %v540
      %v542 = vpop.xlane.xlu0 %541
      %v543 = vmul.f32 %v542, %v536
      %v544 = vadd.f32 %v543, 1e-05
      %v545 = vrsqrt.pop %v544
      %v546 = vmul.f32 %v538, %v545
      %v547 = vmul.f32 %v530, %v546
      %v548 = vadd.f32 %v547, %v531
      %549 = vst.msk [vmem:[%s354] sm:$0xff] %vm532, %v548
      %p550 = scmp.lt.s32.totalorder %s19, 1
      %s551 = scalar_select %p550, %s19, 1
      %s552 = smul.addr %s551, 8
      %s553 = scalar_lea.vmem %s8, %s552
      // Predicated region
      $region53: #{style_decoder_forward.10} parent=51 // pred_check
        %p554 = pneg %p225
      $region54: #{style_decoder_forward.10} parent=51 // pred_check_branch
        %556 = sbr.rel (%p554) target = $region56
      $region55: #{style_decoder_forward.10} parent=51 // pred_region
        _
      $region56: #{style_decoder_forward.10} parent=51 // pred_fallthru
        _
    $region52: #{style_decoder_forward.10} parent=5 // pred_fallthru
      _
    %p557 = scmp.le.s32.totalorder 2, %s14
    // Predicated region
    $region57: #{style_decoder_forward.10} parent=5 // pred_check
      %p558 = pneg %p557
    $region58: #{style_decoder_forward.10} parent=5 // pred_check_branch
      %560 = sbr.rel (%p558) target = $region60
    $region59: #{style_decoder_forward.10} parent=5 // pred_region
      %s561 = ssub.s32 %s14, 2
      // Predicated region
      $region61: #{style_decoder_forward.10} parent=59 // pred_check
        %p562 = pneg %p231
      $region62: #{style_decoder_forward.10} parent=59 // pred_check_branch
        %564 = sbr.rel (%p562) target = $region64
      $region63: #{style_decoder_forward.10} parent=59 // pred_region
        %p565 = scmp.lt.s32.totalorder %s20, 1
        %s566 = scalar_select %p565, %s20, 1
        %s567 = smul.addr %s566, 8
        %s568 = scalar_lea.vmem %s8, %s567
      $region64: #{style_decoder_forward.10} parent=59 // pred_fallthru
        _
    $region60: #{style_decoder_forward.10} parent=5 // pred_fallthru
      _
  $region6: #{style_decoder_forward.10} parent=0 // loop_footer
    %s18 = sadd.s32 1, %s14
  $region7: #{style_decoder_forward.10} parent=0 // loop_footer_branch
    %13 = sbr.rel target = $region3
  $region8: #{style_decoder_forward.10} parent=0 // loop_exit
    _

// kernel: style_decoder_forward.7
$region0: #{style_decoder_forward.7}
  #allocation0 [shape = 'u32[]', space=smem, size = 0x4, offset = 0x4, fixed_abs, tag = 'smem constant byte address 0x4 - core index']
  #allocation1 [shape = 'u32[144,128]{1,0:T(1,128)}', space=vmem, size = 0x12000, scoped, tag = 'internal scratch']
  %s0 = inlined_call_operand.hbm [shape: f32[2,64], index: 0, kind: input, shape index: {}]
  %s1 = inlined_call_operand.hbm [shape: f32[64,64], index: 1, kind: input, shape index: {}]
  %s2 = inlined_call_operand.hbm [shape: f32[1,64], index: 2, kind: input, shape index: {}]
  %s3 = inlined_call_operand.hbm [shape: f32[64,64], index: 3, kind: input, shape index: {}]
  %s4 = inlined_call_operand.hbm [shape: f32[1,64], index: 4, kind: input, shape index: {}]
  %s5 = inlined_call_operand.hbm [shape: f32[64,64], index: 5, kind: input, shape index: {}]
  %s6 = inlined_call_operand.hbm [shape: f32[1,64], index: 6, kind: input, shape index: {}]
  %s7 = inlined_call_operand.hbm [shape: f32[64,9040], index: 7, kind: input, shape index: {}]
  %s8 = inlined_call_operand.hbm [shape: f32[1,9040], index: 8, kind: input, shape index: {}]
  %s9 = inlined_call_operand.vmem [shape: f32[2,9040], index: 9, kind: output, shape index: {}]
  %s10 = sld [smem:[#allocation0]]
  $region82: #{style_decoder_forward.7} parent=0
    _
  %s12 = ssub.s32 1, %s10
  %s13 = scalar_select 0, %s12, %s10
  $region1: #{style_decoder_forward.7} parent=0
    #allocation2 [shape = 'u8[1024]{0}', space=vmem, size = 0x400, scoped, tag = 'input window, operand 0, single buffered']
    #allocation3 [shape = 's32[1]{0}', space=sflag, size = 0x4, scoped, tag = 'scoped memory for style_decoder_forward.7']
    #allocation4 [shape = 'u8[32768]{0}', space=vmem, size = 0x8000, scoped, tag = 'input window, operand 1, single buffered']
    #allocation5 [shape = 's32[1]{0}', space=sflag, size = 0x4, scoped, tag = 'scoped memory for style_decoder_forward.7']
    #allocation6 [shape = 'u8[512]{0}', space=vmem, size = 0x400, scoped, tag = 'input window, operand 2, single buffered']
    #allocation7 [shape = 'u8[32768]{0}', space=vmem, size = 0x8000, scoped, tag = 'input window, operand 3, single buffered']
    #allocation8 [shape = 's32[1]{0}', space=sflag, size = 0x4, scoped, tag = 'scoped memory for style_decoder_forward.7']
    #allocation9 [shape = 'u8[512]{0}', space=vmem, size = 0x400, scoped, tag = 'input window, operand 4, single buffered']
    #allocation10 [shape = 'u8[32768]{0}', space=vmem, size = 0x8000, scoped, tag = 'input window, operand 5, single buffered']
    #allocation11 [shape = 's32[1]{0}', space=sflag, size = 0x4, scoped, tag = 'scoped memory for style_decoder_forward.7']
    #allocation12 [shape = 'u8[512]{0}', space=vmem, size = 0x400, scoped, tag = 'input window, operand 6, single buffered']
    #allocation13 [shape = 'u8[2326528]{0}', space=vmem, size = 0x238000, scoped, tag = 'input window, operand 7, single buffered']
    #allocation14 [shape = 's32[1]{0}', space=sflag, size = 0x4, scoped, tag = 'scoped memory for style_decoder_forward.7']
    #allocation15 [shape = 'u8[36352]{0}', space=vmem, size = 0x9000, scoped, tag = 'input window, operand 8, single buffered']
    %14 = vsyncpa [#allocation3], 0
    %15 = vsyncpa [#allocation5], 0
    %16 = vsyncpa [#allocation8], 0
    %17 = vsyncpa [#allocation11], 0
    %18 = vsyncpa [#allocation14], 0
    // Predicated region
    $region2: #{style_decoder_forward.7} parent=1 // pred_check
      _
    $region3: #{style_decoder_forward.7} parent=1 // pred_check_branch
      %20 = sbr.rel (0) target = $region5
    $region4: #{style_decoder_forward.7} parent=1 // pred_region
      %s22 = ssub.s32 32, 32
      %23 = vsyncadd [#allocation3], %s22
      %s25 = sshll.u32 [#allocation2], 4
      %s26 = int_to_ptr.vmem [resolvable:$true] %s25
      %28 = dma.hbm_to_vmem [thread:$0]  %s0, 32, %s26, [#allocation3]
    $region5: #{style_decoder_forward.7} parent=1 // pred_fallthru
      _
    // Predicated region
    $region6: #{style_decoder_forward.7} parent=1 // pred_check
      _
    $region7: #{style_decoder_forward.7} parent=1 // pred_check_branch
      %30 = sbr.rel (0) target = $region9
    $region8: #{style_decoder_forward.7} parent=1 // pred_region
      %s32 = ssub.s32 1024, 1024
      %33 = vsyncadd [#allocation5], %s32
      %s34 = sshll.u32 [#allocation4], 4
      %s35 = int_to_ptr.vmem [resolvable:$true] %s34
      %40 = dma.hbm_to_vmem [thread:$0]  %s1, 1024, %s35, [#allocation5], 128, 128, 8
    $region9: #{style_decoder_forward.7} parent=1 // pred_fallthru
      _
    // Predicated region
    $region10: #{style_decoder_forward.7} parent=1 // pred_check
      _
    $region11: #{style_decoder_forward.7} parent=1 // pred_check_branch
      %42 = sbr.rel (0) target = $region13
    $region12: #{style_decoder_forward.7} parent=1 // pred_region
      %s44 = ssub.s32 16, 16
      %45 = vsyncadd [#allocation5], %s44
      %s47 = sshll.u32 [#allocation6], 4
      %s48 = int_to_ptr.vmem [resolvable:$true] %s47
      %50 = dma.hbm_to_vmem [thread:$0]  %s2, 16, %s48, [#allocation5]
    $region13: #{style_decoder_forward.7} parent=1 // pred_fallthru
      _
    // Predicated region
    $region14: #{style_decoder_forward.7} parent=1 // pred_check
      _
    $region15: #{style_decoder_forward.7} parent=1 // pred_check_branch
      %52 = sbr.rel (0) target = $region17
    $region16: #{style_decoder_forward.7} parent=1 // pred_region
      %s54 = ssub.s32 1024, 1024
      %55 = vsyncadd [#allocation8], %s54
      %s56 = sshll.u32 [#allocation7], 4
      %s57 = int_to_ptr.vmem [resolvable:$true] %s56
      %62 = dma.hbm_to_vmem [thread:$0]  %s3, 1024, %s57, [#allocation8], 128, 128, 8
    $region17: #{style_decoder_forward.7} parent=1 // pred_fallthru
      _
    // Predicated region
    $region18: #{style_decoder_forward.7} parent=1 // pred_check
      _
    $region19: #{style_decoder_forward.7} parent=1 // pred_check_branch
      %64 = sbr.rel (0) target = $region21
    $region20: #{style_decoder_forward.7} parent=1 // pred_region
      %s66 = ssub.s32 16, 16
      %67 = vsyncadd [#allocation8], %s66
      %s69 = sshll.u32 [#allocation9], 4
      %s70 = int_to_ptr.vmem [resolvable:$true] %s69
      %72 = dma.hbm_to_vmem [thread:$0]  %s4, 16, %s70, [#allocation8]
    $region21: #{style_decoder_forward.7} parent=1 // pred_fallthru
      _
    // Predicated region
    $region22: #{style_decoder_forward.7} parent=1 // pred_check
      _
    $region23: #{style_decoder_forward.7} parent=1 // pred_check_branch
      %74 = sbr.rel (0) target = $region25
    $region24: #{style_decoder_forward.7} parent=1 // pred_region
      %s76 = ssub.s32 1024, 1024
      %77 = vsyncadd [#allocation11], %s76
      %s78 = sshll.u32 [#allocation10], 4
      %s79 = int_to_ptr.vmem [resolvable:$true] %s78
      %84 = dma.hbm_to_vmem [thread:$0]  %s5, 1024, %s79, [#allocation11], 128, 128, 8
    $region25: #{style_decoder_forward.7} parent=1 // pred_fallthru
      _
    // Predicated region
    $region26: #{style_decoder_forward.7} parent=1 // pred_check
      _
    $region27: #{style_decoder_forward.7} parent=1 // pred_check_branch
      %86 = sbr.rel (0) target = $region29
    $region28: #{style_decoder_forward.7} parent=1 // pred_region
      %s88 = ssub.s32 16, 16
      %89 = vsyncadd [#allocation11], %s88
      %s91 = sshll.u32 [#allocation12], 4
      %s92 = int_to_ptr.vmem [resolvable:$true] %s91
      %94 = dma.hbm_to_vmem [thread:$0]  %s6, 16, %s92, [#allocation11]
    $region29: #{style_decoder_forward.7} parent=1 // pred_fallthru
      _
    // Predicated region
    $region30: #{style_decoder_forward.7} parent=1 // pred_check
      _
    $region31: #{style_decoder_forward.7} parent=1 // pred_check_branch
      %96 = sbr.rel (0) target = $region33
    $region32: #{style_decoder_forward.7} parent=1 // pred_region
      %s98 = ssub.s32 72704, 72704
      %99 = vsyncadd [#allocation14], %s98
      %s100 = sshll.u32 [#allocation13], 4
      %s101 = int_to_ptr.vmem [resolvable:$true] %s100
      %106 = dma.hbm_to_vmem [thread:$0]  %s7, 72704, %s101, [#allocation14], 9088, 9088, 568
    $region33: #{style_decoder_forward.7} parent=1 // pred_fallthru
      _
    // Predicated region
    $region34: #{style_decoder_forward.7} parent=1 // pred_check
      _
    $region35: #{style_decoder_forward.7} parent=1 // pred_check_branch
      %108 = sbr.rel (0) target = $region37
    $region36: #{style_decoder_forward.7} parent=1 // pred_region
      %s110 = ssub.s32 1136, 1136
      %111 = vsyncadd [#allocation14], %s110
      %s113 = sshll.u32 [#allocation15], 4
      %s114 = int_to_ptr.vmem [resolvable:$true] %s113
      %116 = dma.hbm_to_vmem [thread:$0]  %s8, 1136, %s114, [#allocation14]
    $region37: #{style_decoder_forward.7} parent=1 // pred_fallthru
      _
    // Predicated region
    $region38: #{style_decoder_forward.7} parent=1 // pred_check
      _
    $region39: #{style_decoder_forward.7} parent=1 // pred_check_branch
      %118 = sbr.rel (0) target = $region41
    $region40: #{style_decoder_forward.7} parent=1 // pred_region
      %119 = dma.done [#allocation3], 32
    $region41: #{style_decoder_forward.7} parent=1 // pred_fallthru
      _
    // Predicated region
    $region42: #{style_decoder_forward.7} parent=1 // pred_check
      _
    $region43: #{style_decoder_forward.7} parent=1 // pred_check_branch
      %121 = sbr.rel (0) target = $region45
    $region44: #{style_decoder_forward.7} parent=1 // pred_region
      %122 = dma.done [#allocation5], 1024
    $region45: #{style_decoder_forward.7} parent=1 // pred_fallthru
      _
    // Predicated region
    $region46: #{style_decoder_forward.7} parent=1 // pred_check
      _
    $region47: #{style_decoder_forward.7} parent=1 // pred_check_branch
      %124 = sbr.rel (0) target = $region49
    $region48: #{style_decoder_forward.7} parent=1 // pred_region
      %125 = dma.done [#allocation5], 16
    $region49: #{style_decoder_forward.7} parent=1 // pred_fallthru
      _
    // Predicated region
    $region50: #{style_decoder_forward.7} parent=1 // pred_check
      _
    $region51: #{style_decoder_forward.7} parent=1 // pred_check_branch
      %127 = sbr.rel (0) target = $region53
    $region52: #{style_decoder_forward.7} parent=1 // pred_region
      %128 = dma.done [#allocation8], 1024
    $region53: #{style_decoder_forward.7} parent=1 // pred_fallthru
      _
    // Predicated region
    $region54: #{style_decoder_forward.7} parent=1 // pred_check
      _
    $region55: #{style_decoder_forward.7} parent=1 // pred_check_branch
      %130 = sbr.rel (0) target = $region57
    $region56: #{style_decoder_forward.7} parent=1 // pred_region
      %131 = dma.done [#allocation8], 16
    $region57: #{style_decoder_forward.7} parent=1 // pred_fallthru
      _
    // Predicated region
    $region58: #{style_decoder_forward.7} parent=1 // pred_check
      _
    $region59: #{style_decoder_forward.7} parent=1 // pred_check_branch
      %133 = sbr.rel (0) target = $region61
    $region60: #{style_decoder_forward.7} parent=1 // pred_region
      %134 = dma.done [#allocation11], 1024
    $region61: #{style_decoder_forward.7} parent=1 // pred_fallthru
      _
    // Predicated region
    $region62: #{style_decoder_forward.7} parent=1 // pred_check
      _
    $region63: #{style_decoder_forward.7} parent=1 // pred_check_branch
      %136 = sbr.rel (0) target = $region65
    $region64: #{style_decoder_forward.7} parent=1 // pred_region
      %137 = dma.done [#allocation11], 16
    $region65: #{style_decoder_forward.7} parent=1 // pred_fallthru
      _
    // Predicated region
    $region66: #{style_decoder_forward.7} parent=1 // pred_check
      _
    $region67: #{style_decoder_forward.7} parent=1 // pred_check_branch
      %139 = sbr.rel (0) target = $region69
    $region68: #{style_decoder_forward.7} parent=1 // pred_region
      %140 = dma.done [#allocation14], 72704
    $region69: #{style_decoder_forward.7} parent=1 // pred_fallthru
      _
    // Predicated region
    $region70: #{style_decoder_forward.7} parent=1 // pred_check
      _
    $region71: #{style_decoder_forward.7} parent=1 // pred_check_branch
      %142 = sbr.rel (0) target = $region73
    $region72: #{style_decoder_forward.7} parent=1 // pred_region
      %143 = dma.done [#allocation14], 1136
    $region73: #{style_decoder_forward.7} parent=1 // pred_fallthru
      _
    %v144 = vld [vmem:[#allocation2] sm:$0x3]
    %v145 = vld [vmem:[#allocation4] sm:$0xff]
    %v146 = vld [vmem:[#allocation4 + $0x8] sm:$0xff]
    %v147 = vld [vmem:[#allocation4 + $0x10] sm:$0xff]
    %v148 = vld [vmem:[#allocation4 + $0x18] sm:$0xff]
    %v149 = vld [vmem:[#allocation4 + $0x20] sm:$0xff]
    %v150 = vld [vmem:[#allocation4 + $0x28] sm:$0xff]
    %v151 = vld [vmem:[#allocation4 + $0x30] sm:$0xff]
    %v152 = vld [vmem:[#allocation4 + $0x38] sm:$0xff]
    %v153 = vld [vmem:[#allocation6] sm:$0x1]
    %v155 = vlaneseq
    %v156 = vshrl.u32 %v155, 7
    %v157 = vsub.s32 0, %v156
    %v158 = vrot.slane %v153, %v157
    %vm160 = vcmask 523264
    %v162 = vsel %vm160, %v144, 0
    %164 = vmatprep.subr.mxu0 0.0
    %165 = vmatpush1.msra.mxu0 %v145
    %166 = vmatprep.subr.mxu0 0.0
    %167 = vmatpush1.msra.mxu0 %v146
    %168 = vmatprep.subr.mxu0 0.0
    %169 = vmatpush1.msra.mxu0 %v147
    %170 = vmatprep.subr.mxu0 0.0
    %171 = vmatpush1.msra.mxu0 %v148
    %172 = vmatprep.subr.mxu0 0.0
    %173 = vmatpush1.msra.mxu0 %v149
    %174 = vmatprep.subr.mxu0 0.0
    %175 = vmatpush1.msra.mxu0 %v150
    %176 = vmatprep.subr.mxu0 0.0
    %177 = vmatpush1.msra.mxu0 %v151
    %178 = vmatprep.subr.mxu0 0.0
    %179 = vmatpush1.msra.mxu0 %v152
    %180 = vmatprep.subr.mxu0 0.0
    %181 = vmatpush1.msra.mxu0 0.0
    %182 = vmatprep.subr.mxu0 0.0
    %183 = vmatpush1.msra.mxu0 0.0
    %184 = vmatprep.subr.mxu0 0.0
    %185 = vmatpush1.msra.mxu0 0.0
    %186 = vmatprep.subr.mxu0 0.0
    %187 = vmatpush1.msra.mxu0 0.0
    %188 = vmatprep.subr.mxu0 0.0
    %189 = vmatpush1.msra.mxu0 0.0
    %190 = vmatprep.subr.mxu0 0.0
    %191 = vmatpush1.msra.mxu0 0.0
    %192 = vmatprep.subr.mxu0 0.0
    %193 = vmatpush1.msra.mxu0 0.0
    %194 = vmatprep.subr.mxu0 0.0
    %195 = vmatpush1.msra.mxu0 0.0
    %196 = vmatprep.subr.mxu0 0.0
    %197 = vmatpush1.msra.mxu0 0.0
    %198 = vmatprep.subr.mxu0 0.0
    %199 = vmatpush1.msra.mxu0 0.0
    %200 = vmatprep.subr.mxu0 0.0
    %201 = vmatpush1.msra.mxu0 0.0
    %202 = vmatprep.subr.mxu0 0.0
    %203 = vmatpush1.msra.mxu0 0.0
    %204 = vmatprep.subr.mxu0 0.0
    %205 = vmatpush1.msra.mxu0 0.0
    %206 = vmatprep.subr.mxu0 0.0
    %207 = vmatpush1.msra.mxu0 0.0
    %208 = vmatprep.subr.mxu0 0.0
    %209 = vmatpush1.msra.mxu0 0.0
    %210 = vmatprep.subr.mxu0 0.0
    %211 = vmatpush1.msra.mxu0 0.0
    %212 = vmatprep.subr.mxu0 0.0
    %213 = vmatpush1.msra.mxu0 0.0
    %214 = vmatprep.subr.mxu0 0.0
    %215 = vmatpush1.msra.mxu0 0.0
    %216 = vmatprep.subr.mxu0 0.0
    %217 = vmatpush1.msra.mxu0 0.0
    %218 = vmatprep.subr.mxu0 0.0
    %219 = vmatpush1.msra.mxu0 0.0
    %220 = vmatprep.subr.mxu0 0.0
    %221 = vmatpush1.msra.mxu0 0.0
    %222 = vmatprep.subr.mxu0 0.0
    %223 = vmatpush1.msra.mxu0 0.0
    %224 = vmatprep.subr.mxu0 0.0
    %225 = vmatpush1.msra.mxu0 0.0
    %226 = vmatprep.subr.mxu0 0.0
    %227 = vmatpush1.msra.mxu0 0.0
    %228 = vmatprep.mubr.f32.mxu0 0.0
    %229 = vmatmul.mubr.f32.gmra.mrb[0].mxu0 %v162
    %v230 = vpop.f32.mrb[0].mxu0
    %v231 = vadd.f32 %v158, %v230
    %v232 = vpop.f32.mrb[0].mxu0
    %233 = vdwg.mxu0
    %v234 = vmax.f32 %v231, 0.0
    %v235 = vld [vmem:[#allocation7] sm:$0xff]
    %v236 = vld [vmem:[#allocation7 + $0x8] sm:$0xff]
    %v237 = vld [vmem:[#allocation7 + $0x10] sm:$0xff]
    %v238 = vld [vmem:[#allocation7 + $0x18] sm:$0xff]
    %v239 = vld [vmem:[#allocation7 + $0x20] sm:$0xff]
    %v240 = vld [vmem:[#allocation7 + $0x28] sm:$0xff]
    %v241 = vld [vmem:[#allocation7 + $0x30] sm:$0xff]
    %v242 = vld [vmem:[#allocation7 + $0x38] sm:$0xff]
    %v243 = vld [vmem:[#allocation9] sm:$0x1]
    %v245 = vlaneseq
    %v246 = vshrl.u32 %v245, 7
    %v247 = vsub.s32 0, %v246
    %v248 = vrot.slane %v243, %v247
    %v251 = vsel %vm160, %v234, 0
    %253 = vmatprep.subr.mxu0 0.0
    %254 = vmatpush1.msra.mxu0 %v235
    %255 = vmatprep.subr.mxu0 0.0
    %256 = vmatpush1.msra.mxu0 %v236
    %257 = vmatprep.subr.mxu0 0.0
    %258 = vmatpush1.msra.mxu0 %v237
    %259 = vmatprep.subr.mxu0 0.0
    %260 = vmatpush1.msra.mxu0 %v238
    %261 = vmatprep.subr.mxu0 0.0
    %262 = vmatpush1.msra.mxu0 %v239
    %263 = vmatprep.subr.mxu0 0.0
    %264 = vmatpush1.msra.mxu0 %v240
    %265 = vmatprep.subr.mxu0 0.0
    %266 = vmatpush1.msra.mxu0 %v241
    %267 = vmatprep.subr.mxu0 0.0
    %268 = vmatpush1.msra.mxu0 %v242
    %269 = vmatprep.subr.mxu0 0.0
    %270 = vmatpush1.msra.mxu0 0.0
    %271 = vmatprep.subr.mxu0 0.0
    %272 = vmatpush1.msra.mxu0 0.0
    %273 = vmatprep.subr.mxu0 0.0
    %274 = vmatpush1.msra.mxu0 0.0
    %275 = vmatprep.subr.mxu0 0.0
    %276 = vmatpush1.msra.mxu0 0.0
    %277 = vmatprep.subr.mxu0 0.0
    %278 = vmatpush1.msra.mxu0 0.0
    %279 = vmatprep.subr.mxu0 0.0
    %280 = vmatpush1.msra.mxu0 0.0
    %281 = vmatprep.subr.mxu0 0.0
    %282 = vmatpush1.msra.mxu0 0.0
    %283 = vmatprep.subr.mxu0 0.0
    %284 = vmatpush1.msra.mxu0 0.0
    %285 = vmatprep.subr.mxu0 0.0
    %286 = vmatpush1.msra.mxu0 0.0
    %287 = vmatprep.subr.mxu0 0.0
    %288 = vmatpush1.msra.mxu0 0.0
    %289 = vmatprep.subr.mxu0 0.0
    %290 = vmatpush1.msra.mxu0 0.0
    %291 = vmatprep.subr.mxu0 0.0
    %292 = vmatpush1.msra.mxu0 0.0
    %293 = vmatprep.subr.mxu0 0.0
    %294 = vmatpush1.msra.mxu0 0.0
    %295 = vmatprep.subr.mxu0 0.0
    %296 = vmatpush1.msra.mxu0 0.0
    %297 = vmatprep.subr.mxu0 0.0
    %298 = vmatpush1.msra.mxu0 0.0
    %299 = vmatprep.subr.mxu0 0.0
    %300 = vmatpush1.msra.mxu0 0.0
    %301 = vmatprep.subr.mxu0 0.0
    %302 = vmatpush1.msra.mxu0 0.0
    %303 = vmatprep.subr.mxu0 0.0
    %304 = vmatpush1.msra.mxu0 0.0
    %305 = vmatprep.subr.mxu0 0.0
    %306 = vmatpush1.msra.mxu0 0.0
    %307 = vmatprep.subr.mxu0 0.0
    %308 = vmatpush1.msra.mxu0 0.0
    %309 = vmatprep.subr.mxu0 0.0
    %310 = vmatpush1.msra.mxu0 0.0
    %311 = vmatprep.subr.mxu0 0.0
    %312 = vmatpush1.msra.mxu0 0.0
    %313 = vmatprep.subr.mxu0 0.0
    %314 = vmatpush1.msra.mxu0 0.0
    %315 = vmatprep.subr.mxu0 0.0
    %316 = vmatpush1.msra.mxu0 0.0
    %317 = vmatprep.mubr.f32.mxu0 0.0
    %318 = vmatmul.mubr.f32.gmra.mrb[0].mxu0 %v251
    %v319 = vpop.f32.mrb[0].mxu0
    %v320 = vadd.f32 %v248, %v319
    %v321 = vpop.f32.mrb[0].mxu0
    %322 = vdwg.mxu0
    %v323 = vmax.f32 %v320, 0.0
    %v324 = vld [vmem:[#allocation10] sm:$0xff]
    %v325 = vld [vmem:[#allocation10 + $0x8] sm:$0xff]
    %v326 = vld [vmem:[#allocation10 + $0x10] sm:$0xff]
    %v327 = vld [vmem:[#allocation10 + $0x18] sm:$0xff]
    %v328 = vld [vmem:[#allocation10 + $0x20] sm:$0xff]
    %v329 = vld [vmem:[#allocation10 + $0x28] sm:$0xff]
    %v330 = vld [vmem:[#allocation10 + $0x30] sm:$0xff]
    %v331 = vld [vmem:[#allocation10 + $0x38] sm:$0xff]
    %v332 = vld [vmem:[#allocation12] sm:$0x1]
    %v334 = vlaneseq
    %v335 = vshrl.u32 %v334, 7
    %v336 = vsub.s32 0, %v335
    %v337 = vrot.slane %v332, %v336
    %v340 = vsel %vm160, %v323, 0
    %342 = vmatprep.subr.mxu0 0.0
    %343 = vmatpush1.msra.mxu0 %v324
    %344 = vmatprep.subr.mxu0 0.0
    %345 = vmatpush1.msra.mxu0 %v325
    %346 = vmatprep.subr.mxu0 0.0
    %347 = vmatpush1.msra.mxu0 %v326
    %348 = vmatprep.subr.mxu0 0.0
    %349 = vmatpush1.msra.mxu0 %v327
    %350 = vmatprep.subr.mxu0 0.0
    %351 = vmatpush1.msra.mxu0 %v328
    %352 = vmatprep.subr.mxu0 0.0
    %353 = vmatpush1.msra.mxu0 %v329
    %354 = vmatprep.subr.mxu0 0.0
    %355 = vmatpush1.msra.mxu0 %v330
    %356 = vmatprep.subr.mxu0 0.0
    %357 = vmatpush1.msra.mxu0 %v331
    %358 = vmatprep.subr.mxu0 0.0
    %359 = vmatpush1.msra.mxu0 0.0
    %360 = vmatprep.subr.mxu0 0.0
    %361 = vmatpush1.msra.mxu0 0.0
    %362 = vmatprep.subr.mxu0 0.0
    %363 = vmatpush1.msra.mxu0 0.0
    %364 = vmatprep.subr.mxu0 0.0
    %365 = vmatpush1.msra.mxu0 0.0
    %366 = vmatprep.subr.mxu0 0.0
    %367 = vmatpush1.msra.mxu0 0.0
    %368 = vmatprep.subr.mxu0 0.0
    %369 = vmatpush1.msra.mxu0 0.0
    %370 = vmatprep.subr.mxu0 0.0
    %371 = vmatpush1.msra.mxu0 0.0
    %372 = vmatprep.subr.mxu0 0.0
    %373 = vmatpush1.msra.mxu0 0.0
    %374 = vmatprep.subr.mxu0 0.0
    %375 = vmatpush1.msra.mxu0 0.0
    %376 = vmatprep.subr.mxu0 0.0
    %377 = vmatpush1.msra.mxu0 0.0
    %378 = vmatprep.subr.mxu0 0.0
    %379 = vmatpush1.msra.mxu0 0.0
    %380 = vmatprep.subr.mxu0 0.0
    %381 = vmatpush1.msra.mxu0 0.0
    %382 = vmatprep.subr.mxu0 0.0
    %383 = vmatpush1.msra.mxu0 0.0
    %384 = vmatprep.subr.mxu0 0.0
    %385 = vmatpush1.msra.mxu0 0.0
    %386 = vmatprep.subr.mxu0 0.0
    %387 = vmatpush1.msra.mxu0 0.0
    %388 = vmatprep.subr.mxu0 0.0
    %389 = vmatpush1.msra.mxu0 0.0
    %390 = vmatprep.subr.mxu0 0.0
    %391 = vmatpush1.msra.mxu0 0.0
    %392 = vmatprep.subr.mxu0 0.0
    %393 = vmatpush1.msra.mxu0 0.0
    %394 = vmatprep.subr.mxu0 0.0
    %395 = vmatpush1.msra.mxu0 0.0
    %396 = vmatprep.subr.mxu0 0.0
    %397 = vmatpush1.msra.mxu0 0.0
    %398 = vmatprep.subr.mxu0 0.0
    %399 = vmatpush1.msra.mxu0 0.0
    %400 = vmatprep.subr.mxu0 0.0
    %401 = vmatpush1.msra.mxu0 0.0
    %402 = vmatprep.subr.mxu0 0.0
    %403 = vmatpush1.msra.mxu0 0.0
    %404 = vmatprep.subr.mxu0 0.0
    %405 = vmatpush1.msra.mxu0 0.0
    %406 = vmatprep.mubr.f32.mxu0 0.0
    %407 = vmatmul.mubr.f32.gmra.mrb[0].mxu0 %v340
    %v408 = vpop.f32.mrb[0].mxu0
    %v409 = vadd.f32 %v337, %v408
    %v410 = vpop.f32.mrb[0].mxu0
    %411 = vdwg.mxu0
    %v412 = vmax.f32 %v409, 0.0
    %v413 = vld [vmem:[#allocation13] sm:$0xff]
    %v414 = vld [vmem:[#allocation13 + $0x8] sm:$0xff]
    %v415 = vld [vmem:[#allocation13 + $0x10] sm:$0xff]
    %v416 = vld [vmem:[#allocation13 + $0x18] sm:$0xff]
    %v417 = vld [vmem:[#allocation13 + $0x20] sm:$0xff]
    %v418 = vld [vmem:[#allocation13 + $0x28] sm:$0xff]
    %v419 = vld [vmem:[#allocation13 + $0x30] sm:$0xff]
    %v420 = vld [vmem:[#allocation13 + $0x38] sm:$0xff]
    %v421 = vld [vmem:[#allocation13 + $0x40] sm:$0xff]
    %v422 = vld [vmem:[#allocation13 + $0x48] sm:$0xff]
    %v423 = vld [vmem:[#allocation13 + $0x50] sm:$0xff]
    %v424 = vld [vmem:[#allocation13 + $0x58] sm:$0xff]
    %v425 = vld [vmem:[#allocation13 + $0x60] sm:$0xff]
    %v426 = vld [vmem:[#allocation13 + $0x68] sm:$0xff]
    %v427 = vld [vmem:[#allocation13 + $0x70] sm:$0xff]
    %v428 = vld [vmem:[#allocation13 + $0x78] sm:$0xff]
    %v429 = vld [vmem:[#allocation13 + $0x80] sm:$0xff]
    %v430 = vld [vmem:[#allocation13 + $0x88] sm:$0xff]
    %v431 = vld [vmem:[#allocation13 + $0x90] sm:$0xff]
    %v432 = vld [vmem:[#allocation13 + $0x98] sm:$0xff]
    %v433 = vld [vmem:[#allocation13 + $0xa0] sm:$0xff]
    %v434 = vld [vmem:[#allocation13 + $0xa8] sm:$0xff]
    %v435 = vld [vmem:[#allocation13 + $0xb0] sm:$0xff]
    %v436 = vld [vmem:[#allocation13 + $0xb8] sm:$0xff]
    %v437 = vld [vmem:[#allocation13 + $0xc0] sm:$0xff]
    %v438 = vld [vmem:[#allocation13 + $0xc8] sm:$0xff]
    %v439 = vld [vmem:[#allocation13 + $0xd0] sm:$0xff]
    %v440 = vld [vmem:[#allocation13 + $0xd8] sm:$0xff]
    %v441 = vld [vmem:[#allocation13 + $0xe0] sm:$0xff]
    %v442 = vld [vmem:[#allocation13 + $0xe8] sm:$0xff]
    %v443 = vld [vmem:[#allocation13 + $0xf0] sm:$0xff]
    %v444 = vld [vmem:[#allocation13 + $0xf8] sm:$0xff]
    %v445 = vld [vmem:[#allocation13 + $0x100] sm:$0xff]
    %v446 = vld [vmem:[#allocation13 + $0x108] sm:$0xff]
    %v447 = vld [vmem:[#allocation13 + $0x110] sm:$0xff]
    %v448 = vld [vmem:[#allocation13 + $0x118] sm:$0xff]
    %v449 = vld [vmem:[#allocation13 + $0x120] sm:$0xff]
    %v450 = vld [vmem:[#allocation13 + $0x128] sm:$0xff]
    %v451 = vld [vmem:[#allocation13 + $0x130] sm:$0xff]
    %v452 = vld [vmem:[#allocation13 + $0x138] sm:$0xff]
    %v453 = vld [vmem:[#allocation13 + $0x140] sm:$0xff]
    %v454 = vld [vmem:[#allocation13 + $0x148] sm:$0xff]
    %v455 = vld [vmem:[#allocation13 + $0x150] sm:$0xff]
    %v456 = vld [vmem:[#allocation13 + $0x158] sm:$0xff]
    %v457 = vld [vmem:[#allocation13 + $0x160] sm:$0xff]
    %v458 = vld [vmem:[#allocation13 + $0x168] sm:$0xff]
    %v459 = vld [vmem:[#allocation13 + $0x170] sm:$0xff]
    %v460 = vld [vmem:[#allocation13 + $0x178] sm:$0xff]
    %v461 = vld [vmem:[#allocation13 + $0x180] sm:$0xff]
    %v462 = vld [vmem:[#allocation13 + $0x188] sm:$0xff]
    %v463 = vld [vmem:[#allocation13 + $0x190] sm:$0xff]
    %v464 = vld [vmem:[#allocation13 + $0x198] sm:$0xff]
    %v465 = vld [vmem:[#allocation13 + $0x1a0] sm:$0xff]
    %v466 = vld [vmem:[#allocation13 + $0x1a8] sm:$0xff]
    %v467 = vld [vmem:[#allocation13 + $0x1b0] sm:$0xff]
    %v468 = vld [vmem:[#allocation13 + $0x1b8] sm:$0xff]
    %v469 = vld [vmem:[#allocation13 + $0x1c0] sm:$0xff]
    %v470 = vld [vmem:[#allocation13 + $0x1c8] sm:$0xff]
    %v471 = vld [vmem:[#allocation13 + $0x1d0] sm:$0xff]
    %v472 = vld [vmem:[#allocation13 + $0x1d8] sm:$0xff]
    %v473 = vld [vmem:[#allocation13 + $0x1e0] sm:$0xff]
    %v474 = vld [vmem:[#allocation13 + $0x1e8] sm:$0xff]
    %v475 = vld [vmem:[#allocation13 + $0x1f0] sm:$0xff]
    %v476 = vld [vmem:[#allocation13 + $0x1f8] sm:$0xff]
    %v477 = vld [vmem:[#allocation13 + $0x200] sm:$0xff]
    %v478 = vld [vmem:[#allocation13 + $0x208] sm:$0xff]
    %v479 = vld [vmem:[#allocation13 + $0x210] sm:$0xff]
    %v480 = vld [vmem:[#allocation13 + $0x218] sm:$0xff]
    %v481 = vld [vmem:[#allocation13 + $0x220] sm:$0xff]
    %v482 = vld [vmem:[#allocation13 + $0x228] sm:$0xff]
    %v483 = vld [vmem:[#allocation13 + $0x230] sm:$0xff]
    %v484 = vld [vmem:[#allocation13 + $0x238] sm:$0xff]
    %v485 = vld [vmem:[#allocation13 + $0x240] sm:$0xff]
    %v486 = vld [vmem:[#allocation13 + $0x248] sm:$0xff]
    %v487 = vld [vmem:[#allocation13 + $0x250] sm:$0xff]
    %v488 = vld [vmem:[#allocation13 + $0x258] sm:$0xff]
    %v489 = vld [vmem:[#allocation13 + $0x260] sm:$0xff]
    %v490 = vld [vmem:[#allocation13 + $0x268] sm:$0xff]
    %v491 = vld [vmem:[#allocation13 + $0x270] sm:$0xff]
    %v492 = vld [vmem:[#allocation13 + $0x278] sm:$0xff]
    %v493 = vld [vmem:[#allocation13 + $0x280] sm:$0xff]
    %v494 = vld [vmem:[#allocation13 + $0x288] sm:$0xff]
    %v495 = vld [vmem:[#allocation13 + $0x290] sm:$0xff]
    %v496 = vld [vmem:[#allocation13 + $0x298] sm:$0xff]
    %v497 = vld [vmem:[#allocation13 + $0x2a0] sm:$0xff]
    %v498 = vld [vmem:[#allocation13 + $0x2a8] sm:$0xff]
    %v499 = vld [vmem:[#allocation13 + $0x2b0] sm:$0xff]
    %v500 = vld [vmem:[#allocation13 + $0x2b8] sm:$0xff]
    %v501 = vld [vmem:[#allocation13 + $0x2c0] sm:$0xff]
    %v502 = vld [vmem:[#allocation13 + $0x2c8] sm:$0xff]
    %v503 = vld [vmem:[#allocation13 + $0x2d0] sm:$0xff]
    %v504 = vld [vmem:[#allocation13 + $0x2d8] sm:$0xff]
    %v505 = vld [vmem:[#allocation13 + $0x2e0] sm:$0xff]
    %v506 = vld [vmem:[#allocation13 + $0x2e8] sm:$0xff]
    %v507 = vld [vmem:[#allocation13 + $0x2f0] sm:$0xff]
    %v508 = vld [vmem:[#allocation13 + $0x2f8] sm:$0xff]
    %v509 = vld [vmem:[#allocation13 + $0x300] sm:$0xff]
    %v510 = vld [vmem:[#allocation13 + $0x308] sm:$0xff]
    %v511 = vld [vmem:[#allocation13 + $0x310] sm:$0xff]
    %v512 = vld [vmem:[#allocation13 + $0x318] sm:$0xff]
    %v513 = vld [vmem:[#allocation13 + $0x320] sm:$0xff]
    %v514 = vld [vmem:[#allocation13 + $0x328] sm:$0xff]
    %v515 = vld [vmem:[#allocation13 + $0x330] sm:$0xff]
    %v516 = vld [vmem:[#allocation13 + $0x338] sm:$0xff]
    %v517 = vld [vmem:[#allocation13 + $0x340] sm:$0xff]
    %v518 = vld [vmem:[#allocation13 + $0x348] sm:$0xff]
    %v519 = vld [vmem:[#allocation13 + $0x350] sm:$0xff]
    %v520 = vld [vmem:[#allocation13 + $0x358] sm:$0xff]
    %v521 = vld [vmem:[#allocation13 + $0x360] sm:$0xff]
    %v522 = vld [vmem:[#allocation13 + $0x368] sm:$0xff]
    %v523 = vld [vmem:[#allocation13 + $0x370] sm:$0xff]
    %v524 = vld [vmem:[#allocation13 + $0x378] sm:$0xff]
    %v525 = vld [vmem:[#allocation13 + $0x380] sm:$0xff]
    %v526 = vld [vmem:[#allocation13 + $0x388] sm:$0xff]
    %v527 = vld [vmem:[#allocation13 + $0x390] sm:$0xff]
    %v528 = vld [vmem:[#allocation13 + $0x398] sm:$0xff]
    %v529 = vld [vmem:[#allocation13 + $0x3a0] sm:$0xff]
    %v530 = vld [vmem:[#allocation13 + $0x3a8] sm:$0xff]
    %v531 = vld [vmem:[#allocation13 + $0x3b0] sm:$0xff]
    %v532 = vld [vmem:[#allocation13 + $0x3b8] sm:$0xff]
    %v533 = vld [vmem:[#allocation13 + $0x3c0] sm:$0xff]
    %v534 = vld [vmem:[#allocation13 + $0x3c8] sm:$0xff]
    %v535 = vld [vmem:[#allocation13 + $0x3d0] sm:$0xff]
    %v536 = vld [vmem:[#allocation13 + $0x3d8] sm:$0xff]
    %v537 = vld [vmem:[#allocation13 + $0x3e0] sm:$0xff]
    %v538 = vld [vmem:[#allocation13 + $0x3e8] sm:$0xff]
    %v539 = vld [vmem:[#allocation13 + $0x3f0] sm:$0xff]
    %v540 = vld [vmem:[#allocation13 + $0x3f8] sm:$0xff]
    %v541 = vld [vmem:[#allocation13 + $0x400] sm:$0xff]
    %v542 = vld [vmem:[#allocation13 + $0x408] sm:$0xff]
    %v543 = vld [vmem:[#allocation13 + $0x410] sm:$0xff]
    %v544 = vld [vmem:[#allocation13 + $0x418] sm:$0xff]
    %v545 = vld [vmem:[#allocation13 + $0x420] sm:$0xff]
    %v546 = vld [vmem:[#allocation13 + $0x428] sm:$0xff]
    %v547 = vld [vmem:[#allocation13 + $0x430] sm:$0xff]
    %v548 = vld [vmem:[#allocation13 + $0x438] sm:$0xff]
    %v549 = vld [vmem:[#allocation13 + $0x440] sm:$0xff]
    %v550 = vld [vmem:[#allocation13 + $0x448] sm:$0xff]
    %v551 = vld [vmem:[#allocation13 + $0x450] sm:$0xff]
    %v552 = vld [vmem:[#allocation13 + $0x458] sm:$0xff]
    %v553 = vld [vmem:[#allocation13 + $0x460] sm:$0xff]
    %v554 = vld [vmem:[#allocation13 + $0x468] sm:$0xff]
    %v555 = vld [vmem:[#allocation13 + $0x470] sm:$0xff]
    %v556 = vld [vmem:[#allocation13 + $0x478] sm:$0xff]
    %v557 = vld [vmem:[#allocation13 + $0x480] sm:$0xff]
    %v558 = vld [vmem:[#allocation13 + $0x488] sm:$0xff]
    %v559 = vld [vmem:[#allocation13 + $0x490] sm:$0xff]
    %v560 = vld [vmem:[#allocation13 + $0x498] sm:$0xff]
    %v561 = vld [vmem:[#allocation13 + $0x4a0] sm:$0xff]
    %v562 = vld [vmem:[#allocation13 + $0x4a8] sm:$0xff]
    %v563 = vld [vmem:[#allocation13 + $0x4b0] sm:$0xff]
    %v564 = vld [vmem:[#allocation13 + $0x4b8] sm:$0xff]
    %v565 = vld [vmem:[#allocation13 + $0x4c0] sm:$0xff]
    %v566 = vld [vmem:[#allocation13 + $0x4c8] sm:$0xff]
    %v567 = vld [vmem:[#allocation13 + $0x4d0] sm:$0xff]
    %v568 = vld [vmem:[#allocation13 + $0x4d8] sm:$0xff]
    %v569 = vld [vmem:[#allocation13 + $0x4e0] sm:$0xff]
    %v570 = vld [vmem:[#allocation13 + $0x4e8] sm:$0xff]
    %v571 = vld [vmem:[#allocation13 + $0x4f0] sm:$0xff]
    %v572 = vld [vmem:[#allocation13 + $0x4f8] sm:$0xff]
    %v573 = vld [vmem:[#allocation13 + $0x500] sm:$0xff]
    %v574 = vld [vmem:[#allocation13 + $0x508] sm:$0xff]
    %v575 = vld [vmem:[#allocation13 + $0x510] sm:$0xff]
    %v576 = vld [vmem:[#allocation13 + $0x518] sm:$0xff]
    %v577 = vld [vmem:[#allocation13 + $0x520] sm:$0xff]
    %v578 = vld [vmem:[#allocation13 + $0x528] sm:$0xff]
    %v579 = vld [vmem:[#allocation13 + $0x530] sm:$0xff]
    %v580 = vld [vmem:[#allocation13 + $0x538] sm:$0xff]
    %v581 = vld [vmem:[#allocation13 + $0x540] sm:$0xff]
    %v582 = vld [vmem:[#allocation13 + $0x548] sm:$0xff]
    %v583 = vld [vmem:[#allocation13 + $0x550] sm:$0xff]
    %v584 = vld [vmem:[#allocation13 + $0x558] sm:$0xff]
    %v585 = vld [vmem:[#allocation13 + $0x560] sm:$0xff]
    %v586 = vld [vmem:[#allocation13 + $0x568] sm:$0xff]
    %v587 = vld [vmem:[#allocation13 + $0x570] sm:$0xff]
    %v588 = vld [vmem:[#allocation13 + $0x578] sm:$0xff]
    %v589 = vld [vmem:[#allocation13 + $0x580] sm:$0xff]
    %v590 = vld [vmem:[#allocation13 + $0x588] sm:$0xff]
    %v591 = vld [vmem:[#allocation13 + $0x590] sm:$0xff]
    %v592 = vld [vmem:[#allocation13 + $0x598] sm:$0xff]
    %v593 = vld [vmem:[#allocation13 + $0x5a0] sm:$0xff]
    %v594 = vld [vmem:[#allocation13 + $0x5a8] sm:$0xff]
    %v595 = vld [vmem:[#allocation13 + $0x5b0] sm:$0xff]
    %v596 = vld [vmem:[#allocation13 + $0x5b8] sm:$0xff]
    %v597 = vld [vmem:[#allocation13 + $0x5c0] sm:$0xff]
    %v598 = vld [vmem:[#allocation13 + $0x5c8] sm:$0xff]
    %v599 = vld [vmem:[#allocation13 + $0x5d0] sm:$0xff]
    %v600 = vld [vmem:[#allocation13 + $0x5d8] sm:$0xff]
    %v601 = vld [vmem:[#allocation13 + $0x5e0] sm:$0xff]
    %v602 = vld [vmem:[#allocation13 + $0x5e8] sm:$0xff]
    %v603 = vld [vmem:[#allocation13 + $0x5f0] sm:$0xff]
    %v604 = vld [vmem:[#allocation13 + $0x5f8] sm:$0xff]
    %v605 = vld [vmem:[#allocation13 + $0x600] sm:$0xff]
    %v606 = vld [vmem:[#allocation13 + $0x608] sm:$0xff]
    %v607 = vld [vmem:[#allocation13 + $0x610] sm:$0xff]
    %v608 = vld [vmem:[#allocation13 + $0x618] sm:$0xff]
    %v609 = vld [vmem:[#allocation13 + $0x620] sm:$0xff]
    %v610 = vld [vmem:[#allocation13 + $0x628] sm:$0xff]
    %v611 = vld [vmem:[#allocation13 + $0x630] sm:$0xff]
    %v612 = vld [vmem:[#allocation13 + $0x638] sm:$0xff]
    %v613 = vld [vmem:[#allocation13 + $0x640] sm:$0xff]
    %v614 = vld [vmem:[#allocation13 + $0x648] sm:$0xff]
    %v615 = vld [vmem:[#allocation13 + $0x650] sm:$0xff]
    %v616 = vld [vmem:[#allocation13 + $0x658] sm:$0xff]
    %v617 = vld [vmem:[#allocation13 + $0x660] sm:$0xff]
    %v618 = vld [vmem:[#allocation13 + $0x668] sm:$0xff]
    %v619 = vld [vmem:[#allocation13 + $0x670] sm:$0xff]
    %v620 = vld [vmem:[#allocation13 + $0x678] sm:$0xff]
    %v621 = vld [vmem:[#allocation13 + $0x680] sm:$0xff]
    %v622 = vld [vmem:[#allocation13 + $0x688] sm:$0xff]
    %v623 = vld [vmem:[#allocation13 + $0x690] sm:$0xff]
    %v624 = vld [vmem:[#allocation13 + $0x698] sm:$0xff]
    %v625 = vld [vmem:[#allocation13 + $0x6a0] sm:$0xff]
    %v626 = vld [vmem:[#allocation13 + $0x6a8] sm:$0xff]
    %v627 = vld [vmem:[#allocation13 + $0x6b0] sm:$0xff]
    %v628 = vld [vmem:[#allocation13 + $0x6b8] sm:$0xff]
    %v629 = vld [vmem:[#allocation13 + $0x6c0] sm:$0xff]
    %v630 = vld [vmem:[#allocation13 + $0x6c8] sm:$0xff]
    %v631 = vld [vmem:[#allocation13 + $0x6d0] sm:$0xff]
    %v632 = vld [vmem:[#allocation13 + $0x6d8] sm:$0xff]
    %v633 = vld [vmem:[#allocation13 + $0x6e0] sm:$0xff]
    %v634 = vld [vmem:[#allocation13 + $0x6e8] sm:$0xff]
    %v635 = vld [vmem:[#allocation13 + $0x6f0] sm:$0xff]
    %v636 = vld [vmem:[#allocation13 + $0x6f8] sm:$0xff]
    %v637 = vld [vmem:[#allocation13 + $0x700] sm:$0xff]
    %v638 = vld [vmem:[#allocation13 + $0x708] sm:$0xff]
    %v639 = vld [vmem:[#allocation13 + $0x710] sm:$0xff]
    %v640 = vld [vmem:[#allocation13 + $0x718] sm:$0xff]
    %v641 = vld [vmem:[#allocation13 + $0x720] sm:$0xff]
    %v642 = vld [vmem:[#allocation13 + $0x728] sm:$0xff]
    %v643 = vld [vmem:[#allocation13 + $0x730] sm:$0xff]
    %v644 = vld [vmem:[#allocation13 + $0x738] sm:$0xff]
    %v645 = vld [vmem:[#allocation13 + $0x740] sm:$0xff]
    %v646 = vld [vmem:[#allocation13 + $0x748] sm:$0xff]
    %v647 = vld [vmem:[#allocation13 + $0x750] sm:$0xff]
    %v648 = vld [vmem:[#allocation13 + $0x758] sm:$0xff]
    %v649 = vld [vmem:[#allocation13 + $0x760] sm:$0xff]
    %v650 = vld [vmem:[#allocation13 + $0x768] sm:$0xff]
    %v651 = vld [vmem:[#allocation13 + $0x770] sm:$0xff]
    %v652 = vld [vmem:[#allocation13 + $0x778] sm:$0xff]
    %v653 = vld [vmem:[#allocation13 + $0x780] sm:$0xff]
    %v654 = vld [vmem:[#allocation13 + $0x788] sm:$0xff]
    %v655 = vld [vmem:[#allocation13 + $0x790] sm:$0xff]
    %v656 = vld [vmem:[#allocation13 + $0x798] sm:$0xff]
    %v657 = vld [vmem:[#allocation13 + $0x7a0] sm:$0xff]
    %v658 = vld [vmem:[#allocation13 + $0x7a8] sm:$0xff]
    %v659 = vld [vmem:[#allocation13 + $0x7b0] sm:$0xff]
    %v660 = vld [vmem:[#allocation13 + $0x7b8] sm:$0xff]
    %v661 = vld [vmem:[#allocation13 + $0x7c0] sm:$0xff]
    %v662 = vld [vmem:[#allocation13 + $0x7c8] sm:$0xff]
    %v663 = vld [vmem:[#allocation13 + $0x7d0] sm:$0xff]
    %v664 = vld [vmem:[#allocation13 + $0x7d8] sm:$0xff]
    %v665 = vld [vmem:[#allocation13 + $0x7e0] sm:$0xff]
    %v666 = vld [vmem:[#allocation13 + $0x7e8] sm:$0xff]
    %v667 = vld [vmem:[#allocation13 + $0x7f0] sm:$0xff]
    %v668 = vld [vmem:[#allocation13 + $0x7f8] sm:$0xff]
    %v669 = vld [vmem:[#allocation13 + $0x800] sm:$0xff]
    %v670 = vld [vmem:[#allocation13 + $0x808] sm:$0xff]
    %v671 = vld [vmem:[#allocation13 + $0x810] sm:$0xff]
    %v672 = vld [vmem:[#allocation13 + $0x818] sm:$0xff]
    %v673 = vld [vmem:[#allocation13 + $0x820] sm:$0xff]
    %v674 = vld [vmem:[#allocation13 + $0x828] sm:$0xff]
    %v675 = vld [vmem:[#allocation13 + $0x830] sm:$0xff]
    %v676 = vld [vmem:[#allocation13 + $0x838] sm:$0xff]
    %v677 = vld [vmem:[#allocation13 + $0x840] sm:$0xff]
    %v678 = vld [vmem:[#allocation13 + $0x848] sm:$0xff]
    %v679 = vld [vmem:[#allocation13 + $0x850] sm:$0xff]
    %v680 = vld [vmem:[#allocation13 + $0x858] sm:$0xff]
    %v681 = vld [vmem:[#allocation13 + $0x860] sm:$0xff]
    %v682 = vld [vmem:[#allocation13 + $0x868] sm:$0xff]
    %v683 = vld [vmem:[#allocation13 + $0x870] sm:$0xff]
    %v684 = vld [vmem:[#allocation13 + $0x878] sm:$0xff]
    %v685 = vld [vmem:[#allocation13 + $0x880] sm:$0xff]
    %v686 = vld [vmem:[#allocation13 + $0x888] sm:$0xff]
    %v687 = vld [vmem:[#allocation13 + $0x890] sm:$0xff]
    %v688 = vld [vmem:[#allocation13 + $0x898] sm:$0xff]
    %v689 = vld [vmem:[#allocation13 + $0x8a0] sm:$0xff]
    %v690 = vld [vmem:[#allocation13 + $0x8a8] sm:$0xff]
    %v691 = vld [vmem:[#allocation13 + $0x8b0] sm:$0xff]
    %v692 = vld [vmem:[#allocation13 + $0x8b8] sm:$0xff]
    %v693 = vld [vmem:[#allocation13 + $0x8c0] sm:$0xff]
    %v694 = vld [vmem:[#allocation13 + $0x8c8] sm:$0xff]
    %v695 = vld [vmem:[#allocation13 + $0x8d0] sm:$0xff]
    %v696 = vld [vmem:[#allocation13 + $0x8d8] sm:$0xff]
    %v697 = vld [vmem:[#allocation13 + $0x8e0] sm:$0xff]
    %v698 = vld [vmem:[#allocation13 + $0x8e8] sm:$0xff]
    %v699 = vld [vmem:[#allocation13 + $0x8f0] sm:$0xff]
    %v700 = vld [vmem:[#allocation13 + $0x8f8] sm:$0xff]
    %v701 = vld [vmem:[#allocation13 + $0x900] sm:$0xff]
    %v702 = vld [vmem:[#allocation13 + $0x908] sm:$0xff]
    %v703 = vld [vmem:[#allocation13 + $0x910] sm:$0xff]
    %v704 = vld [vmem:[#allocation13 + $0x918] sm:$0xff]
    %v705 = vld [vmem:[#allocation13 + $0x920] sm:$0xff]
    %v706 = vld [vmem:[#allocation13 + $0x928] sm:$0xff]
    %v707 = vld [vmem:[#allocation13 + $0x930] sm:$0xff]
    %v708 = vld [vmem:[#allocation13 + $0x938] sm:$0xff]
    %v709 = vld [vmem:[#allocation13 + $0x940] sm:$0xff]
    %v710 = vld [vmem:[#allocation13 + $0x948] sm:$0xff]
    %v711 = vld [vmem:[#allocation13 + $0x950] sm:$0xff]
    %v712 = vld [vmem:[#allocation13 + $0x958] sm:$0xff]
    %v713 = vld [vmem:[#allocation13 + $0x960] sm:$0xff]
    %v714 = vld [vmem:[#allocation13 + $0x968] sm:$0xff]
    %v715 = vld [vmem:[#allocation13 + $0x970] sm:$0xff]
    %v716 = vld [vmem:[#allocation13 + $0x978] sm:$0xff]
    %v717 = vld [vmem:[#allocation13 + $0x980] sm:$0xff]
    %v718 = vld [vmem:[#allocation13 + $0x988] sm:$0xff]
    %v719 = vld [vmem:[#allocation13 + $0x990] sm:$0xff]
    %v720 = vld [vmem:[#allocation13 + $0x998] sm:$0xff]
    %v721 = vld [vmem:[#allocation13 + $0x9a0] sm:$0xff]
    %v722 = vld [vmem:[#allocation13 + $0x9a8] sm:$0xff]
    %v723 = vld [vmem:[#allocation13 + $0x9b0] sm:$0xff]
    %v724 = vld [vmem:[#allocation13 + $0x9b8] sm:$0xff]
    %v725 = vld [vmem:[#allocation13 + $0x9c0] sm:$0xff]
    %v726 = vld [vmem:[#allocation13 + $0x9c8] sm:$0xff]
    %v727 = vld [vmem:[#allocation13 + $0x9d0] sm:$0xff]
    %v728 = vld [vmem:[#allocation13 + $0x9d8] sm:$0xff]
    %v729 = vld [vmem:[#allocation13 + $0x9e0] sm:$0xff]
    %v730 = vld [vmem:[#allocation13 + $0x9e8] sm:$0xff]
    %v731 = vld [vmem:[#allocation13 + $0x9f0] sm:$0xff]
    %v732 = vld [vmem:[#allocation13 + $0x9f8] sm:$0xff]
    %v733 = vld [vmem:[#allocation13 + $0xa00] sm:$0xff]
    %v734 = vld [vmem:[#allocation13 + $0xa08] sm:$0xff]
    %v735 = vld [vmem:[#allocation13 + $0xa10] sm:$0xff]
    %v736 = vld [vmem:[#allocation13 + $0xa18] sm:$0xff]
    %v737 = vld [vmem:[#allocation13 + $0xa20] sm:$0xff]
    %v738 = vld [vmem:[#allocation13 + $0xa28] sm:$0xff]
    %v739 = vld [vmem:[#allocation13 + $0xa30] sm:$0xff]
    %v740 = vld [vmem:[#allocation13 + $0xa38] sm:$0xff]
    %v741 = vld [vmem:[#allocation13 + $0xa40] sm:$0xff]
    %v742 = vld [vmem:[#allocation13 + $0xa48] sm:$0xff]
    %v743 = vld [vmem:[#allocation13 + $0xa50] sm:$0xff]
    %v744 = vld [vmem:[#allocation13 + $0xa58] sm:$0xff]
    %v745 = vld [vmem:[#allocation13 + $0xa60] sm:$0xff]
    %v746 = vld [vmem:[#allocation13 + $0xa68] sm:$0xff]
    %v747 = vld [vmem:[#allocation13 + $0xa70] sm:$0xff]
    %v748 = vld [vmem:[#allocation13 + $0xa78] sm:$0xff]
    %v749 = vld [vmem:[#allocation13 + $0xa80] sm:$0xff]
    %v750 = vld [vmem:[#allocation13 + $0xa88] sm:$0xff]
    %v751 = vld [vmem:[#allocation13 + $0xa90] sm:$0xff]
    %v752 = vld [vmem:[#allocation13 + $0xa98] sm:$0xff]
    %v753 = vld [vmem:[#allocation13 + $0xaa0] sm:$0xff]
    %v754 = vld [vmem:[#allocation13 + $0xaa8] sm:$0xff]
    %v755 = vld [vmem:[#allocation13 + $0xab0] sm:$0xff]
    %v756 = vld [vmem:[#allocation13 + $0xab8] sm:$0xff]
    %v757 = vld [vmem:[#allocation13 + $0xac0] sm:$0xff]
    %v758 = vld [vmem:[#allocation13 + $0xac8] sm:$0xff]
    %v759 = vld [vmem:[#allocation13 + $0xad0] sm:$0xff]
    %v760 = vld [vmem:[#allocation13 + $0xad8] sm:$0xff]
    %v761 = vld [vmem:[#allocation13 + $0xae0] sm:$0xff]
    %v762 = vld [vmem:[#allocation13 + $0xae8] sm:$0xff]
    %v763 = vld [vmem:[#allocation13 + $0xaf0] sm:$0xff]
    %v764 = vld [vmem:[#allocation13 + $0xaf8] sm:$0xff]
    %v765 = vld [vmem:[#allocation13 + $0xb00] sm:$0xff]
    %v766 = vld [vmem:[#allocation13 + $0xb08] sm:$0xff]
    %v767 = vld [vmem:[#allocation13 + $0xb10] sm:$0xff]
    %v768 = vld [vmem:[#allocation13 + $0xb18] sm:$0xff]
    %v769 = vld [vmem:[#allocation13 + $0xb20] sm:$0xff]
    %v770 = vld [vmem:[#allocation13 + $0xb28] sm:$0xff]
    %v771 = vld [vmem:[#allocation13 + $0xb30] sm:$0xff]
    %v772 = vld [vmem:[#allocation13 + $0xb38] sm:$0xff]
    %v773 = vld [vmem:[#allocation13 + $0xb40] sm:$0xff]
    %v774 = vld [vmem:[#allocation13 + $0xb48] sm:$0xff]
    %v775 = vld [vmem:[#allocation13 + $0xb50] sm:$0xff]
    %v776 = vld [vmem:[#allocation13 + $0xb58] sm:$0xff]
    %v777 = vld [vmem:[#allocation13 + $0xb60] sm:$0xff]
    %v778 = vld [vmem:[#allocation13 + $0xb68] sm:$0xff]
    %v779 = vld [vmem:[#allocation13 + $0xb70] sm:$0xff]
    %v780 = vld [vmem:[#allocation13 + $0xb78] sm:$0xff]
    %v781 = vld [vmem:[#allocation13 + $0xb80] sm:$0xff]
    %v782 = vld [vmem:[#allocation13 + $0xb88] sm:$0xff]
    %v783 = vld [vmem:[#allocation13 + $0xb90] sm:$0xff]
    %v784 = vld [vmem:[#allocation13 + $0xb98] sm:$0xff]
    %v785 = vld [vmem:[#allocation13 + $0xba0] sm:$0xff]
    %v786 = vld [vmem:[#allocation13 + $0xba8] sm:$0xff]
    %v787 = vld [vmem:[#allocation13 + $0xbb0] sm:$0xff]
    %v788 = vld [vmem:[#allocation13 + $0xbb8] sm:$0xff]
    %v789 = vld [vmem:[#allocation13 + $0xbc0] sm:$0xff]
    %v790 = vld [vmem:[#allocation13 + $0xbc8] sm:$0xff]
    %v791 = vld [vmem:[#allocation13 + $0xbd0] sm:$0xff]
    %v792 = vld [vmem:[#allocation13 + $0xbd8] sm:$0xff]
    %v793 = vld [vmem:[#allocation13 + $0xbe0] sm:$0xff]
    %v794 = vld [vmem:[#allocation13 + $0xbe8] sm:$0xff]
    %v795 = vld [vmem:[#allocation13 + $0xbf0] sm:$0xff]
    %v796 = vld [vmem:[#allocation13 + $0xbf8] sm:$0xff]
    %v797 = vld [vmem:[#allocation13 + $0xc00] sm:$0xff]
    %v798 = vld [vmem:[#allocation13 + $0xc08] sm:$0xff]
    %v799 = vld [vmem:[#allocation13 + $0xc10] sm:$0xff]
    %v800 = vld [vmem:[#allocation13 + $0xc18] sm:$0xff]
    %v801 = vld [vmem:[#allocation13 + $0xc20] sm:$0xff]
    %v802 = vld [vmem:[#allocation13 + $0xc28] sm:$0xff]
    %v803 = vld [vmem:[#allocation13 + $0xc30] sm:$0xff]
    %v804 = vld [vmem:[#allocation13 + $0xc38] sm:$0xff]
    %v805 = vld [vmem:[#allocation13 + $0xc40] sm:$0xff]
    %v806 = vld [vmem:[#allocation13 + $0xc48] sm:$0xff]
    %v807 = vld [vmem:[#allocation13 + $0xc50] sm:$0xff]
    %v808 = vld [vmem:[#allocation13 + $0xc58] sm:$0xff]
    %v809 = vld [vmem:[#allocation13 + $0xc60] sm:$0xff]
    %v810 = vld [vmem:[#allocation13 + $0xc68] sm:$0xff]
    %v811 = vld [vmem:[#allocation13 + $0xc70] sm:$0xff]
    %v812 = vld [vmem:[#allocation13 + $0xc78] sm:$0xff]
    %v813 = vld [vmem:[#allocation13 + $0xc80] sm:$0xff]
    %v814 = vld [vmem:[#allocation13 + $0xc88] sm:$0xff]
    %v815 = vld [vmem:[#allocation13 + $0xc90] sm:$0xff]
    %v816 = vld [vmem:[#allocation13 + $0xc98] sm:$0xff]
    %v817 = vld [vmem:[#allocation13 + $0xca0] sm:$0xff]
    %v818 = vld [vmem:[#allocation13 + $0xca8] sm:$0xff]
    %v819 = vld [vmem:[#allocation13 + $0xcb0] sm:$0xff]
    %v820 = vld [vmem:[#allocation13 + $0xcb8] sm:$0xff]
    %v821 = vld [vmem:[#allocation13 + $0xcc0] sm:$0xff]
    %v822 = vld [vmem:[#allocation13 + $0xcc8] sm:$0xff]
    %v823 = vld [vmem:[#allocation13 + $0xcd0] sm:$0xff]
    %v824 = vld [vmem:[#allocation13 + $0xcd8] sm:$0xff]
    %v825 = vld [vmem:[#allocation13 + $0xce0] sm:$0xff]
    %v826 = vld [vmem:[#allocation13 + $0xce8] sm:$0xff]
    %v827 = vld [vmem:[#allocation13 + $0xcf0] sm:$0xff]
    %v828 = vld [vmem:[#allocation13 + $0xcf8] sm:$0xff]
    %v829 = vld [vmem:[#allocation13 + $0xd00] sm:$0xff]
    %v830 = vld [vmem:[#allocation13 + $0xd08] sm:$0xff]
    %v831 = vld [vmem:[#allocation13 + $0xd10] sm:$0xff]
    %v832 = vld [vmem:[#allocation13 + $0xd18] sm:$0xff]
    %v833 = vld [vmem:[#allocation13 + $0xd20] sm:$0xff]
    %v834 = vld [vmem:[#allocation13 + $0xd28] sm:$0xff]
    %v835 = vld [vmem:[#allocation13 + $0xd30] sm:$0xff]
    %v836 = vld [vmem:[#allocation13 + $0xd38] sm:$0xff]
    %v837 = vld [vmem:[#allocation13 + $0xd40] sm:$0xff]
    %v838 = vld [vmem:[#allocation13 + $0xd48] sm:$0xff]
    %v839 = vld [vmem:[#allocation13 + $0xd50] sm:$0xff]
    %v840 = vld [vmem:[#allocation13 + $0xd58] sm:$0xff]
    %v841 = vld [vmem:[#allocation13 + $0xd60] sm:$0xff]
    %v842 = vld [vmem:[#allocation13 + $0xd68] sm:$0xff]
    %v843 = vld [vmem:[#allocation13 + $0xd70] sm:$0xff]
    %v844 = vld [vmem:[#allocation13 + $0xd78] sm:$0xff]
    %v845 = vld [vmem:[#allocation13 + $0xd80] sm:$0xff]
    %v846 = vld [vmem:[#allocation13 + $0xd88] sm:$0xff]
    %v847 = vld [vmem:[#allocation13 + $0xd90] sm:$0xff]
    %v848 = vld [vmem:[#allocation13 + $0xd98] sm:$0xff]
    %v849 = vld [vmem:[#allocation13 + $0xda0] sm:$0xff]
    %v850 = vld [vmem:[#allocation13 + $0xda8] sm:$0xff]
    %v851 = vld [vmem:[#allocation13 + $0xdb0] sm:$0xff]
    %v852 = vld [vmem:[#allocation13 + $0xdb8] sm:$0xff]
    %v853 = vld [vmem:[#allocation13 + $0xdc0] sm:$0xff]
    %v854 = vld [vmem:[#allocation13 + $0xdc8] sm:$0xff]
    %v855 = vld [vmem:[#allocation13 + $0xdd0] sm:$0xff]
    %v856 = vld [vmem:[#allocation13 + $0xdd8] sm:$0xff]
    %v857 = vld [vmem:[#allocation13 + $0xde0] sm:$0xff]
    %v858 = vld [vmem:[#allocation13 + $0xde8] sm:$0xff]
    %v859 = vld [vmem:[#allocation13 + $0xdf0] sm:$0xff]
    %v860 = vld [vmem:[#allocation13 + $0xdf8] sm:$0xff]
    %v861 = vld [vmem:[#allocation13 + $0xe00] sm:$0xff]
    %v862 = vld [vmem:[#allocation13 + $0xe08] sm:$0xff]
    %v863 = vld [vmem:[#allocation13 + $0xe10] sm:$0xff]
    %v864 = vld [vmem:[#allocation13 + $0xe18] sm:$0xff]
    %v865 = vld [vmem:[#allocation13 + $0xe20] sm:$0xff]
    %v866 = vld [vmem:[#allocation13 + $0xe28] sm:$0xff]
    %v867 = vld [vmem:[#allocation13 + $0xe30] sm:$0xff]
    %v868 = vld [vmem:[#allocation13 + $0xe38] sm:$0xff]
    %v869 = vld [vmem:[#allocation13 + $0xe40] sm:$0xff]
    %v870 = vld [vmem:[#allocation13 + $0xe48] sm:$0xff]
    %v871 = vld [vmem:[#allocation13 + $0xe50] sm:$0xff]
    %v872 = vld [vmem:[#allocation13 + $0xe58] sm:$0xff]
    %v873 = vld [vmem:[#allocation13 + $0xe60] sm:$0xff]
    %v874 = vld [vmem:[#allocation13 + $0xe68] sm:$0xff]
    %v875 = vld [vmem:[#allocation13 + $0xe70] sm:$0xff]
    %v876 = vld [vmem:[#allocation13 + $0xe78] sm:$0xff]
    %v877 = vld [vmem:[#allocation13 + $0xe80] sm:$0xff]
    %v878 = vld [vmem:[#allocation13 + $0xe88] sm:$0xff]
    %v879 = vld [vmem:[#allocation13 + $0xe90] sm:$0xff]
    %v880 = vld [vmem:[#allocation13 + $0xe98] sm:$0xff]
    %v881 = vld [vmem:[#allocation13 + $0xea0] sm:$0xff]
    %v882 = vld [vmem:[#allocation13 + $0xea8] sm:$0xff]
    %v883 = vld [vmem:[#allocation13 + $0xeb0] sm:$0xff]
    %v884 = vld [vmem:[#allocation13 + $0xeb8] sm:$0xff]
    %v885 = vld [vmem:[#allocation13 + $0xec0] sm:$0xff]
    %v886 = vld [vmem:[#allocation13 + $0xec8] sm:$0xff]
    %v887 = vld [vmem:[#allocation13 + $0xed0] sm:$0xff]
    %v888 = vld [vmem:[#allocation13 + $0xed8] sm:$0xff]
    %v889 = vld [vmem:[#allocation13 + $0xee0] sm:$0xff]
    %v890 = vld [vmem:[#allocation13 + $0xee8] sm:$0xff]
    %v891 = vld [vmem:[#allocation13 + $0xef0] sm:$0xff]
    %v892 = vld [vmem:[#allocation13 + $0xef8] sm:$0xff]
    %v893 = vld [vmem:[#allocation13 + $0xf00] sm:$0xff]
    %v894 = vld [vmem:[#allocation13 + $0xf08] sm:$0xff]
    %v895 = vld [vmem:[#allocation13 + $0xf10] sm:$0xff]
    %v896 = vld [vmem:[#allocation13 + $0xf18] sm:$0xff]
    %v897 = vld [vmem:[#allocation13 + $0xf20] sm:$0xff]
    %v898 = vld [vmem:[#allocation13 + $0xf28] sm:$0xff]
    %v899 = vld [vmem:[#allocation13 + $0xf30] sm:$0xff]
    %v900 = vld [vmem:[#allocation13 + $0xf38] sm:$0xff]
    %v901 = vld [vmem:[#allocation13 + $0xf40] sm:$0xff]
    %v902 = vld [vmem:[#allocation13 + $0xf48] sm:$0xff]
    %v903 = vld [vmem:[#allocation13 + $0xf50] sm:$0xff]
    %v904 = vld [vmem:[#allocation13 + $0xf58] sm:$0xff]
    %v905 = vld [vmem:[#allocation13 + $0xf60] sm:$0xff]
    %v906 = vld [vmem:[#allocation13 + $0xf68] sm:$0xff]
    %v907 = vld [vmem:[#allocation13 + $0xf70] sm:$0xff]
    %v908 = vld [vmem:[#allocation13 + $0xf78] sm:$0xff]
    %v909 = vld [vmem:[#allocation13 + $0xf80] sm:$0xff]
    %v910 = vld [vmem:[#allocation13 + $0xf88] sm:$0xff]
    %v911 = vld [vmem:[#allocation13 + $0xf90] sm:$0xff]
    %v912 = vld [vmem:[#allocation13 + $0xf98] sm:$0xff]
    %v913 = vld [vmem:[#allocation13 + $0xfa0] sm:$0xff]
    %v914 = vld [vmem:[#allocation13 + $0xfa8] sm:$0xff]
    %v915 = vld [vmem:[#allocation13 + $0xfb0] sm:$0xff]
    %v916 = vld [vmem:[#allocation13 + $0xfb8] sm:$0xff]
    %v917 = vld [vmem:[#allocation13 + $0xfc0] sm:$0xff]
    %v918 = vld [vmem:[#allocation13 + $0xfc8] sm:$0xff]
    %v919 = vld [vmem:[#allocation13 + $0xfd0] sm:$0xff]
    %v920 = vld [vmem:[#allocation13 + $0xfd8] sm:$0xff]
    %v921 = vld [vmem:[#allocation13 + $0xfe0] sm:$0xff]
    %v922 = vld [vmem:[#allocation13 + $0xfe8] sm:$0xff]
    %v923 = vld [vmem:[#allocation13 + $0xff0] sm:$0xff]
    %v924 = vld [vmem:[#allocation13 + $0xff8] sm:$0xff]
    %v925 = vld [vmem:[#allocation13 + $0x1000] sm:$0xff]
    %v926 = vld [vmem:[#allocation13 + $0x1008] sm:$0xff]
    %v927 = vld [vmem:[#allocation13 + $0x1010] sm:$0xff]
    %v928 = vld [vmem:[#allocation13 + $0x1018] sm:$0xff]
    %v929 = vld [vmem:[#allocation13 + $0x1020] sm:$0xff]
    %v930 = vld [vmem:[#allocation13 + $0x1028] sm:$0xff]
    %v931 = vld [vmem:[#allocation13 + $0x1030] sm:$0xff]
    %v932 = vld [vmem:[#allocation13 + $0x1038] sm:$0xff]
    %v933 = vld [vmem:[#allocation13 + $0x1040] sm:$0xff]
    %v934 = vld [vmem:[#allocation13 + $0x1048] sm:$0xff]
    %v935 = vld [vmem:[#allocation13 + $0x1050] sm:$0xff]
    %v936 = vld [vmem:[#allocation13 + $0x1058] sm:$0xff]
    %v937 = vld [vmem:[#allocation13 + $0x1060] sm:$0xff]
    %v938 = vld [vmem:[#allocation13 + $0x1068] sm:$0xff]
    %v939 = vld [vmem:[#allocation13 + $0x1070] sm:$0xff]
    %v940 = vld [vmem:[#allocation13 + $0x1078] sm:$0xff]
    %v941 = vld [vmem:[#allocation13 + $0x1080] sm:$0xff]
    %v942 = vld [vmem:[#allocation13 + $0x1088] sm:$0xff]
    %v943 = vld [vmem:[#allocation13 + $0x1090] sm:$0xff]
    %v944 = vld [vmem:[#allocation13 + $0x1098] sm:$0xff]
    %v945 = vld [vmem:[#allocation13 + $0x10a0] sm:$0xff]
    %v946 = vld [vmem:[#allocation13 + $0x10a8] sm:$0xff]
    %v947 = vld [vmem:[#allocation13 + $0x10b0] sm:$0xff]
    %v948 = vld [vmem:[#allocation13 + $0x10b8] sm:$0xff]
    %v949 = vld [vmem:[#allocation13 + $0x10c0] sm:$0xff]
    %v950 = vld [vmem:[#allocation13 + $0x10c8] sm:$0xff]
    %v951 = vld [vmem:[#allocation13 + $0x10d0] sm:$0xff]
    %v952 = vld [vmem:[#allocation13 + $0x10d8] sm:$0xff]
    %v953 = vld [vmem:[#allocation13 + $0x10e0] sm:$0xff]
    %v954 = vld [vmem:[#allocation13 + $0x10e8] sm:$0xff]
    %v955 = vld [vmem:[#allocation13 + $0x10f0] sm:$0xff]
    %v956 = vld [vmem:[#allocation13 + $0x10f8] sm:$0xff]
    %v957 = vld [vmem:[#allocation13 + $0x1100] sm:$0xff]
    %v958 = vld [vmem:[#allocation13 + $0x1108] sm:$0xff]
    %v959 = vld [vmem:[#allocation13 + $0x1110] sm:$0xff]
    %v960 = vld [vmem:[#allocation13 + $0x1118] sm:$0xff]
    %v961 = vld [vmem:[#allocation13 + $0x1120] sm:$0xff]
    %v962 = vld [vmem:[#allocation13 + $0x1128] sm:$0xff]
    %v963 = vld [vmem:[#allocation13 + $0x1130] sm:$0xff]
    %v964 = vld [vmem:[#allocation13 + $0x1138] sm:$0xff]
    %v965 = vld [vmem:[#allocation13 + $0x1140] sm:$0xff]
    %v966 = vld [vmem:[#allocation13 + $0x1148] sm:$0xff]
    %v967 = vld [vmem:[#allocation13 + $0x1150] sm:$0xff]
    %v968 = vld [vmem:[#allocation13 + $0x1158] sm:$0xff]
    %v969 = vld [vmem:[#allocation13 + $0x1160] sm:$0xff]
    %v970 = vld [vmem:[#allocation13 + $0x1168] sm:$0xff]
    %v971 = vld [vmem:[#allocation13 + $0x1170] sm:$0xff]
    %v972 = vld [vmem:[#allocation13 + $0x1178] sm:$0xff]
    %v973 = vld [vmem:[#allocation13 + $0x1180] sm:$0xff]
    %v974 = vld [vmem:[#allocation13 + $0x1188] sm:$0xff]
    %v975 = vld [vmem:[#allocation13 + $0x1190] sm:$0xff]
    %v976 = vld [vmem:[#allocation13 + $0x1198] sm:$0xff]
    %v977 = vld [vmem:[#allocation13 + $0x11a0] sm:$0xff]
    %v978 = vld [vmem:[#allocation13 + $0x11a8] sm:$0xff]
    %v979 = vld [vmem:[#allocation13 + $0x11b0] sm:$0xff]
    %v980 = vld [vmem:[#allocation13 + $0x11b8] sm:$0xff]
    %v981 = vld [vmem:[#allocation15] sm:$0xff]
    %v982 = vld [vmem:[#allocation15 + $0x8] sm:$0xff]
    %v983 = vld [vmem:[#allocation15 + $0x10] sm:$0xff]
    %v984 = vld [vmem:[#allocation15 + $0x18] sm:$0xff]
    %v985 = vld [vmem:[#allocation15 + $0x20] sm:$0xff]
    %v986 = vld [vmem:[#allocation15 + $0x28] sm:$0xff]
    %v987 = vld [vmem:[#allocation15 + $0x30] sm:$0xff]
    %v988 = vld [vmem:[#allocation15 + $0x38] sm:$0xff]
    %v989 = vld [vmem:[#allocation15 + $0x40] sm:$0x7f]
    %v999 = vlaneseq
    %v1000 = vshrl.u32 %v999, 7
    %v1001 = vsub.s32 0, %v1000
    %v1002 = vrot.slane %v981, %v1001
    %v1003 = vlaneseq
    %v1004 = vshrl.u32 %v1003, 7
    %v1005 = vsub.s32 1, %v1004
    %v1006 = vrot.slane %v981, %v1005
    %v1007 = vlaneseq
    %v1008 = vshrl.u32 %v1007, 7
    %v1009 = vsub.s32 2, %v1008
    %v1010 = vrot.slane %v981, %v1009
    %v1011 = vlaneseq
    %v1012 = vshrl.u32 %v1011, 7
    %v1013 = vsub.s32 3, %v1012
    %v1014 = vrot.slane %v981, %v1013
    %v1015 = vlaneseq
    %v1016 = vshrl.u32 %v1015, 7
    %v1017 = vsub.s32 4, %v1016
    %v1018 = vrot.slane %v981, %v1017
    %v1019 = vlaneseq
    %v1020 = vshrl.u32 %v1019, 7
    %v1021 = vsub.s32 5, %v1020
    %v1022 = vrot.slane %v981, %v1021
    %v1023 = vlaneseq
    %v1024 = vshrl.u32 %v1023, 7
    %v1025 = vsub.s32 6, %v1024
    %v1026 = vrot.slane %v981, %v1025
    %v1027 = vlaneseq
    %v1028 = vshrl.u32 %v1027, 7
    %v1029 = vsub.s32 7, %v1028
    %v1030 = vrot.slane %v981, %v1029
    %v1031 = vlaneseq
    %v1032 = vshrl.u32 %v1031, 7
    %v1033 = vsub.s32 0, %v1032
    %v1034 = vrot.slane %v982, %v1033
    %v1035 = vlaneseq
    %v1036 = vshrl.u32 %v1035, 7
    %v1037 = vsub.s32 1, %v1036
    %v1038 = vrot.slane %v982, %v1037
    %v1039 = vlaneseq
    %v1040 = vshrl.u32 %v1039, 7
    %v1041 = vsub.s32 2, %v1040
    %v1042 = vrot.slane %v982, %v1041
    %v1043 = vlaneseq
    %v1044 = vshrl.u32 %v1043, 7
    %v1045 = vsub.s32 3, %v1044
    %v1046 = vrot.slane %v982, %v1045
    %v1047 = vlaneseq
    %v1048 = vshrl.u32 %v1047, 7
    %v1049 = vsub.s32 4, %v1048
    %v1050 = vrot.slane %v982, %v1049
    %v1051 = vlaneseq
    %v1052 = vshrl.u32 %v1051, 7
    %v1053 = vsub.s32 5, %v1052
    %v1054 = vrot.slane %v982, %v1053
    %v1055 = vlaneseq
    %v1056 = vshrl.u32 %v1055, 7
    %v1057 = vsub.s32 6, %v1056
    %v1058 = vrot.slane %v982, %v1057
    %v1059 = vlaneseq
    %v1060 = vshrl.u32 %v1059, 7
    %v1061 = vsub.s32 7, %v1060
    %v1062 = vrot.slane %v982, %v1061
    %v1063 = vlaneseq
    %v1064 = vshrl.u32 %v1063, 7
    %v1065 = vsub.s32 0, %v1064
    %v1066 = vrot.slane %v983, %v1065
    %v1067 = vlaneseq
    %v1068 = vshrl.u32 %v1067, 7
    %v1069 = vsub.s32 1, %v1068
    %v1070 = vrot.slane %v983, %v1069
    %v1071 = vlaneseq
    %v1072 = vshrl.u32 %v1071, 7
    %v1073 = vsub.s32 2, %v1072
    %v1074 = vrot.slane %v983, %v1073
    %v1075 = vlaneseq
    %v1076 = vshrl.u32 %v1075, 7
    %v1077 = vsub.s32 3, %v1076
    %v1078 = vrot.slane %v983, %v1077
    %v1079 = vlaneseq
    %v1080 = vshrl.u32 %v1079, 7
    %v1081 = vsub.s32 4, %v1080
    %v1082 = vrot.slane %v983, %v1081
    %v1083 = vlaneseq
    %v1084 = vshrl.u32 %v1083, 7
    %v1085 = vsub.s32 5, %v1084
    %v1086 = vrot.slane %v983, %v1085
    %v1087 = vlaneseq
    %v1088 = vshrl.u32 %v1087, 7
    %v1089 = vsub.s32 6, %v1088
    %v1090 = vrot.slane %v983, %v1089
    %v1091 = vlaneseq
    %v1092 = vshrl.u32 %v1091, 7
    %v1093 = vsub.s32 7, %v1092
    %v1094 = vrot.slane %v983, %v1093
    %v1095 = vlaneseq
    %v1096 = vshrl.u32 %v1095, 7
    %v1097 = vsub.s32 0, %v1096
    %v1098 = vrot.slane %v984, %v1097
    %v1099 = vlaneseq
    %v1100 = vshrl.u32 %v1099, 7
    %v1101 = vsub.s32 1, %v1100
    %v1102 = vrot.slane %v984, %v1101
    %v1103 = vlaneseq
    %v1104 = vshrl.u32 %v1103, 7
    %v1105 = vsub.s32 2, %v1104
    %v1106 = vrot.slane %v984, %v1105
    %v1107 = vlaneseq
    %v1108 = vshrl.u32 %v1107, 7
    %v1109 = vsub.s32 3, %v1108
    %v1110 = vrot.slane %v984, %v1109
    %v1111 = vlaneseq
    %v1112 = vshrl.u32 %v1111, 7
    %v1113 = vsub.s32 4, %v1112
    %v1114 = vrot.slane %v984, %v1113
    %v1115 = vlaneseq
    %v1116 = vshrl.u32 %v1115, 7
    %v1117 = vsub.s32 5, %v1116
    %v1118 = vrot.slane %v984, %v1117
    %v1119 = vlaneseq
    %v1120 = vshrl.u32 %v1119, 7
    %v1121 = vsub.s32 6, %v1120
    %v1122 = vrot.slane %v984, %v1121
    %v1123 = vlaneseq
    %v1124 = vshrl.u32 %v1123, 7
    %v1125 = vsub.s32 7, %v1124
    %v1126 = vrot.slane %v984, %v1125
    %v1127 = vlaneseq
    %v1128 = vshrl.u32 %v1127, 7
    %v1129 = vsub.s32 0, %v1128
    %v1130 = vrot.slane %v985, %v1129
    %v1131 = vlaneseq
    %v1132 = vshrl.u32 %v1131, 7
    %v1133 = vsub.s32 1, %v1132
    %v1134 = vrot.slane %v985, %v1133
    %v1135 = vlaneseq
    %v1136 = vshrl.u32 %v1135, 7
    %v1137 = vsub.s32 2, %v1136
    %v1138 = vrot.slane %v985, %v1137
    %v1139 = vlaneseq
    %v1140 = vshrl.u32 %v1139, 7
    %v1141 = vsub.s32 3, %v1140
    %v1142 = vrot.slane %v985, %v1141
    %v1143 = vlaneseq
    %v1144 = vshrl.u32 %v1143, 7
    %v1145 = vsub.s32 4, %v1144
    %v1146 = vrot.slane %v985, %v1145
    %v1147 = vlaneseq
    %v1148 = vshrl.u32 %v1147, 7
    %v1149 = vsub.s32 5, %v1148
    %v1150 = vrot.slane %v985, %v1149
    %v1151 = vlaneseq
    %v1152 = vshrl.u32 %v1151, 7
    %v1153 = vsub.s32 6, %v1152
    %v1154 = vrot.slane %v985, %v1153
    %v1155 = vlaneseq
    %v1156 = vshrl.u32 %v1155, 7
    %v1157 = vsub.s32 7, %v1156
    %v1158 = vrot.slane %v985, %v1157
    %v1159 = vlaneseq
    %v1160 = vshrl.u32 %v1159, 7
    %v1161 = vsub.s32 0, %v1160
    %v1162 = vrot.slane %v986, %v1161
    %v1163 = vlaneseq
    %v1164 = vshrl.u32 %v1163, 7
    %v1165 = vsub.s32 1, %v1164
    %v1166 = vrot.slane %v986, %v1165
    %v1167 = vlaneseq
    %v1168 = vshrl.u32 %v1167, 7
    %v1169 = vsub.s32 2, %v1168
    %v1170 = vrot.slane %v986, %v1169
    %v1171 = vlaneseq
    %v1172 = vshrl.u32 %v1171, 7
    %v1173 = vsub.s32 3, %v1172
    %v1174 = vrot.slane %v986, %v1173
    %v1175 = vlaneseq
    %v1176 = vshrl.u32 %v1175, 7
    %v1177 = vsub.s32 4, %v1176
    %v1178 = vrot.slane %v986, %v1177
    %v1179 = vlaneseq
    %v1180 = vshrl.u32 %v1179, 7
    %v1181 = vsub.s32 5, %v1180
    %v1182 = vrot.slane %v986, %v1181
    %v1183 = vlaneseq
    %v1184 = vshrl.u32 %v1183, 7
    %v1185 = vsub.s32 6, %v1184
    %v1186 = vrot.slane %v986, %v1185
    %v1187 = vlaneseq
    %v1188 = vshrl.u32 %v1187, 7
    %v1189 = vsub.s32 7, %v1188
    %v1190 = vrot.slane %v986, %v1189
    %v1191 = vlaneseq
    %v1192 = vshrl.u32 %v1191, 7
    %v1193 = vsub.s32 0, %v1192
    %v1194 = vrot.slane %v987, %v1193
    %v1195 = vlaneseq
    %v1196 = vshrl.u32 %v1195, 7
    %v1197 = vsub.s32 1, %v1196
    %v1198 = vrot.slane %v987, %v1197
    %v1199 = vlaneseq
    %v1200 = vshrl.u32 %v1199, 7
    %v1201 = vsub.s32 2, %v1200
    %v1202 = vrot.slane %v987, %v1201
    %v1203 = vlaneseq
    %v1204 = vshrl.u32 %v1203, 7
    %v1205 = vsub.s32 3, %v1204
    %v1206 = vrot.slane %v987, %v1205
    %v1207 = vlaneseq
    %v1208 = vshrl.u32 %v1207, 7
    %v1209 = vsub.s32 4, %v1208
    %v1210 = vrot.slane %v987, %v1209
    %v1211 = vlaneseq
    %v1212 = vshrl.u32 %v1211, 7
    %v1213 = vsub.s32 5, %v1212
    %v1214 = vrot.slane %v987, %v1213
    %v1215 = vlaneseq
    %v1216 = vshrl.u32 %v1215, 7
    %v1217 = vsub.s32 6, %v1216
    %v1218 = vrot.slane %v987, %v1217
    %v1219 = vlaneseq
    %v1220 = vshrl.u32 %v1219, 7
    %v1221 = vsub.s32 7, %v1220
    %v1222 = vrot.slane %v987, %v1221
    %v1223 = vlaneseq
    %v1224 = vshrl.u32 %v1223, 7
    %v1225 = vsub.s32 0, %v1224
    %v1226 = vrot.slane %v988, %v1225
    %v1227 = vlaneseq
    %v1228 = vshrl.u32 %v1227, 7
    %v1229 = vsub.s32 1, %v1228
    %v1230 = vrot.slane %v988, %v1229
    %v1231 = vlaneseq
    %v1232 = vshrl.u32 %v1231, 7
    %v1233 = vsub.s32 2, %v1232
    %v1234 = vrot.slane %v988, %v1233
    %v1235 = vlaneseq
    %v1236 = vshrl.u32 %v1235, 7
    %v1237 = vsub.s32 3, %v1236
    %v1238 = vrot.slane %v988, %v1237
    %v1239 = vlaneseq
    %v1240 = vshrl.u32 %v1239, 7
    %v1241 = vsub.s32 4, %v1240
    %v1242 = vrot.slane %v988, %v1241
    %v1243 = vlaneseq
    %v1244 = vshrl.u32 %v1243, 7
    %v1245 = vsub.s32 5, %v1244
    %v1246 = vrot.slane %v988, %v1245
    %v1247 = vlaneseq
    %v1248 = vshrl.u32 %v1247, 7
    %v1249 = vsub.s32 6, %v1248
    %v1250 = vrot.slane %v988, %v1249
    %v1251 = vlaneseq
    %v1252 = vshrl.u32 %v1251, 7
    %v1253 = vsub.s32 7, %v1252
    %v1254 = vrot.slane %v988, %v1253
    %v1255 = vlaneseq
    %v1256 = vshrl.u32 %v1255, 7
    %v1257 = vsub.s32 0, %v1256
    %v1258 = vrot.slane %v989, %v1257
    %v1259 = vlaneseq
    %v1260 = vshrl.u32 %v1259, 7
    %v1261 = vsub.s32 1, %v1260
    %v1262 = vrot.slane %v989, %v1261
    %v1263 = vlaneseq
    %v1264 = vshrl.u32 %v1263, 7
    %v1265 = vsub.s32 2, %v1264
    %v1266 = vrot.slane %v989, %v1265
    %v1267 = vlaneseq
    %v1268 = vshrl.u32 %v1267, 7
    %v1269 = vsub.s32 3, %v1268
    %v1270 = vrot.slane %v989, %v1269
    %v1271 = vlaneseq
    %v1272 = vshrl.u32 %v1271, 7
    %v1273 = vsub.s32 4, %v1272
    %v1274 = vrot.slane %v989, %v1273
    %v1275 = vlaneseq
    %v1276 = vshrl.u32 %v1275, 7
    %v1277 = vsub.s32 5, %v1276
    %v1278 = vrot.slane %v989, %v1277
    %v1279 = vlaneseq
    %v1280 = vshrl.u32 %v1279, 7
    %v1281 = vsub.s32 6, %v1280
    %v1282 = vrot.slane %v989, %v1281
    %v1355 = vsel %vm160, %v412, 0
    %1357 = vmatprep.subr.mxu0 %v414
    %1358 = vmatpush1.msra.mxu0 %v413
    %1359 = vmatprep.subr.mxu0 %v485
    %1360 = vmatpush1.msra.mxu0 %v484
    %1361 = vmatprep.subr.mxu0 %v556
    %1362 = vmatpush1.msra.mxu0 %v555
    %1363 = vmatprep.subr.mxu0 %v627
    %1364 = vmatpush1.msra.mxu0 %v626
    %1365 = vmatprep.subr.mxu0 %v698
    %1366 = vmatpush1.msra.mxu0 %v697
    %1367 = vmatprep.subr.mxu0 %v769
    %1368 = vmatpush1.msra.mxu0 %v768
    %1369 = vmatprep.subr.mxu0 %v840
    %1370 = vmatpush1.msra.mxu0 %v839
    %1371 = vmatprep.subr.mxu0 %v911
    %1372 = vmatpush1.msra.mxu0 %v910
    %1373 = vmatprep.subr.mxu0 0.0
    %1374 = vmatpush1.msra.mxu0 0.0
    %1375 = vmatprep.subr.mxu0 0.0
    %1376 = vmatpush1.msra.mxu0 0.0
    %1377 = vmatprep.subr.mxu0 0.0
    %1378 = vmatpush1.msra.mxu0 0.0
    %1379 = vmatprep.subr.mxu0 0.0
    %1380 = vmatpush1.msra.mxu0 0.0
    %1381 = vmatprep.subr.mxu0 0.0
    %1382 = vmatpush1.msra.mxu0 0.0
    %1383 = vmatprep.subr.mxu0 0.0
    %1384 = vmatpush1.msra.mxu0 0.0
    %1385 = vmatprep.subr.mxu0 0.0
    %1386 = vmatpush1.msra.mxu0 0.0
    %1387 = vmatprep.subr.mxu0 0.0
    %1388 = vmatpush1.msra.mxu0 0.0
    %1389 = vmatprep.subr.mxu0 0.0
    %1390 = vmatpush1.msra.mxu0 0.0
    %1391 = vmatprep.subr.mxu0 0.0
    %1392 = vmatpush1.msra.mxu0 0.0
    %1393 = vmatprep.subr.mxu0 0.0
    %1394 = vmatpush1.msra.mxu0 0.0
    %1395 = vmatprep.subr.mxu0 0.0
    %1396 = vmatpush1.msra.mxu0 0.0
    %1397 = vmatprep.subr.mxu0 0.0
    %1398 = vmatpush1.msra.mxu0 0.0
    %1399 = vmatprep.subr.mxu0 0.0
    %1400 = vmatpush1.msra.mxu0 0.0
    %1401 = vmatprep.subr.mxu0 0.0
    %1402 = vmatpush1.msra.mxu0 0.0
    %1403 = vmatprep.subr.mxu0 0.0
    %1404 = vmatpush1.msra.mxu0 0.0
    %1405 = vmatprep.subr.mxu0 0.0
    %1406 = vmatpush1.msra.mxu0 0.0
    %1407 = vmatprep.subr.mxu0 0.0
    %1408 = vmatpush1.msra.mxu0 0.0
    %1409 = vmatprep.subr.mxu0 0.0
    %1410 = vmatpush1.msra.mxu0 0.0
    %1411 = vmatprep.subr.mxu0 0.0
    %1412 = vmatpush1.msra.mxu0 0.0
    %1413 = vmatprep.subr.mxu0 0.0
    %1414 = vmatpush1.msra.mxu0 0.0
    %1415 = vmatprep.subr.mxu0 0.0
    %1416 = vmatpush1.msra.mxu0 0.0
    %1417 = vmatprep.subr.mxu0 0.0
    %1418 = vmatpush1.msra.mxu0 0.0
    %1419 = vmatprep.subr.mxu0 0.0
    %1420 = vmatpush1.msra.mxu0 0.0
    %1421 = vmatprep.mubr.f32.mxu0 0.0
    %1422 = vmatmul.mubr.f32.gmra.mrb[0].mxu0 %v1355
    %v1423 = vpop.f32.mrb[0].mxu0
    %v1424 = vadd.f32 %v1002, %v1423
    %v1425 = vpop.f32.mrb[0].mxu0
    %v1426 = vadd.f32 %v1006, %v1425
    %1427 = vdwg.mxu0
    %1428 = vmatprep.subr.mxu0 %v416
    %1429 = vmatpush1.msra.mxu0 %v415
    %1430 = vmatprep.subr.mxu0 %v487
    %1431 = vmatpush1.msra.mxu0 %v486
    %1432 = vmatprep.subr.mxu0 %v558
    %1433 = vmatpush1.msra.mxu0 %v557
    %1434 = vmatprep.subr.mxu0 %v629
    %1435 = vmatpush1.msra.mxu0 %v628
    %1436 = vmatprep.subr.mxu0 %v700
    %1437 = vmatpush1.msra.mxu0 %v699
    %1438 = vmatprep.subr.mxu0 %v771
    %1439 = vmatpush1.msra.mxu0 %v770
    %1440 = vmatprep.subr.mxu0 %v842
    %1441 = vmatpush1.msra.mxu0 %v841
    %1442 = vmatprep.subr.mxu0 %v913
    %1443 = vmatpush1.msra.mxu0 %v912
    %1444 = vmatprep.subr.mxu0 0.0
    %1445 = vmatpush1.msra.mxu0 0.0
    %1446 = vmatprep.subr.mxu0 0.0
    %1447 = vmatpush1.msra.mxu0 0.0
    %1448 = vmatprep.subr.mxu0 0.0
    %1449 = vmatpush1.msra.mxu0 0.0
    %1450 = vmatprep.subr.mxu0 0.0
    %1451 = vmatpush1.msra.mxu0 0.0
    %1452 = vmatprep.subr.mxu0 0.0
    %1453 = vmatpush1.msra.mxu0 0.0
    %1454 = vmatprep.subr.mxu0 0.0
    %1455 = vmatpush1.msra.mxu0 0.0
    %1456 = vmatprep.subr.mxu0 0.0
    %1457 = vmatpush1.msra.mxu0 0.0
    %1458 = vmatprep.subr.mxu0 0.0
    %1459 = vmatpush1.msra.mxu0 0.0
    %1460 = vmatprep.subr.mxu0 0.0
    %1461 = vmatpush1.msra.mxu0 0.0
    %1462 = vmatprep.subr.mxu0 0.0
    %1463 = vmatpush1.msra.mxu0 0.0
    %1464 = vmatprep.subr.mxu0 0.0
    %1465 = vmatpush1.msra.mxu0 0.0
    %1466 = vmatprep.subr.mxu0 0.0
    %1467 = vmatpush1.msra.mxu0 0.0
    %1468 = vmatprep.subr.mxu0 0.0
    %1469 = vmatpush1.msra.mxu0 0.0
    %1470 = vmatprep.subr.mxu0 0.0
    %1471 = vmatpush1.msra.mxu0 0.0
    %1472 = vmatprep.subr.mxu0 0.0
    %1473 = vmatpush1.msra.mxu0 0.0
    %1474 = vmatprep.subr.mxu0 0.0
    %1475 = vmatpush1.msra.mxu0 0.0
    %1476 = vmatprep.subr.mxu0 0.0
    %1477 = vmatpush1.msra.mxu0 0.0
    %1478 = vmatprep.subr.mxu0 0.0
    %1479 = vmatpush1.msra.mxu0 0.0
    %1480 = vmatprep.subr.mxu0 0.0
    %1481 = vmatpush1.msra.mxu0 0.0
    %1482 = vmatprep.subr.mxu0 0.0
    %1483 = vmatpush1.msra.mxu0 0.0
    %1484 = vmatprep.subr.mxu0 0.0
    %1485 = vmatpush1.msra.mxu0 0.0
    %1486 = vmatprep.subr.mxu0 0.0
    %1487 = vmatpush1.msra.mxu0 0.0
    %1488 = vmatprep.subr.mxu0 0.0
    %1489 = vmatpush1.msra.mxu0 0.0
    %1490 = vmatprep.subr.mxu0 0.0
    %1491 = vmatpush1.msra.mxu0 0.0
    %1492 = vmatprep.mubr.f32.mxu0 0.0
    %1493 = vmatmul.mubr.f32.gmra.mrb[0].mxu0 %v1355
    %v1494 = vpop.f32.mrb[0].mxu0
    %v1495 = vadd.f32 %v1010, %v1494
    %v1496 = vpop.f32.mrb[0].mxu0
    %v1497 = vadd.f32 %v1014, %v1496
    %1498 = vdwg.mxu0
    %1499 = vmatprep.subr.mxu0 %v418
    %1500 = vmatpush1.msra.mxu0 %v417
    %1501 = vmatprep.subr.mxu0 %v489
    %1502 = vmatpush1.msra.mxu0 %v488
    %1503 = vmatprep.subr.mxu0 %v560
    %1504 = vmatpush1.msra.mxu0 %v559
    %1505 = vmatprep.subr.mxu0 %v631
    %1506 = vmatpush1.msra.mxu0 %v630
    %1507 = vmatprep.subr.mxu0 %v702
    %1508 = vmatpush1.msra.mxu0 %v701
    %1509 = vmatprep.subr.mxu0 %v773
    %1510 = vmatpush1.msra.mxu0 %v772
    %1511 = vmatprep.subr.mxu0 %v844
    %1512 = vmatpush1.msra.mxu0 %v843
    %1513 = vmatprep.subr.mxu0 %v915
    %1514 = vmatpush1.msra.mxu0 %v914
    %1515 = vmatprep.subr.mxu0 0.0
    %1516 = vmatpush1.msra.mxu0 0.0
    %1517 = vmatprep.subr.mxu0 0.0
    %1518 = vmatpush1.msra.mxu0 0.0
    %1519 = vmatprep.subr.mxu0 0.0
    %1520 = vmatpush1.msra.mxu0 0.0
    %1521 = vmatprep.subr.mxu0 0.0
    %1522 = vmatpush1.msra.mxu0 0.0
    %1523 = vmatprep.subr.mxu0 0.0
    %1524 = vmatpush1.msra.mxu0 0.0
    %1525 = vmatprep.subr.mxu0 0.0
    %1526 = vmatpush1.msra.mxu0 0.0
    %1527 = vmatprep.subr.mxu0 0.0
    %1528 = vmatpush1.msra.mxu0 0.0
    %1529 = vmatprep.subr.mxu0 0.0
    %1530 = vmatpush1.msra.mxu0 0.0
    %1531 = vmatprep.subr.mxu0 0.0
    %1532 = vmatpush1.msra.mxu0 0.0
    %1533 = vmatprep.subr.mxu0 0.0
    %1534 = vmatpush1.msra.mxu0 0.0
    %1535 = vmatprep.subr.mxu0 0.0
    %1536 = vmatpush1.msra.mxu0 0.0
    %1537 = vmatprep.subr.mxu0 0.0
    %1538 = vmatpush1.msra.mxu0 0.0
    %1539 = vmatprep.subr.mxu0 0.0
    %1540 = vmatpush1.msra.mxu0 0.0
    %1541 = vmatprep.subr.mxu0 0.0
    %1542 = vmatpush1.msra.mxu0 0.0
    %1543 = vmatprep.subr.mxu0 0.0
    %1544 = vmatpush1.msra.mxu0 0.0
    %1545 = vmatprep.subr.mxu0 0.0
    %1546 = vmatpush1.msra.mxu0 0.0
    %1547 = vmatprep.subr.mxu0 0.0
    %1548 = vmatpush1.msra.mxu0 0.0
    %1549 = vmatprep.subr.mxu0 0.0
    %1550 = vmatpush1.msra.mxu0 0.0
    %1551 = vmatprep.subr.mxu0 0.0
    %1552 = vmatpush1.msra.mxu0 0.0
    %1553 = vmatprep.subr.mxu0 0.0
    %1554 = vmatpush1.msra.mxu0 0.0
    %1555 = vmatprep.subr.mxu0 0.0
    %1556 = vmatpush1.msra.mxu0 0.0
    %1557 = vmatprep.subr.mxu0 0.0
    %1558 = vmatpush1.msra.mxu0 0.0
    %1559 = vmatprep.subr.mxu0 0.0
    %1560 = vmatpush1.msra.mxu0 0.0
    %1561 = vmatprep.subr.mxu0 0.0
    %1562 = vmatpush1.msra.mxu0 0.0
    %1563 = vmatprep.mubr.f32.mxu0 0.0
    %1564 = vmatmul.mubr.f32.gmra.mrb[0].mxu0 %v1355
    %v1565 = vpop.f32.mrb[0].mxu0
    %v1566 = vadd.f32 %v1018, %v1565
    %v1567 = vpop.f32.mrb[0].mxu0
    %v1568 = vadd.f32 %v1022, %v1567
    %1569 = vdwg.mxu0
    %1570 = vmatprep.subr.mxu0 %v420
    %1571 = vmatpush1.msra.mxu0 %v419
    %1572 = vmatprep.subr.mxu0 %v491
    %1573 = vmatpush1.msra.mxu0 %v490
    %1574 = vmatprep.subr.mxu0 %v562
    %1575 = vmatpush1.msra.mxu0 %v561
    %1576 = vmatprep.subr.mxu0 %v633
    %1577 = vmatpush1.msra.mxu0 %v632
    %1578 = vmatprep.subr.mxu0 %v704
    %1579 = vmatpush1.msra.mxu0 %v703
    %1580 = vmatprep.subr.mxu0 %v775
    %1581 = vmatpush1.msra.mxu0 %v774
    %1582 = vmatprep.subr.mxu0 %v846
    %1583 = vmatpush1.msra.mxu0 %v845
    %1584 = vmatprep.subr.mxu0 %v917
    %1585 = vmatpush1.msra.mxu0 %v916
    %1586 = vmatprep.subr.mxu0 0.0
    %1587 = vmatpush1.msra.mxu0 0.0
    %1588 = vmatprep.subr.mxu0 0.0
    %1589 = vmatpush1.msra.mxu0 0.0
    %1590 = vmatprep.subr.mxu0 0.0
    %1591 = vmatpush1.msra.mxu0 0.0
    %1592 = vmatprep.subr.mxu0 0.0
    %1593 = vmatpush1.msra.mxu0 0.0
    %1594 = vmatprep.subr.mxu0 0.0
    %1595 = vmatpush1.msra.mxu0 0.0
    %1596 = vmatprep.subr.mxu0 0.0
    %1597 = vmatpush1.msra.mxu0 0.0
    %1598 = vmatprep.subr.mxu0 0.0
    %1599 = vmatpush1.msra.mxu0 0.0
    %1600 = vmatprep.subr.mxu0 0.0
    %1601 = vmatpush1.msra.mxu0 0.0
    %1602 = vmatprep.subr.mxu0 0.0
    %1603 = vmatpush1.msra.mxu0 0.0
    %1604 = vmatprep.subr.mxu0 0.0
    %1605 = vmatpush1.msra.mxu0 0.0
    %1606 = vmatprep.subr.mxu0 0.0
    %1607 = vmatpush1.msra.mxu0 0.0
    %1608 = vmatprep.subr.mxu0 0.0
    %1609 = vmatpush1.msra.mxu0 0.0
    %1610 = vmatprep.subr.mxu0 0.0
    %1611 = vmatpush1.msra.mxu0 0.0
    %1612 = vmatprep.subr.mxu0 0.0
    %1613 = vmatpush1.msra.mxu0 0.0
    %1614 = vmatprep.subr.mxu0 0.0
    %1615 = vmatpush1.msra.mxu0 0.0
    %1616 = vmatprep.subr.mxu0 0.0
    %1617 = vmatpush1.msra.mxu0 0.0
    %1618 = vmatprep.subr.mxu0 0.0
    %1619 = vmatpush1.msra.mxu0 0.0
    %1620 = vmatprep.subr.mxu0 0.0
    %1621 = vmatpush1.msra.mxu0 0.0
    %1622 = vmatprep.subr.mxu0 0.0
    %1623 = vmatpush1.msra.mxu0 0.0
    %1624 = vmatprep.subr.mxu0 0.0
    %1625 = vmatpush1.msra.mxu0 0.0
    %1626 = vmatprep.subr.mxu0 0.0
    %1627 = vmatpush1.msra.mxu0 0.0
    %1628 = vmatprep.subr.mxu0 0.0
    %1629 = vmatpush1.msra.mxu0 0.0
    %1630 = vmatprep.subr.mxu0 0.0
    %1631 = vmatpush1.msra.mxu0 0.0
    %1632 = vmatprep.subr.mxu0 0.0
    %1633 = vmatpush1.msra.mxu0 0.0
    %1634 = vmatprep.mubr.f32.mxu0 0.0
    %1635 = vmatmul.mubr.f32.gmra.mrb[0].mxu0 %v1355
    %v1636 = vpop.f32.mrb[0].mxu0
    %v1637 = vadd.f32 %v1026, %v1636
    %v1638 = vpop.f32.mrb[0].mxu0
    %v1639 = vadd.f32 %v1030, %v1638
    %1640 = vdwg.mxu0
    %1641 = vmatprep.subr.mxu0 %v422
    %1642 = vmatpush1.msra.mxu0 %v421
    %1643 = vmatprep.subr.mxu0 %v493
    %1644 = vmatpush1.msra.mxu0 %v492
    %1645 = vmatprep.subr.mxu0 %v564
    %1646 = vmatpush1.msra.mxu0 %v563
    %1647 = vmatprep.subr.mxu0 %v635
    %1648 = vmatpush1.msra.mxu0 %v634
    %1649 = vmatprep.subr.mxu0 %v706
    %1650 = vmatpush1.msra.mxu0 %v705
    %1651 = vmatprep.subr.mxu0 %v777
    %1652 = vmatpush1.msra.mxu0 %v776
    %1653 = vmatprep.subr.mxu0 %v848
    %1654 = vmatpush1.msra.mxu0 %v847
    %1655 = vmatprep.subr.mxu0 %v919
    %1656 = vmatpush1.msra.mxu0 %v918
    %1657 = vmatprep.subr.mxu0 0.0
    %1658 = vmatpush1.msra.mxu0 0.0
    %1659 = vmatprep.subr.mxu0 0.0
    %1660 = vmatpush1.msra.mxu0 0.0
    %1661 = vmatprep.subr.mxu0 0.0
    %1662 = vmatpush1.msra.mxu0 0.0
    %1663 = vmatprep.subr.mxu0 0.0
    %1664 = vmatpush1.msra.mxu0 0.0
    %1665 = vmatprep.subr.mxu0 0.0
    %1666 = vmatpush1.msra.mxu0 0.0
    %1667 = vmatprep.subr.mxu0 0.0
    %1668 = vmatpush1.msra.mxu0 0.0
    %1669 = vmatprep.subr.mxu0 0.0
    %1670 = vmatpush1.msra.mxu0 0.0
    %1671 = vmatprep.subr.mxu0 0.0
    %1672 = vmatpush1.msra.mxu0 0.0
    %1673 = vmatprep.subr.mxu0 0.0
    %1674 = vmatpush1.msra.mxu0 0.0
    %1675 = vmatprep.subr.mxu0 0.0
    %1676 = vmatpush1.msra.mxu0 0.0
    %1677 = vmatprep.subr.mxu0 0.0
    %1678 = vmatpush1.msra.mxu0 0.0
    %1679 = vmatprep.subr.mxu0 0.0
    %1680 = vmatpush1.msra.mxu0 0.0
    %1681 = vmatprep.subr.mxu0 0.0
    %1682 = vmatpush1.msra.mxu0 0.0
    %1683 = vmatprep.subr.mxu0 0.0
    %1684 = vmatpush1.msra.mxu0 0.0
    %1685 = vmatprep.subr.mxu0 0.0
    %1686 = vmatpush1.msra.mxu0 0.0
    %1687 = vmatprep.subr.mxu0 0.0
    %1688 = vmatpush1.msra.mxu0 0.0
    %1689 = vmatprep.subr.mxu0 0.0
    %1690 = vmatpush1.msra.mxu0 0.0
    %1691 = vmatprep.subr.mxu0 0.0
    %1692 = vmatpush1.msra.mxu0 0.0
    %1693 = vmatprep.subr.mxu0 0.0
    %1694 = vmatpush1.msra.mxu0 0.0
    %1695 = vmatprep.subr.mxu0 0.0
    %1696 = vmatpush1.msra.mxu0 0.0
    %1697 = vmatprep.subr.mxu0 0.0
    %1698 = vmatpush1.msra.mxu0 0.0
    %1699 = vmatprep.subr.mxu0 0.0
    %1700 = vmatpush1.msra.mxu0 0.0
    %1701 = vmatprep.subr.mxu0 0.0
    %1702 = vmatpush1.msra.mxu0 0.0
    %1703 = vmatprep.subr.mxu0 0.0
    %1704 = vmatpush1.msra.mxu0 0.0
    %1705 = vmatprep.mubr.f32.mxu0 0.0
    %1706 = vmatmul.mubr.f32.gmra.mrb[0].mxu0 %v1355
    %v1707 = vpop.f32.mrb[0].mxu0
    %v1708 = vadd.f32 %v1034, %v1707
    %v1709 = vpop.f32.mrb[0].mxu0
    %v1710 = vadd.f32 %v1038, %v1709
    %1711 = vdwg.mxu0
    %1712 = vmatprep.subr.mxu0 %v424
    %1713 = vmatpush1.msra.mxu0 %v423
    %1714 = vmatprep.subr.mxu0 %v495
    %1715 = vmatpush1.msra.mxu0 %v494
    %1716 = vmatprep.subr.mxu0 %v566
    %1717 = vmatpush1.msra.mxu0 %v565
    %1718 = vmatprep.subr.mxu0 %v637
    %1719 = vmatpush1.msra.mxu0 %v636
    %1720 = vmatprep.subr.mxu0 %v708
    %1721 = vmatpush1.msra.mxu0 %v707
    %1722 = vmatprep.subr.mxu0 %v779
    %1723 = vmatpush1.msra.mxu0 %v778
    %1724 = vmatprep.subr.mxu0 %v850
    %1725 = vmatpush1.msra.mxu0 %v849
    %1726 = vmatprep.subr.mxu0 %v921
    %1727 = vmatpush1.msra.mxu0 %v920
    %1728 = vmatprep.subr.mxu0 0.0
    %1729 = vmatpush1.msra.mxu0 0.0
    %1730 = vmatprep.subr.mxu0 0.0
    %1731 = vmatpush1.msra.mxu0 0.0
    %1732 = vmatprep.subr.mxu0 0.0
    %1733 = vmatpush1.msra.mxu0 0.0
    %1734 = vmatprep.subr.mxu0 0.0
    %1735 = vmatpush1.msra.mxu0 0.0
    %1736 = vmatprep.subr.mxu0 0.0
    %1737 = vmatpush1.msra.mxu0 0.0
    %1738 = vmatprep.subr.mxu0 0.0
    %1739 = vmatpush1.msra.mxu0 0.0
    %1740 = vmatprep.subr.mxu0 0.0
    %1741 = vmatpush1.msra.mxu0 0.0
    %1742 = vmatprep.subr.mxu0 0.0
    %1743 = vmatpush1.msra.mxu0 0.0
    %1744 = vmatprep.subr.mxu0 0.0
    %1745 = vmatpush1.msra.mxu0 0.0
    %1746 = vmatprep.subr.mxu0 0.0
    %1747 = vmatpush1.msra.mxu0 0.0
    %1748 = vmatprep.subr.mxu0 0.0
    %1749 = vmatpush1.msra.mxu0 0.0
    %1750 = vmatprep.subr.mxu0 0.0
    %1751 = vmatpush1.msra.mxu0 0.0
    %1752 = vmatprep.subr.mxu0 0.0
    %1753 = vmatpush1.msra.mxu0 0.0
    %1754 = vmatprep.subr.mxu0 0.0
    %1755 = vmatpush1.msra.mxu0 0.0
    %1756 = vmatprep.subr.mxu0 0.0
    %1757 = vmatpush1.msra.mxu0 0.0
    %1758 = vmatprep.subr.mxu0 0.0
    %1759 = vmatpush1.msra.mxu0 0.0
    %1760 = vmatprep.subr.mxu0 0.0
    %1761 = vmatpush1.msra.mxu0 0.0
    %1762 = vmatprep.subr.mxu0 0.0
    %1763 = vmatpush1.msra.mxu0 0.0
    %1764 = vmatprep.subr.mxu0 0.0
    %1765 = vmatpush1.msra.mxu0 0.0
    %1766 = vmatprep.subr.mxu0 0.0
    %1767 = vmatpush1.msra.mxu0 0.0
    %1768 = vmatprep.subr.mxu0 0.0
    %1769 = vmatpush1.msra.mxu0 0.0
    %1770 = vmatprep.subr.mxu0 0.0
    %1771 = vmatpush1.msra.mxu0 0.0
    %1772 = vmatprep.subr.mxu0 0.0
    %1773 = vmatpush1.msra.mxu0 0.0
    %1774 = vmatprep.subr.mxu0 0.0
    %1775 = vmatpush1.msra.mxu0 0.0
    %1776 = vmatprep.mubr.f32.mxu0 0.0
    %1777 = vmatmul.mubr.f32.gmra.mrb[0].mxu0 %v1355
    %v1778 = vpop.f32.mrb[0].mxu0
    %v1779 = vadd.f32 %v1042, %v1778
    %v1780 = vpop.f32.mrb[0].mxu0
    %v1781 = vadd.f32 %v1046, %v1780
    %1782 = vdwg.mxu0
    %1783 = vmatprep.subr.mxu0 %v426
    %1784 = vmatpush1.msra.mxu0 %v425
    %1785 = vmatprep.subr.mxu0 %v497
    %1786 = vmatpush1.msra.mxu0 %v496
    %1787 = vmatprep.subr.mxu0 %v568
    %1788 = vmatpush1.msra.mxu0 %v567
    %1789 = vmatprep.subr.mxu0 %v639
    %1790 = vmatpush1.msra.mxu0 %v638
    %1791 = vmatprep.subr.mxu0 %v710
    %1792 = vmatpush1.msra.mxu0 %v709
    %1793 = vmatprep.subr.mxu0 %v781
    %1794 = vmatpush1.msra.mxu0 %v780
    %1795 = vmatprep.subr.mxu0 %v852
    %1796 = vmatpush1.msra.mxu0 %v851
    %1797 = vmatprep.subr.mxu0 %v923
    %1798 = vmatpush1.msra.mxu0 %v922
    %1799 = vmatprep.subr.mxu0 0.0
    %1800 = vmatpush1.msra.mxu0 0.0
    %1801 = vmatprep.subr.mxu0 0.0
    %1802 = vmatpush1.msra.mxu0 0.0
    %1803 = vmatprep.subr.mxu0 0.0
    %1804 = vmatpush1.msra.mxu0 0.0
    %1805 = vmatprep.subr.mxu0 0.0
    %1806 = vmatpush1.msra.mxu0 0.0
    %1807 = vmatprep.subr.mxu0 0.0
    %1808 = vmatpush1.msra.mxu0 0.0
    %1809 = vmatprep.subr.mxu0 0.0
    %1810 = vmatpush1.msra.mxu0 0.0
    %1811 = vmatprep.subr.mxu0 0.0
    %1812 = vmatpush1.msra.mxu0 0.0
    %1813 = vmatprep.subr.mxu0 0.0
    %1814 = vmatpush1.msra.mxu0 0.0
    %1815 = vmatprep.subr.mxu0 0.0
    %1816 = vmatpush1.msra.mxu0 0.0
    %1817 = vmatprep.subr.mxu0 0.0
    %1818 = vmatpush1.msra.mxu0 0.0
    %1819 = vmatprep.subr.mxu0 0.0
    %1820 = vmatpush1.msra.mxu0 0.0
    %1821 = vmatprep.subr.mxu0 0.0
    %1822 = vmatpush1.msra.mxu0 0.0
    %1823 = vmatprep.subr.mxu0 0.0
    %1824 = vmatpush1.msra.mxu0 0.0
    %1825 = vmatprep.subr.mxu0 0.0
    %1826 = vmatpush1.msra.mxu0 0.0
    %1827 = vmatprep.subr.mxu0 0.0
    %1828 = vmatpush1.msra.mxu0 0.0
    %1829 = vmatprep.subr.mxu0 0.0
    %1830 = vmatpush1.msra.mxu0 0.0
    %1831 = vmatprep.subr.mxu0 0.0
    %1832 = vmatpush1.msra.mxu0 0.0
    %1833 = vmatprep.subr.mxu0 0.0
    %1834 = vmatpush1.msra.mxu0 0.0
    %1835 = vmatprep.subr.mxu0 0.0
    %1836 = vmatpush1.msra.mxu0 0.0
    %1837 = vmatprep.subr.mxu0 0.0
    %1838 = vmatpush1.msra.mxu0 0.0
    %1839 = vmatprep.subr.mxu0 0.0
    %1840 = vmatpush1.msra.mxu0 0.0
    %1841 = vmatprep.subr.mxu0 0.0
    %1842 = vmatpush1.msra.mxu0 0.0
    %1843 = vmatprep.subr.mxu0 0.0
    %1844 = vmatpush1.msra.mxu0 0.0
    %1845 = vmatprep.subr.mxu0 0.0
    %1846 = vmatpush1.msra.mxu0 0.0
    %1847 = vmatprep.mubr.f32.mxu0 0.0
    %1848 = vmatmul.mubr.f32.gmra.mrb[0].mxu0 %v1355
    %v1849 = vpop.f32.mrb[0].mxu0
    %v1850 = vadd.f32 %v1050, %v1849
    %v1851 = vpop.f32.mrb[0].mxu0
    %v1852 = vadd.f32 %v1054, %v1851
    %1853 = vdwg.mxu0
    %1854 = vmatprep.subr.mxu0 %v428
    %1855 = vmatpush1.msra.mxu0 %v427
    %1856 = vmatprep.subr.mxu0 %v499
    %1857 = vmatpush1.msra.mxu0 %v498
    %1858 = vmatprep.subr.mxu0 %v570
    %1859 = vmatpush1.msra.mxu0 %v569
    %1860 = vmatprep.subr.mxu0 %v641
    %1861 = vmatpush1.msra.mxu0 %v640
    %1862 = vmatprep.subr.mxu0 %v712
    %1863 = vmatpush1.msra.mxu0 %v711
    %1864 = vmatprep.subr.mxu0 %v783
    %1865 = vmatpush1.msra.mxu0 %v782
    %1866 = vmatprep.subr.mxu0 %v854
    %1867 = vmatpush1.msra.mxu0 %v853
    %1868 = vmatprep.subr.mxu0 %v925
    %1869 = vmatpush1.msra.mxu0 %v924
    %1870 = vmatprep.subr.mxu0 0.0
    %1871 = vmatpush1.msra.mxu0 0.0
    %1872 = vmatprep.subr.mxu0 0.0
    %1873 = vmatpush1.msra.mxu0 0.0
    %1874 = vmatprep.subr.mxu0 0.0
    %1875 = vmatpush1.msra.mxu0 0.0
    %1876 = vmatprep.subr.mxu0 0.0
    %1877 = vmatpush1.msra.mxu0 0.0
    %1878 = vmatprep.subr.mxu0 0.0
    %1879 = vmatpush1.msra.mxu0 0.0
    %1880 = vmatprep.subr.mxu0 0.0
    %1881 = vmatpush1.msra.mxu0 0.0
    %1882 = vmatprep.subr.mxu0 0.0
    %1883 = vmatpush1.msra.mxu0 0.0
    %1884 = vmatprep.subr.mxu0 0.0
    %1885 = vmatpush1.msra.mxu0 0.0
    %1886 = vmatprep.subr.mxu0 0.0
    %1887 = vmatpush1.msra.mxu0 0.0
    %1888 = vmatprep.subr.mxu0 0.0
    %1889 = vmatpush1.msra.mxu0 0.0
    %1890 = vmatprep.subr.mxu0 0.0
    %1891 = vmatpush1.msra.mxu0 0.0
    %1892 = vmatprep.subr.mxu0 0.0
    %1893 = vmatpush1.msra.mxu0 0.0
    %1894 = vmatprep.subr.mxu0 0.0
    %1895 = vmatpush1.msra.mxu0 0.0
    %1896 = vmatprep.subr.mxu0 0.0
    %1897 = vmatpush1.msra.mxu0 0.0
    %1898 = vmatprep.subr.mxu0 0.0
    %1899 = vmatpush1.msra.mxu0 0.0
    %1900 = vmatprep.subr.mxu0 0.0
    %1901 = vmatpush1.msra.mxu0 0.0
    %1902 = vmatprep.subr.mxu0 0.0
    %1903 = vmatpush1.msra.mxu0 0.0
    %1904 = vmatprep.subr.mxu0 0.0
    %1905 = vmatpush1.msra.mxu0 0.0
    %1906 = vmatprep.subr.mxu0 0.0
    %1907 = vmatpush1.msra.mxu0 0.0
    %1908 = vmatprep.subr.mxu0 0.0
    %1909 = vmatpush1.msra.mxu0 0.0
    %1910 = vmatprep.subr.mxu0 0.0
    %1911 = vmatpush1.msra.mxu0 0.0
    %1912 = vmatprep.subr.mxu0 0.0
    %1913 = vmatpush1.msra.mxu0 0.0
    %1914 = vmatprep.subr.mxu0 0.0
    %1915 = vmatpush1.msra.mxu0 0.0
    %1916 = vmatprep.subr.mxu0 0.0
    %1917 = vmatpush1.msra.mxu0 0.0
    %1918 = vmatprep.mubr.f32.mxu0 0.0
    %1919 = vmatmul.mubr.f32.gmra.mrb[0].mxu0 %v1355
    %v1920 = vpop.f32.mrb[0].mxu0
    %v1921 = vadd.f32 %v1058, %v1920
    %v1922 = vpop.f32.mrb[0].mxu0
    %v1923 = vadd.f32 %v1062, %v1922
    %1924 = vdwg.mxu0
    %1925 = vmatprep.subr.mxu0 %v430
    %1926 = vmatpush1.msra.mxu0 %v429
    %1927 = vmatprep.subr.mxu0 %v501
    %1928 = vmatpush1.msra.mxu0 %v500
    %1929 = vmatprep.subr.mxu0 %v572
    %1930 = vmatpush1.msra.mxu0 %v571
    %1931 = vmatprep.subr.mxu0 %v643
    %1932 = vmatpush1.msra.mxu0 %v642
    %1933 = vmatprep.subr.mxu0 %v714
    %1934 = vmatpush1.msra.mxu0 %v713
    %1935 = vmatprep.subr.mxu0 %v785
    %1936 = vmatpush1.msra.mxu0 %v784
    %1937 = vmatprep.subr.mxu0 %v856
    %1938 = vmatpush1.msra.mxu0 %v855
    %1939 = vmatprep.subr.mxu0 %v927
    %1940 = vmatpush1.msra.mxu0 %v926
    %1941 = vmatprep.subr.mxu0 0.0
    %1942 = vmatpush1.msra.mxu0 0.0
    %1943 = vmatprep.subr.mxu0 0.0
    %1944 = vmatpush1.msra.mxu0 0.0
    %1945 = vmatprep.subr.mxu0 0.0
    %1946 = vmatpush1.msra.mxu0 0.0
    %1947 = vmatprep.subr.mxu0 0.0
    %1948 = vmatpush1.msra.mxu0 0.0
    %1949 = vmatprep.subr.mxu0 0.0
    %1950 = vmatpush1.msra.mxu0 0.0
    %1951 = vmatprep.subr.mxu0 0.0
    %1952 = vmatpush1.msra.mxu0 0.0
    %1953 = vmatprep.subr.mxu0 0.0
    %1954 = vmatpush1.msra.mxu0 0.0
    %1955 = vmatprep.subr.mxu0 0.0
    %1956 = vmatpush1.msra.mxu0 0.0
    %1957 = vmatprep.subr.mxu0 0.0
    %1958 = vmatpush1.msra.mxu0 0.0
    %1959 = vmatprep.subr.mxu0 0.0
    %1960 = vmatpush1.msra.mxu0 0.0
    %1961 = vmatprep.subr.mxu0 0.0
    %1962 = vmatpush1.msra.mxu0 0.0
    %1963 = vmatprep.subr.mxu0 0.0
    %1964 = vmatpush1.msra.mxu0 0.0
    %1965 = vmatprep.subr.mxu0 0.0
    %1966 = vmatpush1.msra.mxu0 0.0
    %1967 = vmatprep.subr.mxu0 0.0
    %1968 = vmatpush1.msra.mxu0 0.0
    %1969 = vmatprep.subr.mxu0 0.0
    %1970 = vmatpush1.msra.mxu0 0.0
    %1971 = vmatprep.subr.mxu0 0.0
    %1972 = vmatpush1.msra.mxu0 0.0
    %1973 = vmatprep.subr.mxu0 0.0
    %1974 = vmatpush1.msra.mxu0 0.0
    %1975 = vmatprep.subr.mxu0 0.0
    %1976 = vmatpush1.msra.mxu0 0.0
    %1977 = vmatprep.subr.mxu0 0.0
    %1978 = vmatpush1.msra.mxu0 0.0
    %1979 = vmatprep.subr.mxu0 0.0
    %1980 = vmatpush1.msra.mxu0 0.0
    %1981 = vmatprep.subr.mxu0 0.0
    %1982 = vmatpush1.msra.mxu0 0.0
    %1983 = vmatprep.subr.mxu0 0.0
    %1984 = vmatpush1.msra.mxu0 0.0
    %1985 = vmatprep.subr.mxu0 0.0
    %1986 = vmatpush1.msra.mxu0 0.0
    %1987 = vmatprep.subr.mxu0 0.0
    %1988 = vmatpush1.msra.mxu0 0.0
    %1989 = vmatprep.mubr.f32.mxu0 0.0
    %1990 = vmatmul.mubr.f32.gmra.mrb[0].mxu0 %v1355
    %v1991 = vpop.f32.mrb[0].mxu0
    %v1992 = vadd.f32 %v1066, %v1991
    %v1993 = vpop.f32.mrb[0].mxu0
    %v1994 = vadd.f32 %v1070, %v1993
    %1995 = vdwg.mxu0
    %1996 = vmatprep.subr.mxu0 %v432
    %1997 = vmatpush1.msra.mxu0 %v431
    %1998 = vmatprep.subr.mxu0 %v503
    %1999 = vmatpush1.msra.mxu0 %v502
    %2000 = vmatprep.subr.mxu0 %v574
    %2001 = vmatpush1.msra.mxu0 %v573
    %2002 = vmatprep.subr.mxu0 %v645
    %2003 = vmatpush1.msra.mxu0 %v644
    %2004 = vmatprep.subr.mxu0 %v716
    %2005 = vmatpush1.msra.mxu0 %v715
    %2006 = vmatprep.subr.mxu0 %v787
    %2007 = vmatpush1.msra.mxu0 %v786
    %2008 = vmatprep.subr.mxu0 %v858
    %2009 = vmatpush1.msra.mxu0 %v857
    %2010 = vmatprep.subr.mxu0 %v929
    %2011 = vmatpush1.msra.mxu0 %v928
    %2012 = vmatprep.subr.mxu0 0.0
    %2013 = vmatpush1.msra.mxu0 0.0
    %2014 = vmatprep.subr.mxu0 0.0
    %2015 = vmatpush1.msra.mxu0 0.0
    %2016 = vmatprep.subr.mxu0 0.0
    %2017 = vmatpush1.msra.mxu0 0.0
    %2018 = vmatprep.subr.mxu0 0.0
    %2019 = vmatpush1.msra.mxu0 0.0
    %2020 = vmatprep.subr.mxu0 0.0
    %2021 = vmatpush1.msra.mxu0 0.0
    %2022 = vmatprep.subr.mxu0 0.0
    %2023 = vmatpush1.msra.mxu0 0.0
    %2024 = vmatprep.subr.mxu0 0.0
    %2025 = vmatpush1.msra.mxu0 0.0
    %2026 = vmatprep.subr.mxu0 0.0
    %2027 = vmatpush1.msra.mxu0 0.0
    %2028 = vmatprep.subr.mxu0 0.0
    %2029 = vmatpush1.msra.mxu0 0.0
    %2030 = vmatprep.subr.mxu0 0.0
    %2031 = vmatpush1.msra.mxu0 0.0
    %2032 = vmatprep.subr.mxu0 0.0
    %2033 = vmatpush1.msra.mxu0 0.0
    %2034 = vmatprep.subr.mxu0 0.0
    %2035 = vmatpush1.msra.mxu0 0.0
    %2036 = vmatprep.subr.mxu0 0.0
    %2037 = vmatpush1.msra.mxu0 0.0
    %2038 = vmatprep.subr.mxu0 0.0
    %2039 = vmatpush1.msra.mxu0 0.0
    %2040 = vmatprep.subr.mxu0 0.0
    %2041 = vmatpush1.msra.mxu0 0.0
    %2042 = vmatprep.subr.mxu0 0.0
    %2043 = vmatpush1.msra.mxu0 0.0
    %2044 = vmatprep.subr.mxu0 0.0
    %2045 = vmatpush1.msra.mxu0 0.0
    %2046 = vmatprep.subr.mxu0 0.0
    %2047 = vmatpush1.msra.mxu0 0.0
    %2048 = vmatprep.subr.mxu0 0.0
    %2049 = vmatpush1.msra.mxu0 0.0
    %2050 = vmatprep.subr.mxu0 0.0
    %2051 = vmatpush1.msra.mxu0 0.0
    %2052 = vmatprep.subr.mxu0 0.0
    %2053 = vmatpush1.msra.mxu0 0.0
    %2054 = vmatprep.subr.mxu0 0.0
    %2055 = vmatpush1.msra.mxu0 0.0
    %2056 = vmatprep.subr.mxu0 0.0
    %2057 = vmatpush1.msra.mxu0 0.0
    %2058 = vmatprep.subr.mxu0 0.0
    %2059 = vmatpush1.msra.mxu0 0.0
    %2060 = vmatprep.mubr.f32.mxu0 0.0
    %2061 = vmatmul.mubr.f32.gmra.mrb[0].mxu0 %v1355
    %v2062 = vpop.f32.mrb[0].mxu0
    %v2063 = vadd.f32 %v1074, %v2062
    %v2064 = vpop.f32.mrb[0].mxu0
    %v2065 = vadd.f32 %v1078, %v2064
    %2066 = vdwg.mxu0
    %2067 = vmatprep.subr.mxu0 %v434
    %2068 = vmatpush1.msra.mxu0 %v433
    %2069 = vmatprep.subr.mxu0 %v505
    %2070 = vmatpush1.msra.mxu0 %v504
    %2071 = vmatprep.subr.mxu0 %v576
    %2072 = vmatpush1.msra.mxu0 %v575
    %2073 = vmatprep.subr.mxu0 %v647
    %2074 = vmatpush1.msra.mxu0 %v646
    %2075 = vmatprep.subr.mxu0 %v718
    %2076 = vmatpush1.msra.mxu0 %v717
    %2077 = vmatprep.subr.mxu0 %v789
    %2078 = vmatpush1.msra.mxu0 %v788
    %2079 = vmatprep.subr.mxu0 %v860
    %2080 = vmatpush1.msra.mxu0 %v859
    %2081 = vmatprep.subr.mxu0 %v931
    %2082 = vmatpush1.msra.mxu0 %v930
    %2083 = vmatprep.subr.mxu0 0.0
    %2084 = vmatpush1.msra.mxu0 0.0
    %2085 = vmatprep.subr.mxu0 0.0
    %2086 = vmatpush1.msra.mxu0 0.0
    %2087 = vmatprep.subr.mxu0 0.0
    %2088 = vmatpush1.msra.mxu0 0.0
    %2089 = vmatprep.subr.mxu0 0.0
    %2090 = vmatpush1.msra.mxu0 0.0
    %2091 = vmatprep.subr.mxu0 0.0
    %2092 = vmatpush1.msra.mxu0 0.0
    %2093 = vmatprep.subr.mxu0 0.0
    %2094 = vmatpush1.msra.mxu0 0.0
    %2095 = vmatprep.subr.mxu0 0.0
    %2096 = vmatpush1.msra.mxu0 0.0
    %2097 = vmatprep.subr.mxu0 0.0
    %2098 = vmatpush1.msra.mxu0 0.0
    %2099 = vmatprep.subr.mxu0 0.0
    %2100 = vmatpush1.msra.mxu0 0.0
    %2101 = vmatprep.subr.mxu0 0.0
    %2102 = vmatpush1.msra.mxu0 0.0
    %2103 = vmatprep.subr.mxu0 0.0
    %2104 = vmatpush1.msra.mxu0 0.0
    %2105 = vmatprep.subr.mxu0 0.0
    %2106 = vmatpush1.msra.mxu0 0.0
    %2107 = vmatprep.subr.mxu0 0.0
    %2108 = vmatpush1.msra.mxu0 0.0
    %2109 = vmatprep.subr.mxu0 0.0
    %2110 = vmatpush1.msra.mxu0 0.0
    %2111 = vmatprep.subr.mxu0 0.0
    %2112 = vmatpush1.msra.mxu0 0.0
    %2113 = vmatprep.subr.mxu0 0.0
    %2114 = vmatpush1.msra.mxu0 0.0
    %2115 = vmatprep.subr.mxu0 0.0
    %2116 = vmatpush1.msra.mxu0 0.0
    %2117 = vmatprep.subr.mxu0 0.0
    %2118 = vmatpush1.msra.mxu0 0.0
    %2119 = vmatprep.subr.mxu0 0.0
    %2120 = vmatpush1.msra.mxu0 0.0
    %2121 = vmatprep.subr.mxu0 0.0
    %2122 = vmatpush1.msra.mxu0 0.0
    %2123 = vmatprep.subr.mxu0 0.0
    %2124 = vmatpush1.msra.mxu0 0.0
    %2125 = vmatprep.subr.mxu0 0.0
    %2126 = vmatpush1.msra.mxu0 0.0
    %2127 = vmatprep.subr.mxu0 0.0
    %2128 = vmatpush1.msra.mxu0 0.0
    %2129 = vmatprep.subr.mxu0 0.0
    %2130 = vmatpush1.msra.mxu0 0.0
    %2131 = vmatprep.mubr.f32.mxu0 0.0
    %2132 = vmatmul.mubr.f32.gmra.mrb[0].mxu0 %v1355
    %v2133 = vpop.f32.mrb[0].mxu0
    %v2134 = vadd.f32 %v1082, %v2133
    %v2135 = vpop.f32.mrb[0].mxu0
    %v2136 = vadd.f32 %v1086, %v2135
    %2137 = vdwg.mxu0
    %2138 = vmatprep.subr.mxu0 %v436
    %2139 = vmatpush1.msra.mxu0 %v435
    %2140 = vmatprep.subr.mxu0 %v507
    %2141 = vmatpush1.msra.mxu0 %v506
    %2142 = vmatprep.subr.mxu0 %v578
    %2143 = vmatpush1.msra.mxu0 %v577
    %2144 = vmatprep.subr.mxu0 %v649
    %2145 = vmatpush1.msra.mxu0 %v648
    %2146 = vmatprep.subr.mxu0 %v720
    %2147 = vmatpush1.msra.mxu0 %v719
    %2148 = vmatprep.subr.mxu0 %v791
    %2149 = vmatpush1.msra.mxu0 %v790
    %2150 = vmatprep.subr.mxu0 %v862
    %2151 = vmatpush1.msra.mxu0 %v861
    %2152 = vmatprep.subr.mxu0 %v933
    %2153 = vmatpush1.msra.mxu0 %v932
    %2154 = vmatprep.subr.mxu0 0.0
    %2155 = vmatpush1.msra.mxu0 0.0
    %2156 = vmatprep.subr.mxu0 0.0
    %2157 = vmatpush1.msra.mxu0 0.0
    %2158 = vmatprep.subr.mxu0 0.0
    %2159 = vmatpush1.msra.mxu0 0.0
    %2160 = vmatprep.subr.mxu0 0.0
    %2161 = vmatpush1.msra.mxu0 0.0
    %2162 = vmatprep.subr.mxu0 0.0
    %2163 = vmatpush1.msra.mxu0 0.0
    %2164 = vmatprep.subr.mxu0 0.0
    %2165 = vmatpush1.msra.mxu0 0.0
    %2166 = vmatprep.subr.mxu0 0.0
    %2167 = vmatpush1.msra.mxu0 0.0
    %2168 = vmatprep.subr.mxu0 0.0
    %2169 = vmatpush1.msra.mxu0 0.0
    %2170 = vmatprep.subr.mxu0 0.0
    %2171 = vmatpush1.msra.mxu0 0.0
    %2172 = vmatprep.subr.mxu0 0.0
    %2173 = vmatpush1.msra.mxu0 0.0
    %2174 = vmatprep.subr.mxu0 0.0
    %2175 = vmatpush1.msra.mxu0 0.0
    %2176 = vmatprep.subr.mxu0 0.0
    %2177 = vmatpush1.msra.mxu0 0.0
    %2178 = vmatprep.subr.mxu0 0.0
    %2179 = vmatpush1.msra.mxu0 0.0
    %2180 = vmatprep.subr.mxu0 0.0
    %2181 = vmatpush1.msra.mxu0 0.0
    %2182 = vmatprep.subr.mxu0 0.0
    %2183 = vmatpush1.msra.mxu0 0.0
    %2184 = vmatprep.subr.mxu0 0.0
    %2185 = vmatpush1.msra.mxu0 0.0
    %2186 = vmatprep.subr.mxu0 0.0
    %2187 = vmatpush1.msra.mxu0 0.0
    %2188 = vmatprep.subr.mxu0 0.0
    %2189 = vmatpush1.msra.mxu0 0.0
    %2190 = vmatprep.subr.mxu0 0.0
    %2191 = vmatpush1.msra.mxu0 0.0
    %2192 = vmatprep.subr.mxu0 0.0
    %2193 = vmatpush1.msra.mxu0 0.0
    %2194 = vmatprep.subr.mxu0 0.0
    %2195 = vmatpush1.msra.mxu0 0.0
    %2196 = vmatprep.subr.mxu0 0.0
    %2197 = vmatpush1.msra.mxu0 0.0
    %2198 = vmatprep.subr.mxu0 0.0
    %2199 = vmatpush1.msra.mxu0 0.0
    %2200 = vmatprep.subr.mxu0 0.0
    %2201 = vmatpush1.msra.mxu0 0.0
    %2202 = vmatprep.mubr.f32.mxu0 0.0
    %2203 = vmatmul.mubr.f32.gmra.mrb[0].mxu0 %v1355
    %v2204 = vpop.f32.mrb[0].mxu0
    %v2205 = vadd.f32 %v1090, %v2204
    %v2206 = vpop.f32.mrb[0].mxu0
    %v2207 = vadd.f32 %v1094, %v2206
    %2208 = vdwg.mxu0
    %2209 = vmatprep.subr.mxu0 %v438
    %2210 = vmatpush1.msra.mxu0 %v437
    %2211 = vmatprep.subr.mxu0 %v509
    %2212 = vmatpush1.msra.mxu0 %v508
    %2213 = vmatprep.subr.mxu0 %v580
    %2214 = vmatpush1.msra.mxu0 %v579
    %2215 = vmatprep.subr.mxu0 %v651
    %2216 = vmatpush1.msra.mxu0 %v650
    %2217 = vmatprep.subr.mxu0 %v722
    %2218 = vmatpush1.msra.mxu0 %v721
    %2219 = vmatprep.subr.mxu0 %v793
    %2220 = vmatpush1.msra.mxu0 %v792
    %2221 = vmatprep.subr.mxu0 %v864
    %2222 = vmatpush1.msra.mxu0 %v863
    %2223 = vmatprep.subr.mxu0 %v935
    %2224 = vmatpush1.msra.mxu0 %v934
    %2225 = vmatprep.subr.mxu0 0.0
    %2226 = vmatpush1.msra.mxu0 0.0
    %2227 = vmatprep.subr.mxu0 0.0
    %2228 = vmatpush1.msra.mxu0 0.0
    %2229 = vmatprep.subr.mxu0 0.0
    %2230 = vmatpush1.msra.mxu0 0.0
    %2231 = vmatprep.subr.mxu0 0.0
    %2232 = vmatpush1.msra.mxu0 0.0
    %2233 = vmatprep.subr.mxu0 0.0
    %2234 = vmatpush1.msra.mxu0 0.0
    %2235 = vmatprep.subr.mxu0 0.0
    %2236 = vmatpush1.msra.mxu0 0.0
    %2237 = vmatprep.subr.mxu0 0.0
    %2238 = vmatpush1.msra.mxu0 0.0
    %2239 = vmatprep.subr.mxu0 0.0
    %2240 = vmatpush1.msra.mxu0 0.0
    %2241 = vmatprep.subr.mxu0 0.0
    %2242 = vmatpush1.msra.mxu0 0.0
    %2243 = vmatprep.subr.mxu0 0.0
    %2244 = vmatpush1.msra.mxu0 0.0
    %2245 = vmatprep.subr.mxu0 0.0
    %2246 = vmatpush1.msra.mxu0 0.0
    %2247 = vmatprep.subr.mxu0 0.0
    %2248 = vmatpush1.msra.mxu0 0.0
    %2249 = vmatprep.subr.mxu0 0.0
    %2250 = vmatpush1.msra.mxu0 0.0
    %2251 = vmatprep.subr.mxu0 0.0
    %2252 = vmatpush1.msra.mxu0 0.0
    %2253 = vmatprep.subr.mxu0 0.0
    %2254 = vmatpush1.msra.mxu0 0.0
    %2255 = vmatprep.subr.mxu0 0.0
    %2256 = vmatpush1.msra.mxu0 0.0
    %2257 = vmatprep.subr.mxu0 0.0
    %2258 = vmatpush1.msra.mxu0 0.0
    %2259 = vmatprep.subr.mxu0 0.0
    %2260 = vmatpush1.msra.mxu0 0.0
    %2261 = vmatprep.subr.mxu0 0.0
    %2262 = vmatpush1.msra.mxu0 0.0
    %2263 = vmatprep.subr.mxu0 0.0
    %2264 = vmatpush1.msra.mxu0 0.0
    %2265 = vmatprep.subr.mxu0 0.0
    %2266 = vmatpush1.msra.mxu0 0.0
    %2267 = vmatprep.subr.mxu0 0.0
    %2268 = vmatpush1.msra.mxu0 0.0
    %2269 = vmatprep.subr.mxu0 0.0
    %2270 = vmatpush1.msra.mxu0 0.0
    %2271 = vmatprep.subr.mxu0 0.0
    %2272 = vmatpush1.msra.mxu0 0.0
    %2273 = vmatprep.mubr.f32.mxu0 0.0
    %2274 = vmatmul.mubr.f32.gmra.mrb[0].mxu0 %v1355
    %v2275 = vpop.f32.mrb[0].mxu0
    %v2276 = vadd.f32 %v1098, %v2275
    %v2277 = vpop.f32.mrb[0].mxu0
    %v2278 = vadd.f32 %v1102, %v2277
    %2279 = vdwg.mxu0
    %2280 = vmatprep.subr.mxu0 %v440
    %2281 = vmatpush1.msra.mxu0 %v439
    %2282 = vmatprep.subr.mxu0 %v511
    %2283 = vmatpush1.msra.mxu0 %v510
    %2284 = vmatprep.subr.mxu0 %v582
    %2285 = vmatpush1.msra.mxu0 %v581
    %2286 = vmatprep.subr.mxu0 %v653
    %2287 = vmatpush1.msra.mxu0 %v652
    %2288 = vmatprep.subr.mxu0 %v724
    %2289 = vmatpush1.msra.mxu0 %v723
    %2290 = vmatprep.subr.mxu0 %v795
    %2291 = vmatpush1.msra.mxu0 %v794
    %2292 = vmatprep.subr.mxu0 %v866
    %2293 = vmatpush1.msra.mxu0 %v865
    %2294 = vmatprep.subr.mxu0 %v937
    %2295 = vmatpush1.msra.mxu0 %v936
    %2296 = vmatprep.subr.mxu0 0.0
    %2297 = vmatpush1.msra.mxu0 0.0
    %2298 = vmatprep.subr.mxu0 0.0
    %2299 = vmatpush1.msra.mxu0 0.0
    %2300 = vmatprep.subr.mxu0 0.0
    %2301 = vmatpush1.msra.mxu0 0.0
    %2302 = vmatprep.subr.mxu0 0.0
    %2303 = vmatpush1.msra.mxu0 0.0
    %2304 = vmatprep.subr.mxu0 0.0
    %2305 = vmatpush1.msra.mxu0 0.0
    %2306 = vmatprep.subr.mxu0 0.0
    %2307 = vmatpush1.msra.mxu0 0.0
    %2308 = vmatprep.subr.mxu0 0.0
    %2309 = vmatpush1.msra.mxu0 0.0
    %2310 = vmatprep.subr.mxu0 0.0
    %2311 = vmatpush1.msra.mxu0 0.0
    %2312 = vmatprep.subr.mxu0 0.0
    %2313 = vmatpush1.msra.mxu0 0.0
    %2314 = vmatprep.subr.mxu0 0.0
    %2315 = vmatpush1.msra.mxu0 0.0
    %2316 = vmatprep.subr.mxu0 0.0
    %2317 = vmatpush1.msra.mxu0 0.0
    %2318 = vmatprep.subr.mxu0 0.0
    %2319 = vmatpush1.msra.mxu0 0.0
    %2320 = vmatprep.subr.mxu0 0.0
    %2321 = vmatpush1.msra.mxu0 0.0
    %2322 = vmatprep.subr.mxu0 0.0
    %2323 = vmatpush1.msra.mxu0 0.0
    %2324 = vmatprep.subr.mxu0 0.0
    %2325 = vmatpush1.msra.mxu0 0.0
    %2326 = vmatprep.subr.mxu0 0.0
    %2327 = vmatpush1.msra.mxu0 0.0
    %2328 = vmatprep.subr.mxu0 0.0
    %2329 = vmatpush1.msra.mxu0 0.0
    %2330 = vmatprep.subr.mxu0 0.0
    %2331 = vmatpush1.msra.mxu0 0.0
    %2332 = vmatprep.subr.mxu0 0.0
    %2333 = vmatpush1.msra.mxu0 0.0
    %2334 = vmatprep.subr.mxu0 0.0
    %2335 = vmatpush1.msra.mxu0 0.0
    %2336 = vmatprep.subr.mxu0 0.0
    %2337 = vmatpush1.msra.mxu0 0.0
    %2338 = vmatprep.subr.mxu0 0.0
    %2339 = vmatpush1.msra.mxu0 0.0
    %2340 = vmatprep.subr.mxu0 0.0
    %2341 = vmatpush1.msra.mxu0 0.0
    %2342 = vmatprep.subr.mxu0 0.0
    %2343 = vmatpush1.msra.mxu0 0.0
    %2344 = vmatprep.mubr.f32.mxu0 0.0
    %2345 = vmatmul.mubr.f32.gmra.mrb[0].mxu0 %v1355
    %v2346 = vpop.f32.mrb[0].mxu0
    %v2347 = vadd.f32 %v1106, %v2346
    %v2348 = vpop.f32.mrb[0].mxu0
    %v2349 = vadd.f32 %v1110, %v2348
    %2350 = vdwg.mxu0
    %2351 = vmatprep.subr.mxu0 %v442
    %2352 = vmatpush1.msra.mxu0 %v441
    %2353 = vmatprep.subr.mxu0 %v513
    %2354 = vmatpush1.msra.mxu0 %v512
    %2355 = vmatprep.subr.mxu0 %v584
    %2356 = vmatpush1.msra.mxu0 %v583
    %2357 = vmatprep.subr.mxu0 %v655
    %2358 = vmatpush1.msra.mxu0 %v654
    %2359 = vmatprep.subr.mxu0 %v726
    %2360 = vmatpush1.msra.mxu0 %v725
    %2361 = vmatprep.subr.mxu0 %v797
    %2362 = vmatpush1.msra.mxu0 %v796
    %2363 = vmatprep.subr.mxu0 %v868
    %2364 = vmatpush1.msra.mxu0 %v867
    %2365 = vmatprep.subr.mxu0 %v939
    %2366 = vmatpush1.msra.mxu0 %v938
    %2367 = vmatprep.subr.mxu0 0.0
    %2368 = vmatpush1.msra.mxu0 0.0
    %2369 = vmatprep.subr.mxu0 0.0
    %2370 = vmatpush1.msra.mxu0 0.0
    %2371 = vmatprep.subr.mxu0 0.0
    %2372 = vmatpush1.msra.mxu0 0.0
    %2373 = vmatprep.subr.mxu0 0.0
    %2374 = vmatpush1.msra.mxu0 0.0
    %2375 = vmatprep.subr.mxu0 0.0
    %2376 = vmatpush1.msra.mxu0 0.0
    %2377 = vmatprep.subr.mxu0 0.0
    %2378 = vmatpush1.msra.mxu0 0.0
    %2379 = vmatprep.subr.mxu0 0.0
    %2380 = vmatpush1.msra.mxu0 0.0
    %2381 = vmatprep.subr.mxu0 0.0
    %2382 = vmatpush1.msra.mxu0 0.0
    %2383 = vmatprep.subr.mxu0 0.0
    %2384 = vmatpush1.msra.mxu0 0.0
    %2385 = vmatprep.subr.mxu0 0.0
    %2386 = vmatpush1.msra.mxu0 0.0
    %2387 = vmatprep.subr.mxu0 0.0
    %2388 = vmatpush1.msra.mxu0 0.0
    %2389 = vmatprep.subr.mxu0 0.0
    %2390 = vmatpush1.msra.mxu0 0.0
    %2391 = vmatprep.subr.mxu0 0.0
    %2392 = vmatpush1.msra.mxu0 0.0
    %2393 = vmatprep.subr.mxu0 0.0
    %2394 = vmatpush1.msra.mxu0 0.0
    %2395 = vmatprep.subr.mxu0 0.0
    %2396 = vmatpush1.msra.mxu0 0.0
    %2397 = vmatprep.subr.mxu0 0.0
    %2398 = vmatpush1.msra.mxu0 0.0
    %2399 = vmatprep.subr.mxu0 0.0
    %2400 = vmatpush1.msra.mxu0 0.0
    %2401 = vmatprep.subr.mxu0 0.0
    %2402 = vmatpush1.msra.mxu0 0.0
    %2403 = vmatprep.subr.mxu0 0.0
    %2404 = vmatpush1.msra.mxu0 0.0
    %2405 = vmatprep.subr.mxu0 0.0
    %2406 = vmatpush1.msra.mxu0 0.0
    %2407 = vmatprep.subr.mxu0 0.0
    %2408 = vmatpush1.msra.mxu0 0.0
    %2409 = vmatprep.subr.mxu0 0.0
    %2410 = vmatpush1.msra.mxu0 0.0
    %2411 = vmatprep.subr.mxu0 0.0
    %2412 = vmatpush1.msra.mxu0 0.0
    %2413 = vmatprep.subr.mxu0 0.0
    %2414 = vmatpush1.msra.mxu0 0.0
    %2415 = vmatprep.mubr.f32.mxu0 0.0
    %2416 = vmatmul.mubr.f32.gmra.mrb[0].mxu0 %v1355
    %v2417 = vpop.f32.mrb[0].mxu0
    %v2418 = vadd.f32 %v1114, %v2417
    %v2419 = vpop.f32.mrb[0].mxu0
    %v2420 = vadd.f32 %v1118, %v2419
    %2421 = vdwg.mxu0
    %2422 = vmatprep.subr.mxu0 %v444
    %2423 = vmatpush1.msra.mxu0 %v443
    %2424 = vmatprep.subr.mxu0 %v515
    %2425 = vmatpush1.msra.mxu0 %v514
    %2426 = vmatprep.subr.mxu0 %v586
    %2427 = vmatpush1.msra.mxu0 %v585
    %2428 = vmatprep.subr.mxu0 %v657
    %2429 = vmatpush1.msra.mxu0 %v656
    %2430 = vmatprep.subr.mxu0 %v728
    %2431 = vmatpush1.msra.mxu0 %v727
    %2432 = vmatprep.subr.mxu0 %v799
    %2433 = vmatpush1.msra.mxu0 %v798
    %2434 = vmatprep.subr.mxu0 %v870
    %2435 = vmatpush1.msra.mxu0 %v869
    %2436 = vmatprep.subr.mxu0 %v941
    %2437 = vmatpush1.msra.mxu0 %v940
    %2438 = vmatprep.subr.mxu0 0.0
    %2439 = vmatpush1.msra.mxu0 0.0
    %2440 = vmatprep.subr.mxu0 0.0
    %2441 = vmatpush1.msra.mxu0 0.0
    %2442 = vmatprep.subr.mxu0 0.0
    %2443 = vmatpush1.msra.mxu0 0.0
    %2444 = vmatprep.subr.mxu0 0.0
    %2445 = vmatpush1.msra.mxu0 0.0
    %2446 = vmatprep.subr.mxu0 0.0
    %2447 = vmatpush1.msra.mxu0 0.0
    %2448 = vmatprep.subr.mxu0 0.0
    %2449 = vmatpush1.msra.mxu0 0.0
    %2450 = vmatprep.subr.mxu0 0.0
    %2451 = vmatpush1.msra.mxu0 0.0
    %2452 = vmatprep.subr.mxu0 0.0
    %2453 = vmatpush1.msra.mxu0 0.0
    %2454 = vmatprep.subr.mxu0 0.0
    %2455 = vmatpush1.msra.mxu0 0.0
    %2456 = vmatprep.subr.mxu0 0.0
    %2457 = vmatpush1.msra.mxu0 0.0
    %2458 = vmatprep.subr.mxu0 0.0
    %2459 = vmatpush1.msra.mxu0 0.0
    %2460 = vmatprep.subr.mxu0 0.0
    %2461 = vmatpush1.msra.mxu0 0.0
    %2462 = vmatprep.subr.mxu0 0.0
    %2463 = vmatpush1.msra.mxu0 0.0
    %2464 = vmatprep.subr.mxu0 0.0
    %2465 = vmatpush1.msra.mxu0 0.0
    %2466 = vmatprep.subr.mxu0 0.0
    %2467 = vmatpush1.msra.mxu0 0.0
    %2468 = vmatprep.subr.mxu0 0.0
    %2469 = vmatpush1.msra.mxu0 0.0
    %2470 = vmatprep.subr.mxu0 0.0
    %2471 = vmatpush1.msra.mxu0 0.0
    %2472 = vmatprep.subr.mxu0 0.0
    %2473 = vmatpush1.msra.mxu0 0.0
    %2474 = vmatprep.subr.mxu0 0.0
    %2475 = vmatpush1.msra.mxu0 0.0
    %2476 = vmatprep.subr.mxu0 0.0
    %2477 = vmatpush1.msra.mxu0 0.0
    %2478 = vmatprep.subr.mxu0 0.0
    %2479 = vmatpush1.msra.mxu0 0.0
    %2480 = vmatprep.subr.mxu0 0.0
    %2481 = vmatpush1.msra.mxu0 0.0
    %2482 = vmatprep.subr.mxu0 0.0
    %2483 = vmatpush1.msra.mxu0 0.0
    %2484 = vmatprep.subr.mxu0 0.0
    %2485 = vmatpush1.msra.mxu0 0.0
    %2486 = vmatprep.mubr.f32.mxu0 0.0
    %2487 = vmatmul.mubr.f32.gmra.mrb[0].mxu0 %v1355
    %v2488 = vpop.f32.mrb[0].mxu0
    %v2489 = vadd.f32 %v1122, %v2488
    %v2490 = vpop.f32.mrb[0].mxu0
    %v2491 = vadd.f32 %v1126, %v2490
    %2492 = vdwg.mxu0
    %2493 = vmatprep.subr.mxu0 %v446
    %2494 = vmatpush1.msra.mxu0 %v445
    %2495 = vmatprep.subr.mxu0 %v517
    %2496 = vmatpush1.msra.mxu0 %v516
    %2497 = vmatprep.subr.mxu0 %v588
    %2498 = vmatpush1.msra.mxu0 %v587
    %2499 = vmatprep.subr.mxu0 %v659
    %2500 = vmatpush1.msra.mxu0 %v658
    %2501 = vmatprep.subr.mxu0 %v730
    %2502 = vmatpush1.msra.mxu0 %v729
    %2503 = vmatprep.subr.mxu0 %v801
    %2504 = vmatpush1.msra.mxu0 %v800
    %2505 = vmatprep.subr.mxu0 %v872
    %2506 = vmatpush1.msra.mxu0 %v871
    %2507 = vmatprep.subr.mxu0 %v943
    %2508 = vmatpush1.msra.mxu0 %v942
    %2509 = vmatprep.subr.mxu0 0.0
    %2510 = vmatpush1.msra.mxu0 0.0
    %2511 = vmatprep.subr.mxu0 0.0
    %2512 = vmatpush1.msra.mxu0 0.0
    %2513 = vmatprep.subr.mxu0 0.0
    %2514 = vmatpush1.msra.mxu0 0.0
    %2515 = vmatprep.subr.mxu0 0.0
    %2516 = vmatpush1.msra.mxu0 0.0
    %2517 = vmatprep.subr.mxu0 0.0
    %2518 = vmatpush1.msra.mxu0 0.0
    %2519 = vmatprep.subr.mxu0 0.0
    %2520 = vmatpush1.msra.mxu0 0.0
    %2521 = vmatprep.subr.mxu0 0.0
    %2522 = vmatpush1.msra.mxu0 0.0
    %2523 = vmatprep.subr.mxu0 0.0
    %2524 = vmatpush1.msra.mxu0 0.0
    %2525 = vmatprep.subr.mxu0 0.0
    %2526 = vmatpush1.msra.mxu0 0.0
    %2527 = vmatprep.subr.mxu0 0.0
    %2528 = vmatpush1.msra.mxu0 0.0
    %2529 = vmatprep.subr.mxu0 0.0
    %2530 = vmatpush1.msra.mxu0 0.0
    %2531 = vmatprep.subr.mxu0 0.0
    %2532 = vmatpush1.msra.mxu0 0.0
    %2533 = vmatprep.subr.mxu0 0.0
    %2534 = vmatpush1.msra.mxu0 0.0
    %2535 = vmatprep.subr.mxu0 0.0
    %2536 = vmatpush1.msra.mxu0 0.0
    %2537 = vmatprep.subr.mxu0 0.0
    %2538 = vmatpush1.msra.mxu0 0.0
    %2539 = vmatprep.subr.mxu0 0.0
    %2540 = vmatpush1.msra.mxu0 0.0
    %2541 = vmatprep.subr.mxu0 0.0
    %2542 = vmatpush1.msra.mxu0 0.0
    %2543 = vmatprep.subr.mxu0 0.0
    %2544 = vmatpush1.msra.mxu0 0.0
    %2545 = vmatprep.subr.mxu0 0.0
    %2546 = vmatpush1.msra.mxu0 0.0
    %2547 = vmatprep.subr.mxu0 0.0
    %2548 = vmatpush1.msra.mxu0 0.0
    %2549 = vmatprep.subr.mxu0 0.0
    %2550 = vmatpush1.msra.mxu0 0.0
    %2551 = vmatprep.subr.mxu0 0.0
    %2552 = vmatpush1.msra.mxu0 0.0
    %2553 = vmatprep.subr.mxu0 0.0
    %2554 = vmatpush1.msra.mxu0 0.0
    %2555 = vmatprep.subr.mxu0 0.0
    %2556 = vmatpush1.msra.mxu0 0.0
    %2557 = vmatprep.mubr.f32.mxu0 0.0
    %2558 = vmatmul.mubr.f32.gmra.mrb[0].mxu0 %v1355
    %v2559 = vpop.f32.mrb[0].mxu0
    %v2560 = vadd.f32 %v1130, %v2559
    %v2561 = vpop.f32.mrb[0].mxu0
    %v2562 = vadd.f32 %v1134, %v2561
    %2563 = vdwg.mxu0
    %2564 = vmatprep.subr.mxu0 %v448
    %2565 = vmatpush1.msra.mxu0 %v447
    %2566 = vmatprep.subr.mxu0 %v519
    %2567 = vmatpush1.msra.mxu0 %v518
    %2568 = vmatprep.subr.mxu0 %v590
    %2569 = vmatpush1.msra.mxu0 %v589
    %2570 = vmatprep.subr.mxu0 %v661
    %2571 = vmatpush1.msra.mxu0 %v660
    %2572 = vmatprep.subr.mxu0 %v732
    %2573 = vmatpush1.msra.mxu0 %v731
    %2574 = vmatprep.subr.mxu0 %v803
    %2575 = vmatpush1.msra.mxu0 %v802
    %2576 = vmatprep.subr.mxu0 %v874
    %2577 = vmatpush1.msra.mxu0 %v873
    %2578 = vmatprep.subr.mxu0 %v945
    %2579 = vmatpush1.msra.mxu0 %v944
    %2580 = vmatprep.subr.mxu0 0.0
    %2581 = vmatpush1.msra.mxu0 0.0
    %2582 = vmatprep.subr.mxu0 0.0
    %2583 = vmatpush1.msra.mxu0 0.0
    %2584 = vmatprep.subr.mxu0 0.0
    %2585 = vmatpush1.msra.mxu0 0.0
    %2586 = vmatprep.subr.mxu0 0.0
    %2587 = vmatpush1.msra.mxu0 0.0
    %2588 = vmatprep.subr.mxu0 0.0
    %2589 = vmatpush1.msra.mxu0 0.0
    %2590 = vmatprep.subr.mxu0 0.0
    %2591 = vmatpush1.msra.mxu0 0.0
    %2592 = vmatprep.subr.mxu0 0.0
    %2593 = vmatpush1.msra.mxu0 0.0
    %2594 = vmatprep.subr.mxu0 0.0
    %2595 = vmatpush1.msra.mxu0 0.0
    %2596 = vmatprep.subr.mxu0 0.0
    %2597 = vmatpush1.msra.mxu0 0.0
    %2598 = vmatprep.subr.mxu0 0.0
    %2599 = vmatpush1.msra.mxu0 0.0
    %2600 = vmatprep.subr.mxu0 0.0
    %2601 = vmatpush1.msra.mxu0 0.0
    %2602 = vmatprep.subr.mxu0 0.0
    %2603 = vmatpush1.msra.mxu0 0.0
    %2604 = vmatprep.subr.mxu0 0.0
    %2605 = vmatpush1.msra.mxu0 0.0
    %2606 = vmatprep.subr.mxu0 0.0
    %2607 = vmatpush1.msra.mxu0 0.0
    %2608 = vmatprep.subr.mxu0 0.0
    %2609 = vmatpush1.msra.mxu0 0.0
    %2610 = vmatprep.subr.mxu0 0.0
    %2611 = vmatpush1.msra.mxu0 0.0
    %2612 = vmatprep.subr.mxu0 0.0
    %2613 = vmatpush1.msra.mxu0 0.0
    %2614 = vmatprep.subr.mxu0 0.0
    %2615 = vmatpush1.msra.mxu0 0.0
    %2616 = vmatprep.subr.mxu0 0.0
    %2617 = vmatpush1.msra.mxu0 0.0
    %2618 = vmatprep.subr.mxu0 0.0
    %2619 = vmatpush1.msra.mxu0 0.0
    %2620 = vmatprep.subr.mxu0 0.0
    %2621 = vmatpush1.msra.mxu0 0.0
    %2622 = vmatprep.subr.mxu0 0.0
    %2623 = vmatpush1.msra.mxu0 0.0
    %2624 = vmatprep.subr.mxu0 0.0
    %2625 = vmatpush1.msra.mxu0 0.0
    %2626 = vmatprep.subr.mxu0 0.0
    %2627 = vmatpush1.msra.mxu0 0.0
    %2628 = vmatprep.mubr.f32.mxu0 0.0
    %2629 = vmatmul.mubr.f32.gmra.mrb[0].mxu0 %v1355
    %v2630 = vpop.f32.mrb[0].mxu0
    %v2631 = vadd.f32 %v1138, %v2630
    %v2632 = vpop.f32.mrb[0].mxu0
    %v2633 = vadd.f32 %v1142, %v2632
    %2634 = vdwg.mxu0
    %2635 = vmatprep.subr.mxu0 %v450
    %2636 = vmatpush1.msra.mxu0 %v449
    %2637 = vmatprep.subr.mxu0 %v521
    %2638 = vmatpush1.msra.mxu0 %v520
    %2639 = vmatprep.subr.mxu0 %v592
    %2640 = vmatpush1.msra.mxu0 %v591
    %2641 = vmatprep.subr.mxu0 %v663
    %2642 = vmatpush1.msra.mxu0 %v662
    %2643 = vmatprep.subr.mxu0 %v734
    %2644 = vmatpush1.msra.mxu0 %v733
    %2645 = vmatprep.subr.mxu0 %v805
    %2646 = vmatpush1.msra.mxu0 %v804
    %2647 = vmatprep.subr.mxu0 %v876
    %2648 = vmatpush1.msra.mxu0 %v875
    %2649 = vmatprep.subr.mxu0 %v947
    %2650 = vmatpush1.msra.mxu0 %v946
    %2651 = vmatprep.subr.mxu0 0.0
    %2652 = vmatpush1.msra.mxu0 0.0
    %2653 = vmatprep.subr.mxu0 0.0
    %2654 = vmatpush1.msra.mxu0 0.0
    %2655 = vmatprep.subr.mxu0 0.0
    %2656 = vmatpush1.msra.mxu0 0.0
    %2657 = vmatprep.subr.mxu0 0.0
    %2658 = vmatpush1.msra.mxu0 0.0
    %2659 = vmatprep.subr.mxu0 0.0
    %2660 = vmatpush1.msra.mxu0 0.0
    %2661 = vmatprep.subr.mxu0 0.0
    %2662 = vmatpush1.msra.mxu0 0.0
    %2663 = vmatprep.subr.mxu0 0.0
    %2664 = vmatpush1.msra.mxu0 0.0
    %2665 = vmatprep.subr.mxu0 0.0
    %2666 = vmatpush1.msra.mxu0 0.0
    %2667 = vmatprep.subr.mxu0 0.0
    %2668 = vmatpush1.msra.mxu0 0.0
    %2669 = vmatprep.subr.mxu0 0.0
    %2670 = vmatpush1.msra.mxu0 0.0
    %2671 = vmatprep.subr.mxu0 0.0
    %2672 = vmatpush1.msra.mxu0 0.0
    %2673 = vmatprep.subr.mxu0 0.0
    %2674 = vmatpush1.msra.mxu0 0.0
    %2675 = vmatprep.subr.mxu0 0.0
    %2676 = vmatpush1.msra.mxu0 0.0
    %2677 = vmatprep.subr.mxu0 0.0
    %2678 = vmatpush1.msra.mxu0 0.0
    %2679 = vmatprep.subr.mxu0 0.0
    %2680 = vmatpush1.msra.mxu0 0.0
    %2681 = vmatprep.subr.mxu0 0.0
    %2682 = vmatpush1.msra.mxu0 0.0
    %2683 = vmatprep.subr.mxu0 0.0
    %2684 = vmatpush1.msra.mxu0 0.0
    %2685 = vmatprep.subr.mxu0 0.0
    %2686 = vmatpush1.msra.mxu0 0.0
    %2687 = vmatprep.subr.mxu0 0.0
    %2688 = vmatpush1.msra.mxu0 0.0
    %2689 = vmatprep.subr.mxu0 0.0
    %2690 = vmatpush1.msra.mxu0 0.0
    %2691 = vmatprep.subr.mxu0 0.0
    %2692 = vmatpush1.msra.mxu0 0.0
    %2693 = vmatprep.subr.mxu0 0.0
    %2694 = vmatpush1.msra.mxu0 0.0
    %2695 = vmatprep.subr.mxu0 0.0
    %2696 = vmatpush1.msra.mxu0 0.0
    %2697 = vmatprep.subr.mxu0 0.0
    %2698 = vmatpush1.msra.mxu0 0.0
    %2699 = vmatprep.mubr.f32.mxu0 0.0
    %2700 = vmatmul.mubr.f32.gmra.mrb[0].mxu0 %v1355
    %v2701 = vpop.f32.mrb[0].mxu0
    %v2702 = vadd.f32 %v1146, %v2701
    %v2703 = vpop.f32.mrb[0].mxu0
    %v2704 = vadd.f32 %v1150, %v2703
    %2705 = vdwg.mxu0
    %2706 = vmatprep.subr.mxu0 %v452
    %2707 = vmatpush1.msra.mxu0 %v451
    %2708 = vmatprep.subr.mxu0 %v523
    %2709 = vmatpush1.msra.mxu0 %v522
    %2710 = vmatprep.subr.mxu0 %v594
    %2711 = vmatpush1.msra.mxu0 %v593
    %2712 = vmatprep.subr.mxu0 %v665
    %2713 = vmatpush1.msra.mxu0 %v664
    %2714 = vmatprep.subr.mxu0 %v736
    %2715 = vmatpush1.msra.mxu0 %v735
    %2716 = vmatprep.subr.mxu0 %v807
    %2717 = vmatpush1.msra.mxu0 %v806
    %2718 = vmatprep.subr.mxu0 %v878
    %2719 = vmatpush1.msra.mxu0 %v877
    %2720 = vmatprep.subr.mxu0 %v949
    %2721 = vmatpush1.msra.mxu0 %v948
    %2722 = vmatprep.subr.mxu0 0.0
    %2723 = vmatpush1.msra.mxu0 0.0
    %2724 = vmatprep.subr.mxu0 0.0
    %2725 = vmatpush1.msra.mxu0 0.0
    %2726 = vmatprep.subr.mxu0 0.0
    %2727 = vmatpush1.msra.mxu0 0.0
    %2728 = vmatprep.subr.mxu0 0.0
    %2729 = vmatpush1.msra.mxu0 0.0
    %2730 = vmatprep.subr.mxu0 0.0
    %2731 = vmatpush1.msra.mxu0 0.0
    %2732 = vmatprep.subr.mxu0 0.0
    %2733 = vmatpush1.msra.mxu0 0.0
    %2734 = vmatprep.subr.mxu0 0.0
    %2735 = vmatpush1.msra.mxu0 0.0
    %2736 = vmatprep.subr.mxu0 0.0
    %2737 = vmatpush1.msra.mxu0 0.0
    %2738 = vmatprep.subr.mxu0 0.0
    %2739 = vmatpush1.msra.mxu0 0.0
    %2740 = vmatprep.subr.mxu0 0.0
    %2741 = vmatpush1.msra.mxu0 0.0
    %2742 = vmatprep.subr.mxu0 0.0
    %2743 = vmatpush1.msra.mxu0 0.0
    %2744 = vmatprep.subr.mxu0 0.0
    %2745 = vmatpush1.msra.mxu0 0.0
    %2746 = vmatprep.subr.mxu0 0.0
    %2747 = vmatpush1.msra.mxu0 0.0
    %2748 = vmatprep.subr.mxu0 0.0
    %2749 = vmatpush1.msra.mxu0 0.0
    %2750 = vmatprep.subr.mxu0 0.0
    %2751 = vmatpush1.msra.mxu0 0.0
    %2752 = vmatprep.subr.mxu0 0.0
    %2753 = vmatpush1.msra.mxu0 0.0
    %2754 = vmatprep.subr.mxu0 0.0
    %2755 = vmatpush1.msra.mxu0 0.0
    %2756 = vmatprep.subr.mxu0 0.0
    %2757 = vmatpush1.msra.mxu0 0.0
    %2758 = vmatprep.subr.mxu0 0.0
    %2759 = vmatpush1.msra.mxu0 0.0
    %2760 = vmatprep.subr.mxu0 0.0
    %2761 = vmatpush1.msra.mxu0 0.0
    %2762 = vmatprep.subr.mxu0 0.0
    %2763 = vmatpush1.msra.mxu0 0.0
    %2764 = vmatprep.subr.mxu0 0.0
    %2765 = vmatpush1.msra.mxu0 0.0
    %2766 = vmatprep.subr.mxu0 0.0
    %2767 = vmatpush1.msra.mxu0 0.0
    %2768 = vmatprep.subr.mxu0 0.0
    %2769 = vmatpush1.msra.mxu0 0.0
    %2770 = vmatprep.mubr.f32.mxu0 0.0
    %2771 = vmatmul.mubr.f32.gmra.mrb[0].mxu0 %v1355
    %v2772 = vpop.f32.mrb[0].mxu0
    %v2773 = vadd.f32 %v1154, %v2772
    %v2774 = vpop.f32.mrb[0].mxu0
    %v2775 = vadd.f32 %v1158, %v2774
    %2776 = vdwg.mxu0
    %2777 = vmatprep.subr.mxu0 %v454
    %2778 = vmatpush1.msra.mxu0 %v453
    %2779 = vmatprep.subr.mxu0 %v525
    %2780 = vmatpush1.msra.mxu0 %v524
    %2781 = vmatprep.subr.mxu0 %v596
    %2782 = vmatpush1.msra.mxu0 %v595
    %2783 = vmatprep.subr.mxu0 %v667
    %2784 = vmatpush1.msra.mxu0 %v666
    %2785 = vmatprep.subr.mxu0 %v738
    %2786 = vmatpush1.msra.mxu0 %v737
    %2787 = vmatprep.subr.mxu0 %v809
    %2788 = vmatpush1.msra.mxu0 %v808
    %2789 = vmatprep.subr.mxu0 %v880
    %2790 = vmatpush1.msra.mxu0 %v879
    %2791 = vmatprep.subr.mxu0 %v951
    %2792 = vmatpush1.msra.mxu0 %v950
    %2793 = vmatprep.subr.mxu0 0.0
    %2794 = vmatpush1.msra.mxu0 0.0
    %2795 = vmatprep.subr.mxu0 0.0
    %2796 = vmatpush1.msra.mxu0 0.0
    %2797 = vmatprep.subr.mxu0 0.0
    %2798 = vmatpush1.msra.mxu0 0.0
    %2799 = vmatprep.subr.mxu0 0.0
    %2800 = vmatpush1.msra.mxu0 0.0
    %2801 = vmatprep.subr.mxu0 0.0
    %2802 = vmatpush1.msra.mxu0 0.0
    %2803 = vmatprep.subr.mxu0 0.0
    %2804 = vmatpush1.msra.mxu0 0.0
    %2805 = vmatprep.subr.mxu0 0.0
    %2806 = vmatpush1.msra.mxu0 0.0
    %2807 = vmatprep.subr.mxu0 0.0
    %2808 = vmatpush1.msra.mxu0 0.0
    %2809 = vmatprep.subr.mxu0 0.0
    %2810 = vmatpush1.msra.mxu0 0.0
    %2811 = vmatprep.subr.mxu0 0.0
    %2812 = vmatpush1.msra.mxu0 0.0
    %2813 = vmatprep.subr.mxu0 0.0
    %2814 = vmatpush1.msra.mxu0 0.0
    %2815 = vmatprep.subr.mxu0 0.0
    %2816 = vmatpush1.msra.mxu0 0.0
    %2817 = vmatprep.subr.mxu0 0.0
    %2818 = vmatpush1.msra.mxu0 0.0
    %2819 = vmatprep.subr.mxu0 0.0
    %2820 = vmatpush1.msra.mxu0 0.0
    %2821 = vmatprep.subr.mxu0 0.0
    %2822 = vmatpush1.msra.mxu0 0.0
    %2823 = vmatprep.subr.mxu0 0.0
    %2824 = vmatpush1.msra.mxu0 0.0
    %2825 = vmatprep.subr.mxu0 0.0
    %2826 = vmatpush1.msra.mxu0 0.0
    %2827 = vmatprep.subr.mxu0 0.0
    %2828 = vmatpush1.msra.mxu0 0.0
    %2829 = vmatprep.subr.mxu0 0.0
    %2830 = vmatpush1.msra.mxu0 0.0
    %2831 = vmatprep.subr.mxu0 0.0
    %2832 = vmatpush1.msra.mxu0 0.0
    %2833 = vmatprep.subr.mxu0 0.0
    %2834 = vmatpush1.msra.mxu0 0.0
    %2835 = vmatprep.subr.mxu0 0.0
    %2836 = vmatpush1.msra.mxu0 0.0
    %2837 = vmatprep.subr.mxu0 0.0
    %2838 = vmatpush1.msra.mxu0 0.0
    %2839 = vmatprep.subr.mxu0 0.0
    %2840 = vmatpush1.msra.mxu0 0.0
    %2841 = vmatprep.mubr.f32.mxu0 0.0
    %2842 = vmatmul.mubr.f32.gmra.mrb[0].mxu0 %v1355
    %v2843 = vpop.f32.mrb[0].mxu0
    %v2844 = vadd.f32 %v1162, %v2843
    %v2845 = vpop.f32.mrb[0].mxu0
    %v2846 = vadd.f32 %v1166, %v2845
    %2847 = vdwg.mxu0
    %2848 = vmatprep.subr.mxu0 %v456
    %2849 = vmatpush1.msra.mxu0 %v455
    %2850 = vmatprep.subr.mxu0 %v527
    %2851 = vmatpush1.msra.mxu0 %v526
    %2852 = vmatprep.subr.mxu0 %v598
    %2853 = vmatpush1.msra.mxu0 %v597
    %2854 = vmatprep.subr.mxu0 %v669
    %2855 = vmatpush1.msra.mxu0 %v668
    %2856 = vmatprep.subr.mxu0 %v740
    %2857 = vmatpush1.msra.mxu0 %v739
    %2858 = vmatprep.subr.mxu0 %v811
    %2859 = vmatpush1.msra.mxu0 %v810
    %2860 = vmatprep.subr.mxu0 %v882
    %2861 = vmatpush1.msra.mxu0 %v881
    %2862 = vmatprep.subr.mxu0 %v953
    %2863 = vmatpush1.msra.mxu0 %v952
    %2864 = vmatprep.subr.mxu0 0.0
    %2865 = vmatpush1.msra.mxu0 0.0
    %2866 = vmatprep.subr.mxu0 0.0
    %2867 = vmatpush1.msra.mxu0 0.0
    %2868 = vmatprep.subr.mxu0 0.0
    %2869 = vmatpush1.msra.mxu0 0.0
    %2870 = vmatprep.subr.mxu0 0.0
    %2871 = vmatpush1.msra.mxu0 0.0
    %2872 = vmatprep.subr.mxu0 0.0
    %2873 = vmatpush1.msra.mxu0 0.0
    %2874 = vmatprep.subr.mxu0 0.0
    %2875 = vmatpush1.msra.mxu0 0.0
    %2876 = vmatprep.subr.mxu0 0.0
    %2877 = vmatpush1.msra.mxu0 0.0
    %2878 = vmatprep.subr.mxu0 0.0
    %2879 = vmatpush1.msra.mxu0 0.0
    %2880 = vmatprep.subr.mxu0 0.0
    %2881 = vmatpush1.msra.mxu0 0.0
    %2882 = vmatprep.subr.mxu0 0.0
    %2883 = vmatpush1.msra.mxu0 0.0
    %2884 = vmatprep.subr.mxu0 0.0
    %2885 = vmatpush1.msra.mxu0 0.0
    %2886 = vmatprep.subr.mxu0 0.0
    %2887 = vmatpush1.msra.mxu0 0.0
    %2888 = vmatprep.subr.mxu0 0.0
    %2889 = vmatpush1.msra.mxu0 0.0
    %2890 = vmatprep.subr.mxu0 0.0
    %2891 = vmatpush1.msra.mxu0 0.0
    %2892 = vmatprep.subr.mxu0 0.0
    %2893 = vmatpush1.msra.mxu0 0.0
    %2894 = vmatprep.subr.mxu0 0.0
    %2895 = vmatpush1.msra.mxu0 0.0
    %2896 = vmatprep.subr.mxu0 0.0
    %2897 = vmatpush1.msra.mxu0 0.0
    %2898 = vmatprep.subr.mxu0 0.0
    %2899 = vmatpush1.msra.mxu0 0.0
    %2900 = vmatprep.subr.mxu0 0.0
    %2901 = vmatpush1.msra.mxu0 0.0
    %2902 = vmatprep.subr.mxu0 0.0
    %2903 = vmatpush1.msra.mxu0 0.0
    %2904 = vmatprep.subr.mxu0 0.0
    %2905 = vmatpush1.msra.mxu0 0.0
    %2906 = vmatprep.subr.mxu0 0.0
    %2907 = vmatpush1.msra.mxu0 0.0
    %2908 = vmatprep.subr.mxu0 0.0
    %2909 = vmatpush1.msra.mxu0 0.0
    %2910 = vmatprep.subr.mxu0 0.0
    %2911 = vmatpush1.msra.mxu0 0.0
    %2912 = vmatprep.mubr.f32.mxu0 0.0
    %2913 = vmatmul.mubr.f32.gmra.mrb[0].mxu0 %v1355
    %v2914 = vpop.f32.mrb[0].mxu0
    %v2915 = vadd.f32 %v1170, %v2914
    %v2916 = vpop.f32.mrb[0].mxu0
    %v2917 = vadd.f32 %v1174, %v2916
    %2918 = vdwg.mxu0
    %2919 = vmatprep.subr.mxu0 %v458
    %2920 = vmatpush1.msra.mxu0 %v457
    %2921 = vmatprep.subr.mxu0 %v529
    %2922 = vmatpush1.msra.mxu0 %v528
    %2923 = vmatprep.subr.mxu0 %v600
    %2924 = vmatpush1.msra.mxu0 %v599
    %2925 = vmatprep.subr.mxu0 %v671
    %2926 = vmatpush1.msra.mxu0 %v670
    %2927 = vmatprep.subr.mxu0 %v742
    %2928 = vmatpush1.msra.mxu0 %v741
    %2929 = vmatprep.subr.mxu0 %v813
    %2930 = vmatpush1.msra.mxu0 %v812
    %2931 = vmatprep.subr.mxu0 %v884
    %2932 = vmatpush1.msra.mxu0 %v883
    %2933 = vmatprep.subr.mxu0 %v955
    %2934 = vmatpush1.msra.mxu0 %v954
    %2935 = vmatprep.subr.mxu0 0.0
    %2936 = vmatpush1.msra.mxu0 0.0
    %2937 = vmatprep.subr.mxu0 0.0
    %2938 = vmatpush1.msra.mxu0 0.0
    %2939 = vmatprep.subr.mxu0 0.0
    %2940 = vmatpush1.msra.mxu0 0.0
    %2941 = vmatprep.subr.mxu0 0.0
    %2942 = vmatpush1.msra.mxu0 0.0
    %2943 = vmatprep.subr.mxu0 0.0
    %2944 = vmatpush1.msra.mxu0 0.0
    %2945 = vmatprep.subr.mxu0 0.0
    %2946 = vmatpush1.msra.mxu0 0.0
    %2947 = vmatprep.subr.mxu0 0.0
    %2948 = vmatpush1.msra.mxu0 0.0
    %2949 = vmatprep.subr.mxu0 0.0
    %2950 = vmatpush1.msra.mxu0 0.0
    %2951 = vmatprep.subr.mxu0 0.0
    %2952 = vmatpush1.msra.mxu0 0.0
    %2953 = vmatprep.subr.mxu0 0.0
    %2954 = vmatpush1.msra.mxu0 0.0
    %2955 = vmatprep.subr.mxu0 0.0
    %2956 = vmatpush1.msra.mxu0 0.0
    %2957 = vmatprep.subr.mxu0 0.0
    %2958 = vmatpush1.msra.mxu0 0.0
    %2959 = vmatprep.subr.mxu0 0.0
    %2960 = vmatpush1.msra.mxu0 0.0
    %2961 = vmatprep.subr.mxu0 0.0
    %2962 = vmatpush1.msra.mxu0 0.0
    %2963 = vmatprep.subr.mxu0 0.0
    %2964 = vmatpush1.msra.mxu0 0.0
    %2965 = vmatprep.subr.mxu0 0.0
    %2966 = vmatpush1.msra.mxu0 0.0
    %2967 = vmatprep.subr.mxu0 0.0
    %2968 = vmatpush1.msra.mxu0 0.0
    %2969 = vmatprep.subr.mxu0 0.0
    %2970 = vmatpush1.msra.mxu0 0.0
    %2971 = vmatprep.subr.mxu0 0.0
    %2972 = vmatpush1.msra.mxu0 0.0
    %2973 = vmatprep.subr.mxu0 0.0
    %2974 = vmatpush1.msra.mxu0 0.0
    %2975 = vmatprep.subr.mxu0 0.0
    %2976 = vmatpush1.msra.mxu0 0.0
    %2977 = vmatprep.subr.mxu0 0.0
    %2978 = vmatpush1.msra.mxu0 0.0
    %2979 = vmatprep.subr.mxu0 0.0
    %2980 = vmatpush1.msra.mxu0 0.0
    %2981 = vmatprep.subr.mxu0 0.0
    %2982 = vmatpush1.msra.mxu0 0.0
    %2983 = vmatprep.mubr.f32.mxu0 0.0
    %2984 = vmatmul.mubr.f32.gmra.mrb[0].mxu0 %v1355
    %v2985 = vpop.f32.mrb[0].mxu0
    %v2986 = vadd.f32 %v1178, %v2985
    %v2987 = vpop.f32.mrb[0].mxu0
    %v2988 = vadd.f32 %v1182, %v2987
    %2989 = vdwg.mxu0
    %2990 = vmatprep.subr.mxu0 %v460
    %2991 = vmatpush1.msra.mxu0 %v459
    %2992 = vmatprep.subr.mxu0 %v531
    %2993 = vmatpush1.msra.mxu0 %v530
    %2994 = vmatprep.subr.mxu0 %v602
    %2995 = vmatpush1.msra.mxu0 %v601
    %2996 = vmatprep.subr.mxu0 %v673
    %2997 = vmatpush1.msra.mxu0 %v672
    %2998 = vmatprep.subr.mxu0 %v744
    %2999 = vmatpush1.msra.mxu0 %v743
    %3000 = vmatprep.subr.mxu0 %v815
    %3001 = vmatpush1.msra.mxu0 %v814
    %3002 = vmatprep.subr.mxu0 %v886
    %3003 = vmatpush1.msra.mxu0 %v885
    %3004 = vmatprep.subr.mxu0 %v957
    %3005 = vmatpush1.msra.mxu0 %v956
    %3006 = vmatprep.subr.mxu0 0.0
    %3007 = vmatpush1.msra.mxu0 0.0
    %3008 = vmatprep.subr.mxu0 0.0
    %3009 = vmatpush1.msra.mxu0 0.0
    %3010 = vmatprep.subr.mxu0 0.0
    %3011 = vmatpush1.msra.mxu0 0.0
    %3012 = vmatprep.subr.mxu0 0.0
    %3013 = vmatpush1.msra.mxu0 0.0
    %3014 = vmatprep.subr.mxu0 0.0
    %3015 = vmatpush1.msra.mxu0 0.0
    %3016 = vmatprep.subr.mxu0 0.0
    %3017 = vmatpush1.msra.mxu0 0.0
    %3018 = vmatprep.subr.mxu0 0.0
    %3019 = vmatpush1.msra.mxu0 0.0
    %3020 = vmatprep.subr.mxu0 0.0
    %3021 = vmatpush1.msra.mxu0 0.0
    %3022 = vmatprep.subr.mxu0 0.0
    %3023 = vmatpush1.msra.mxu0 0.0
    %3024 = vmatprep.subr.mxu0 0.0
    %3025 = vmatpush1.msra.mxu0 0.0
    %3026 = vmatprep.subr.mxu0 0.0
    %3027 = vmatpush1.msra.mxu0 0.0
    %3028 = vmatprep.subr.mxu0 0.0
    %3029 = vmatpush1.msra.mxu0 0.0
    %3030 = vmatprep.subr.mxu0 0.0
    %3031 = vmatpush1.msra.mxu0 0.0
    %3032 = vmatprep.subr.mxu0 0.0
    %3033 = vmatpush1.msra.mxu0 0.0
    %3034 = vmatprep.subr.mxu0 0.0
    %3035 = vmatpush1.msra.mxu0 0.0
    %3036 = vmatprep.subr.mxu0 0.0
    %3037 = vmatpush1.msra.mxu0 0.0
    %3038 = vmatprep.subr.mxu0 0.0
    %3039 = vmatpush1.msra.mxu0 0.0
    %3040 = vmatprep.subr.mxu0 0.0
    %3041 = vmatpush1.msra.mxu0 0.0
    %3042 = vmatprep.subr.mxu0 0.0
    %3043 = vmatpush1.msra.mxu0 0.0
    %3044 = vmatprep.subr.mxu0 0.0
    %3045 = vmatpush1.msra.mxu0 0.0
    %3046 = vmatprep.subr.mxu0 0.0
    %3047 = vmatpush1.msra.mxu0 0.0
    %3048 = vmatprep.subr.mxu0 0.0
    %3049 = vmatpush1.msra.mxu0 0.0
    %3050 = vmatprep.subr.mxu0 0.0
    %3051 = vmatpush1.msra.mxu0 0.0
    %3052 = vmatprep.subr.mxu0 0.0
    %3053 = vmatpush1.msra.mxu0 0.0
    %3054 = vmatprep.mubr.f32.mxu0 0.0
    %3055 = vmatmul.mubr.f32.gmra.mrb[0].mxu0 %v1355
    %v3056 = vpop.f32.mrb[0].mxu0
    %v3057 = vadd.f32 %v1186, %v3056
    %v3058 = vpop.f32.mrb[0].mxu0
    %v3059 = vadd.f32 %v1190, %v3058
    %3060 = vdwg.mxu0
    %3061 = vmatprep.subr.mxu0 %v462
    %3062 = vmatpush1.msra.mxu0 %v461
    %3063 = vmatprep.subr.mxu0 %v533
    %3064 = vmatpush1.msra.mxu0 %v532
    %3065 = vmatprep.subr.mxu0 %v604
    %3066 = vmatpush1.msra.mxu0 %v603
    %3067 = vmatprep.subr.mxu0 %v675
    %3068 = vmatpush1.msra.mxu0 %v674
    %3069 = vmatprep.subr.mxu0 %v746
    %3070 = vmatpush1.msra.mxu0 %v745
    %3071 = vmatprep.subr.mxu0 %v817
    %3072 = vmatpush1.msra.mxu0 %v816
    %3073 = vmatprep.subr.mxu0 %v888
    %3074 = vmatpush1.msra.mxu0 %v887
    %3075 = vmatprep.subr.mxu0 %v959
    %3076 = vmatpush1.msra.mxu0 %v958
    %3077 = vmatprep.subr.mxu0 0.0
    %3078 = vmatpush1.msra.mxu0 0.0
    %3079 = vmatprep.subr.mxu0 0.0
    %3080 = vmatpush1.msra.mxu0 0.0
    %3081 = vmatprep.subr.mxu0 0.0
    %3082 = vmatpush1.msra.mxu0 0.0
    %3083 = vmatprep.subr.mxu0 0.0
    %3084 = vmatpush1.msra.mxu0 0.0
    %3085 = vmatprep.subr.mxu0 0.0
    %3086 = vmatpush1.msra.mxu0 0.0
    %3087 = vmatprep.subr.mxu0 0.0
    %3088 = vmatpush1.msra.mxu0 0.0
    %3089 = vmatprep.subr.mxu0 0.0
    %3090 = vmatpush1.msra.mxu0 0.0
    %3091 = vmatprep.subr.mxu0 0.0
    %3092 = vmatpush1.msra.mxu0 0.0
    %3093 = vmatprep.subr.mxu0 0.0
    %3094 = vmatpush1.msra.mxu0 0.0
    %3095 = vmatprep.subr.mxu0 0.0
    %3096 = vmatpush1.msra.mxu0 0.0
    %3097 = vmatprep.subr.mxu0 0.0
    %3098 = vmatpush1.msra.mxu0 0.0
    %3099 = vmatprep.subr.mxu0 0.0
    %3100 = vmatpush1.msra.mxu0 0.0
    %3101 = vmatprep.subr.mxu0 0.0
    %3102 = vmatpush1.msra.mxu0 0.0
    %3103 = vmatprep.subr.mxu0 0.0
    %3104 = vmatpush1.msra.mxu0 0.0
    %3105 = vmatprep.subr.mxu0 0.0
    %3106 = vmatpush1.msra.mxu0 0.0
    %3107 = vmatprep.subr.mxu0 0.0
    %3108 = vmatpush1.msra.mxu0 0.0
    %3109 = vmatprep.subr.mxu0 0.0
    %3110 = vmatpush1.msra.mxu0 0.0
    %3111 = vmatprep.subr.mxu0 0.0
    %3112 = vmatpush1.msra.mxu0 0.0
    %3113 = vmatprep.subr.mxu0 0.0
    %3114 = vmatpush1.msra.mxu0 0.0
    %3115 = vmatprep.subr.mxu0 0.0
    %3116 = vmatpush1.msra.mxu0 0.0
    %3117 = vmatprep.subr.mxu0 0.0
    %3118 = vmatpush1.msra.mxu0 0.0
    %3119 = vmatprep.subr.mxu0 0.0
    %3120 = vmatpush1.msra.mxu0 0.0
    %3121 = vmatprep.subr.mxu0 0.0
    %3122 = vmatpush1.msra.mxu0 0.0
    %3123 = vmatprep.subr.mxu0 0.0
    %3124 = vmatpush1.msra.mxu0 0.0
    %3125 = vmatprep.mubr.f32.mxu0 0.0
    %3126 = vmatmul.mubr.f32.gmra.mrb[0].mxu0 %v1355
    %v3127 = vpop.f32.mrb[0].mxu0
    %v3128 = vadd.f32 %v1194, %v3127
    %v3129 = vpop.f32.mrb[0].mxu0
    %v3130 = vadd.f32 %v1198, %v3129
    %3131 = vdwg.mxu0
    %3132 = vmatprep.subr.mxu0 %v464
    %3133 = vmatpush1.msra.mxu0 %v463
    %3134 = vmatprep.subr.mxu0 %v535
    %3135 = vmatpush1.msra.mxu0 %v534
    %3136 = vmatprep.subr.mxu0 %v606
    %3137 = vmatpush1.msra.mxu0 %v605
    %3138 = vmatprep.subr.mxu0 %v677
    %3139 = vmatpush1.msra.mxu0 %v676
    %3140 = vmatprep.subr.mxu0 %v748
    %3141 = vmatpush1.msra.mxu0 %v747
    %3142 = vmatprep.subr.mxu0 %v819
    %3143 = vmatpush1.msra.mxu0 %v818
    %3144 = vmatprep.subr.mxu0 %v890
    %3145 = vmatpush1.msra.mxu0 %v889
    %3146 = vmatprep.subr.mxu0 %v961
    %3147 = vmatpush1.msra.mxu0 %v960
    %3148 = vmatprep.subr.mxu0 0.0
    %3149 = vmatpush1.msra.mxu0 0.0
    %3150 = vmatprep.subr.mxu0 0.0
    %3151 = vmatpush1.msra.mxu0 0.0
    %3152 = vmatprep.subr.mxu0 0.0
    %3153 = vmatpush1.msra.mxu0 0.0
    %3154 = vmatprep.subr.mxu0 0.0
    %3155 = vmatpush1.msra.mxu0 0.0
    %3156 = vmatprep.subr.mxu0 0.0
    %3157 = vmatpush1.msra.mxu0 0.0
    %3158 = vmatprep.subr.mxu0 0.0
    %3159 = vmatpush1.msra.mxu0 0.0
    %3160 = vmatprep.subr.mxu0 0.0
    %3161 = vmatpush1.msra.mxu0 0.0
    %3162 = vmatprep.subr.mxu0 0.0
    %3163 = vmatpush1.msra.mxu0 0.0
    %3164 = vmatprep.subr.mxu0 0.0
    %3165 = vmatpush1.msra.mxu0 0.0
    %3166 = vmatprep.subr.mxu0 0.0
    %3167 = vmatpush1.msra.mxu0 0.0
    %3168 = vmatprep.subr.mxu0 0.0
    %3169 = vmatpush1.msra.mxu0 0.0
    %3170 = vmatprep.subr.mxu0 0.0
    %3171 = vmatpush1.msra.mxu0 0.0
    %3172 = vmatprep.subr.mxu0 0.0
    %3173 = vmatpush1.msra.mxu0 0.0
    %3174 = vmatprep.subr.mxu0 0.0
    %3175 = vmatpush1.msra.mxu0 0.0
    %3176 = vmatprep.subr.mxu0 0.0
    %3177 = vmatpush1.msra.mxu0 0.0
    %3178 = vmatprep.subr.mxu0 0.0
    %3179 = vmatpush1.msra.mxu0 0.0
    %3180 = vmatprep.subr.mxu0 0.0
    %3181 = vmatpush1.msra.mxu0 0.0
    %3182 = vmatprep.subr.mxu0 0.0
    %3183 = vmatpush1.msra.mxu0 0.0
    %3184 = vmatprep.subr.mxu0 0.0
    %3185 = vmatpush1.msra.mxu0 0.0
    %3186 = vmatprep.subr.mxu0 0.0
    %3187 = vmatpush1.msra.mxu0 0.0
    %3188 = vmatprep.subr.mxu0 0.0
    %3189 = vmatpush1.msra.mxu0 0.0
    %3190 = vmatprep.subr.mxu0 0.0
    %3191 = vmatpush1.msra.mxu0 0.0
    %3192 = vmatprep.subr.mxu0 0.0
    %3193 = vmatpush1.msra.mxu0 0.0
    %3194 = vmatprep.subr.mxu0 0.0
    %3195 = vmatpush1.msra.mxu0 0.0
    %3196 = vmatprep.mubr.f32.mxu0 0.0
    %3197 = vmatmul.mubr.f32.gmra.mrb[0].mxu0 %v1355
    %v3198 = vpop.f32.mrb[0].mxu0
    %v3199 = vadd.f32 %v1202, %v3198
    %v3200 = vpop.f32.mrb[0].mxu0
    %v3201 = vadd.f32 %v1206, %v3200
    %3202 = vdwg.mxu0
    %3203 = vmatprep.subr.mxu0 %v466
    %3204 = vmatpush1.msra.mxu0 %v465
    %3205 = vmatprep.subr.mxu0 %v537
    %3206 = vmatpush1.msra.mxu0 %v536
    %3207 = vmatprep.subr.mxu0 %v608
    %3208 = vmatpush1.msra.mxu0 %v607
    %3209 = vmatprep.subr.mxu0 %v679
    %3210 = vmatpush1.msra.mxu0 %v678
    %3211 = vmatprep.subr.mxu0 %v750
    %3212 = vmatpush1.msra.mxu0 %v749
    %3213 = vmatprep.subr.mxu0 %v821
    %3214 = vmatpush1.msra.mxu0 %v820
    %3215 = vmatprep.subr.mxu0 %v892
    %3216 = vmatpush1.msra.mxu0 %v891
    %3217 = vmatprep.subr.mxu0 %v963
    %3218 = vmatpush1.msra.mxu0 %v962
    %3219 = vmatprep.subr.mxu0 0.0
    %3220 = vmatpush1.msra.mxu0 0.0
    %3221 = vmatprep.subr.mxu0 0.0
    %3222 = vmatpush1.msra.mxu0 0.0
    %3223 = vmatprep.subr.mxu0 0.0
    %3224 = vmatpush1.msra.mxu0 0.0
    %3225 = vmatprep.subr.mxu0 0.0
    %3226 = vmatpush1.msra.mxu0 0.0
    %3227 = vmatprep.subr.mxu0 0.0
    %3228 = vmatpush1.msra.mxu0 0.0
    %3229 = vmatprep.subr.mxu0 0.0
    %3230 = vmatpush1.msra.mxu0 0.0
    %3231 = vmatprep.subr.mxu0 0.0
    %3232 = vmatpush1.msra.mxu0 0.0
    %3233 = vmatprep.subr.mxu0 0.0
    %3234 = vmatpush1.msra.mxu0 0.0
    %3235 = vmatprep.subr.mxu0 0.0
    %3236 = vmatpush1.msra.mxu0 0.0
    %3237 = vmatprep.subr.mxu0 0.0
    %3238 = vmatpush1.msra.mxu0 0.0
    %3239 = vmatprep.subr.mxu0 0.0
    %3240 = vmatpush1.msra.mxu0 0.0
    %3241 = vmatprep.subr.mxu0 0.0
    %3242 = vmatpush1.msra.mxu0 0.0
    %3243 = vmatprep.subr.mxu0 0.0
    %3244 = vmatpush1.msra.mxu0 0.0
    %3245 = vmatprep.subr.mxu0 0.0
    %3246 = vmatpush1.msra.mxu0 0.0
    %3247 = vmatprep.subr.mxu0 0.0
    %3248 = vmatpush1.msra.mxu0 0.0
    %3249 = vmatprep.subr.mxu0 0.0
    %3250 = vmatpush1.msra.mxu0 0.0
    %3251 = vmatprep.subr.mxu0 0.0
    %3252 = vmatpush1.msra.mxu0 0.0
    %3253 = vmatprep.subr.mxu0 0.0
    %3254 = vmatpush1.msra.mxu0 0.0
    %3255 = vmatprep.subr.mxu0 0.0
    %3256 = vmatpush1.msra.mxu0 0.0
    %3257 = vmatprep.subr.mxu0 0.0
    %3258 = vmatpush1.msra.mxu0 0.0
    %3259 = vmatprep.subr.mxu0 0.0
    %3260 = vmatpush1.msra.mxu0 0.0
    %3261 = vmatprep.subr.mxu0 0.0
    %3262 = vmatpush1.msra.mxu0 0.0
    %3263 = vmatprep.subr.mxu0 0.0
    %3264 = vmatpush1.msra.mxu0 0.0
    %3265 = vmatprep.subr.mxu0 0.0
    %3266 = vmatpush1.msra.mxu0 0.0
    %3267 = vmatprep.mubr.f32.mxu0 0.0
    %3268 = vmatmul.mubr.f32.gmra.mrb[0].mxu0 %v1355
    %v3269 = vpop.f32.mrb[0].mxu0
    %v3270 = vadd.f32 %v1210, %v3269
    %v3271 = vpop.f32.mrb[0].mxu0
    %v3272 = vadd.f32 %v1214, %v3271
    %3273 = vdwg.mxu0
    %3274 = vmatprep.subr.mxu0 %v468
    %3275 = vmatpush1.msra.mxu0 %v467
    %3276 = vmatprep.subr.mxu0 %v539
    %3277 = vmatpush1.msra.mxu0 %v538
    %3278 = vmatprep.subr.mxu0 %v610
    %3279 = vmatpush1.msra.mxu0 %v609
    %3280 = vmatprep.subr.mxu0 %v681
    %3281 = vmatpush1.msra.mxu0 %v680
    %3282 = vmatprep.subr.mxu0 %v752
    %3283 = vmatpush1.msra.mxu0 %v751
    %3284 = vmatprep.subr.mxu0 %v823
    %3285 = vmatpush1.msra.mxu0 %v822
    %3286 = vmatprep.subr.mxu0 %v894
    %3287 = vmatpush1.msra.mxu0 %v893
    %3288 = vmatprep.subr.mxu0 %v965
    %3289 = vmatpush1.msra.mxu0 %v964
    %3290 = vmatprep.subr.mxu0 0.0
    %3291 = vmatpush1.msra.mxu0 0.0
    %3292 = vmatprep.subr.mxu0 0.0
    %3293 = vmatpush1.msra.mxu0 0.0
    %3294 = vmatprep.subr.mxu0 0.0
    %3295 = vmatpush1.msra.mxu0 0.0
    %3296 = vmatprep.subr.mxu0 0.0
    %3297 = vmatpush1.msra.mxu0 0.0
    %3298 = vmatprep.subr.mxu0 0.0
    %3299 = vmatpush1.msra.mxu0 0.0
    %3300 = vmatprep.subr.mxu0 0.0
    %3301 = vmatpush1.msra.mxu0 0.0
    %3302 = vmatprep.subr.mxu0 0.0
    %3303 = vmatpush1.msra.mxu0 0.0
    %3304 = vmatprep.subr.mxu0 0.0
    %3305 = vmatpush1.msra.mxu0 0.0
    %3306 = vmatprep.subr.mxu0 0.0
    %3307 = vmatpush1.msra.mxu0 0.0
    %3308 = vmatprep.subr.mxu0 0.0
    %3309 = vmatpush1.msra.mxu0 0.0
    %3310 = vmatprep.subr.mxu0 0.0
    %3311 = vmatpush1.msra.mxu0 0.0
    %3312 = vmatprep.subr.mxu0 0.0
    %3313 = vmatpush1.msra.mxu0 0.0
    %3314 = vmatprep.subr.mxu0 0.0
    %3315 = vmatpush1.msra.mxu0 0.0
    %3316 = vmatprep.subr.mxu0 0.0
    %3317 = vmatpush1.msra.mxu0 0.0
    %3318 = vmatprep.subr.mxu0 0.0
    %3319 = vmatpush1.msra.mxu0 0.0
    %3320 = vmatprep.subr.mxu0 0.0
    %3321 = vmatpush1.msra.mxu0 0.0
    %3322 = vmatprep.subr.mxu0 0.0
    %3323 = vmatpush1.msra.mxu0 0.0
    %3324 = vmatprep.subr.mxu0 0.0
    %3325 = vmatpush1.msra.mxu0 0.0
    %3326 = vmatprep.subr.mxu0 0.0
    %3327 = vmatpush1.msra.mxu0 0.0
    %3328 = vmatprep.subr.mxu0 0.0
    %3329 = vmatpush1.msra.mxu0 0.0
    %3330 = vmatprep.subr.mxu0 0.0
    %3331 = vmatpush1.msra.mxu0 0.0
    %3332 = vmatprep.subr.mxu0 0.0
    %3333 = vmatpush1.msra.mxu0 0.0
    %3334 = vmatprep.subr.mxu0 0.0
    %3335 = vmatpush1.msra.mxu0 0.0
    %3336 = vmatprep.subr.mxu0 0.0
    %3337 = vmatpush1.msra.mxu0 0.0
    %3338 = vmatprep.mubr.f32.mxu0 0.0
    %3339 = vmatmul.mubr.f32.gmra.mrb[0].mxu0 %v1355
    %v3340 = vpop.f32.mrb[0].mxu0
    %v3341 = vadd.f32 %v1218, %v3340
    %v3342 = vpop.f32.mrb[0].mxu0
    %v3343 = vadd.f32 %v1222, %v3342
    %3344 = vdwg.mxu0
    %3345 = vmatprep.subr.mxu0 %v470
    %3346 = vmatpush1.msra.mxu0 %v469
    %3347 = vmatprep.subr.mxu0 %v541
    %3348 = vmatpush1.msra.mxu0 %v540
    %3349 = vmatprep.subr.mxu0 %v612
    %3350 = vmatpush1.msra.mxu0 %v611
    %3351 = vmatprep.subr.mxu0 %v683
    %3352 = vmatpush1.msra.mxu0 %v682
    %3353 = vmatprep.subr.mxu0 %v754
    %3354 = vmatpush1.msra.mxu0 %v753
    %3355 = vmatprep.subr.mxu0 %v825
    %3356 = vmatpush1.msra.mxu0 %v824
    %3357 = vmatprep.subr.mxu0 %v896
    %3358 = vmatpush1.msra.mxu0 %v895
    %3359 = vmatprep.subr.mxu0 %v967
    %3360 = vmatpush1.msra.mxu0 %v966
    %3361 = vmatprep.subr.mxu0 0.0
    %3362 = vmatpush1.msra.mxu0 0.0
    %3363 = vmatprep.subr.mxu0 0.0
    %3364 = vmatpush1.msra.mxu0 0.0
    %3365 = vmatprep.subr.mxu0 0.0
    %3366 = vmatpush1.msra.mxu0 0.0
    %3367 = vmatprep.subr.mxu0 0.0
    %3368 = vmatpush1.msra.mxu0 0.0
    %3369 = vmatprep.subr.mxu0 0.0
    %3370 = vmatpush1.msra.mxu0 0.0
    %3371 = vmatprep.subr.mxu0 0.0
    %3372 = vmatpush1.msra.mxu0 0.0
    %3373 = vmatprep.subr.mxu0 0.0
    %3374 = vmatpush1.msra.mxu0 0.0
    %3375 = vmatprep.subr.mxu0 0.0
    %3376 = vmatpush1.msra.mxu0 0.0
    %3377 = vmatprep.subr.mxu0 0.0
    %3378 = vmatpush1.msra.mxu0 0.0
    %3379 = vmatprep.subr.mxu0 0.0
    %3380 = vmatpush1.msra.mxu0 0.0
    %3381 = vmatprep.subr.mxu0 0.0
    %3382 = vmatpush1.msra.mxu0 0.0
    %3383 = vmatprep.subr.mxu0 0.0
    %3384 = vmatpush1.msra.mxu0 0.0
    %3385 = vmatprep.subr.mxu0 0.0
    %3386 = vmatpush1.msra.mxu0 0.0
    %3387 = vmatprep.subr.mxu0 0.0
    %3388 = vmatpush1.msra.mxu0 0.0
    %3389 = vmatprep.subr.mxu0 0.0
    %3390 = vmatpush1.msra.mxu0 0.0
    %3391 = vmatprep.subr.mxu0 0.0
    %3392 = vmatpush1.msra.mxu0 0.0
    %3393 = vmatprep.subr.mxu0 0.0
    %3394 = vmatpush1.msra.mxu0 0.0
    %3395 = vmatprep.subr.mxu0 0.0
    %3396 = vmatpush1.msra.mxu0 0.0
    %3397 = vmatprep.subr.mxu0 0.0
    %3398 = vmatpush1.msra.mxu0 0.0
    %3399 = vmatprep.subr.mxu0 0.0
    %3400 = vmatpush1.msra.mxu0 0.0
    %3401 = vmatprep.subr.mxu0 0.0
    %3402 = vmatpush1.msra.mxu0 0.0
    %3403 = vmatprep.subr.mxu0 0.0
    %3404 = vmatpush1.msra.mxu0 0.0
    %3405 = vmatprep.subr.mxu0 0.0
    %3406 = vmatpush1.msra.mxu0 0.0
    %3407 = vmatprep.subr.mxu0 0.0
    %3408 = vmatpush1.msra.mxu0 0.0
    %3409 = vmatprep.mubr.f32.mxu0 0.0
    %3410 = vmatmul.mubr.f32.gmra.mrb[0].mxu0 %v1355
    %v3411 = vpop.f32.mrb[0].mxu0
    %v3412 = vadd.f32 %v1226, %v3411
    %v3413 = vpop.f32.mrb[0].mxu0
    %v3414 = vadd.f32 %v1230, %v3413
    %3415 = vdwg.mxu0
    %3416 = vmatprep.subr.mxu0 %v472
    %3417 = vmatpush1.msra.mxu0 %v471
    %3418 = vmatprep.subr.mxu0 %v543
    %3419 = vmatpush1.msra.mxu0 %v542
    %3420 = vmatprep.subr.mxu0 %v614
    %3421 = vmatpush1.msra.mxu0 %v613
    %3422 = vmatprep.subr.mxu0 %v685
    %3423 = vmatpush1.msra.mxu0 %v684
    %3424 = vmatprep.subr.mxu0 %v756
    %3425 = vmatpush1.msra.mxu0 %v755
    %3426 = vmatprep.subr.mxu0 %v827
    %3427 = vmatpush1.msra.mxu0 %v826
    %3428 = vmatprep.subr.mxu0 %v898
    %3429 = vmatpush1.msra.mxu0 %v897
    %3430 = vmatprep.subr.mxu0 %v969
    %3431 = vmatpush1.msra.mxu0 %v968
    %3432 = vmatprep.subr.mxu0 0.0
    %3433 = vmatpush1.msra.mxu0 0.0
    %3434 = vmatprep.subr.mxu0 0.0
    %3435 = vmatpush1.msra.mxu0 0.0
    %3436 = vmatprep.subr.mxu0 0.0
    %3437 = vmatpush1.msra.mxu0 0.0
    %3438 = vmatprep.subr.mxu0 0.0
    %3439 = vmatpush1.msra.mxu0 0.0
    %3440 = vmatprep.subr.mxu0 0.0
    %3441 = vmatpush1.msra.mxu0 0.0
    %3442 = vmatprep.subr.mxu0 0.0
    %3443 = vmatpush1.msra.mxu0 0.0
    %3444 = vmatprep.subr.mxu0 0.0
    %3445 = vmatpush1.msra.mxu0 0.0
    %3446 = vmatprep.subr.mxu0 0.0
    %3447 = vmatpush1.msra.mxu0 0.0
    %3448 = vmatprep.subr.mxu0 0.0
    %3449 = vmatpush1.msra.mxu0 0.0
    %3450 = vmatprep.subr.mxu0 0.0
    %3451 = vmatpush1.msra.mxu0 0.0
    %3452 = vmatprep.subr.mxu0 0.0
    %3453 = vmatpush1.msra.mxu0 0.0
    %3454 = vmatprep.subr.mxu0 0.0
    %3455 = vmatpush1.msra.mxu0 0.0
    %3456 = vmatprep.subr.mxu0 0.0
    %3457 = vmatpush1.msra.mxu0 0.0
    %3458 = vmatprep.subr.mxu0 0.0
    %3459 = vmatpush1.msra.mxu0 0.0
    %3460 = vmatprep.subr.mxu0 0.0
    %3461 = vmatpush1.msra.mxu0 0.0
    %3462 = vmatprep.subr.mxu0 0.0
    %3463 = vmatpush1.msra.mxu0 0.0
    %3464 = vmatprep.subr.mxu0 0.0
    %3465 = vmatpush1.msra.mxu0 0.0
    %3466 = vmatprep.subr.mxu0 0.0
    %3467 = vmatpush1.msra.mxu0 0.0
    %3468 = vmatprep.subr.mxu0 0.0
    %3469 = vmatpush1.msra.mxu0 0.0
    %3470 = vmatprep.subr.mxu0 0.0
    %3471 = vmatpush1.msra.mxu0 0.0
    %3472 = vmatprep.subr.mxu0 0.0
    %3473 = vmatpush1.msra.mxu0 0.0
    %3474 = vmatprep.subr.mxu0 0.0
    %3475 = vmatpush1.msra.mxu0 0.0
    %3476 = vmatprep.subr.mxu0 0.0
    %3477 = vmatpush1.msra.mxu0 0.0
    %3478 = vmatprep.subr.mxu0 0.0
    %3479 = vmatpush1.msra.mxu0 0.0
    %3480 = vmatprep.mubr.f32.mxu0 0.0
    %3481 = vmatmul.mubr.f32.gmra.mrb[0].mxu0 %v1355
    %v3482 = vpop.f32.mrb[0].mxu0
    %v3483 = vadd.f32 %v1234, %v3482
    %v3484 = vpop.f32.mrb[0].mxu0
    %v3485 = vadd.f32 %v1238, %v3484
    %3486 = vdwg.mxu0
    %3487 = vmatprep.subr.mxu0 %v474
    %3488 = vmatpush1.msra.mxu0 %v473
    %3489 = vmatprep.subr.mxu0 %v545
    %3490 = vmatpush1.msra.mxu0 %v544
    %3491 = vmatprep.subr.mxu0 %v616
    %3492 = vmatpush1.msra.mxu0 %v615
    %3493 = vmatprep.subr.mxu0 %v687
    %3494 = vmatpush1.msra.mxu0 %v686
    %3495 = vmatprep.subr.mxu0 %v758
    %3496 = vmatpush1.msra.mxu0 %v757
    %3497 = vmatprep.subr.mxu0 %v829
    %3498 = vmatpush1.msra.mxu0 %v828
    %3499 = vmatprep.subr.mxu0 %v900
    %3500 = vmatpush1.msra.mxu0 %v899
    %3501 = vmatprep.subr.mxu0 %v971
    %3502 = vmatpush1.msra.mxu0 %v970
    %3503 = vmatprep.subr.mxu0 0.0
    %3504 = vmatpush1.msra.mxu0 0.0
    %3505 = vmatprep.subr.mxu0 0.0
    %3506 = vmatpush1.msra.mxu0 0.0
    %3507 = vmatprep.subr.mxu0 0.0
    %3508 = vmatpush1.msra.mxu0 0.0
    %3509 = vmatprep.subr.mxu0 0.0
    %3510 = vmatpush1.msra.mxu0 0.0
    %3511 = vmatprep.subr.mxu0 0.0
    %3512 = vmatpush1.msra.mxu0 0.0
    %3513 = vmatprep.subr.mxu0 0.0
    %3514 = vmatpush1.msra.mxu0 0.0
    %3515 = vmatprep.subr.mxu0 0.0
    %3516 = vmatpush1.msra.mxu0 0.0
    %3517 = vmatprep.subr.mxu0 0.0
    %3518 = vmatpush1.msra.mxu0 0.0
    %3519 = vmatprep.subr.mxu0 0.0
    %3520 = vmatpush1.msra.mxu0 0.0
    %3521 = vmatprep.subr.mxu0 0.0
    %3522 = vmatpush1.msra.mxu0 0.0
    %3523 = vmatprep.subr.mxu0 0.0
    %3524 = vmatpush1.msra.mxu0 0.0
    %3525 = vmatprep.subr.mxu0 0.0
    %3526 = vmatpush1.msra.mxu0 0.0
    %3527 = vmatprep.subr.mxu0 0.0
    %3528 = vmatpush1.msra.mxu0 0.0
    %3529 = vmatprep.subr.mxu0 0.0
    %3530 = vmatpush1.msra.mxu0 0.0
    %3531 = vmatprep.subr.mxu0 0.0
    %3532 = vmatpush1.msra.mxu0 0.0
    %3533 = vmatprep.subr.mxu0 0.0
    %3534 = vmatpush1.msra.mxu0 0.0
    %3535 = vmatprep.subr.mxu0 0.0
    %3536 = vmatpush1.msra.mxu0 0.0
    %3537 = vmatprep.subr.mxu0 0.0
    %3538 = vmatpush1.msra.mxu0 0.0
    %3539 = vmatprep.subr.mxu0 0.0
    %3540 = vmatpush1.msra.mxu0 0.0
    %3541 = vmatprep.subr.mxu0 0.0
    %3542 = vmatpush1.msra.mxu0 0.0
    %3543 = vmatprep.subr.mxu0 0.0
    %3544 = vmatpush1.msra.mxu0 0.0
    %3545 = vmatprep.subr.mxu0 0.0
    %3546 = vmatpush1.msra.mxu0 0.0
    %3547 = vmatprep.subr.mxu0 0.0
    %3548 = vmatpush1.msra.mxu0 0.0
    %3549 = vmatprep.subr.mxu0 0.0
    %3550 = vmatpush1.msra.mxu0 0.0
    %3551 = vmatprep.mubr.f32.mxu0 0.0
    %3552 = vmatmul.mubr.f32.gmra.mrb[0].mxu0 %v1355
    %v3553 = vpop.f32.mrb[0].mxu0
    %v3554 = vadd.f32 %v1242, %v3553
    %v3555 = vpop.f32.mrb[0].mxu0
    %v3556 = vadd.f32 %v1246, %v3555
    %3557 = vdwg.mxu0
    %3558 = vmatprep.subr.mxu0 %v476
    %3559 = vmatpush1.msra.mxu0 %v475
    %3560 = vmatprep.subr.mxu0 %v547
    %3561 = vmatpush1.msra.mxu0 %v546
    %3562 = vmatprep.subr.mxu0 %v618
    %3563 = vmatpush1.msra.mxu0 %v617
    %3564 = vmatprep.subr.mxu0 %v689
    %3565 = vmatpush1.msra.mxu0 %v688
    %3566 = vmatprep.subr.mxu0 %v760
    %3567 = vmatpush1.msra.mxu0 %v759
    %3568 = vmatprep.subr.mxu0 %v831
    %3569 = vmatpush1.msra.mxu0 %v830
    %3570 = vmatprep.subr.mxu0 %v902
    %3571 = vmatpush1.msra.mxu0 %v901
    %3572 = vmatprep.subr.mxu0 %v973
    %3573 = vmatpush1.msra.mxu0 %v972
    %3574 = vmatprep.subr.mxu0 0.0
    %3575 = vmatpush1.msra.mxu0 0.0
    %3576 = vmatprep.subr.mxu0 0.0
    %3577 = vmatpush1.msra.mxu0 0.0
    %3578 = vmatprep.subr.mxu0 0.0
    %3579 = vmatpush1.msra.mxu0 0.0
    %3580 = vmatprep.subr.mxu0 0.0
    %3581 = vmatpush1.msra.mxu0 0.0
    %3582 = vmatprep.subr.mxu0 0.0
    %3583 = vmatpush1.msra.mxu0 0.0
    %3584 = vmatprep.subr.mxu0 0.0
    %3585 = vmatpush1.msra.mxu0 0.0
    %3586 = vmatprep.subr.mxu0 0.0
    %3587 = vmatpush1.msra.mxu0 0.0
    %3588 = vmatprep.subr.mxu0 0.0
    %3589 = vmatpush1.msra.mxu0 0.0
    %3590 = vmatprep.subr.mxu0 0.0
    %3591 = vmatpush1.msra.mxu0 0.0
    %3592 = vmatprep.subr.mxu0 0.0
    %3593 = vmatpush1.msra.mxu0 0.0
    %3594 = vmatprep.subr.mxu0 0.0
    %3595 = vmatpush1.msra.mxu0 0.0
    %3596 = vmatprep.subr.mxu0 0.0
    %3597 = vmatpush1.msra.mxu0 0.0
    %3598 = vmatprep.subr.mxu0 0.0
    %3599 = vmatpush1.msra.mxu0 0.0
    %3600 = vmatprep.subr.mxu0 0.0
    %3601 = vmatpush1.msra.mxu0 0.0
    %3602 = vmatprep.subr.mxu0 0.0
    %3603 = vmatpush1.msra.mxu0 0.0
    %3604 = vmatprep.subr.mxu0 0.0
    %3605 = vmatpush1.msra.mxu0 0.0
    %3606 = vmatprep.subr.mxu0 0.0
    %3607 = vmatpush1.msra.mxu0 0.0
    %3608 = vmatprep.subr.mxu0 0.0
    %3609 = vmatpush1.msra.mxu0 0.0
    %3610 = vmatprep.subr.mxu0 0.0
    %3611 = vmatpush1.msra.mxu0 0.0
    %3612 = vmatprep.subr.mxu0 0.0
    %3613 = vmatpush1.msra.mxu0 0.0
    %3614 = vmatprep.subr.mxu0 0.0
    %3615 = vmatpush1.msra.mxu0 0.0
    %3616 = vmatprep.subr.mxu0 0.0
    %3617 = vmatpush1.msra.mxu0 0.0
    %3618 = vmatprep.subr.mxu0 0.0
    %3619 = vmatpush1.msra.mxu0 0.0
    %3620 = vmatprep.subr.mxu0 0.0
    %3621 = vmatpush1.msra.mxu0 0.0
    %3622 = vmatprep.mubr.f32.mxu0 0.0
    %3623 = vmatmul.mubr.f32.gmra.mrb[0].mxu0 %v1355
    %v3624 = vpop.f32.mrb[0].mxu0
    %v3625 = vadd.f32 %v1250, %v3624
    %v3626 = vpop.f32.mrb[0].mxu0
    %v3627 = vadd.f32 %v1254, %v3626
    %3628 = vdwg.mxu0
    %3629 = vmatprep.subr.mxu0 %v478
    %3630 = vmatpush1.msra.mxu0 %v477
    %3631 = vmatprep.subr.mxu0 %v549
    %3632 = vmatpush1.msra.mxu0 %v548
    %3633 = vmatprep.subr.mxu0 %v620
    %3634 = vmatpush1.msra.mxu0 %v619
    %3635 = vmatprep.subr.mxu0 %v691
    %3636 = vmatpush1.msra.mxu0 %v690
    %3637 = vmatprep.subr.mxu0 %v762
    %3638 = vmatpush1.msra.mxu0 %v761
    %3639 = vmatprep.subr.mxu0 %v833
    %3640 = vmatpush1.msra.mxu0 %v832
    %3641 = vmatprep.subr.mxu0 %v904
    %3642 = vmatpush1.msra.mxu0 %v903
    %3643 = vmatprep.subr.mxu0 %v975
    %3644 = vmatpush1.msra.mxu0 %v974
    %3645 = vmatprep.subr.mxu0 0.0
    %3646 = vmatpush1.msra.mxu0 0.0
    %3647 = vmatprep.subr.mxu0 0.0
    %3648 = vmatpush1.msra.mxu0 0.0
    %3649 = vmatprep.subr.mxu0 0.0
    %3650 = vmatpush1.msra.mxu0 0.0
    %3651 = vmatprep.subr.mxu0 0.0
    %3652 = vmatpush1.msra.mxu0 0.0
    %3653 = vmatprep.subr.mxu0 0.0
    %3654 = vmatpush1.msra.mxu0 0.0
    %3655 = vmatprep.subr.mxu0 0.0
    %3656 = vmatpush1.msra.mxu0 0.0
    %3657 = vmatprep.subr.mxu0 0.0
    %3658 = vmatpush1.msra.mxu0 0.0
    %3659 = vmatprep.subr.mxu0 0.0
    %3660 = vmatpush1.msra.mxu0 0.0
    %3661 = vmatprep.subr.mxu0 0.0
    %3662 = vmatpush1.msra.mxu0 0.0
    %3663 = vmatprep.subr.mxu0 0.0
    %3664 = vmatpush1.msra.mxu0 0.0
    %3665 = vmatprep.subr.mxu0 0.0
    %3666 = vmatpush1.msra.mxu0 0.0
    %3667 = vmatprep.subr.mxu0 0.0
    %3668 = vmatpush1.msra.mxu0 0.0
    %3669 = vmatprep.subr.mxu0 0.0
    %3670 = vmatpush1.msra.mxu0 0.0
    %3671 = vmatprep.subr.mxu0 0.0
    %3672 = vmatpush1.msra.mxu0 0.0
    %3673 = vmatprep.subr.mxu0 0.0
    %3674 = vmatpush1.msra.mxu0 0.0
    %3675 = vmatprep.subr.mxu0 0.0
    %3676 = vmatpush1.msra.mxu0 0.0
    %3677 = vmatprep.subr.mxu0 0.0
    %3678 = vmatpush1.msra.mxu0 0.0
    %3679 = vmatprep.subr.mxu0 0.0
    %3680 = vmatpush1.msra.mxu0 0.0
    %3681 = vmatprep.subr.mxu0 0.0
    %3682 = vmatpush1.msra.mxu0 0.0
    %3683 = vmatprep.subr.mxu0 0.0
    %3684 = vmatpush1.msra.mxu0 0.0
    %3685 = vmatprep.subr.mxu0 0.0
    %3686 = vmatpush1.msra.mxu0 0.0
    %3687 = vmatprep.subr.mxu0 0.0
    %3688 = vmatpush1.msra.mxu0 0.0
    %3689 = vmatprep.subr.mxu0 0.0
    %3690 = vmatpush1.msra.mxu0 0.0
    %3691 = vmatprep.subr.mxu0 0.0
    %3692 = vmatpush1.msra.mxu0 0.0
    %3693 = vmatprep.mubr.f32.mxu0 0.0
    %3694 = vmatmul.mubr.f32.gmra.mrb[0].mxu0 %v1355
    %v3695 = vpop.f32.mrb[0].mxu0
    %v3696 = vadd.f32 %v1258, %v3695
    %v3697 = vpop.f32.mrb[0].mxu0
    %v3698 = vadd.f32 %v1262, %v3697
    %3699 = vdwg.mxu0
    %3700 = vmatprep.subr.mxu0 %v480
    %3701 = vmatpush1.msra.mxu0 %v479
    %3702 = vmatprep.subr.mxu0 %v551
    %3703 = vmatpush1.msra.mxu0 %v550
    %3704 = vmatprep.subr.mxu0 %v622
    %3705 = vmatpush1.msra.mxu0 %v621
    %3706 = vmatprep.subr.mxu0 %v693
    %3707 = vmatpush1.msra.mxu0 %v692
    %3708 = vmatprep.subr.mxu0 %v764
    %3709 = vmatpush1.msra.mxu0 %v763
    %3710 = vmatprep.subr.mxu0 %v835
    %3711 = vmatpush1.msra.mxu0 %v834
    %3712 = vmatprep.subr.mxu0 %v906
    %3713 = vmatpush1.msra.mxu0 %v905
    %3714 = vmatprep.subr.mxu0 %v977
    %3715 = vmatpush1.msra.mxu0 %v976
    %3716 = vmatprep.subr.mxu0 0.0
    %3717 = vmatpush1.msra.mxu0 0.0
    %3718 = vmatprep.subr.mxu0 0.0
    %3719 = vmatpush1.msra.mxu0 0.0
    %3720 = vmatprep.subr.mxu0 0.0
    %3721 = vmatpush1.msra.mxu0 0.0
    %3722 = vmatprep.subr.mxu0 0.0
    %3723 = vmatpush1.msra.mxu0 0.0
    %3724 = vmatprep.subr.mxu0 0.0
    %3725 = vmatpush1.msra.mxu0 0.0
    %3726 = vmatprep.subr.mxu0 0.0
    %3727 = vmatpush1.msra.mxu0 0.0
    %3728 = vmatprep.subr.mxu0 0.0
    %3729 = vmatpush1.msra.mxu0 0.0
    %3730 = vmatprep.subr.mxu0 0.0
    %3731 = vmatpush1.msra.mxu0 0.0
    %3732 = vmatprep.subr.mxu0 0.0
    %3733 = vmatpush1.msra.mxu0 0.0
    %3734 = vmatprep.subr.mxu0 0.0
    %3735 = vmatpush1.msra.mxu0 0.0
    %3736 = vmatprep.subr.mxu0 0.0
    %3737 = vmatpush1.msra.mxu0 0.0
    %3738 = vmatprep.subr.mxu0 0.0
    %3739 = vmatpush1.msra.mxu0 0.0
    %3740 = vmatprep.subr.mxu0 0.0
    %3741 = vmatpush1.msra.mxu0 0.0
    %3742 = vmatprep.subr.mxu0 0.0
    %3743 = vmatpush1.msra.mxu0 0.0
    %3744 = vmatprep.subr.mxu0 0.0
    %3745 = vmatpush1.msra.mxu0 0.0
    %3746 = vmatprep.subr.mxu0 0.0
    %3747 = vmatpush1.msra.mxu0 0.0
    %3748 = vmatprep.subr.mxu0 0.0
    %3749 = vmatpush1.msra.mxu0 0.0
    %3750 = vmatprep.subr.mxu0 0.0
    %3751 = vmatpush1.msra.mxu0 0.0
    %3752 = vmatprep.subr.mxu0 0.0
    %3753 = vmatpush1.msra.mxu0 0.0
    %3754 = vmatprep.subr.mxu0 0.0
    %3755 = vmatpush1.msra.mxu0 0.0
    %3756 = vmatprep.subr.mxu0 0.0
    %3757 = vmatpush1.msra.mxu0 0.0
    %3758 = vmatprep.subr.mxu0 0.0
    %3759 = vmatpush1.msra.mxu0 0.0
    %3760 = vmatprep.subr.mxu0 0.0
    %3761 = vmatpush1.msra.mxu0 0.0
    %3762 = vmatprep.subr.mxu0 0.0
    %3763 = vmatpush1.msra.mxu0 0.0
    %3764 = vmatprep.mubr.f32.mxu0 0.0
    %3765 = vmatmul.mubr.f32.gmra.mrb[0].mxu0 %v1355
    %v3766 = vpop.f32.mrb[0].mxu0
    %v3767 = vadd.f32 %v1266, %v3766
    %v3768 = vpop.f32.mrb[0].mxu0
    %v3769 = vadd.f32 %v1270, %v3768
    %3770 = vdwg.mxu0
    %3771 = vmatprep.subr.mxu0 %v482
    %3772 = vmatpush1.msra.mxu0 %v481
    %3773 = vmatprep.subr.mxu0 %v553
    %3774 = vmatpush1.msra.mxu0 %v552
    %3775 = vmatprep.subr.mxu0 %v624
    %3776 = vmatpush1.msra.mxu0 %v623
    %3777 = vmatprep.subr.mxu0 %v695
    %3778 = vmatpush1.msra.mxu0 %v694
    %3779 = vmatprep.subr.mxu0 %v766
    %3780 = vmatpush1.msra.mxu0 %v765
    %3781 = vmatprep.subr.mxu0 %v837
    %3782 = vmatpush1.msra.mxu0 %v836
    %3783 = vmatprep.subr.mxu0 %v908
    %3784 = vmatpush1.msra.mxu0 %v907
    %3785 = vmatprep.subr.mxu0 %v979
    %3786 = vmatpush1.msra.mxu0 %v978
    %3787 = vmatprep.subr.mxu0 0.0
    %3788 = vmatpush1.msra.mxu0 0.0
    %3789 = vmatprep.subr.mxu0 0.0
    %3790 = vmatpush1.msra.mxu0 0.0
    %3791 = vmatprep.subr.mxu0 0.0
    %3792 = vmatpush1.msra.mxu0 0.0
    %3793 = vmatprep.subr.mxu0 0.0
    %3794 = vmatpush1.msra.mxu0 0.0
    %3795 = vmatprep.subr.mxu0 0.0
    %3796 = vmatpush1.msra.mxu0 0.0
    %3797 = vmatprep.subr.mxu0 0.0
    %3798 = vmatpush1.msra.mxu0 0.0
    %3799 = vmatprep.subr.mxu0 0.0
    %3800 = vmatpush1.msra.mxu0 0.0
    %3801 = vmatprep.subr.mxu0 0.0
    %3802 = vmatpush1.msra.mxu0 0.0
    %3803 = vmatprep.subr.mxu0 0.0
    %3804 = vmatpush1.msra.mxu0 0.0
    %3805 = vmatprep.subr.mxu0 0.0
    %3806 = vmatpush1.msra.mxu0 0.0
    %3807 = vmatprep.subr.mxu0 0.0
    %3808 = vmatpush1.msra.mxu0 0.0
    %3809 = vmatprep.subr.mxu0 0.0
    %3810 = vmatpush1.msra.mxu0 0.0
    %3811 = vmatprep.subr.mxu0 0.0
    %3812 = vmatpush1.msra.mxu0 0.0
    %3813 = vmatprep.subr.mxu0 0.0
    %3814 = vmatpush1.msra.mxu0 0.0
    %3815 = vmatprep.subr.mxu0 0.0
    %3816 = vmatpush1.msra.mxu0 0.0
    %3817 = vmatprep.subr.mxu0 0.0
    %3818 = vmatpush1.msra.mxu0 0.0
    %3819 = vmatprep.subr.mxu0 0.0
    %3820 = vmatpush1.msra.mxu0 0.0
    %3821 = vmatprep.subr.mxu0 0.0
    %3822 = vmatpush1.msra.mxu0 0.0
    %3823 = vmatprep.subr.mxu0 0.0
    %3824 = vmatpush1.msra.mxu0 0.0
    %3825 = vmatprep.subr.mxu0 0.0
    %3826 = vmatpush1.msra.mxu0 0.0
    %3827 = vmatprep.subr.mxu0 0.0
    %3828 = vmatpush1.msra.mxu0 0.0
    %3829 = vmatprep.subr.mxu0 0.0
    %3830 = vmatpush1.msra.mxu0 0.0
    %3831 = vmatprep.subr.mxu0 0.0
    %3832 = vmatpush1.msra.mxu0 0.0
    %3833 = vmatprep.subr.mxu0 0.0
    %3834 = vmatpush1.msra.mxu0 0.0
    %3835 = vmatprep.mubr.f32.mxu0 0.0
    %3836 = vmatmul.mubr.f32.gmra.mrb[0].mxu0 %v1355
    %v3837 = vpop.f32.mrb[0].mxu0
    %v3838 = vadd.f32 %v1274, %v3837
    %v3839 = vpop.f32.mrb[0].mxu0
    %v3840 = vadd.f32 %v1278, %v3839
    %3841 = vdwg.mxu0
    %3842 = vmatprep.subr.mxu0 0.0
    %3843 = vmatpush1.msra.mxu0 %v483
    %3844 = vmatprep.subr.mxu0 0.0
    %3845 = vmatpush1.msra.mxu0 %v554
    %3846 = vmatprep.subr.mxu0 0.0
    %3847 = vmatpush1.msra.mxu0 %v625
    %3848 = vmatprep.subr.mxu0 0.0
    %3849 = vmatpush1.msra.mxu0 %v696
    %3850 = vmatprep.subr.mxu0 0.0
    %3851 = vmatpush1.msra.mxu0 %v767
    %3852 = vmatprep.subr.mxu0 0.0
    %3853 = vmatpush1.msra.mxu0 %v838
    %3854 = vmatprep.subr.mxu0 0.0
    %3855 = vmatpush1.msra.mxu0 %v909
    %3856 = vmatprep.subr.mxu0 0.0
    %3857 = vmatpush1.msra.mxu0 %v980
    %3858 = vmatprep.subr.mxu0 0.0
    %3859 = vmatpush1.msra.mxu0 0.0
    %3860 = vmatprep.subr.mxu0 0.0
    %3861 = vmatpush1.msra.mxu0 0.0
    %3862 = vmatprep.subr.mxu0 0.0
    %3863 = vmatpush1.msra.mxu0 0.0
    %3864 = vmatprep.subr.mxu0 0.0
    %3865 = vmatpush1.msra.mxu0 0.0
    %3866 = vmatprep.subr.mxu0 0.0
    %3867 = vmatpush1.msra.mxu0 0.0
    %3868 = vmatprep.subr.mxu0 0.0
    %3869 = vmatpush1.msra.mxu0 0.0
    %3870 = vmatprep.subr.mxu0 0.0
    %3871 = vmatpush1.msra.mxu0 0.0
    %3872 = vmatprep.subr.mxu0 0.0
    %3873 = vmatpush1.msra.mxu0 0.0
    %3874 = vmatprep.subr.mxu0 0.0
    %3875 = vmatpush1.msra.mxu0 0.0
    %3876 = vmatprep.subr.mxu0 0.0
    %3877 = vmatpush1.msra.mxu0 0.0
    %3878 = vmatprep.subr.mxu0 0.0
    %3879 = vmatpush1.msra.mxu0 0.0
    %3880 = vmatprep.subr.mxu0 0.0
    %3881 = vmatpush1.msra.mxu0 0.0
    %3882 = vmatprep.subr.mxu0 0.0
    %3883 = vmatpush1.msra.mxu0 0.0
    %3884 = vmatprep.subr.mxu0 0.0
    %3885 = vmatpush1.msra.mxu0 0.0
    %3886 = vmatprep.subr.mxu0 0.0
    %3887 = vmatpush1.msra.mxu0 0.0
    %3888 = vmatprep.subr.mxu0 0.0
    %3889 = vmatpush1.msra.mxu0 0.0
    %3890 = vmatprep.subr.mxu0 0.0
    %3891 = vmatpush1.msra.mxu0 0.0
    %3892 = vmatprep.subr.mxu0 0.0
    %3893 = vmatpush1.msra.mxu0 0.0
    %3894 = vmatprep.subr.mxu0 0.0
    %3895 = vmatpush1.msra.mxu0 0.0
    %3896 = vmatprep.subr.mxu0 0.0
    %3897 = vmatpush1.msra.mxu0 0.0
    %3898 = vmatprep.subr.mxu0 0.0
    %3899 = vmatpush1.msra.mxu0 0.0
    %3900 = vmatprep.subr.mxu0 0.0
    %3901 = vmatpush1.msra.mxu0 0.0
    %3902 = vmatprep.subr.mxu0 0.0
    %3903 = vmatpush1.msra.mxu0 0.0
    %3904 = vmatprep.subr.mxu0 0.0
    %3905 = vmatpush1.msra.mxu0 0.0
    %3906 = vmatprep.mubr.f32.mxu0 0.0
    %3907 = vmatmul.mubr.f32.gmra.mrb[0].mxu0 %v1355
    %v3908 = vpop.f32.mrb[0].mxu0
    %v3909 = vadd.f32 %v1282, %v3908
    %v3910 = vpop.f32.mrb[0].mxu0
    %3911 = vdwg.mxu0
    %v3983 = vcombine.low %v1424, %v1426
    %v3984 = vcombine.low %v1495, %v1497
    %v3986 = vunpack.c.l.s4 1983009808
    %v3987 = vunpack.c.0.s8 %v3986
    %v3988 = vlaneseq
    %v3989 = vshrl.u32 %v3988, 7
    %v3990 = vsub.s32 %v3987, %v3989
    %v3991 = vrot.slane %v3983, %v3990
    %v3993 = vunpack.c.l.s4 1983009808
    %v3994 = vunpack.c.0.s8 %v3993
    %v3995 = vlaneseq
    %v3996 = vshrl.u32 %v3995, 7
    %v3997 = vsub.s32 %v3994, %v3996
    %v3998 = vrot.slane %v3984, %v3997
    %v3999 = vcombine.low %v3991, %v3998
    %v4000 = vcombine.low %v1566, %v1568
    %v4001 = vcombine.low %v1637, %v1639
    %v4003 = vunpack.c.l.s4 1983009808
    %v4004 = vunpack.c.0.s8 %v4003
    %v4005 = vlaneseq
    %v4006 = vshrl.u32 %v4005, 7
    %v4007 = vsub.s32 %v4004, %v4006
    %v4008 = vrot.slane %v4000, %v4007
    %v4010 = vunpack.c.l.s4 1983009808
    %v4011 = vunpack.c.0.s8 %v4010
    %v4012 = vlaneseq
    %v4013 = vshrl.u32 %v4012, 7
    %v4014 = vsub.s32 %v4011, %v4013
    %v4015 = vrot.slane %v4001, %v4014
    %v4016 = vcombine.low %v4008, %v4015
    %v4017 = vcombine.low %v1708, %v1710
    %v4018 = vcombine.low %v1779, %v1781
    %v4020 = vunpack.c.l.s4 1983009808
    %v4021 = vunpack.c.0.s8 %v4020
    %v4022 = vlaneseq
    %v4023 = vshrl.u32 %v4022, 7
    %v4024 = vsub.s32 %v4021, %v4023
    %v4025 = vrot.slane %v4017, %v4024
    %v4027 = vunpack.c.l.s4 1983009808
    %v4028 = vunpack.c.0.s8 %v4027
    %v4029 = vlaneseq
    %v4030 = vshrl.u32 %v4029, 7
    %v4031 = vsub.s32 %v4028, %v4030
    %v4032 = vrot.slane %v4018, %v4031
    %v4033 = vcombine.low %v4025, %v4032
    %v4034 = vcombine.low %v1850, %v1852
    %v4035 = vcombine.low %v1921, %v1923
    %v4037 = vunpack.c.l.s4 1983009808
    %v4038 = vunpack.c.0.s8 %v4037
    %v4039 = vlaneseq
    %v4040 = vshrl.u32 %v4039, 7
    %v4041 = vsub.s32 %v4038, %v4040
    %v4042 = vrot.slane %v4034, %v4041
    %v4044 = vunpack.c.l.s4 1983009808
    %v4045 = vunpack.c.0.s8 %v4044
    %v4046 = vlaneseq
    %v4047 = vshrl.u32 %v4046, 7
    %v4048 = vsub.s32 %v4045, %v4047
    %v4049 = vrot.slane %v4035, %v4048
    %v4050 = vcombine.low %v4042, %v4049
    %v4051 = vcombine.low %v1992, %v1994
    %v4052 = vcombine.low %v2063, %v2065
    %v4054 = vunpack.c.l.s4 1983009808
    %v4055 = vunpack.c.0.s8 %v4054
    %v4056 = vlaneseq
    %v4057 = vshrl.u32 %v4056, 7
    %v4058 = vsub.s32 %v4055, %v4057
    %v4059 = vrot.slane %v4051, %v4058
    %v4061 = vunpack.c.l.s4 1983009808
    %v4062 = vunpack.c.0.s8 %v4061
    %v4063 = vlaneseq
    %v4064 = vshrl.u32 %v4063, 7
    %v4065 = vsub.s32 %v4062, %v4064
    %v4066 = vrot.slane %v4052, %v4065
    %v4067 = vcombine.low %v4059, %v4066
    %v4068 = vcombine.low %v2134, %v2136
    %v4069 = vcombine.low %v2205, %v2207
    %v4071 = vunpack.c.l.s4 1983009808
    %v4072 = vunpack.c.0.s8 %v4071
    %v4073 = vlaneseq
    %v4074 = vshrl.u32 %v4073, 7
    %v4075 = vsub.s32 %v4072, %v4074
    %v4076 = vrot.slane %v4068, %v4075
    %v4078 = vunpack.c.l.s4 1983009808
    %v4079 = vunpack.c.0.s8 %v4078
    %v4080 = vlaneseq
    %v4081 = vshrl.u32 %v4080, 7
    %v4082 = vsub.s32 %v4079, %v4081
    %v4083 = vrot.slane %v4069, %v4082
    %v4084 = vcombine.low %v4076, %v4083
    %v4085 = vcombine.low %v2276, %v2278
    %v4086 = vcombine.low %v2347, %v2349
    %v4088 = vunpack.c.l.s4 1983009808
    %v4089 = vunpack.c.0.s8 %v4088
    %v4090 = vlaneseq
    %v4091 = vshrl.u32 %v4090, 7
    %v4092 = vsub.s32 %v4089, %v4091
    %v4093 = vrot.slane %v4085, %v4092
    %v4095 = vunpack.c.l.s4 1983009808
    %v4096 = vunpack.c.0.s8 %v4095
    %v4097 = vlaneseq
    %v4098 = vshrl.u32 %v4097, 7
    %v4099 = vsub.s32 %v4096, %v4098
    %v4100 = vrot.slane %v4086, %v4099
    %v4101 = vcombine.low %v4093, %v4100
    %v4102 = vcombine.low %v2418, %v2420
    %v4103 = vcombine.low %v2489, %v2491
    %v4105 = vunpack.c.l.s4 1983009808
    %v4106 = vunpack.c.0.s8 %v4105
    %v4107 = vlaneseq
    %v4108 = vshrl.u32 %v4107, 7
    %v4109 = vsub.s32 %v4106, %v4108
    %v4110 = vrot.slane %v4102, %v4109
    %v4112 = vunpack.c.l.s4 1983009808
    %v4113 = vunpack.c.0.s8 %v4112
    %v4114 = vlaneseq
    %v4115 = vshrl.u32 %v4114, 7
    %v4116 = vsub.s32 %v4113, %v4115
    %v4117 = vrot.slane %v4103, %v4116
    %v4118 = vcombine.low %v4110, %v4117
    %v4119 = vcombine.low %v2560, %v2562
    %v4120 = vcombine.low %v2631, %v2633
    %v4122 = vunpack.c.l.s4 1983009808
    %v4123 = vunpack.c.0.s8 %v4122
    %v4124 = vlaneseq
    %v4125 = vshrl.u32 %v4124, 7
    %v4126 = vsub.s32 %v4123, %v4125
    %v4127 = vrot.slane %v4119, %v4126
    %v4129 = vunpack.c.l.s4 1983009808
    %v4130 = vunpack.c.0.s8 %v4129
    %v4131 = vlaneseq
    %v4132 = vshrl.u32 %v4131, 7
    %v4133 = vsub.s32 %v4130, %v4132
    %v4134 = vrot.slane %v4120, %v4133
    %v4135 = vcombine.low %v4127, %v4134
    %v4136 = vcombine.low %v2702, %v2704
    %v4137 = vcombine.low %v2773, %v2775
    %v4139 = vunpack.c.l.s4 1983009808
    %v4140 = vunpack.c.0.s8 %v4139
    %v4141 = vlaneseq
    %v4142 = vshrl.u32 %v4141, 7
    %v4143 = vsub.s32 %v4140, %v4142
    %v4144 = vrot.slane %v4136, %v4143
    %v4146 = vunpack.c.l.s4 1983009808
    %v4147 = vunpack.c.0.s8 %v4146
    %v4148 = vlaneseq
    %v4149 = vshrl.u32 %v4148, 7
    %v4150 = vsub.s32 %v4147, %v4149
    %v4151 = vrot.slane %v4137, %v4150
    %v4152 = vcombine.low %v4144, %v4151
    %v4153 = vcombine.low %v2844, %v2846
    %v4154 = vcombine.low %v2915, %v2917
    %v4156 = vunpack.c.l.s4 1983009808
    %v4157 = vunpack.c.0.s8 %v4156
    %v4158 = vlaneseq
    %v4159 = vshrl.u32 %v4158, 7
    %v4160 = vsub.s32 %v4157, %v4159
    %v4161 = vrot.slane %v4153, %v4160
    %v4163 = vunpack.c.l.s4 1983009808
    %v4164 = vunpack.c.0.s8 %v4163
    %v4165 = vlaneseq
    %v4166 = vshrl.u32 %v4165, 7
    %v4167 = vsub.s32 %v4164, %v4166
    %v4168 = vrot.slane %v4154, %v4167
    %v4169 = vcombine.low %v4161, %v4168
    %v4170 = vcombine.low %v2986, %v2988
    %v4171 = vcombine.low %v3057, %v3059
    %v4173 = vunpack.c.l.s4 1983009808
    %v4174 = vunpack.c.0.s8 %v4173
    %v4175 = vlaneseq
    %v4176 = vshrl.u32 %v4175, 7
    %v4177 = vsub.s32 %v4174, %v4176
    %v4178 = vrot.slane %v4170, %v4177
    %v4180 = vunpack.c.l.s4 1983009808
    %v4181 = vunpack.c.0.s8 %v4180
    %v4182 = vlaneseq
    %v4183 = vshrl.u32 %v4182, 7
    %v4184 = vsub.s32 %v4181, %v4183
    %v4185 = vrot.slane %v4171, %v4184
    %v4186 = vcombine.low %v4178, %v4185
    %v4187 = vcombine.low %v3128, %v3130
    %v4188 = vcombine.low %v3199, %v3201
    %v4190 = vunpack.c.l.s4 1983009808
    %v4191 = vunpack.c.0.s8 %v4190
    %v4192 = vlaneseq
    %v4193 = vshrl.u32 %v4192, 7
    %v4194 = vsub.s32 %v4191, %v4193
    %v4195 = vrot.slane %v4187, %v4194
    %v4197 = vunpack.c.l.s4 1983009808
    %v4198 = vunpack.c.0.s8 %v4197
    %v4199 = vlaneseq
    %v4200 = vshrl.u32 %v4199, 7
    %v4201 = vsub.s32 %v4198, %v4200
    %v4202 = vrot.slane %v4188, %v4201
    %v4203 = vcombine.low %v4195, %v4202
    %v4204 = vcombine.low %v3270, %v3272
    %v4205 = vcombine.low %v3341, %v3343
    %v4207 = vunpack.c.l.s4 1983009808
    %v4208 = vunpack.c.0.s8 %v4207
    %v4209 = vlaneseq
    %v4210 = vshrl.u32 %v4209, 7
    %v4211 = vsub.s32 %v4208, %v4210
    %v4212 = vrot.slane %v4204, %v4211
    %v4214 = vunpack.c.l.s4 1983009808
    %v4215 = vunpack.c.0.s8 %v4214
    %v4216 = vlaneseq
    %v4217 = vshrl.u32 %v4216, 7
    %v4218 = vsub.s32 %v4215, %v4217
    %v4219 = vrot.slane %v4205, %v4218
    %v4220 = vcombine.low %v4212, %v4219
    %v4221 = vcombine.low %v3412, %v3414
    %v4222 = vcombine.low %v3483, %v3485
    %v4224 = vunpack.c.l.s4 1983009808
    %v4225 = vunpack.c.0.s8 %v4224
    %v4226 = vlaneseq
    %v4227 = vshrl.u32 %v4226, 7
    %v4228 = vsub.s32 %v4225, %v4227
    %v4229 = vrot.slane %v4221, %v4228
    %v4231 = vunpack.c.l.s4 1983009808
    %v4232 = vunpack.c.0.s8 %v4231
    %v4233 = vlaneseq
    %v4234 = vshrl.u32 %v4233, 7
    %v4235 = vsub.s32 %v4232, %v4234
    %v4236 = vrot.slane %v4222, %v4235
    %v4237 = vcombine.low %v4229, %v4236
    %v4238 = vcombine.low %v3554, %v3556
    %v4239 = vcombine.low %v3625, %v3627
    %v4241 = vunpack.c.l.s4 1983009808
    %v4242 = vunpack.c.0.s8 %v4241
    %v4243 = vlaneseq
    %v4244 = vshrl.u32 %v4243, 7
    %v4245 = vsub.s32 %v4242, %v4244
    %v4246 = vrot.slane %v4238, %v4245
    %v4248 = vunpack.c.l.s4 1983009808
    %v4249 = vunpack.c.0.s8 %v4248
    %v4250 = vlaneseq
    %v4251 = vshrl.u32 %v4250, 7
    %v4252 = vsub.s32 %v4249, %v4251
    %v4253 = vrot.slane %v4239, %v4252
    %v4254 = vcombine.low %v4246, %v4253
    %v4255 = vcombine.low %v3696, %v3698
    %v4256 = vcombine.low %v3767, %v3769
    %v4258 = vunpack.c.l.s4 1983009808
    %v4259 = vunpack.c.0.s8 %v4258
    %v4260 = vlaneseq
    %v4261 = vshrl.u32 %v4260, 7
    %v4262 = vsub.s32 %v4259, %v4261
    %v4263 = vrot.slane %v4255, %v4262
    %v4265 = vunpack.c.l.s4 1983009808
    %v4266 = vunpack.c.0.s8 %v4265
    %v4267 = vlaneseq
    %v4268 = vshrl.u32 %v4267, 7
    %v4269 = vsub.s32 %v4266, %v4268
    %v4270 = vrot.slane %v4256, %v4269
    %v4271 = vcombine.low %v4263, %v4270
    %v4272 = vcombine.low %v3838, %v3840
    %v4274 = vunpack.c.l.s4 1983009808
    %v4275 = vunpack.c.0.s8 %v4274
    %v4276 = vlaneseq
    %v4277 = vshrl.u32 %v4276, 7
    %v4278 = vsub.s32 %v4275, %v4277
    %v4279 = vrot.slane %v4272, %v4278
    %v4281 = vunpack.c.l.s4 1983009808
    %v4282 = vunpack.c.0.s8 %v4281
    %v4283 = vlaneseq
    %v4284 = vshrl.u32 %v4283, 7
    %v4285 = vsub.s32 %v4282, %v4284
    %v4286 = vrot.slane %v3909, %v4285
    %v4287 = vcombine.low %v4279, %v4286
    %4306 = vst [vmem:[%s9] sm:$0xff] %v3999
    %4307 = vst [vmem:[%s9 + $0x8] sm:$0xff] %v4016
    %4308 = vst [vmem:[%s9 + $0x10] sm:$0xff] %v4033
    %4309 = vst [vmem:[%s9 + $0x18] sm:$0xff] %v4050
    %4310 = vst [vmem:[%s9 + $0x20] sm:$0xff] %v4067
    %4311 = vst [vmem:[%s9 + $0x28] sm:$0xff] %v4084
    %4312 = vst [vmem:[%s9 + $0x30] sm:$0xff] %v4101
    %4313 = vst [vmem:[%s9 + $0x38] sm:$0xff] %v4118
    %4314 = vst [vmem:[%s9 + $0x40] sm:$0xff] %v4135
    %4315 = vst [vmem:[%s9 + $0x48] sm:$0xff] %v4152
    %4316 = vst [vmem:[%s9 + $0x50] sm:$0xff] %v4169
    %4317 = vst [vmem:[%s9 + $0x58] sm:$0xff] %v4186
    %4318 = vst [vmem:[%s9 + $0x60] sm:$0xff] %v4203
    %4319 = vst [vmem:[%s9 + $0x68] sm:$0xff] %v4220
    %4320 = vst [vmem:[%s9 + $0x70] sm:$0xff] %v4237
    %4321 = vst [vmem:[%s9 + $0x78] sm:$0xff] %v4254
    %4322 = vst [vmem:[%s9 + $0x80] sm:$0xff] %v4271
    %vm4323 = vcmask 1041408
    %vm4324 = vcmask 1043458
    %vm4325 = vmor %vm4324, %vm4323
    %vm4326 = vcmask 652292
    %vm4327 = vmor %vm4326, %vm4325
    %4328 = vst.msk [vmem:[%s9 + $0x88] sm:$0x3f] %vm4327, %v4287
    // Predicated region
    $region74: #{style_decoder_forward.7} parent=1 // pred_check
      _
    $region75: #{style_decoder_forward.7} parent=1 // pred_check_branch
      %4330 = sbr.rel (0) target = $region77
    $region76: #{style_decoder_forward.7} parent=1 // pred_region
      _
    $region77: #{style_decoder_forward.7} parent=1 // pred_fallthru
      _
    // Predicated region
    $region78: #{style_decoder_forward.7} parent=1 // pred_check
      _
    $region79: #{style_decoder_forward.7} parent=1 // pred_check_branch
      %4332 = sbr.rel (0) target = $region81
    $region80: #{style_decoder_forward.7} parent=1 // pred_region
      _
    $region81: #{style_decoder_forward.7} parent=1 // pred_fallthru
      _
    %4333 = vsyncpa [#allocation3], 1
    %4334 = vsyncpa [#allocation5], 1
    %4335 = vsyncpa [#allocation8], 1
    %4336 = vsyncpa [#allocation11], 1
    %4337 = vsyncpa [#allocation14], 1

// kernel: style_decoder_forward.11
$region0: #{style_decoder_forward.11}
  #allocation0 [shape = 'u32[]', space=smem, size = 0x4, offset = 0x4, fixed_abs, tag = 'smem constant byte address 0x4 - core index']
  #allocation1 [shape = 'u32[144,128]{1,0:T(1,128)}', space=vmem, size = 0x12000, scoped, tag = 'internal scratch']
  %s0 = inlined_call_operand.vmem [shape: f32[2,72,64], index: 0, kind: input, shape index: {}]
  %s1 = inlined_call_operand.vmem [shape: f32[4,72], index: 1, kind: input, shape index: {}]
  %s2 = inlined_call_operand.vmem [shape: f32[4,1], index: 2, kind: input, shape index: {}]
  %s3 = inlined_call_operand.vmem [shape: f32[2,4,64], index: 3, kind: input, shape index: {}]
  %s4 = inlined_call_operand.vmem [shape: f32[4,4], index: 4, kind: input, shape index: {}]
  %s5 = inlined_call_operand.vmem [shape: f32[4,1], index: 5, kind: input, shape index: {}]
  %s6 = inlined_call_operand.vmem [shape: f32[2,4,64], index: 6, kind: input, shape index: {}]
  %s7 = inlined_call_operand.vmem [shape: f32[2,4,64], index: 7, kind: input, shape index: {}]
  %s8 = inlined_call_operand.vmem [shape: f32[2,4,64], index: 8, kind: output, shape index: {}]
  %s9 = sld [smem:[#allocation0]]
  $region65: #{style_decoder_forward.11} parent=0
    _
  %s11 = ssub.s32 1, %s9
  %s12 = scalar_select 0, %s11, %s9
  loop: start=0, step=1, limit=4
  $region2: #{style_decoder_forward.11} parent=0 // loop_pre_header
    _
  $region3: #{style_decoder_forward.11} parent=0 // loop_header
    %s14 = sphi 0, %s18
    %p15 = scmp.ge.s32.totalorder %s14, 4
    %s24 = sphi 0, %s26
    %s27 = sphi 0, %s24
    %s28 = sphi 0, %s27
    %s44 = sphi 0, %s28
    %s48 = sphi 0, %s48
    %s50 = sphi 0, %s48
    %s51 = sphi 0, %s50
    %s65 = sphi 0, %s51
    %s69 = sphi 0, %s69
    %s71 = sphi 0, %s69
    %s72 = sphi 0, %s71
    %s86 = sphi 0, %s72
    %s92 = sphi 0, %s94
    %s95 = sphi 0, %s92
    %s96 = sphi 0, %s95
    %s112 = sphi 0, %s96
    %s116 = sphi 0, %s116
    %s118 = sphi 0, %s116
    %s119 = sphi 0, %s118
    %s133 = sphi 0, %s119
    %s137 = sphi 0, %s137
    %s139 = sphi 0, %s137
    %s140 = sphi 0, %s139
    %s154 = sphi 0, %s140
    %s160 = sphi 0, %s162
    %s163 = sphi 0, %s160
    %s164 = sphi 0, %s163
    %s180 = sphi 0, %s164
    %s186 = sphi 0, %s188
    %s189 = sphi 0, %s186
    %s190 = sphi 0, %s189
    %s206 = sphi 0, %s190
    %s212 = sphi 0, %s214
    %s215 = sphi 0, %s212
    %s216 = sphi 0, %s215
    %s232 = sphi 0, %s216
  $region4: #{style_decoder_forward.11} parent=0 // loop_header_branch
    %17 = sbr.rel (%p15) target = $region8
  $region5: #{style_decoder_forward.11} parent=0 // loop_body
    %s19 = ssub.s32 %s14, 1
    %s20 = ssub.s32 %s14, 2
    %s21 = sadd.s32 %s14, 1
    %s22 = ssub.s32 %s14, %s21
    %p23 = scmp.eq.s32.totalorder %s22, 0
    %s25 = sadd.s32 %s24, 1
    %s26 = scalar_select %p23, %s24, %s25
    %p29 = pneg %p23
    %p30 = scmp.eq.s32.totalorder %s14, 1
    %p31 = por %p29, %p30
    %p32 = scmp.ne.s32.totalorder %s24, %s27
    %p33 = scmp.eq.s32.totalorder %s14, 0
    %p34 = por %p32, %p33
    %p35 = scmp.ne.s32.totalorder %s24, %s27
    %p36 = scmp.eq.s32.totalorder %s19, 1
    %p37 = por %p35, %p36
    %p38 = scmp.ne.s32.totalorder %s27, %s28
    %p39 = scmp.eq.s32.totalorder %s19, 0
    %p40 = por %p38, %p39
    %p41 = scmp.ne.s32.totalorder %s27, %s28
    %p42 = scmp.eq.s32.totalorder %s20, 1
    %p43 = por %p41, %p42
    %p45 = scmp.ne.s32.totalorder %s28, %s44
    %p46 = scmp.eq.s32.totalorder %s20, 0
    %p47 = por %p45, %p46
    %s49 = sadd.s32 %s48, 1
    %p52 = scmp.eq.s32.totalorder %s14, 1
    %p53 = scmp.ne.s32.totalorder %s48, %s50
    %p54 = scmp.eq.s32.totalorder %s14, 0
    %p55 = por %p53, %p54
    %p56 = scmp.ne.s32.totalorder %s48, %s50
    %p57 = scmp.eq.s32.totalorder %s19, 1
    %p58 = por %p56, %p57
    %p59 = scmp.ne.s32.totalorder %s50, %s51
    %p60 = scmp.eq.s32.totalorder %s19, 0
    %p61 = por %p59, %p60
    %p62 = scmp.ne.s32.totalorder %s50, %s51
    %p63 = scmp.eq.s32.totalorder %s20, 1
    %p64 = por %p62, %p63
    %p66 = scmp.ne.s32.totalorder %s51, %s65
    %p67 = scmp.eq.s32.totalorder %s20, 0
    %p68 = por %p66, %p67
    %s70 = sadd.s32 %s69, 1
    %p73 = scmp.eq.s32.totalorder %s14, 1
    %p74 = scmp.ne.s32.totalorder %s69, %s71
    %p75 = scmp.eq.s32.totalorder %s14, 0
    %p76 = por %p74, %p75
    %p77 = scmp.ne.s32.totalorder %s69, %s71
    %p78 = scmp.eq.s32.totalorder %s19, 1
    %p79 = por %p77, %p78
    %p80 = scmp.ne.s32.totalorder %s71, %s72
    %p81 = scmp.eq.s32.totalorder %s19, 0
    %p82 = por %p80, %p81
    %p83 = scmp.ne.s32.totalorder %s71, %s72
    %p84 = scmp.eq.s32.totalorder %s20, 1
    %p85 = por %p83, %p84
    %p87 = scmp.ne.s32.totalorder %s72, %s86
    %p88 = scmp.eq.s32.totalorder %s20, 0
    %p89 = por %p87, %p88
    %s90 = ssub.s32 %s14, %s21
    %p91 = scmp.eq.s32.totalorder %s90, 0
    %s93 = sadd.s32 %s92, 1
    %s94 = scalar_select %p91, %s92, %s93
    %p97 = pneg %p91
    %p98 = scmp.eq.s32.totalorder %s14, 1
    %p99 = por %p97, %p98
    %p100 = scmp.ne.s32.totalorder %s92, %s95
    %p101 = scmp.eq.s32.totalorder %s14, 0
    %p102 = por %p100, %p101
    %p103 = scmp.ne.s32.totalorder %s92, %s95
    %p104 = scmp.eq.s32.totalorder %s19, 1
    %p105 = por %p103, %p104
    %p106 = scmp.ne.s32.totalorder %s95, %s96
    %p107 = scmp.eq.s32.totalorder %s19, 0
    %p108 = por %p106, %p107
    %p109 = scmp.ne.s32.totalorder %s95, %s96
    %p110 = scmp.eq.s32.totalorder %s20, 1
    %p111 = por %p109, %p110
    %p113 = scmp.ne.s32.totalorder %s96, %s112
    %p114 = scmp.eq.s32.totalorder %s20, 0
    %p115 = por %p113, %p114
    %s117 = sadd.s32 %s116, 1
    %p120 = scmp.eq.s32.totalorder %s14, 1
    %p121 = scmp.ne.s32.totalorder %s116, %s118
    %p122 = scmp.eq.s32.totalorder %s14, 0
    %p123 = por %p121, %p122
    %p124 = scmp.ne.s32.totalorder %s116, %s118
    %p125 = scmp.eq.s32.totalorder %s19, 1
    %p126 = por %p124, %p125
    %p127 = scmp.ne.s32.totalorder %s118, %s119
    %p128 = scmp.eq.s32.totalorder %s19, 0
    %p129 = por %p127, %p128
    %p130 = scmp.ne.s32.totalorder %s118, %s119
    %p131 = scmp.eq.s32.totalorder %s20, 1
    %p132 = por %p130, %p131
    %p134 = scmp.ne.s32.totalorder %s119, %s133
    %p135 = scmp.eq.s32.totalorder %s20, 0
    %p136 = por %p134, %p135
    %s138 = sadd.s32 %s137, 1
    %p141 = scmp.eq.s32.totalorder %s14, 1
    %p142 = scmp.ne.s32.totalorder %s137, %s139
    %p143 = scmp.eq.s32.totalorder %s14, 0
    %p144 = por %p142, %p143
    %p145 = scmp.ne.s32.totalorder %s137, %s139
    %p146 = scmp.eq.s32.totalorder %s19, 1
    %p147 = por %p145, %p146
    %p148 = scmp.ne.s32.totalorder %s139, %s140
    %p149 = scmp.eq.s32.totalorder %s19, 0
    %p150 = por %p148, %p149
    %p151 = scmp.ne.s32.totalorder %s139, %s140
    %p152 = scmp.eq.s32.totalorder %s20, 1
    %p153 = por %p151, %p152
    %p155 = scmp.ne.s32.totalorder %s140, %s154
    %p156 = scmp.eq.s32.totalorder %s20, 0
    %p157 = por %p155, %p156
    %s158 = ssub.s32 %s14, %s21
    %p159 = scmp.eq.s32.totalorder %s158, 0
    %s161 = sadd.s32 %s160, 1
    %s162 = scalar_select %p159, %s160, %s161
    %p165 = pneg %p159
    %p166 = scmp.eq.s32.totalorder %s14, 1
    %p167 = por %p165, %p166
    %p168 = scmp.ne.s32.totalorder %s160, %s163
    %p169 = scmp.eq.s32.totalorder %s14, 0
    %p170 = por %p168, %p169
    %p171 = scmp.ne.s32.totalorder %s160, %s163
    %p172 = scmp.eq.s32.totalorder %s19, 1
    %p173 = por %p171, %p172
    %p174 = scmp.ne.s32.totalorder %s163, %s164
    %p175 = scmp.eq.s32.totalorder %s19, 0
    %p176 = por %p174, %p175
    %p177 = scmp.ne.s32.totalorder %s163, %s164
    %p178 = scmp.eq.s32.totalorder %s20, 1
    %p179 = por %p177, %p178
    %p181 = scmp.ne.s32.totalorder %s164, %s180
    %p182 = scmp.eq.s32.totalorder %s20, 0
    %p183 = por %p181, %p182
    %s184 = ssub.s32 %s14, %s21
    %p185 = scmp.eq.s32.totalorder %s184, 0
    %s187 = sadd.s32 %s186, 1
    %s188 = scalar_select %p185, %s186, %s187
    %p191 = pneg %p185
    %p192 = scmp.eq.s32.totalorder %s14, 1
    %p193 = por %p191, %p192
    %p194 = scmp.ne.s32.totalorder %s186, %s189
    %p195 = scmp.eq.s32.totalorder %s14, 0
    %p196 = por %p194, %p195
    %p197 = scmp.ne.s32.totalorder %s186, %s189
    %p198 = scmp.eq.s32.totalorder %s19, 1
    %p199 = por %p197, %p198
    %p200 = scmp.ne.s32.totalorder %s189, %s190
    %p201 = scmp.eq.s32.totalorder %s19, 0
    %p202 = por %p200, %p201
    %p203 = scmp.ne.s32.totalorder %s189, %s190
    %p204 = scmp.eq.s32.totalorder %s20, 1
    %p205 = por %p203, %p204
    %p207 = scmp.ne.s32.totalorder %s190, %s206
    %p208 = scmp.eq.s32.totalorder %s20, 0
    %p209 = por %p207, %p208
    %s210 = ssub.s32 %s14, %s21
    %p211 = scmp.eq.s32.totalorder %s210, 0
    %s213 = sadd.s32 %s212, 1
    %s214 = scalar_select %p211, %s212, %s213
    %p217 = pneg %p211
    %p218 = scmp.eq.s32.totalorder %s14, 1
    %p219 = por %p217, %p218
    %p220 = scmp.ne.s32.totalorder %s212, %s215
    %p221 = scmp.eq.s32.totalorder %s14, 0
    %p222 = por %p220, %p221
    %p223 = scmp.ne.s32.totalorder %s212, %s215
    %p224 = scmp.eq.s32.totalorder %s19, 1
    %p225 = por %p223, %p224
    %p226 = scmp.ne.s32.totalorder %s215, %s216
    %p227 = scmp.eq.s32.totalorder %s19, 0
    %p228 = por %p226, %p227
    %p229 = scmp.ne.s32.totalorder %s215, %s216
    %p230 = scmp.eq.s32.totalorder %s20, 1
    %p231 = por %p229, %p230
    %p233 = scmp.ne.s32.totalorder %s216, %s232
    %p234 = scmp.eq.s32.totalorder %s20, 0
    %p235 = por %p233, %p234
    %p236 = scmp.le.s32.totalorder 1, %s14
    %p237 = scmp.lt.s32.totalorder %s14, 3
    %p238 = pnand %p236, %p237
    %p239 = pneg %p238
    // Predicated region
    $region9: #{style_decoder_forward.11} parent=5 // pred_check
      _
    $region10: #{style_decoder_forward.11} parent=5 // pred_check_branch
      %241 = sbr.rel (%p238) target = $region12
    $region11: #{style_decoder_forward.11} parent=5 // pred_region
      %s242 = ssub.s32 %s14, 1
      // Predicated region
      $region13: #{style_decoder_forward.11} parent=11 // pred_check
        %p243 = pneg %p61
      $region14: #{style_decoder_forward.11} parent=11 // pred_check_branch
        %245 = sbr.rel (%p243) target = $region16
      $region15: #{style_decoder_forward.11} parent=11 // pred_region
        _
      $region16: #{style_decoder_forward.11} parent=11 // pred_fallthru
        _
      // Predicated region
      $region17: #{style_decoder_forward.11} parent=11 // pred_check
        %p246 = pneg %p82
      $region18: #{style_decoder_forward.11} parent=11 // pred_check_branch
        %248 = sbr.rel (%p246) target = $region20
      $region19: #{style_decoder_forward.11} parent=11 // pred_region
        _
      $region20: #{style_decoder_forward.11} parent=11 // pred_fallthru
        _
      // Predicated region
      $region21: #{style_decoder_forward.11} parent=11 // pred_check
        %p249 = pneg %p129
      $region22: #{style_decoder_forward.11} parent=11 // pred_check_branch
        %251 = sbr.rel (%p249) target = $region24
      $region23: #{style_decoder_forward.11} parent=11 // pred_region
        _
      $region24: #{style_decoder_forward.11} parent=11 // pred_fallthru
        _
      // Predicated region
      $region25: #{style_decoder_forward.11} parent=11 // pred_check
        %p252 = pneg %p150
      $region26: #{style_decoder_forward.11} parent=11 // pred_check_branch
        %254 = sbr.rel (%p252) target = $region28
      $region27: #{style_decoder_forward.11} parent=11 // pred_region
        _
      $region28: #{style_decoder_forward.11} parent=11 // pred_fallthru
        _
    $region12: #{style_decoder_forward.11} parent=5 // pred_fallthru
      _
    %p255 = scmp.lt.s32.totalorder %s14, 2
    // Predicated region
    $region29: #{style_decoder_forward.11} parent=5 // pred_check
      %p256 = pneg %p255
    $region30: #{style_decoder_forward.11} parent=5 // pred_check_branch
      %258 = sbr.rel (%p256) target = $region32
    $region31: #{style_decoder_forward.11} parent=5 // pred_region
      // Predicated region
      $region33: #{style_decoder_forward.11} parent=31 // pred_check
        %p259 = pneg %p34
      $region34: #{style_decoder_forward.11} parent=31 // pred_check_branch
        %261 = sbr.rel (%p259) target = $region36
      $region35: #{style_decoder_forward.11} parent=31 // pred_region
        %p262 = scmp.lt.s32.totalorder %s14, 1
        %s263 = scalar_select %p262, %s14, 1
        %s264 = smul.addr %s263, 9
        %s265 = smul.addr %s264, 8
        %s266 = scalar_lea.vmem %s0, %s265
      $region36: #{style_decoder_forward.11} parent=31 // pred_fallthru
        _
      // Predicated region
      $region37: #{style_decoder_forward.11} parent=31 // pred_check
        %p267 = pneg %p102
      $region38: #{style_decoder_forward.11} parent=31 // pred_check_branch
        %269 = sbr.rel (%p267) target = $region40
      $region39: #{style_decoder_forward.11} parent=31 // pred_region
        %p270 = scmp.lt.s32.totalorder %s14, 1
        %s271 = scalar_select %p270, %s14, 1
        %s272 = smul.addr %s271, 4
        %s273 = scalar_lea.vmem %s3, %s272
      $region40: #{style_decoder_forward.11} parent=31 // pred_fallthru
        _
      // Predicated region
      $region41: #{style_decoder_forward.11} parent=31 // pred_check
        %p274 = pneg %p170
      $region42: #{style_decoder_forward.11} parent=31 // pred_check_branch
        %276 = sbr.rel (%p274) target = $region44
      $region43: #{style_decoder_forward.11} parent=31 // pred_region
        %p277 = scmp.lt.s32.totalorder %s14, 1
        %s278 = scalar_select %p277, %s14, 1
        %s279 = smul.addr %s278, 4
        %s280 = scalar_lea.vmem %s6, %s279
      $region44: #{style_decoder_forward.11} parent=31 // pred_fallthru
        _
      // Predicated region
      $region45: #{style_decoder_forward.11} parent=31 // pred_check
        %p281 = pneg %p196
      $region46: #{style_decoder_forward.11} parent=31 // pred_check_branch
        %283 = sbr.rel (%p281) target = $region48
      $region47: #{style_decoder_forward.11} parent=31 // pred_region
        %p284 = scmp.lt.s32.totalorder %s14, 1
        %s285 = scalar_select %p284, %s14, 1
        %s286 = smul.addr %s285, 4
        %s287 = scalar_lea.vmem %s7, %s286
      $region48: #{style_decoder_forward.11} parent=31 // pred_fallthru
        _
    $region32: #{style_decoder_forward.11} parent=5 // pred_fallthru
      _
    %p288 = scmp.le.s32.totalorder 1, %s14
    %p289 = scmp.lt.s32.totalorder %s14, 3
    %p290 = pnand %p288, %p289
    %p291 = pneg %p290
    // Predicated region
    $region49: #{style_decoder_forward.11} parent=5 // pred_check
      _
    $region50: #{style_decoder_forward.11} parent=5 // pred_check_branch
      %293 = sbr.rel (%p290) target = $region52
    $region51: #{style_decoder_forward.11} parent=5 // pred_region
      %s294 = ssub.s32 %s14, 1
      %p295 = scmp.lt.s32.totalorder %s19, 1
      %s296 = scalar_select %p295, %s19, 1
      %s297 = smul.addr %s296, 9
      %s298 = smul.addr %s297, 8
      %s299 = scalar_lea.vmem %s0, %s298
      %p300 = pneg %p40
      %p301 = pneg %p37
      %p302 = pneg %p61
      %p303 = pneg %p58
      %p304 = pneg %p82
      %p305 = pneg %p79
      %p306 = scmp.lt.s32.totalorder %s19, 1
      %s307 = scalar_select %p306, %s19, 1
      %s308 = smul.addr %s307, 4
      %s309 = scalar_lea.vmem %s3, %s308
      %p310 = pneg %p108
      %p311 = pneg %p105
      %p312 = pneg %p129
      %p313 = pneg %p126
      %p314 = pneg %p150
      %p315 = pneg %p147
      %p316 = scmp.lt.s32.totalorder %s19, 1
      %s317 = scalar_select %p316, %s19, 1
      %s318 = smul.addr %s317, 4
      %s319 = scalar_lea.vmem %s6, %s318
      %p320 = pneg %p176
      %p321 = pneg %p173
      %p322 = scmp.lt.s32.totalorder %s19, 1
      %s323 = scalar_select %p322, %s19, 1
      %s324 = smul.addr %s323, 4
      %s325 = scalar_lea.vmem %s7, %s324
      %p326 = pneg %p202
      %p327 = pneg %p199
      %p328 = pneg %p228
      %p329 = pneg %p225
      %p330 = scmp.lt.s32.totalorder %s19, 1
      %s331 = scalar_select %p330, %s19, 1
      %s332 = smul.addr %s331, 4
      %s333 = scalar_lea.vmem %s8, %s332
      %p334 = scmp.lt.s32.totalorder %s19, 1
      %s335 = scalar_select %p334, %s19, 1
      %s336 = smul.addr %s335, 9
      %s337 = smul.addr %s336, 8
      %s338 = scalar_lea.vmem %s0, %s337
      %p339 = scmp.lt.s32.totalorder %s19, 1
      %s340 = scalar_select %p339, %s19, 1
      %s341 = smul.addr %s340, 4
      %s342 = scalar_lea.vmem %s3, %s341
      %p343 = scmp.lt.s32.totalorder %s19, 1
      %s344 = scalar_select %p343, %s19, 1
      %s345 = smul.addr %s344, 4
      %s346 = scalar_lea.vmem %s6, %s345
      %p347 = scmp.lt.s32.totalorder %s19, 1
      %s348 = scalar_select %p347, %s19, 1
      %s349 = smul.addr %s348, 4
      %s350 = scalar_lea.vmem %s7, %s349
      %p351 = scmp.lt.s32.totalorder %s19, 1
      %s352 = scalar_select %p351, %s19, 1
      %s353 = smul.addr %s352, 4
      %s354 = scalar_lea.vmem %s8, %s353
      %v355 = vld [vmem:[%s1] sm:$0xf]
      %v356 = vld [vmem:[%s338] sm:$0xff]
      %v357 = vld [vmem:[%s338 + $0x8] sm:$0xff]
      %v358 = vld [vmem:[%s338 + $0x10] sm:$0xff]
      %v359 = vld [vmem:[%s338 + $0x18] sm:$0xff]
      %v360 = vld [vmem:[%s338 + $0x20] sm:$0xff]
      %v361 = vld [vmem:[%s338 + $0x28] sm:$0xff]
      %v362 = vld [vmem:[%s338 + $0x30] sm:$0xff]
      %v363 = vld [vmem:[%s338 + $0x38] sm:$0xff]
      %v364 = vld [vmem:[%s338 + $0x40] sm:$0xff]
      %v365 = vld [vmem:[%s2] sm:$0xf]
      %367 = vset.pattern.permute.xlu0 0
      %368 = vperm.xlu0 %367, %v365
      %v369 = vpop.permute.xlu0 %368
      %vm371 = vcmask 588800
      %v373 = vsel %vm371, %v355, 0
      %375 = vmatprep.subr.mxu0 0.0
      %376 = vmatpush1.msra.mxu0 %v356
      %377 = vmatprep.subr.mxu0 0.0
      %378 = vmatpush1.msra.mxu0 %v357
      %379 = vmatprep.subr.mxu0 0.0
      %380 = vmatpush1.msra.mxu0 %v358
      %381 = vmatprep.subr.mxu0 0.0
      %382 = vmatpush1.msra.mxu0 %v359
      %383 = vmatprep.subr.mxu0 0.0
      %384 = vmatpush1.msra.mxu0 %v360
      %385 = vmatprep.subr.mxu0 0.0
      %386 = vmatpush1.msra.mxu0 %v361
      %387 = vmatprep.subr.mxu0 0.0
      %388 = vmatpush1.msra.mxu0 %v362
      %389 = vmatprep.subr.mxu0 0.0
      %390 = vmatpush1.msra.mxu0 %v363
      %391 = vmatprep.subr.mxu0 0.0
      %392 = vmatpush1.msra.mxu0 %v364
      %393 = vmatprep.subr.mxu0 0.0
      %394 = vmatpush1.msra.mxu0 0.0
      %395 = vmatprep.subr.mxu0 0.0
      %396 = vmatpush1.msra.mxu0 0.0
      %397 = vmatprep.subr.mxu0 0.0
      %398 = vmatpush1.msra.mxu0 0.0
      %399 = vmatprep.subr.mxu0 0.0
      %400 = vmatpush1.msra.mxu0 0.0
      %401 = vmatprep.subr.mxu0 0.0
      %402 = vmatpush1.msra.mxu0 0.0
      %403 = vmatprep.subr.mxu0 0.0
      %404 = vmatpush1.msra.mxu0 0.0
      %405 = vmatprep.subr.mxu0 0.0
      %406 = vmatpush1.msra.mxu0 0.0
      %407 = vmatprep.subr.mxu0 0.0
      %408 = vmatpush1.msra.mxu0 0.0
      %409 = vmatprep.subr.mxu0 0.0
      %410 = vmatpush1.msra.mxu0 0.0
      %411 = vmatprep.subr.mxu0 0.0
      %412 = vmatpush1.msra.mxu0 0.0
      %413 = vmatprep.subr.mxu0 0.0
      %414 = vmatpush1.msra.mxu0 0.0
      %415 = vmatprep.subr.mxu0 0.0
      %416 = vmatpush1.msra.mxu0 0.0
      %417 = vmatprep.subr.mxu0 0.0
      %418 = vmatpush1.msra.mxu0 0.0
      %419 = vmatprep.subr.mxu0 0.0
      %420 = vmatpush1.msra.mxu0 0.0
      %421 = vmatprep.subr.mxu0 0.0
      %422 = vmatpush1.msra.mxu0 0.0
      %423 = vmatprep.subr.mxu0 0.0
      %424 = vmatpush1.msra.mxu0 0.0
      %425 = vmatprep.subr.mxu0 0.0
      %426 = vmatpush1.msra.mxu0 0.0
      %427 = vmatprep.subr.mxu0 0.0
      %428 = vmatpush1.msra.mxu0 0.0
      %429 = vmatprep.subr.mxu0 0.0
      %430 = vmatpush1.msra.mxu0 0.0
      %431 = vmatprep.subr.mxu0 0.0
      %432 = vmatpush1.msra.mxu0 0.0
      %433 = vmatprep.subr.mxu0 0.0
      %434 = vmatpush1.msra.mxu0 0.0
      %435 = vmatprep.subr.mxu0 0.0
      %436 = vmatpush1.msra.mxu0 0.0
      %437 = vmatprep.subr.mxu0 0.0
      %438 = vmatpush1.msra.mxu0 0.0
      %439 = vmatprep.mubr.f32.mxu0 0.0
      %440 = vmatmul.mubr.f32.gmra.mrb[0].mxu0 %v373
      %v441 = vpop.f32.mrb[0].mxu0
      %v442 = vadd.f32 %v369, %v441
      %v443 = vpop.f32.mrb[0].mxu0
      %444 = vdwg.mxu0
      %v445 = vmax.f32 %v442, 0.0
      %v446 = vld [vmem:[%s4] sm:$0xf]
      %v447 = vld [vmem:[%s342] sm:$0xf]
      %vm448 = vcmask 31744
      %v450 = vsel %vm448, %v446, 0
      %vm452 = vcmask 1043456
      %v454 = vsel %vm452, %v447, 0
      %456 = vmatprep.subr.mxu0 0.0
      %457 = vmatpush1.msra.mxu0 %v454
      %458 = vmatprep.subr.mxu0 0.0
      %459 = vmatpush1.msra.mxu0 0.0
      %460 = vmatprep.subr.mxu0 0.0
      %461 = vmatpush1.msra.mxu0 0.0
      %462 = vmatprep.subr.mxu0 0.0
      %463 = vmatpush1.msra.mxu0 0.0
      %464 = vmatprep.subr.mxu0 0.0
      %465 = vmatpush1.msra.mxu0 0.0
      %466 = vmatprep.subr.mxu0 0.0
      %467 = vmatpush1.msra.mxu0 0.0
      %468 = vmatprep.subr.mxu0 0.0
      %469 = vmatpush1.msra.mxu0 0.0
      %470 = vmatprep.subr.mxu0 0.0
      %471 = vmatpush1.msra.mxu0 0.0
      %472 = vmatprep.subr.mxu0 0.0
      %473 = vmatpush1.msra.mxu0 0.0
      %474 = vmatprep.subr.mxu0 0.0
      %475 = vmatpush1.msra.mxu0 0.0
      %476 = vmatprep.subr.mxu0 0.0
      %477 = vmatpush1.msra.mxu0 0.0
      %478 = vmatprep.subr.mxu0 0.0
      %479 = vmatpush1.msra.mxu0 0.0
      %480 = vmatprep.subr.mxu0 0.0
      %481 = vmatpush1.msra.mxu0 0.0
      %482 = vmatprep.subr.mxu0 0.0
      %483 = vmatpush1.msra.mxu0 0.0
      %484 = vmatprep.subr.mxu0 0.0
      %485 = vmatpush1.msra.mxu0 0.0
      %486 = vmatprep.subr.mxu0 0.0
      %487 = vmatpush1.msra.mxu0 0.0
      %488 = vmatprep.subr.mxu0 0.0
      %489 = vmatpush1.msra.mxu0 0.0
      %490 = vmatprep.subr.mxu0 0.0
      %491 = vmatpush1.msra.mxu0 0.0
      %492 = vmatprep.subr.mxu0 0.0
      %493 = vmatpush1.msra.mxu0 0.0
      %494 = vmatprep.subr.mxu0 0.0
      %495 = vmatpush1.msra.mxu0 0.0
      %496 = vmatprep.subr.mxu0 0.0
      %497 = vmatpush1.msra.mxu0 0.0
      %498 = vmatprep.subr.mxu0 0.0
      %499 = vmatpush1.msra.mxu0 0.0
      %500 = vmatprep.subr.mxu0 0.0
      %501 = vmatpush1.msra.mxu0 0.0
      %502 = vmatprep.subr.mxu0 0.0
      %503 = vmatpush1.msra.mxu0 0.0
      %504 = vmatprep.subr.mxu0 0.0
      %505 = vmatpush1.msra.mxu0 0.0
      %506 = vmatprep.subr.mxu0 0.0
      %507 = vmatpush1.msra.mxu0 0.0
      %508 = vmatprep.subr.mxu0 0.0
      %509 = vmatpush1.msra.mxu0 0.0
      %510 = vmatprep.subr.mxu0 0.0
      %511 = vmatpush1.msra.mxu0 0.0
      %512 = vmatprep.subr.mxu0 0.0
      %513 = vmatpush1.msra.mxu0 0.0
      %514 = vmatprep.subr.mxu0 0.0
      %515 = vmatpush1.msra.mxu0 0.0
      %516 = vmatprep.subr.mxu0 0.0
      %517 = vmatpush1.msra.mxu0 0.0
      %518 = vmatprep.subr.mxu0 0.0
      %519 = vmatpush1.msra.mxu0 0.0
      %520 = vmatprep.mubr.f32.mxu0 0.0
      %521 = vmatmul.mubr.f32.gmra.mrb[0].mxu0 %v450
      %v522 = vpop.f32.mrb[0].mxu0
      %v523 = vadd.f32 0.0, %v522
      %v524 = vpop.f32.mrb[0].mxu0
      %525 = vdwg.mxu0
      %v526 = vadd.f32 %v445, %v523
      %v527 = vld [vmem:[%s5] sm:$0xf]
      %529 = vset.pattern.permute.xlu0 0
      %530 = vperm.xlu0 %529, %v527
      %v531 = vpop.permute.xlu0 %530
      %v533 = vadd.f32 %v526, %v531
      %v534 = vld [vmem:[%s346] sm:$0xf]
      %v535 = vld [vmem:[%s350] sm:$0xf]
      %vm536 = vcmask 519168
      %v537 = vsel %vm536, %v533, 0.0
      %538 = vadd.xlane.f32.xlu0 %v537
      %v539 = vpop.xlane.xlu0 %538
      %v540 = vrcp.pop 64.0
      %v541 = vmul.f32 %v539, %v540
      %v542 = vsub.f32 %v533, %v541
      %v543 = vmul.f32 %v542, %v542
      %v544 = vsel %vm536, %v543, 0.0
      %545 = vadd.xlane.f32.xlu0 %v544
      %v546 = vpop.xlane.xlu0 %545
      %v547 = vmul.f32 %v546, %v540
      %v548 = vadd.f32 %v547, 1e-05
      %v549 = vrsqrt.pop %v548
      %v550 = vmul.f32 %v542, %v549
      %v551 = vmul.f32 %v534, %v550
      %v552 = vadd.f32 %v551, %v535
      %553 = vst.msk [vmem:[%s354] sm:$0xf] %vm536, %v552
      %p554 = scmp.lt.s32.totalorder %s19, 1
      %s555 = scalar_select %p554, %s19, 1
      %s556 = smul.addr %s555, 4
      %s557 = scalar_lea.vmem %s8, %s556
      // Predicated region
      $region53: #{style_decoder_forward.11} parent=51 // pred_check
        %p558 = pneg %p225
      $region54: #{style_decoder_forward.11} parent=51 // pred_check_branch
        %560 = sbr.rel (%p558) target = $region56
      $region55: #{style_decoder_forward.11} parent=51 // pred_region
        _
      $region56: #{style_decoder_forward.11} parent=51 // pred_fallthru
        _
    $region52: #{style_decoder_forward.11} parent=5 // pred_fallthru
      _
    %p561 = scmp.le.s32.totalorder 2, %s14
    // Predicated region
    $region57: #{style_decoder_forward.11} parent=5 // pred_check
      %p562 = pneg %p561
    $region58: #{style_decoder_forward.11} parent=5 // pred_check_branch
      %564 = sbr.rel (%p562) target = $region60
    $region59: #{style_decoder_forward.11} parent=5 // pred_region
      %s565 = ssub.s32 %s14, 2
      // Predicated region
      $region61: #{style_decoder_forward.11} parent=59 // pred_check
        %p566 = pneg %p231
      $region62: #{style_decoder_forward.11} parent=59 // pred_check_branch
        %568 = sbr.rel (%p566) target = $region64
      $region63: #{style_decoder_forward.11} parent=59 // pred_region
        %p569 = scmp.lt.s32.totalorder %s20, 1
        %s570 = scalar_select %p569, %s20, 1
        %s571 = smul.addr %s570, 4
        %s572 = scalar_lea.vmem %s8, %s571
      $region64: #{style_decoder_forward.11} parent=59 // pred_fallthru
        _
    $region60: #{style_decoder_forward.11} parent=5 // pred_fallthru
      _
  $region6: #{style_decoder_forward.11} parent=0 // loop_footer
    %s18 = sadd.s32 1, %s14
  $region7: #{style_decoder_forward.11} parent=0 // loop_footer_branch
    %13 = sbr.rel target = $region3
  $region8: #{style_decoder_forward.11} parent=0 // loop_exit
    _

// kernel: style_decoder_forward.12
$region0: #{style_decoder_forward.12}
  #allocation0 [shape = 'u32[]', space=smem, size = 0x4, offset = 0x4, fixed_abs, tag = 'smem constant byte address 0x4 - core index']
  #allocation1 [shape = 'u32[144,128]{1,0:T(1,128)}', space=vmem, size = 0x12000, scoped, tag = 'internal scratch']
  %s0 = inlined_call_operand.vmem [shape: f32[2,36,256], index: 0, kind: input, shape index: {}]
  %s1 = inlined_call_operand.vmem [shape: f32[4,36], index: 1, kind: input, shape index: {}]
  %s2 = inlined_call_operand.vmem [shape: f32[4,1], index: 2, kind: input, shape index: {}]
  %s3 = inlined_call_operand.vmem [shape: f32[2,4,256], index: 3, kind: input, shape index: {}]
  %s4 = inlined_call_operand.vmem [shape: f32[4,4], index: 4, kind: input, shape index: {}]
  %s5 = inlined_call_operand.vmem [shape: f32[4,1], index: 5, kind: input, shape index: {}]
  %s6 = inlined_call_operand.vmem [shape: f32[2,4,256], index: 6, kind: input, shape index: {}]
  %s7 = inlined_call_operand.vmem [shape: f32[2,4,256], index: 7, kind: input, shape index: {}]
  %s8 = inlined_call_operand.vmem [shape: f32[2,4,256], index: 8, kind: output, shape index: {}]
  %s9 = sld [smem:[#allocation0]]
  $region65: #{style_decoder_forward.12} parent=0
    _
  %s11 = ssub.s32 1, %s9
  %s12 = scalar_select 0, %s11, %s9
  loop: start=0, step=1, limit=4
  $region2: #{style_decoder_forward.12} parent=0 // loop_pre_header
    _
  $region3: #{style_decoder_forward.12} parent=0 // loop_header
    %s14 = sphi 0, %s18
    %p15 = scmp.ge.s32.totalorder %s14, 4
    %s24 = sphi 0, %s26
    %s27 = sphi 0, %s24
    %s28 = sphi 0, %s27
    %s44 = sphi 0, %s28
    %s48 = sphi 0, %s48
    %s50 = sphi 0, %s48
    %s51 = sphi 0, %s50
    %s65 = sphi 0, %s51
    %s69 = sphi 0, %s69
    %s71 = sphi 0, %s69
    %s72 = sphi 0, %s71
    %s86 = sphi 0, %s72
    %s92 = sphi 0, %s94
    %s95 = sphi 0, %s92
    %s96 = sphi 0, %s95
    %s112 = sphi 0, %s96
    %s116 = sphi 0, %s116
    %s118 = sphi 0, %s116
    %s119 = sphi 0, %s118
    %s133 = sphi 0, %s119
    %s137 = sphi 0, %s137
    %s139 = sphi 0, %s137
    %s140 = sphi 0, %s139
    %s154 = sphi 0, %s140
    %s160 = sphi 0, %s162
    %s163 = sphi 0, %s160
    %s164 = sphi 0, %s163
    %s180 = sphi 0, %s164
    %s186 = sphi 0, %s188
    %s189 = sphi 0, %s186
    %s190 = sphi 0, %s189
    %s206 = sphi 0, %s190
    %s212 = sphi 0, %s214
    %s215 = sphi 0, %s212
    %s216 = sphi 0, %s215
    %s232 = sphi 0, %s216
  $region4: #{style_decoder_forward.12} parent=0 // loop_header_branch
    %17 = sbr.rel (%p15) target = $region8
  $region5: #{style_decoder_forward.12} parent=0 // loop_body
    %s19 = ssub.s32 %s14, 1
    %s20 = ssub.s32 %s14, 2
    %s21 = sadd.s32 %s14, 1
    %s22 = ssub.s32 %s14, %s21
    %p23 = scmp.eq.s32.totalorder %s22, 0
    %s25 = sadd.s32 %s24, 1
    %s26 = scalar_select %p23, %s24, %s25
    %p29 = pneg %p23
    %p30 = scmp.eq.s32.totalorder %s14, 1
    %p31 = por %p29, %p30
    %p32 = scmp.ne.s32.totalorder %s24, %s27
    %p33 = scmp.eq.s32.totalorder %s14, 0
    %p34 = por %p32, %p33
    %p35 = scmp.ne.s32.totalorder %s24, %s27
    %p36 = scmp.eq.s32.totalorder %s19, 1
    %p37 = por %p35, %p36
    %p38 = scmp.ne.s32.totalorder %s27, %s28
    %p39 = scmp.eq.s32.totalorder %s19, 0
    %p40 = por %p38, %p39
    %p41 = scmp.ne.s32.totalorder %s27, %s28
    %p42 = scmp.eq.s32.totalorder %s20, 1
    %p43 = por %p41, %p42
    %p45 = scmp.ne.s32.totalorder %s28, %s44
    %p46 = scmp.eq.s32.totalorder %s20, 0
    %p47 = por %p45, %p46
    %s49 = sadd.s32 %s48, 1
    %p52 = scmp.eq.s32.totalorder %s14, 1
    %p53 = scmp.ne.s32.totalorder %s48, %s50
    %p54 = scmp.eq.s32.totalorder %s14, 0
    %p55 = por %p53, %p54
    %p56 = scmp.ne.s32.totalorder %s48, %s50
    %p57 = scmp.eq.s32.totalorder %s19, 1
    %p58 = por %p56, %p57
    %p59 = scmp.ne.s32.totalorder %s50, %s51
    %p60 = scmp.eq.s32.totalorder %s19, 0
    %p61 = por %p59, %p60
    %p62 = scmp.ne.s32.totalorder %s50, %s51
    %p63 = scmp.eq.s32.totalorder %s20, 1
    %p64 = por %p62, %p63
    %p66 = scmp.ne.s32.totalorder %s51, %s65
    %p67 = scmp.eq.s32.totalorder %s20, 0
    %p68 = por %p66, %p67
    %s70 = sadd.s32 %s69, 1
    %p73 = scmp.eq.s32.totalorder %s14, 1
    %p74 = scmp.ne.s32.totalorder %s69, %s71
    %p75 = scmp.eq.s32.totalorder %s14, 0
    %p76 = por %p74, %p75
    %p77 = scmp.ne.s32.totalorder %s69, %s71
    %p78 = scmp.eq.s32.totalorder %s19, 1
    %p79 = por %p77, %p78
    %p80 = scmp.ne.s32.totalorder %s71, %s72
    %p81 = scmp.eq.s32.totalorder %s19, 0
    %p82 = por %p80, %p81
    %p83 = scmp.ne.s32.totalorder %s71, %s72
    %p84 = scmp.eq.s32.totalorder %s20, 1
    %p85 = por %p83, %p84
    %p87 = scmp.ne.s32.totalorder %s72, %s86
    %p88 = scmp.eq.s32.totalorder %s20, 0
    %p89 = por %p87, %p88
    %s90 = ssub.s32 %s14, %s21
    %p91 = scmp.eq.s32.totalorder %s90, 0
    %s93 = sadd.s32 %s92, 1
    %s94 = scalar_select %p91, %s92, %s93
    %p97 = pneg %p91
    %p98 = scmp.eq.s32.totalorder %s14, 1
    %p99 = por %p97, %p98
    %p100 = scmp.ne.s32.totalorder %s92, %s95
    %p101 = scmp.eq.s32.totalorder %s14, 0
    %p102 = por %p100, %p101
    %p103 = scmp.ne.s32.totalorder %s92, %s95
    %p104 = scmp.eq.s32.totalorder %s19, 1
    %p105 = por %p103, %p104
    %p106 = scmp.ne.s32.totalorder %s95, %s96
    %p107 = scmp.eq.s32.totalorder %s19, 0
    %p108 = por %p106, %p107
    %p109 = scmp.ne.s32.totalorder %s95, %s96
    %p110 = scmp.eq.s32.totalorder %s20, 1
    %p111 = por %p109, %p110
    %p113 = scmp.ne.s32.totalorder %s96, %s112
    %p114 = scmp.eq.s32.totalorder %s20, 0
    %p115 = por %p113, %p114
    %s117 = sadd.s32 %s116, 1
    %p120 = scmp.eq.s32.totalorder %s14, 1
    %p121 = scmp.ne.s32.totalorder %s116, %s118
    %p122 = scmp.eq.s32.totalorder %s14, 0
    %p123 = por %p121, %p122
    %p124 = scmp.ne.s32.totalorder %s116, %s118
    %p125 = scmp.eq.s32.totalorder %s19, 1
    %p126 = por %p124, %p125
    %p127 = scmp.ne.s32.totalorder %s118, %s119
    %p128 = scmp.eq.s32.totalorder %s19, 0
    %p129 = por %p127, %p128
    %p130 = scmp.ne.s32.totalorder %s118, %s119
    %p131 = scmp.eq.s32.totalorder %s20, 1
    %p132 = por %p130, %p131
    %p134 = scmp.ne.s32.totalorder %s119, %s133
    %p135 = scmp.eq.s32.totalorder %s20, 0
    %p136 = por %p134, %p135
    %s138 = sadd.s32 %s137, 1
    %p141 = scmp.eq.s32.totalorder %s14, 1
    %p142 = scmp.ne.s32.totalorder %s137, %s139
    %p143 = scmp.eq.s32.totalorder %s14, 0
    %p144 = por %p142, %p143
    %p145 = scmp.ne.s32.totalorder %s137, %s139
    %p146 = scmp.eq.s32.totalorder %s19, 1
    %p147 = por %p145, %p146
    %p148 = scmp.ne.s32.totalorder %s139, %s140
    %p149 = scmp.eq.s32.totalorder %s19, 0
    %p150 = por %p148, %p149
    %p151 = scmp.ne.s32.totalorder %s139, %s140
    %p152 = scmp.eq.s32.totalorder %s20, 1
    %p153 = por %p151, %p152
    %p155 = scmp.ne.s32.totalorder %s140, %s154
    %p156 = scmp.eq.s32.totalorder %s20, 0
    %p157 = por %p155, %p156
    %s158 = ssub.s32 %s14, %s21
    %p159 = scmp.eq.s32.totalorder %s158, 0
    %s161 = sadd.s32 %s160, 1
    %s162 = scalar_select %p159, %s160, %s161
    %p165 = pneg %p159
    %p166 = scmp.eq.s32.totalorder %s14, 1
    %p167 = por %p165, %p166
    %p168 = scmp.ne.s32.totalorder %s160, %s163
    %p169 = scmp.eq.s32.totalorder %s14, 0
    %p170 = por %p168, %p169
    %p171 = scmp.ne.s32.totalorder %s160, %s163
    %p172 = scmp.eq.s32.totalorder %s19, 1
    %p173 = por %p171, %p172
    %p174 = scmp.ne.s32.totalorder %s163, %s164
    %p175 = scmp.eq.s32.totalorder %s19, 0
    %p176 = por %p174, %p175
    %p177 = scmp.ne.s32.totalorder %s163, %s164
    %p178 = scmp.eq.s32.totalorder %s20, 1
    %p179 = por %p177, %p178
    %p181 = scmp.ne.s32.totalorder %s164, %s180
    %p182 = scmp.eq.s32.totalorder %s20, 0
    %p183 = por %p181, %p182
    %s184 = ssub.s32 %s14, %s21
    %p185 = scmp.eq.s32.totalorder %s184, 0
    %s187 = sadd.s32 %s186, 1
    %s188 = scalar_select %p185, %s186, %s187
    %p191 = pneg %p185
    %p192 = scmp.eq.s32.totalorder %s14, 1
    %p193 = por %p191, %p192
    %p194 = scmp.ne.s32.totalorder %s186, %s189
    %p195 = scmp.eq.s32.totalorder %s14, 0
    %p196 = por %p194, %p195
    %p197 = scmp.ne.s32.totalorder %s186, %s189
    %p198 = scmp.eq.s32.totalorder %s19, 1
    %p199 = por %p197, %p198
    %p200 = scmp.ne.s32.totalorder %s189, %s190
    %p201 = scmp.eq.s32.totalorder %s19, 0
    %p202 = por %p200, %p201
    %p203 = scmp.ne.s32.totalorder %s189, %s190
    %p204 = scmp.eq.s32.totalorder %s20, 1
    %p205 = por %p203, %p204
    %p207 = scmp.ne.s32.totalorder %s190, %s206
    %p208 = scmp.eq.s32.totalorder %s20, 0
    %p209 = por %p207, %p208
    %s210 = ssub.s32 %s14, %s21
    %p211 = scmp.eq.s32.totalorder %s210, 0
    %s213 = sadd.s32 %s212, 1
    %s214 = scalar_select %p211, %s212, %s213
    %p217 = pneg %p211
    %p218 = scmp.eq.s32.totalorder %s14, 1
    %p219 = por %p217, %p218
    %p220 = scmp.ne.s32.totalorder %s212, %s215
    %p221 = scmp.eq.s32.totalorder %s14, 0
    %p222 = por %p220, %p221
    %p223 = scmp.ne.s32.totalorder %s212, %s215
    %p224 = scmp.eq.s32.totalorder %s19, 1
    %p225 = por %p223, %p224
    %p226 = scmp.ne.s32.totalorder %s215, %s216
    %p227 = scmp.eq.s32.totalorder %s19, 0
    %p228 = por %p226, %p227
    %p229 = scmp.ne.s32.totalorder %s215, %s216
    %p230 = scmp.eq.s32.totalorder %s20, 1
    %p231 = por %p229, %p230
    %p233 = scmp.ne.s32.totalorder %s216, %s232
    %p234 = scmp.eq.s32.totalorder %s20, 0
    %p235 = por %p233, %p234
    %p236 = scmp.le.s32.totalorder 1, %s14
    %p237 = scmp.lt.s32.totalorder %s14, 3
    %p238 = pnand %p236, %p237
    %p239 = pneg %p238
    // Predicated region
    $region9: #{style_decoder_forward.12} parent=5 // pred_check
      _
    $region10: #{style_decoder_forward.12} parent=5 // pred_check_branch
      %241 = sbr.rel (%p238) target = $region12
    $region11: #{style_decoder_forward.12} parent=5 // pred_region
      %s242 = ssub.s32 %s14, 1
      // Predicated region
      $region13: #{style_decoder_forward.12} parent=11 // pred_check
        %p243 = pneg %p61
      $region14: #{style_decoder_forward.12} parent=11 // pred_check_branch
        %245 = sbr.rel (%p243) target = $region16
      $region15: #{style_decoder_forward.12} parent=11 // pred_region
        _
      $region16: #{style_decoder_forward.12} parent=11 // pred_fallthru
        _
      // Predicated region
      $region17: #{style_decoder_forward.12} parent=11 // pred_check
        %p246 = pneg %p82
      $region18: #{style_decoder_forward.12} parent=11 // pred_check_branch
        %248 = sbr.rel (%p246) target = $region20
      $region19: #{style_decoder_forward.12} parent=11 // pred_region
        _
      $region20: #{style_decoder_forward.12} parent=11 // pred_fallthru
        _
      // Predicated region
      $region21: #{style_decoder_forward.12} parent=11 // pred_check
        %p249 = pneg %p129
      $region22: #{style_decoder_forward.12} parent=11 // pred_check_branch
        %251 = sbr.rel (%p249) target = $region24
      $region23: #{style_decoder_forward.12} parent=11 // pred_region
        _
      $region24: #{style_decoder_forward.12} parent=11 // pred_fallthru
        _
      // Predicated region
      $region25: #{style_decoder_forward.12} parent=11 // pred_check
        %p252 = pneg %p150
      $region26: #{style_decoder_forward.12} parent=11 // pred_check_branch
        %254 = sbr.rel (%p252) target = $region28
      $region27: #{style_decoder_forward.12} parent=11 // pred_region
        _
      $region28: #{style_decoder_forward.12} parent=11 // pred_fallthru
        _
    $region12: #{style_decoder_forward.12} parent=5 // pred_fallthru
      _
    %p255 = scmp.lt.s32.totalorder %s14, 2
    // Predicated region
    $region29: #{style_decoder_forward.12} parent=5 // pred_check
      %p256 = pneg %p255
    $region30: #{style_decoder_forward.12} parent=5 // pred_check_branch
      %258 = sbr.rel (%p256) target = $region32
    $region31: #{style_decoder_forward.12} parent=5 // pred_region
      // Predicated region
      $region33: #{style_decoder_forward.12} parent=31 // pred_check
        %p259 = pneg %p34
      $region34: #{style_decoder_forward.12} parent=31 // pred_check_branch
        %261 = sbr.rel (%p259) target = $region36
      $region35: #{style_decoder_forward.12} parent=31 // pred_region
        %p262 = scmp.lt.s32.totalorder %s14, 1
        %s263 = scalar_select %p262, %s14, 1
        %s264 = smul.addr %s263, 10
        %s265 = smul.addr %s264, 8
        %s266 = scalar_lea.vmem %s0, %s265
      $region36: #{style_decoder_forward.12} parent=31 // pred_fallthru
        _
      // Predicated region
      $region37: #{style_decoder_forward.12} parent=31 // pred_check
        %p267 = pneg %p102
      $region38: #{style_decoder_forward.12} parent=31 // pred_check_branch
        %269 = sbr.rel (%p267) target = $region40
      $region39: #{style_decoder_forward.12} parent=31 // pred_region
        %p270 = scmp.lt.s32.totalorder %s14, 1
        %s271 = scalar_select %p270, %s14, 1
        %s272 = smul.addr %s271, 2
        %s273 = smul.addr %s272, 4
        %s274 = scalar_lea.vmem %s3, %s273
      $region40: #{style_decoder_forward.12} parent=31 // pred_fallthru
        _
      // Predicated region
      $region41: #{style_decoder_forward.12} parent=31 // pred_check
        %p275 = pneg %p170
      $region42: #{style_decoder_forward.12} parent=31 // pred_check_branch
        %277 = sbr.rel (%p275) target = $region44
      $region43: #{style_decoder_forward.12} parent=31 // pred_region
        %p278 = scmp.lt.s32.totalorder %s14, 1
        %s279 = scalar_select %p278, %s14, 1
        %s280 = smul.addr %s279, 2
        %s281 = smul.addr %s280, 4
        %s282 = scalar_lea.vmem %s6, %s281
      $region44: #{style_decoder_forward.12} parent=31 // pred_fallthru
        _
      // Predicated region
      $region45: #{style_decoder_forward.12} parent=31 // pred_check
        %p283 = pneg %p196
      $region46: #{style_decoder_forward.12} parent=31 // pred_check_branch
        %285 = sbr.rel (%p283) target = $region48
      $region47: #{style_decoder_forward.12} parent=31 // pred_region
        %p286 = scmp.lt.s32.totalorder %s14, 1
        %s287 = scalar_select %p286, %s14, 1
        %s288 = smul.addr %s287, 2
        %s289 = smul.addr %s288, 4
        %s290 = scalar_lea.vmem %s7, %s289
      $region48: #{style_decoder_forward.12} parent=31 // pred_fallthru
        _
    $region32: #{style_decoder_forward.12} parent=5 // pred_fallthru
      _
    %p291 = scmp.le.s32.totalorder 1, %s14
    %p292 = scmp.lt.s32.totalorder %s14, 3
    %p293 = pnand %p291, %p292
    %p294 = pneg %p293
    // Predicated region
    $region49: #{style_decoder_forward.12} parent=5 // pred_check
      _
    $region50: #{style_decoder_forward.12} parent=5 // pred_check_branch
      %296 = sbr.rel (%p293) target = $region52
    $region51: #{style_decoder_forward.12} parent=5 // pred_region
      %s297 = ssub.s32 %s14, 1
      %p298 = scmp.lt.s32.totalorder %s19, 1
      %s299 = scalar_select %p298, %s19, 1
      %s300 = smul.addr %s299, 10
      %s301 = smul.addr %s300, 8
      %s302 = scalar_lea.vmem %s0, %s301
      %p303 = pneg %p40
      %p304 = pneg %p37
      %p305 = pneg %p61
      %p306 = pneg %p58
      %p307 = pneg %p82
      %p308 = pneg %p79
      %p309 = scmp.lt.s32.totalorder %s19, 1
      %s310 = scalar_select %p309, %s19, 1
      %s311 = smul.addr %s310, 2
      %s312 = smul.addr %s311, 4
      %s313 = scalar_lea.vmem %s3, %s312
      %p314 = pneg %p108
      %p315 = pneg %p105
      %p316 = pneg %p129
      %p317 = pneg %p126
      %p318 = pneg %p150
      %p319 = pneg %p147
      %p320 = scmp.lt.s32.totalorder %s19, 1
      %s321 = scalar_select %p320, %s19, 1
      %s322 = smul.addr %s321, 2
      %s323 = smul.addr %s322, 4
      %s324 = scalar_lea.vmem %s6, %s323
      %p325 = pneg %p176
      %p326 = pneg %p173
      %p327 = scmp.lt.s32.totalorder %s19, 1
      %s328 = scalar_select %p327, %s19, 1
      %s329 = smul.addr %s328, 2
      %s330 = smul.addr %s329, 4
      %s331 = scalar_lea.vmem %s7, %s330
      %p332 = pneg %p202
      %p333 = pneg %p199
      %p334 = pneg %p228
      %p335 = pneg %p225
      %p336 = scmp.lt.s32.totalorder %s19, 1
      %s337 = scalar_select %p336, %s19, 1
      %s338 = smul.addr %s337, 2
      %s339 = smul.addr %s338, 4
      %s340 = scalar_lea.vmem %s8, %s339
      %p341 = scmp.lt.s32.totalorder %s19, 1
      %s342 = scalar_select %p341, %s19, 1
      %s343 = smul.addr %s342, 10
      %s344 = smul.addr %s343, 8
      %s345 = scalar_lea.vmem %s0, %s344
      %p346 = scmp.lt.s32.totalorder %s19, 1
      %s347 = scalar_select %p346, %s19, 1
      %s348 = smul.addr %s347, 2
      %s349 = smul.addr %s348, 4
      %s350 = scalar_lea.vmem %s3, %s349
      %p351 = scmp.lt.s32.totalorder %s19, 1
      %s352 = scalar_select %p351, %s19, 1
      %s353 = smul.addr %s352, 2
      %s354 = smul.addr %s353, 4
      %s355 = scalar_lea.vmem %s6, %s354
      %p356 = scmp.lt.s32.totalorder %s19, 1
      %s357 = scalar_select %p356, %s19, 1
      %s358 = smul.addr %s357, 2
      %s359 = smul.addr %s358, 4
      %s360 = scalar_lea.vmem %s7, %s359
      %p361 = scmp.lt.s32.totalorder %s19, 1
      %s362 = scalar_select %p361, %s19, 1
      %s363 = smul.addr %s362, 2
      %s364 = smul.addr %s363, 4
      %s365 = scalar_lea.vmem %s8, %s364
      %v366 = vld [vmem:[%s1] sm:$0xf]
      %v367 = vld [vmem:[%s345] sm:$0xff]
      %v368 = vld [vmem:[%s345 + $0x8] sm:$0xff]
      %v369 = vld [vmem:[%s345 + $0x10] sm:$0xff]
      %v370 = vld [vmem:[%s345 + $0x18] sm:$0xff]
      %v371 = vld [vmem:[%s345 + $0x20] sm:$0xff]
      %v372 = vld [vmem:[%s345 + $0x28] sm:$0xff]
      %v373 = vld [vmem:[%s345 + $0x30] sm:$0xff]
      %v374 = vld [vmem:[%s345 + $0x38] sm:$0xff]
      %v375 = vld [vmem:[%s345 + $0x40] sm:$0xf]
      %v376 = vld [vmem:[%s345 + $0x48] sm:$0xf]
      %v377 = vld [vmem:[%s2] sm:$0xf]
      %379 = vset.pattern.permute.xlu0 0
      %380 = vperm.xlu0 %379, %v377
      %v381 = vpop.permute.xlu0 %380
      %vm383 = vcmask 293888
      %v385 = vsel %vm383, %v366, 0
      %vm387 = vcmask 1043456
      %v389 = vsel %vm387, %v375, 0
      %v392 = vsel %vm387, %v376, 0
      %394 = vmatprep.subr.mxu0 %v368
      %395 = vmatpush1.msra.mxu0 %v367
      %396 = vmatprep.subr.mxu0 %v370
      %397 = vmatpush1.msra.mxu0 %v369
      %398 = vmatprep.subr.mxu0 %v372
      %399 = vmatpush1.msra.mxu0 %v371
      %400 = vmatprep.subr.mxu0 %v374
      %401 = vmatpush1.msra.mxu0 %v373
      %402 = vmatprep.subr.mxu0 %v392
      %403 = vmatpush1.msra.mxu0 %v389
      %404 = vmatprep.subr.mxu0 0.0
      %405 = vmatpush1.msra.mxu0 0.0
      %406 = vmatprep.subr.mxu0 0.0
      %407 = vmatpush1.msra.mxu0 0.0
      %408 = vmatprep.subr.mxu0 0.0
      %409 = vmatpush1.msra.mxu0 0.0
      %410 = vmatprep.subr.mxu0 0.0
      %411 = vmatpush1.msra.mxu0 0.0
      %412 = vmatprep.subr.mxu0 0.0
      %413 = vmatpush1.msra.mxu0 0.0
      %414 = vmatprep.subr.mxu0 0.0
      %415 = vmatpush1.msra.mxu0 0.0
      %416 = vmatprep.subr.mxu0 0.0
      %417 = vmatpush1.msra.mxu0 0.0
      %418 = vmatprep.subr.mxu0 0.0
      %419 = vmatpush1.msra.mxu0 0.0
      %420 = vmatprep.subr.mxu0 0.0
      %421 = vmatpush1.msra.mxu0 0.0
      %422 = vmatprep.subr.mxu0 0.0
      %423 = vmatpush1.msra.mxu0 0.0
      %424 = vmatprep.subr.mxu0 0.0
      %425 = vmatpush1.msra.mxu0 0.0
      %426 = vmatprep.subr.mxu0 0.0
      %427 = vmatpush1.msra.mxu0 0.0
      %428 = vmatprep.subr.mxu0 0.0
      %429 = vmatpush1.msra.mxu0 0.0
      %430 = vmatprep.subr.mxu0 0.0
      %431 = vmatpush1.msra.mxu0 0.0
      %432 = vmatprep.subr.mxu0 0.0
      %433 = vmatpush1.msra.mxu0 0.0
      %434 = vmatprep.subr.mxu0 0.0
      %435 = vmatpush1.msra.mxu0 0.0
      %436 = vmatprep.subr.mxu0 0.0
      %437 = vmatpush1.msra.mxu0 0.0
      %438 = vmatprep.subr.mxu0 0.0
      %439 = vmatpush1.msra.mxu0 0.0
      %440 = vmatprep.subr.mxu0 0.0
      %441 = vmatpush1.msra.mxu0 0.0
      %442 = vmatprep.subr.mxu0 0.0
      %443 = vmatpush1.msra.mxu0 0.0
      %444 = vmatprep.subr.mxu0 0.0
      %445 = vmatpush1.msra.mxu0 0.0
      %446 = vmatprep.subr.mxu0 0.0
      %447 = vmatpush1.msra.mxu0 0.0
      %448 = vmatprep.subr.mxu0 0.0
      %449 = vmatpush1.msra.mxu0 0.0
      %450 = vmatprep.subr.mxu0 0.0
      %451 = vmatpush1.msra.mxu0 0.0
      %452 = vmatprep.subr.mxu0 0.0
      %453 = vmatpush1.msra.mxu0 0.0
      %454 = vmatprep.subr.mxu0 0.0
      %455 = vmatpush1.msra.mxu0 0.0
      %456 = vmatprep.subr.mxu0 0.0
      %457 = vmatpush1.msra.mxu0 0.0
      %458 = vmatprep.mubr.f32.mxu0 0.0
      %459 = vmatmul.mubr.f32.gmra.mrb[0].mxu0 %v385
      %v460 = vpop.f32.mrb[0].mxu0
      %v461 = vadd.f32 %v381, %v460
      %v462 = vpop.f32.mrb[0].mxu0
      %v463 = vadd.f32 %v381, %v462
      %464 = vdwg.mxu0
      %v465 = vmax.f32 %v461, 0.0
      %v466 = vmax.f32 %v463, 0.0
      %v467 = vld [vmem:[%s4] sm:$0xf]
      %v468 = vld [vmem:[%s350] sm:$0xff]
      %v470 = vcombine.high %v468, %v468
      %vm471 = vcmask 31744
      %v473 = vsel %vm471, %v467, 0
      %v475 = vsel %vm387, %v468, 0
      %v477 = vsel %vm387, %v470, 0
      %479 = vmatprep.subr.mxu0 %v477
      %480 = vmatpush1.msra.mxu0 %v475
      %481 = vmatprep.subr.mxu0 0.0
      %482 = vmatpush1.msra.mxu0 0.0
      %483 = vmatprep.subr.mxu0 0.0
      %484 = vmatpush1.msra.mxu0 0.0
      %485 = vmatprep.subr.mxu0 0.0
      %486 = vmatpush1.msra.mxu0 0.0
      %487 = vmatprep.subr.mxu0 0.0
      %488 = vmatpush1.msra.mxu0 0.0
      %489 = vmatprep.subr.mxu0 0.0
      %490 = vmatpush1.msra.mxu0 0.0
      %491 = vmatprep.subr.mxu0 0.0
      %492 = vmatpush1.msra.mxu0 0.0
      %493 = vmatprep.subr.mxu0 0.0
      %494 = vmatpush1.msra.mxu0 0.0
      %495 = vmatprep.subr.mxu0 0.0
      %496 = vmatpush1.msra.mxu0 0.0
      %497 = vmatprep.subr.mxu0 0.0
      %498 = vmatpush1.msra.mxu0 0.0
      %499 = vmatprep.subr.mxu0 0.0
      %500 = vmatpush1.msra.mxu0 0.0
      %501 = vmatprep.subr.mxu0 0.0
      %502 = vmatpush1.msra.mxu0 0.0
      %503 = vmatprep.subr.mxu0 0.0
      %504 = vmatpush1.msra.mxu0 0.0
      %505 = vmatprep.subr.mxu0 0.0
      %506 = vmatpush1.msra.mxu0 0.0
      %507 = vmatprep.subr.mxu0 0.0
      %508 = vmatpush1.msra.mxu0 0.0
      %509 = vmatprep.subr.mxu0 0.0
      %510 = vmatpush1.msra.mxu0 0.0
      %511 = vmatprep.subr.mxu0 0.0
      %512 = vmatpush1.msra.mxu0 0.0
      %513 = vmatprep.subr.mxu0 0.0
      %514 = vmatpush1.msra.mxu0 0.0
      %515 = vmatprep.subr.mxu0 0.0
      %516 = vmatpush1.msra.mxu0 0.0
      %517 = vmatprep.subr.mxu0 0.0
      %518 = vmatpush1.msra.mxu0 0.0
      %519 = vmatprep.subr.mxu0 0.0
      %520 = vmatpush1.msra.mxu0 0.0
      %521 = vmatprep.subr.mxu0 0.0
      %522 = vmatpush1.msra.mxu0 0.0
      %523 = vmatprep.subr.mxu0 0.0
      %524 = vmatpush1.msra.mxu0 0.0
      %525 = vmatprep.subr.mxu0 0.0
      %526 = vmatpush1.msra.mxu0 0.0
      %527 = vmatprep.subr.mxu0 0.0
      %528 = vmatpush1.msra.mxu0 0.0
      %529 = vmatprep.subr.mxu0 0.0
      %530 = vmatpush1.msra.mxu0 0.0
      %531 = vmatprep.subr.mxu0 0.0
      %532 = vmatpush1.msra.mxu0 0.0
      %533 = vmatprep.subr.mxu0 0.0
      %534 = vmatpush1.msra.mxu0 0.0
      %535 = vmatprep.subr.mxu0 0.0
      %536 = vmatpush1.msra.mxu0 0.0
      %537 = vmatprep.subr.mxu0 0.0
      %538 = vmatpush1.msra.mxu0 0.0
      %539 = vmatprep.subr.mxu0 0.0
      %540 = vmatpush1.msra.mxu0 0.0
      %541 = vmatprep.subr.mxu0 0.0
      %542 = vmatpush1.msra.mxu0 0.0
      %543 = vmatprep.mubr.f32.mxu0 0.0
      %544 = vmatmul.mubr.f32.gmra.mrb[0].mxu0 %v473
      %v545 = vpop.f32.mrb[0].mxu0
      %v546 = vadd.f32 0.0, %v545
      %v547 = vpop.f32.mrb[0].mxu0
      %v548 = vadd.f32 0.0, %v547
      %549 = vdwg.mxu0
      %v550 = vadd.f32 %v465, %v546
      %v551 = vadd.f32 %v466, %v548
      %v552 = vld [vmem:[%s5] sm:$0xf]
      %554 = vset.pattern.permute.xlu0 0
      %555 = vperm.xlu0 %554, %v552
      %v556 = vpop.permute.xlu0 %555
      %v558 = vadd.f32 %v550, %v556
      %v559 = vadd.f32 %v551, %v556
      %v560 = vld [vmem:[%s355] sm:$0xff]
      %v561 = vld [vmem:[%s360] sm:$0xff]
      %v562 = vsel %vm387, %v558, 0.0
      %v563 = vsel %vm387, %v559, 0.0
      %v564 = vadd.f32 %v562, %v563
      %565 = vadd.xlane.f32.xlu0 %v564
      %v566 = vpop.xlane.xlu0 %565
      %v567 = vrcp.pop 256.0
      %v568 = vmul.f32 %v566, %v567
      %v569 = vsub.f32 %v558, %v568
      %v570 = vsub.f32 %v559, %v568
      %v571 = vmul.f32 %v569, %v569
      %v572 = vmul.f32 %v570, %v570
      %v573 = vsel %vm387, %v571, 0.0
      %v574 = vsel %vm387, %v572, 0.0
      %v575 = vadd.f32 %v573, %v574
      %576 = vadd.xlane.f32.xlu0 %v575
      %v577 = vpop.xlane.xlu0 %576
      %v578 = vmul.f32 %v577, %v567
      %v579 = vadd.f32 %v578, 1e-05
      %v580 = vrsqrt.pop %v579
      %v581 = vmul.f32 %v569, %v580
      %v582 = vmul.f32 %v570, %v580
      %v585 = vcombine.low %v581, %v582
      %v587 = vmul.f32 %v560, %v585
      %v588 = vadd.f32 %v587, %v561
      %589 = vst [vmem:[%s365] sm:$0xff] %v588
      %p590 = scmp.lt.s32.totalorder %s19, 1
      %s591 = scalar_select %p590, %s19, 1
      %s592 = smul.addr %s591, 2
      %s593 = smul.addr %s592, 4
      %s594 = scalar_lea.vmem %s8, %s593
      // Predicated region
      $region53: #{style_decoder_forward.12} parent=51 // pred_check
        %p595 = pneg %p225
      $region54: #{style_decoder_forward.12} parent=51 // pred_check_branch
        %597 = sbr.rel (%p595) target = $region56
      $region55: #{style_decoder_forward.12} parent=51 // pred_region
        _
      $region56: #{style_decoder_forward.12} parent=51 // pred_fallthru
        _
    $region52: #{style_decoder_forward.12} parent=5 // pred_fallthru
      _
    %p598 = scmp.le.s32.totalorder 2, %s14
    // Predicated region
    $region57: #{style_decoder_forward.12} parent=5 // pred_check
      %p599 = pneg %p598
    $region58: #{style_decoder_forward.12} parent=5 // pred_check_branch
      %601 = sbr.rel (%p599) target = $region60
    $region59: #{style_decoder_forward.12} parent=5 // pred_region
      %s602 = ssub.s32 %s14, 2
      // Predicated region
      $region61: #{style_decoder_forward.12} parent=59 // pred_check
        %p603 = pneg %p231
      $region62: #{style_decoder_forward.12} parent=59 // pred_check_branch
        %605 = sbr.rel (%p603) target = $region64
      $region63: #{style_decoder_forward.12} parent=59 // pred_region
        %p606 = scmp.lt.s32.totalorder %s20, 1
        %s607 = scalar_select %p606, %s20, 1
        %s608 = smul.addr %s607, 2
        %s609 = smul.addr %s608, 4
        %s610 = scalar_lea.vmem %s8, %s609
      $region64: #{style_decoder_forward.12} parent=59 // pred_fallthru
        _
    $region60: #{style_decoder_forward.12} parent=5 // pred_fallthru
      _
  $region6: #{style_decoder_forward.12} parent=0 // loop_footer
    %s18 = sadd.s32 1, %s14
  $region7: #{style_decoder_forward.12} parent=0 // loop_footer_branch
    %13 = sbr.rel target = $region3
  $region8: #{style_decoder_forward.12} parent=0 // loop_exit
    _

// kernel: style_decoder_forward.13
$region0: #{style_decoder_forward.13}
  #allocation0 [shape = 'u32[]', space=smem, size = 0x4, offset = 0x4, fixed_abs, tag = 'smem constant byte address 0x4 - core index']
  #allocation1 [shape = 'u32[144,128]{1,0:T(1,128)}', space=vmem, size = 0x12000, scoped, tag = 'internal scratch']
  %s0 = inlined_call_operand.vmem [shape: f32[2,36,1024], index: 0, kind: input, shape index: {}]
  %s1 = inlined_call_operand.vmem [shape: f32[3,36], index: 1, kind: input, shape index: {}]
  %s2 = inlined_call_operand.vmem [shape: f32[3,1], index: 2, kind: input, shape index: {}]
  %s3 = inlined_call_operand.vmem [shape: f32[2,3,1024], index: 3, kind: input, shape index: {}]
  %s4 = inlined_call_operand.vmem [shape: f32[3,3], index: 4, kind: input, shape index: {}]
  %s5 = inlined_call_operand.vmem [shape: f32[3,1], index: 5, kind: input, shape index: {}]
  %s6 = inlined_call_operand.vmem [shape: f32[2,3,1024], index: 6, kind: input, shape index: {}]
  %s7 = inlined_call_operand.vmem [shape: f32[2,3,1024], index: 7, kind: input, shape index: {}]
  %s8 = inlined_call_operand.vmem [shape: f32[3,3], index: 8, kind: input, shape index: {}]
  %s9 = inlined_call_operand.vmem [shape: f32[3,1], index: 9, kind: input, shape index: {}]
  %s10 = inlined_call_operand.vmem [shape: f32[2,3,1024], index: 10, kind: output, shape index: {}]
  %s11 = sld [smem:[#allocation0]]
  $region73: #{style_decoder_forward.13} parent=0
    _
  %s13 = ssub.s32 1, %s11
  %s14 = scalar_select 0, %s13, %s11
  loop: start=0, step=1, limit=4
  $region2: #{style_decoder_forward.13} parent=0 // loop_pre_header
    _
  $region3: #{style_decoder_forward.13} parent=0 // loop_header
    %s16 = sphi 0, %s20
    %p17 = scmp.ge.s32.totalorder %s16, 4
    %s26 = sphi 0, %s28
    %s29 = sphi 0, %s26
    %s30 = sphi 0, %s29
    %s46 = sphi 0, %s30
    %s50 = sphi 0, %s50
    %s52 = sphi 0, %s50
    %s53 = sphi 0, %s52
    %s67 = sphi 0, %s53
    %s71 = sphi 0, %s71
    %s73 = sphi 0, %s71
    %s74 = sphi 0, %s73
    %s88 = sphi 0, %s74
    %s94 = sphi 0, %s96
    %s97 = sphi 0, %s94
    %s98 = sphi 0, %s97
    %s114 = sphi 0, %s98
    %s118 = sphi 0, %s118
    %s120 = sphi 0, %s118
    %s121 = sphi 0, %s120
    %s135 = sphi 0, %s121
    %s139 = sphi 0, %s139
    %s141 = sphi 0, %s139
    %s142 = sphi 0, %s141
    %s156 = sphi 0, %s142
    %s162 = sphi 0, %s164
    %s165 = sphi 0, %s162
    %s166 = sphi 0, %s165
    %s182 = sphi 0, %s166
    %s188 = sphi 0, %s190
    %s191 = sphi 0, %s188
    %s192 = sphi 0, %s191
    %s208 = sphi 0, %s192
    %s212 = sphi 0, %s212
    %s214 = sphi 0, %s212
    %s215 = sphi 0, %s214
    %s229 = sphi 0, %s215
    %s233 = sphi 0, %s233
    %s235 = sphi 0, %s233
    %s236 = sphi 0, %s235
    %s250 = sphi 0, %s236
    %s256 = sphi 0, %s258
    %s259 = sphi 0, %s256
    %s260 = sphi 0, %s259
    %s276 = sphi 0, %s260
  $region4: #{style_decoder_forward.13} parent=0 // loop_header_branch
    %19 = sbr.rel (%p17) target = $region8
  $region5: #{style_decoder_forward.13} parent=0 // loop_body
    %s21 = ssub.s32 %s16, 1
    %s22 = ssub.s32 %s16, 2
    %s23 = sadd.s32 %s16, 1
    %s24 = ssub.s32 %s16, %s23
    %p25 = scmp.eq.s32.totalorder %s24, 0
    %s27 = sadd.s32 %s26, 1
    %s28 = scalar_select %p25, %s26, %s27
    %p31 = pneg %p25
    %p32 = scmp.eq.s32.totalorder %s16, 1
    %p33 = por %p31, %p32
    %p34 = scmp.ne.s32.totalorder %s26, %s29
    %p35 = scmp.eq.s32.totalorder %s16, 0
    %p36 = por %p34, %p35
    %p37 = scmp.ne.s32.totalorder %s26, %s29
    %p38 = scmp.eq.s32.totalorder %s21, 1
    %p39 = por %p37, %p38
    %p40 = scmp.ne.s32.totalorder %s29, %s30
    %p41 = scmp.eq.s32.totalorder %s21, 0
    %p42 = por %p40, %p41
    %p43 = scmp.ne.s32.totalorder %s29, %s30
    %p44 = scmp.eq.s32.totalorder %s22, 1
    %p45 = por %p43, %p44
    %p47 = scmp.ne.s32.totalorder %s30, %s46
    %p48 = scmp.eq.s32.totalorder %s22, 0
    %p49 = por %p47, %p48
    %s51 = sadd.s32 %s50, 1
    %p54 = scmp.eq.s32.totalorder %s16, 1
    %p55 = scmp.ne.s32.totalorder %s50, %s52
    %p56 = scmp.eq.s32.totalorder %s16, 0
    %p57 = por %p55, %p56
    %p58 = scmp.ne.s32.totalorder %s50, %s52
    %p59 = scmp.eq.s32.totalorder %s21, 1
    %p60 = por %p58, %p59
    %p61 = scmp.ne.s32.totalorder %s52, %s53
    %p62 = scmp.eq.s32.totalorder %s21, 0
    %p63 = por %p61, %p62
    %p64 = scmp.ne.s32.totalorder %s52, %s53
    %p65 = scmp.eq.s32.totalorder %s22, 1
    %p66 = por %p64, %p65
    %p68 = scmp.ne.s32.totalorder %s53, %s67
    %p69 = scmp.eq.s32.totalorder %s22, 0
    %p70 = por %p68, %p69
    %s72 = sadd.s32 %s71, 1
    %p75 = scmp.eq.s32.totalorder %s16, 1
    %p76 = scmp.ne.s32.totalorder %s71, %s73
    %p77 = scmp.eq.s32.totalorder %s16, 0
    %p78 = por %p76, %p77
    %p79 = scmp.ne.s32.totalorder %s71, %s73
    %p80 = scmp.eq.s32.totalorder %s21, 1
    %p81 = por %p79, %p80
    %p82 = scmp.ne.s32.totalorder %s73, %s74
    %p83 = scmp.eq.s32.totalorder %s21, 0
    %p84 = por %p82, %p83
    %p85 = scmp.ne.s32.totalorder %s73, %s74
    %p86 = scmp.eq.s32.totalorder %s22, 1
    %p87 = por %p85, %p86
    %p89 = scmp.ne.s32.totalorder %s74, %s88
    %p90 = scmp.eq.s32.totalorder %s22, 0
    %p91 = por %p89, %p90
    %s92 = ssub.s32 %s16, %s23
    %p93 = scmp.eq.s32.totalorder %s92, 0
    %s95 = sadd.s32 %s94, 1
    %s96 = scalar_select %p93, %s94, %s95
    %p99 = pneg %p93
    %p100 = scmp.eq.s32.totalorder %s16, 1
    %p101 = por %p99, %p100
    %p102 = scmp.ne.s32.totalorder %s94, %s97
    %p103 = scmp.eq.s32.totalorder %s16, 0
    %p104 = por %p102, %p103
    %p105 = scmp.ne.s32.totalorder %s94, %s97
    %p106 = scmp.eq.s32.totalorder %s21, 1
    %p107 = por %p105, %p106
    %p108 = scmp.ne.s32.totalorder %s97, %s98
    %p109 = scmp.eq.s32.totalorder %s21, 0
    %p110 = por %p108, %p109
    %p111 = scmp.ne.s32.totalorder %s97, %s98
    %p112 = scmp.eq.s32.totalorder %s22, 1
    %p113 = por %p111, %p112
    %p115 = scmp.ne.s32.totalorder %s98, %s114
    %p116 = scmp.eq.s32.totalorder %s22, 0
    %p117 = por %p115, %p116
    %s119 = sadd.s32 %s118, 1
    %p122 = scmp.eq.s32.totalorder %s16, 1
    %p123 = scmp.ne.s32.totalorder %s118, %s120
    %p124 = scmp.eq.s32.totalorder %s16, 0
    %p125 = por %p123, %p124
    %p126 = scmp.ne.s32.totalorder %s118, %s120
    %p127 = scmp.eq.s32.totalorder %s21, 1
    %p128 = por %p126, %p127
    %p129 = scmp.ne.s32.totalorder %s120, %s121
    %p130 = scmp.eq.s32.totalorder %s21, 0
    %p131 = por %p129, %p130
    %p132 = scmp.ne.s32.totalorder %s120, %s121
    %p133 = scmp.eq.s32.totalorder %s22, 1
    %p134 = por %p132, %p133
    %p136 = scmp.ne.s32.totalorder %s121, %s135
    %p137 = scmp.eq.s32.totalorder %s22, 0
    %p138 = por %p136, %p137
    %s140 = sadd.s32 %s139, 1
    %p143 = scmp.eq.s32.totalorder %s16, 1
    %p144 = scmp.ne.s32.totalorder %s139, %s141
    %p145 = scmp.eq.s32.totalorder %s16, 0
    %p146 = por %p144, %p145
    %p147 = scmp.ne.s32.totalorder %s139, %s141
    %p148 = scmp.eq.s32.totalorder %s21, 1
    %p149 = por %p147, %p148
    %p150 = scmp.ne.s32.totalorder %s141, %s142
    %p151 = scmp.eq.s32.totalorder %s21, 0
    %p152 = por %p150, %p151
    %p153 = scmp.ne.s32.totalorder %s141, %s142
    %p154 = scmp.eq.s32.totalorder %s22, 1
    %p155 = por %p153, %p154
    %p157 = scmp.ne.s32.totalorder %s142, %s156
    %p158 = scmp.eq.s32.totalorder %s22, 0
    %p159 = por %p157, %p158
    %s160 = ssub.s32 %s16, %s23
    %p161 = scmp.eq.s32.totalorder %s160, 0
    %s163 = sadd.s32 %s162, 1
    %s164 = scalar_select %p161, %s162, %s163
    %p167 = pneg %p161
    %p168 = scmp.eq.s32.totalorder %s16, 1
    %p169 = por %p167, %p168
    %p170 = scmp.ne.s32.totalorder %s162, %s165
    %p171 = scmp.eq.s32.totalorder %s16, 0
    %p172 = por %p170, %p171
    %p173 = scmp.ne.s32.totalorder %s162, %s165
    %p174 = scmp.eq.s32.totalorder %s21, 1
    %p175 = por %p173, %p174
    %p176 = scmp.ne.s32.totalorder %s165, %s166
    %p177 = scmp.eq.s32.totalorder %s21, 0
    %p178 = por %p176, %p177
    %p179 = scmp.ne.s32.totalorder %s165, %s166
    %p180 = scmp.eq.s32.totalorder %s22, 1
    %p181 = por %p179, %p180
    %p183 = scmp.ne.s32.totalorder %s166, %s182
    %p184 = scmp.eq.s32.totalorder %s22, 0
    %p185 = por %p183, %p184
    %s186 = ssub.s32 %s16, %s23
    %p187 = scmp.eq.s32.totalorder %s186, 0
    %s189 = sadd.s32 %s188, 1
    %s190 = scalar_select %p187, %s188, %s189
    %p193 = pneg %p187
    %p194 = scmp.eq.s32.totalorder %s16, 1
    %p195 = por %p193, %p194
    %p196 = scmp.ne.s32.totalorder %s188, %s191
    %p197 = scmp.eq.s32.totalorder %s16, 0
    %p198 = por %p196, %p197
    %p199 = scmp.ne.s32.totalorder %s188, %s191
    %p200 = scmp.eq.s32.totalorder %s21, 1
    %p201 = por %p199, %p200
    %p202 = scmp.ne.s32.totalorder %s191, %s192
    %p203 = scmp.eq.s32.totalorder %s21, 0
    %p204 = por %p202, %p203
    %p205 = scmp.ne.s32.totalorder %s191, %s192
    %p206 = scmp.eq.s32.totalorder %s22, 1
    %p207 = por %p205, %p206
    %p209 = scmp.ne.s32.totalorder %s192, %s208
    %p210 = scmp.eq.s32.totalorder %s22, 0
    %p211 = por %p209, %p210
    %s213 = sadd.s32 %s212, 1
    %p216 = scmp.eq.s32.totalorder %s16, 1
    %p217 = scmp.ne.s32.totalorder %s212, %s214
    %p218 = scmp.eq.s32.totalorder %s16, 0
    %p219 = por %p217, %p218
    %p220 = scmp.ne.s32.totalorder %s212, %s214
    %p221 = scmp.eq.s32.totalorder %s21, 1
    %p222 = por %p220, %p221
    %p223 = scmp.ne.s32.totalorder %s214, %s215
    %p224 = scmp.eq.s32.totalorder %s21, 0
    %p225 = por %p223, %p224
    %p226 = scmp.ne.s32.totalorder %s214, %s215
    %p227 = scmp.eq.s32.totalorder %s22, 1
    %p228 = por %p226, %p227
    %p230 = scmp.ne.s32.totalorder %s215, %s229
    %p231 = scmp.eq.s32.totalorder %s22, 0
    %p232 = por %p230, %p231
    %s234 = sadd.s32 %s233, 1
    %p237 = scmp.eq.s32.totalorder %s16, 1
    %p238 = scmp.ne.s32.totalorder %s233, %s235
    %p239 = scmp.eq.s32.totalorder %s16, 0
    %p240 = por %p238, %p239
    %p241 = scmp.ne.s32.totalorder %s233, %s235
    %p242 = scmp.eq.s32.totalorder %s21, 1
    %p243 = por %p241, %p242
    %p244 = scmp.ne.s32.totalorder %s235, %s236
    %p245 = scmp.eq.s32.totalorder %s21, 0
    %p246 = por %p244, %p245
    %p247 = scmp.ne.s32.totalorder %s235, %s236
    %p248 = scmp.eq.s32.totalorder %s22, 1
    %p249 = por %p247, %p248
    %p251 = scmp.ne.s32.totalorder %s236, %s250
    %p252 = scmp.eq.s32.totalorder %s22, 0
    %p253 = por %p251, %p252
    %s254 = ssub.s32 %s16, %s23
    %p255 = scmp.eq.s32.totalorder %s254, 0
    %s257 = sadd.s32 %s256, 1
    %s258 = scalar_select %p255, %s256, %s257
    %p261 = pneg %p255
    %p262 = scmp.eq.s32.totalorder %s16, 1
    %p263 = por %p261, %p262
    %p264 = scmp.ne.s32.totalorder %s256, %s259
    %p265 = scmp.eq.s32.totalorder %s16, 0
    %p266 = por %p264, %p265
    %p267 = scmp.ne.s32.totalorder %s256, %s259
    %p268 = scmp.eq.s32.totalorder %s21, 1
    %p269 = por %p267, %p268
    %p270 = scmp.ne.s32.totalorder %s259, %s260
    %p271 = scmp.eq.s32.totalorder %s21, 0
    %p272 = por %p270, %p271
    %p273 = scmp.ne.s32.totalorder %s259, %s260
    %p274 = scmp.eq.s32.totalorder %s22, 1
    %p275 = por %p273, %p274
    %p277 = scmp.ne.s32.totalorder %s260, %s276
    %p278 = scmp.eq.s32.totalorder %s22, 0
    %p279 = por %p277, %p278
    %p280 = scmp.le.s32.totalorder 1, %s16
    %p281 = scmp.lt.s32.totalorder %s16, 3
    %p282 = pnand %p280, %p281
    %p283 = pneg %p282
    // Predicated region
    $region9: #{style_decoder_forward.13} parent=5 // pred_check
      _
    $region10: #{style_decoder_forward.13} parent=5 // pred_check_branch
      %285 = sbr.rel (%p282) target = $region12
    $region11: #{style_decoder_forward.13} parent=5 // pred_region
      %s286 = ssub.s32 %s16, 1
      // Predicated region
      $region13: #{style_decoder_forward.13} parent=11 // pred_check
        %p287 = pneg %p63
      $region14: #{style_decoder_forward.13} parent=11 // pred_check_branch
        %289 = sbr.rel (%p287) target = $region16
      $region15: #{style_decoder_forward.13} parent=11 // pred_region
        _
      $region16: #{style_decoder_forward.13} parent=11 // pred_fallthru
        _
      // Predicated region
      $region17: #{style_decoder_forward.13} parent=11 // pred_check
        %p290 = pneg %p84
      $region18: #{style_decoder_forward.13} parent=11 // pred_check_branch
        %292 = sbr.rel (%p290) target = $region20
      $region19: #{style_decoder_forward.13} parent=11 // pred_region
        _
      $region20: #{style_decoder_forward.13} parent=11 // pred_fallthru
        _
      // Predicated region
      $region21: #{style_decoder_forward.13} parent=11 // pred_check
        %p293 = pneg %p131
      $region22: #{style_decoder_forward.13} parent=11 // pred_check_branch
        %295 = sbr.rel (%p293) target = $region24
      $region23: #{style_decoder_forward.13} parent=11 // pred_region
        _
      $region24: #{style_decoder_forward.13} parent=11 // pred_fallthru
        _
      // Predicated region
      $region25: #{style_decoder_forward.13} parent=11 // pred_check
        %p296 = pneg %p152
      $region26: #{style_decoder_forward.13} parent=11 // pred_check_branch
        %298 = sbr.rel (%p296) target = $region28
      $region27: #{style_decoder_forward.13} parent=11 // pred_region
        _
      $region28: #{style_decoder_forward.13} parent=11 // pred_fallthru
        _
      // Predicated region
      $region29: #{style_decoder_forward.13} parent=11 // pred_check
        %p299 = pneg %p225
      $region30: #{style_decoder_forward.13} parent=11 // pred_check_branch
        %301 = sbr.rel (%p299) target = $region32
      $region31: #{style_decoder_forward.13} parent=11 // pred_region
        _
      $region32: #{style_decoder_forward.13} parent=11 // pred_fallthru
        _
      // Predicated region
      $region33: #{style_decoder_forward.13} parent=11 // pred_check
        %p302 = pneg %p246
      $region34: #{style_decoder_forward.13} parent=11 // pred_check_branch
        %304 = sbr.rel (%p302) target = $region36
      $region35: #{style_decoder_forward.13} parent=11 // pred_region
        _
      $region36: #{style_decoder_forward.13} parent=11 // pred_fallthru
        _
    $region12: #{style_decoder_forward.13} parent=5 // pred_fallthru
      _
    %p305 = scmp.lt.s32.totalorder %s16, 2
    // Predicated region
    $region37: #{style_decoder_forward.13} parent=5 // pred_check
      %p306 = pneg %p305
    $region38: #{style_decoder_forward.13} parent=5 // pred_check_branch
      %308 = sbr.rel (%p306) target = $region40
    $region39: #{style_decoder_forward.13} parent=5 // pred_region
      // Predicated region
      $region41: #{style_decoder_forward.13} parent=39 // pred_check
        %p309 = pneg %p36
      $region42: #{style_decoder_forward.13} parent=39 // pred_check_branch
        %311 = sbr.rel (%p309) target = $region44
      $region43: #{style_decoder_forward.13} parent=39 // pred_region
        %p312 = scmp.lt.s32.totalorder %s16, 1
        %s313 = scalar_select %p312, %s16, 1
        %s314 = smul.addr %s313, 40
        %s315 = smul.addr %s314, 8
        %s316 = scalar_lea.vmem %s0, %s315
      $region44: #{style_decoder_forward.13} parent=39 // pred_fallthru
        _
      // Predicated region
      $region45: #{style_decoder_forward.13} parent=39 // pred_check
        %p317 = pneg %p104
      $region46: #{style_decoder_forward.13} parent=39 // pred_check_branch
        %319 = sbr.rel (%p317) target = $region48
      $region47: #{style_decoder_forward.13} parent=39 // pred_region
        %p320 = scmp.lt.s32.totalorder %s16, 1
        %s321 = scalar_select %p320, %s16, 1
        %s322 = smul.addr %s321, 8
        %s323 = smul.addr %s322, 4
        %s324 = scalar_lea.vmem %s3, %s323
      $region48: #{style_decoder_forward.13} parent=39 // pred_fallthru
        _
      // Predicated region
      $region49: #{style_decoder_forward.13} parent=39 // pred_check
        %p325 = pneg %p172
      $region50: #{style_decoder_forward.13} parent=39 // pred_check_branch
        %327 = sbr.rel (%p325) target = $region52
      $region51: #{style_decoder_forward.13} parent=39 // pred_region
        %p328 = scmp.lt.s32.totalorder %s16, 1
        %s329 = scalar_select %p328, %s16, 1
        %s330 = smul.addr %s329, 8
        %s331 = smul.addr %s330, 4
        %s332 = scalar_lea.vmem %s6, %s331
      $region52: #{style_decoder_forward.13} parent=39 // pred_fallthru
        _
      // Predicated region
      $region53: #{style_decoder_forward.13} parent=39 // pred_check
        %p333 = pneg %p198
      $region54: #{style_decoder_forward.13} parent=39 // pred_check_branch
        %335 = sbr.rel (%p333) target = $region56
      $region55: #{style_decoder_forward.13} parent=39 // pred_region
        %p336 = scmp.lt.s32.totalorder %s16, 1
        %s337 = scalar_select %p336, %s16, 1
        %s338 = smul.addr %s337, 8
        %s339 = smul.addr %s338, 4
        %s340 = scalar_lea.vmem %s7, %s339
      $region56: #{style_decoder_forward.13} parent=39 // pred_fallthru
        _
    $region40: #{style_decoder_forward.13} parent=5 // pred_fallthru
      _
    %p341 = scmp.le.s32.totalorder 1, %s16
    %p342 = scmp.lt.s32.totalorder %s16, 3
    %p343 = pnand %p341, %p342
    %p344 = pneg %p343
    // Predicated region
    $region57: #{style_decoder_forward.13} parent=5 // pred_check
      _
    $region58: #{style_decoder_forward.13} parent=5 // pred_check_branch
      %346 = sbr.rel (%p343) target = $region60
    $region59: #{style_decoder_forward.13} parent=5 // pred_region
      %s347 = ssub.s32 %s16, 1
      %p348 = scmp.lt.s32.totalorder %s21, 1
      %s349 = scalar_select %p348, %s21, 1
      %s350 = smul.addr %s349, 40
      %s351 = smul.addr %s350, 8
      %s352 = scalar_lea.vmem %s0, %s351
      %p353 = pneg %p42
      %p354 = pneg %p39
      %p355 = pneg %p63
      %p356 = pneg %p60
      %p357 = pneg %p84
      %p358 = pneg %p81
      %p359 = scmp.lt.s32.totalorder %s21, 1
      %s360 = scalar_select %p359, %s21, 1
      %s361 = smul.addr %s360, 8
      %s362 = smul.addr %s361, 4
      %s363 = scalar_lea.vmem %s3, %s362
      %p364 = pneg %p110
      %p365 = pneg %p107
      %p366 = pneg %p131
      %p367 = pneg %p128
      %p368 = pneg %p152
      %p369 = pneg %p149
      %p370 = scmp.lt.s32.totalorder %s21, 1
      %s371 = scalar_select %p370, %s21, 1
      %s372 = smul.addr %s371, 8
      %s373 = smul.addr %s372, 4
      %s374 = scalar_lea.vmem %s6, %s373
      %p375 = pneg %p178
      %p376 = pneg %p175
      %p377 = scmp.lt.s32.totalorder %s21, 1
      %s378 = scalar_select %p377, %s21, 1
      %s379 = smul.addr %s378, 8
      %s380 = smul.addr %s379, 4
      %s381 = scalar_lea.vmem %s7, %s380
      %p382 = pneg %p204
      %p383 = pneg %p201
      %p384 = pneg %p225
      %p385 = pneg %p222
      %p386 = pneg %p246
      %p387 = pneg %p243
      %p388 = pneg %p272
      %p389 = pneg %p269
      %p390 = scmp.lt.s32.totalorder %s21, 1
      %s391 = scalar_select %p390, %s21, 1
      %s392 = smul.addr %s391, 8
      %s393 = smul.addr %s392, 4
      %s394 = scalar_lea.vmem %s10, %s393
      %p395 = scmp.lt.s32.totalorder %s21, 1
      %s396 = scalar_select %p395, %s21, 1
      %s397 = smul.addr %s396, 40
      %s398 = smul.addr %s397, 8
      %s399 = scalar_lea.vmem %s0, %s398
      %p400 = scmp.lt.s32.totalorder %s21, 1
      %s401 = scalar_select %p400, %s21, 1
      %s402 = smul.addr %s401, 8
      %s403 = smul.addr %s402, 4
      %s404 = scalar_lea.vmem %s3, %s403
      %p405 = scmp.lt.s32.totalorder %s21, 1
      %s406 = scalar_select %p405, %s21, 1
      %s407 = smul.addr %s406, 8
      %s408 = smul.addr %s407, 4
      %s409 = scalar_lea.vmem %s6, %s408
      %p410 = scmp.lt.s32.totalorder %s21, 1
      %s411 = scalar_select %p410, %s21, 1
      %s412 = smul.addr %s411, 8
      %s413 = smul.addr %s412, 4
      %s414 = scalar_lea.vmem %s7, %s413
      %p415 = scmp.lt.s32.totalorder %s21, 1
      %s416 = scalar_select %p415, %s21, 1
      %s417 = smul.addr %s416, 8
      %s418 = smul.addr %s417, 4
      %s419 = scalar_lea.vmem %s10, %s418
      %v420 = vld [vmem:[%s1] sm:$0x7]
      %v421 = vld [vmem:[%s399] sm:$0xff]
      %v422 = vld [vmem:[%s399 + $0x8] sm:$0xff]
      %v423 = vld [vmem:[%s399 + $0x10] sm:$0xff]
      %v424 = vld [vmem:[%s399 + $0x18] sm:$0xff]
      %v425 = vld [vmem:[%s399 + $0x20] sm:$0xff]
      %v426 = vld [vmem:[%s399 + $0x28] sm:$0xff]
      %v427 = vld [vmem:[%s399 + $0x30] sm:$0xff]
      %v428 = vld [vmem:[%s399 + $0x38] sm:$0xff]
      %v429 = vld [vmem:[%s399 + $0x40] sm:$0xff]
      %v430 = vld [vmem:[%s399 + $0x48] sm:$0xff]
      %v431 = vld [vmem:[%s399 + $0x50] sm:$0xff]
      %v432 = vld [vmem:[%s399 + $0x58] sm:$0xff]
      %v433 = vld [vmem:[%s399 + $0x60] sm:$0xff]
      %v434 = vld [vmem:[%s399 + $0x68] sm:$0xff]
      %v435 = vld [vmem:[%s399 + $0x70] sm:$0xff]
      %v436 = vld [vmem:[%s399 + $0x78] sm:$0xff]
      %v437 = vld [vmem:[%s399 + $0x80] sm:$0xff]
      %v438 = vld [vmem:[%s399 + $0x88] sm:$0xff]
      %v439 = vld [vmem:[%s399 + $0x90] sm:$0xff]
      %v440 = vld [vmem:[%s399 + $0x98] sm:$0xff]
      %v441 = vld [vmem:[%s399 + $0xa0] sm:$0xff]
      %v442 = vld [vmem:[%s399 + $0xa8] sm:$0xff]
      %v443 = vld [vmem:[%s399 + $0xb0] sm:$0xff]
      %v444 = vld [vmem:[%s399 + $0xb8] sm:$0xff]
      %v445 = vld [vmem:[%s399 + $0xc0] sm:$0xff]
      %v446 = vld [vmem:[%s399 + $0xc8] sm:$0xff]
      %v447 = vld [vmem:[%s399 + $0xd0] sm:$0xff]
      %v448 = vld [vmem:[%s399 + $0xd8] sm:$0xff]
      %v449 = vld [vmem:[%s399 + $0xe0] sm:$0xff]
      %v450 = vld [vmem:[%s399 + $0xe8] sm:$0xff]
      %v451 = vld [vmem:[%s399 + $0xf0] sm:$0xff]
      %v452 = vld [vmem:[%s399 + $0xf8] sm:$0xff]
      %v453 = vld [vmem:[%s399 + $0x100] sm:$0xf]
      %v454 = vld [vmem:[%s399 + $0x108] sm:$0xf]
      %v455 = vld [vmem:[%s399 + $0x110] sm:$0xf]
      %v456 = vld [vmem:[%s399 + $0x118] sm:$0xf]
      %v457 = vld [vmem:[%s399 + $0x120] sm:$0xf]
      %v458 = vld [vmem:[%s399 + $0x128] sm:$0xf]
      %v459 = vld [vmem:[%s399 + $0x130] sm:$0xf]
      %v460 = vld [vmem:[%s399 + $0x138] sm:$0xf]
      %v461 = vld [vmem:[%s2] sm:$0x7]
      %463 = vset.pattern.permute.xlu0 0
      %464 = vperm.xlu0 %463, %v461
      %v465 = vpop.permute.xlu0 %464
      %vm467 = vcmask 293888
      %v469 = vsel %vm467, %v420, 0
      %vm471 = vcmask 1043456
      %v473 = vsel %vm471, %v453, 0
      %v476 = vsel %vm471, %v454, 0
      %v479 = vsel %vm471, %v455, 0
      %v482 = vsel %vm471, %v456, 0
      %v485 = vsel %vm471, %v457, 0
      %v488 = vsel %vm471, %v458, 0
      %v491 = vsel %vm471, %v459, 0
      %v494 = vsel %vm471, %v460, 0
      %496 = vmatprep.subr.mxu0 %v422
      %497 = vmatpush1.msra.mxu0 %v421
      %498 = vmatprep.subr.mxu0 %v430
      %499 = vmatpush1.msra.mxu0 %v429
      %500 = vmatprep.subr.mxu0 %v438
      %501 = vmatpush1.msra.mxu0 %v437
      %502 = vmatprep.subr.mxu0 %v446
      %503 = vmatpush1.msra.mxu0 %v445
      %504 = vmatprep.subr.mxu0 %v476
      %505 = vmatpush1.msra.mxu0 %v473
      %506 = vmatprep.subr.mxu0 0.0
      %507 = vmatpush1.msra.mxu0 0.0
      %508 = vmatprep.subr.mxu0 0.0
      %509 = vmatpush1.msra.mxu0 0.0
      %510 = vmatprep.subr.mxu0 0.0
      %511 = vmatpush1.msra.mxu0 0.0
      %512 = vmatprep.subr.mxu0 0.0
      %513 = vmatpush1.msra.mxu0 0.0
      %514 = vmatprep.subr.mxu0 0.0
      %515 = vmatpush1.msra.mxu0 0.0
      %516 = vmatprep.subr.mxu0 0.0
      %517 = vmatpush1.msra.mxu0 0.0
      %518 = vmatprep.subr.mxu0 0.0
      %519 = vmatpush1.msra.mxu0 0.0
      %520 = vmatprep.subr.mxu0 0.0
      %521 = vmatpush1.msra.mxu0 0.0
      %522 = vmatprep.subr.mxu0 0.0
      %523 = vmatpush1.msra.mxu0 0.0
      %524 = vmatprep.subr.mxu0 0.0
      %525 = vmatpush1.msra.mxu0 0.0
      %526 = vmatprep.subr.mxu0 0.0
      %527 = vmatpush1.msra.mxu0 0.0
      %528 = vmatprep.subr.mxu0 0.0
      %529 = vmatpush1.msra.mxu0 0.0
      %530 = vmatprep.subr.mxu0 0.0
      %531 = vmatpush1.msra.mxu0 0.0
      %532 = vmatprep.subr.mxu0 0.0
      %533 = vmatpush1.msra.mxu0 0.0
      %534 = vmatprep.subr.mxu0 0.0
      %535 = vmatpush1.msra.mxu0 0.0
      %536 = vmatprep.subr.mxu0 0.0
      %537 = vmatpush1.msra.mxu0 0.0
      %538 = vmatprep.subr.mxu0 0.0
      %539 = vmatpush1.msra.mxu0 0.0
      %540 = vmatprep.subr.mxu0 0.0
      %541 = vmatpush1.msra.mxu0 0.0
      %542 = vmatprep.subr.mxu0 0.0
      %543 = vmatpush1.msra.mxu0 0.0
      %544 = vmatprep.subr.mxu0 0.0
      %545 = vmatpush1.msra.mxu0 0.0
      %546 = vmatprep.subr.mxu0 0.0
      %547 = vmatpush1.msra.mxu0 0.0
      %548 = vmatprep.subr.mxu0 0.0
      %549 = vmatpush1.msra.mxu0 0.0
      %550 = vmatprep.subr.mxu0 0.0
      %551 = vmatpush1.msra.mxu0 0.0
      %552 = vmatprep.subr.mxu0 0.0
      %553 = vmatpush1.msra.mxu0 0.0
      %554 = vmatprep.subr.mxu0 0.0
      %555 = vmatpush1.msra.mxu0 0.0
      %556 = vmatprep.subr.mxu0 0.0
      %557 = vmatpush1.msra.mxu0 0.0
      %558 = vmatprep.subr.mxu0 0.0
      %559 = vmatpush1.msra.mxu0 0.0
      %560 = vmatprep.mubr.f32.mxu0 0.0
      %561 = vmatmul.mubr.f32.gmra.mrb[0].mxu0 %v469
      %v562 = vpop.f32.mrb[0].mxu0
      %v563 = vadd.f32 %v465, %v562
      %v564 = vpop.f32.mrb[0].mxu0
      %v565 = vadd.f32 %v465, %v564
      %566 = vdwg.mxu0
      %567 = vmatprep.subr.mxu0 %v424
      %568 = vmatpush1.msra.mxu0 %v423
      %569 = vmatprep.subr.mxu0 %v432
      %570 = vmatpush1.msra.mxu0 %v431
      %571 = vmatprep.subr.mxu0 %v440
      %572 = vmatpush1.msra.mxu0 %v439
      %573 = vmatprep.subr.mxu0 %v448
      %574 = vmatpush1.msra.mxu0 %v447
      %575 = vmatprep.subr.mxu0 %v482
      %576 = vmatpush1.msra.mxu0 %v479
      %577 = vmatprep.subr.mxu0 0.0
      %578 = vmatpush1.msra.mxu0 0.0
      %579 = vmatprep.subr.mxu0 0.0
      %580 = vmatpush1.msra.mxu0 0.0
      %581 = vmatprep.subr.mxu0 0.0
      %582 = vmatpush1.msra.mxu0 0.0
      %583 = vmatprep.subr.mxu0 0.0
      %584 = vmatpush1.msra.mxu0 0.0
      %585 = vmatprep.subr.mxu0 0.0
      %586 = vmatpush1.msra.mxu0 0.0
      %587 = vmatprep.subr.mxu0 0.0
      %588 = vmatpush1.msra.mxu0 0.0
      %589 = vmatprep.subr.mxu0 0.0
      %590 = vmatpush1.msra.mxu0 0.0
      %591 = vmatprep.subr.mxu0 0.0
      %592 = vmatpush1.msra.mxu0 0.0
      %593 = vmatprep.subr.mxu0 0.0
      %594 = vmatpush1.msra.mxu0 0.0
      %595 = vmatprep.subr.mxu0 0.0
      %596 = vmatpush1.msra.mxu0 0.0
      %597 = vmatprep.subr.mxu0 0.0
      %598 = vmatpush1.msra.mxu0 0.0
      %599 = vmatprep.subr.mxu0 0.0
      %600 = vmatpush1.msra.mxu0 0.0
      %601 = vmatprep.subr.mxu0 0.0
      %602 = vmatpush1.msra.mxu0 0.0
      %603 = vmatprep.subr.mxu0 0.0
      %604 = vmatpush1.msra.mxu0 0.0
      %605 = vmatprep.subr.mxu0 0.0
      %606 = vmatpush1.msra.mxu0 0.0
      %607 = vmatprep.subr.mxu0 0.0
      %608 = vmatpush1.msra.mxu0 0.0
      %609 = vmatprep.subr.mxu0 0.0
      %610 = vmatpush1.msra.mxu0 0.0
      %611 = vmatprep.subr.mxu0 0.0
      %612 = vmatpush1.msra.mxu0 0.0
      %613 = vmatprep.subr.mxu0 0.0
      %614 = vmatpush1.msra.mxu0 0.0
      %615 = vmatprep.subr.mxu0 0.0
      %616 = vmatpush1.msra.mxu0 0.0
      %617 = vmatprep.subr.mxu0 0.0
      %618 = vmatpush1.msra.mxu0 0.0
      %619 = vmatprep.subr.mxu0 0.0
      %620 = vmatpush1.msra.mxu0 0.0
      %621 = vmatprep.subr.mxu0 0.0
      %622 = vmatpush1.msra.mxu0 0.0
      %623 = vmatprep.subr.mxu0 0.0
      %624 = vmatpush1.msra.mxu0 0.0
      %625 = vmatprep.subr.mxu0 0.0
      %626 = vmatpush1.msra.mxu0 0.0
      %627 = vmatprep.subr.mxu0 0.0
      %628 = vmatpush1.msra.mxu0 0.0
      %629 = vmatprep.subr.mxu0 0.0
      %630 = vmatpush1.msra.mxu0 0.0
      %631 = vmatprep.mubr.f32.mxu0 0.0
      %632 = vmatmul.mubr.f32.gmra.mrb[0].mxu0 %v469
      %v633 = vpop.f32.mrb[0].mxu0
      %v634 = vadd.f32 %v465, %v633
      %v635 = vpop.f32.mrb[0].mxu0
      %v636 = vadd.f32 %v465, %v635
      %637 = vdwg.mxu0
      %638 = vmatprep.subr.mxu0 %v426
      %639 = vmatpush1.msra.mxu0 %v425
      %640 = vmatprep.subr.mxu0 %v434
      %641 = vmatpush1.msra.mxu0 %v433
      %642 = vmatprep.subr.mxu0 %v442
      %643 = vmatpush1.msra.mxu0 %v441
      %644 = vmatprep.subr.mxu0 %v450
      %645 = vmatpush1.msra.mxu0 %v449
      %646 = vmatprep.subr.mxu0 %v488
      %647 = vmatpush1.msra.mxu0 %v485
      %648 = vmatprep.subr.mxu0 0.0
      %649 = vmatpush1.msra.mxu0 0.0
      %650 = vmatprep.subr.mxu0 0.0
      %651 = vmatpush1.msra.mxu0 0.0
      %652 = vmatprep.subr.mxu0 0.0
      %653 = vmatpush1.msra.mxu0 0.0
      %654 = vmatprep.subr.mxu0 0.0
      %655 = vmatpush1.msra.mxu0 0.0
      %656 = vmatprep.subr.mxu0 0.0
      %657 = vmatpush1.msra.mxu0 0.0
      %658 = vmatprep.subr.mxu0 0.0
      %659 = vmatpush1.msra.mxu0 0.0
      %660 = vmatprep.subr.mxu0 0.0
      %661 = vmatpush1.msra.mxu0 0.0
      %662 = vmatprep.subr.mxu0 0.0
      %663 = vmatpush1.msra.mxu0 0.0
      %664 = vmatprep.subr.mxu0 0.0
      %665 = vmatpush1.msra.mxu0 0.0
      %666 = vmatprep.subr.mxu0 0.0
      %667 = vmatpush1.msra.mxu0 0.0
      %668 = vmatprep.subr.mxu0 0.0
      %669 = vmatpush1.msra.mxu0 0.0
      %670 = vmatprep.subr.mxu0 0.0
      %671 = vmatpush1.msra.mxu0 0.0
      %672 = vmatprep.subr.mxu0 0.0
      %673 = vmatpush1.msra.mxu0 0.0
      %674 = vmatprep.subr.mxu0 0.0
      %675 = vmatpush1.msra.mxu0 0.0
      %676 = vmatprep.subr.mxu0 0.0
      %677 = vmatpush1.msra.mxu0 0.0
      %678 = vmatprep.subr.mxu0 0.0
      %679 = vmatpush1.msra.mxu0 0.0
      %680 = vmatprep.subr.mxu0 0.0
      %681 = vmatpush1.msra.mxu0 0.0
      %682 = vmatprep.subr.mxu0 0.0
      %683 = vmatpush1.msra.mxu0 0.0
      %684 = vmatprep.subr.mxu0 0.0
      %685 = vmatpush1.msra.mxu0 0.0
      %686 = vmatprep.subr.mxu0 0.0
      %687 = vmatpush1.msra.mxu0 0.0
      %688 = vmatprep.subr.mxu0 0.0
      %689 = vmatpush1.msra.mxu0 0.0
      %690 = vmatprep.subr.mxu0 0.0
      %691 = vmatpush1.msra.mxu0 0.0
      %692 = vmatprep.subr.mxu0 0.0
      %693 = vmatpush1.msra.mxu0 0.0
      %694 = vmatprep.subr.mxu0 0.0
      %695 = vmatpush1.msra.mxu0 0.0
      %696 = vmatprep.subr.mxu0 0.0
      %697 = vmatpush1.msra.mxu0 0.0
      %698 = vmatprep.subr.mxu0 0.0
      %699 = vmatpush1.msra.mxu0 0.0
      %700 = vmatprep.subr.mxu0 0.0
      %701 = vmatpush1.msra.mxu0 0.0
      %702 = vmatprep.mubr.f32.mxu0 0.0
      %703 = vmatmul.mubr.f32.gmra.mrb[0].mxu0 %v469
      %v704 = vpop.f32.mrb[0].mxu0
      %v705 = vadd.f32 %v465, %v704
      %v706 = vpop.f32.mrb[0].mxu0
      %v707 = vadd.f32 %v465, %v706
      %708 = vdwg.mxu0
      %709 = vmatprep.subr.mxu0 %v428
      %710 = vmatpush1.msra.mxu0 %v427
      %711 = vmatprep.subr.mxu0 %v436
      %712 = vmatpush1.msra.mxu0 %v435
      %713 = vmatprep.subr.mxu0 %v444
      %714 = vmatpush1.msra.mxu0 %v443
      %715 = vmatprep.subr.mxu0 %v452
      %716 = vmatpush1.msra.mxu0 %v451
      %717 = vmatprep.subr.mxu0 %v494
      %718 = vmatpush1.msra.mxu0 %v491
      %719 = vmatprep.subr.mxu0 0.0
      %720 = vmatpush1.msra.mxu0 0.0
      %721 = vmatprep.subr.mxu0 0.0
      %722 = vmatpush1.msra.mxu0 0.0
      %723 = vmatprep.subr.mxu0 0.0
      %724 = vmatpush1.msra.mxu0 0.0
      %725 = vmatprep.subr.mxu0 0.0
      %726 = vmatpush1.msra.mxu0 0.0
      %727 = vmatprep.subr.mxu0 0.0
      %728 = vmatpush1.msra.mxu0 0.0
      %729 = vmatprep.subr.mxu0 0.0
      %730 = vmatpush1.msra.mxu0 0.0
      %731 = vmatprep.subr.mxu0 0.0
      %732 = vmatpush1.msra.mxu0 0.0
      %733 = vmatprep.subr.mxu0 0.0
      %734 = vmatpush1.msra.mxu0 0.0
      %735 = vmatprep.subr.mxu0 0.0
      %736 = vmatpush1.msra.mxu0 0.0
      %737 = vmatprep.subr.mxu0 0.0
      %738 = vmatpush1.msra.mxu0 0.0
      %739 = vmatprep.subr.mxu0 0.0
      %740 = vmatpush1.msra.mxu0 0.0
      %741 = vmatprep.subr.mxu0 0.0
      %742 = vmatpush1.msra.mxu0 0.0
      %743 = vmatprep.subr.mxu0 0.0
      %744 = vmatpush1.msra.mxu0 0.0
      %745 = vmatprep.subr.mxu0 0.0
      %746 = vmatpush1.msra.mxu0 0.0
      %747 = vmatprep.subr.mxu0 0.0
      %748 = vmatpush1.msra.mxu0 0.0
      %749 = vmatprep.subr.mxu0 0.0
      %750 = vmatpush1.msra.mxu0 0.0
      %751 = vmatprep.subr.mxu0 0.0
      %752 = vmatpush1.msra.mxu0 0.0
      %753 = vmatprep.subr.mxu0 0.0
      %754 = vmatpush1.msra.mxu0 0.0
      %755 = vmatprep.subr.mxu0 0.0
      %756 = vmatpush1.msra.mxu0 0.0
      %757 = vmatprep.subr.mxu0 0.0
      %758 = vmatpush1.msra.mxu0 0.0
      %759 = vmatprep.subr.mxu0 0.0
      %760 = vmatpush1.msra.mxu0 0.0
      %761 = vmatprep.subr.mxu0 0.0
      %762 = vmatpush1.msra.mxu0 0.0
      %763 = vmatprep.subr.mxu0 0.0
      %764 = vmatpush1.msra.mxu0 0.0
      %765 = vmatprep.subr.mxu0 0.0
      %766 = vmatpush1.msra.mxu0 0.0
      %767 = vmatprep.subr.mxu0 0.0
      %768 = vmatpush1.msra.mxu0 0.0
      %769 = vmatprep.subr.mxu0 0.0
      %770 = vmatpush1.msra.mxu0 0.0
      %771 = vmatprep.subr.mxu0 0.0
      %772 = vmatpush1.msra.mxu0 0.0
      %773 = vmatprep.mubr.f32.mxu0 0.0
      %774 = vmatmul.mubr.f32.gmra.mrb[0].mxu0 %v469
      %v775 = vpop.f32.mrb[0].mxu0
      %v776 = vadd.f32 %v465, %v775
      %v777 = vpop.f32.mrb[0].mxu0
      %v778 = vadd.f32 %v465, %v777
      %779 = vdwg.mxu0
      %v780 = vmax.f32 %v563, 0.0
      %v781 = vmax.f32 %v565, 0.0
      %v782 = vmax.f32 %v634, 0.0
      %v783 = vmax.f32 %v636, 0.0
      %v784 = vmax.f32 %v705, 0.0
      %v785 = vmax.f32 %v707, 0.0
      %v786 = vmax.f32 %v776, 0.0
      %v787 = vmax.f32 %v778, 0.0
      %v788 = vld [vmem:[%s4] sm:$0x7]
      %v789 = vld [vmem:[%s404] sm:$0x77]
      %v790 = vld [vmem:[%s404 + $0x8] sm:$0x77]
      %v791 = vld [vmem:[%s404 + $0x10] sm:$0x77]
      %v792 = vld [vmem:[%s404 + $0x18] sm:$0x77]
      %v797 = vcombine.high %v789, %v789
      %v798 = vcombine.high %v790, %v790
      %v799 = vcombine.high %v791, %v791
      %v800 = vcombine.high %v792, %v792
      %vm801 = vcmask 23552
      %v803 = vsel %vm801, %v788, 0
      %vm805 = vcmask 1042432
      %v806 = vsel %vm805, %v789, 0
      %v808 = vsel %vm805, %v797, 0
      %v810 = vsel %vm805, %v790, 0
      %v812 = vsel %vm805, %v798, 0
      %v814 = vsel %vm805, %v791, 0
      %v816 = vsel %vm805, %v799, 0
      %v818 = vsel %vm805, %v792, 0
      %v820 = vsel %vm805, %v800, 0
      %822 = vmatprep.subr.mxu0 %v808
      %823 = vmatpush1.msra.mxu0 %v806
      %824 = vmatprep.subr.mxu0 0.0
      %825 = vmatpush1.msra.mxu0 0.0
      %826 = vmatprep.subr.mxu0 0.0
      %827 = vmatpush1.msra.mxu0 0.0
      %828 = vmatprep.subr.mxu0 0.0
      %829 = vmatpush1.msra.mxu0 0.0
      %830 = vmatprep.subr.mxu0 0.0
      %831 = vmatpush1.msra.mxu0 0.0
      %832 = vmatprep.subr.mxu0 0.0
      %833 = vmatpush1.msra.mxu0 0.0
      %834 = vmatprep.subr.mxu0 0.0
      %835 = vmatpush1.msra.mxu0 0.0
      %836 = vmatprep.subr.mxu0 0.0
      %837 = vmatpush1.msra.mxu0 0.0
      %838 = vmatprep.subr.mxu0 0.0
      %839 = vmatpush1.msra.mxu0 0.0
      %840 = vmatprep.subr.mxu0 0.0
      %841 = vmatpush1.msra.mxu0 0.0
      %842 = vmatprep.subr.mxu0 0.0
      %843 = vmatpush1.msra.mxu0 0.0
      %844 = vmatprep.subr.mxu0 0.0
      %845 = vmatpush1.msra.mxu0 0.0
      %846 = vmatprep.subr.mxu0 0.0
      %847 = vmatpush1.msra.mxu0 0.0
      %848 = vmatprep.subr.mxu0 0.0
      %849 = vmatpush1.msra.mxu0 0.0
      %850 = vmatprep.subr.mxu0 0.0
      %851 = vmatpush1.msra.mxu0 0.0
      %852 = vmatprep.subr.mxu0 0.0
      %853 = vmatpush1.msra.mxu0 0.0
      %854 = vmatprep.subr.mxu0 0.0
      %855 = vmatpush1.msra.mxu0 0.0
      %856 = vmatprep.subr.mxu0 0.0
      %857 = vmatpush1.msra.mxu0 0.0
      %858 = vmatprep.subr.mxu0 0.0
      %859 = vmatpush1.msra.mxu0 0.0
      %860 = vmatprep.subr.mxu0 0.0
      %861 = vmatpush1.msra.mxu0 0.0
      %862 = vmatprep.subr.mxu0 0.0
      %863 = vmatpush1.msra.mxu0 0.0
      %864 = vmatprep.subr.mxu0 0.0
      %865 = vmatpush1.msra.mxu0 0.0
      %866 = vmatprep.subr.mxu0 0.0
      %867 = vmatpush1.msra.mxu0 0.0
      %868 = vmatprep.subr.mxu0 0.0
      %869 = vmatpush1.msra.mxu0 0.0
      %870 = vmatprep.subr.mxu0 0.0
      %871 = vmatpush1.msra.mxu0 0.0
      %872 = vmatprep.subr.mxu0 0.0
      %873 = vmatpush1.msra.mxu0 0.0
      %874 = vmatprep.subr.mxu0 0.0
      %875 = vmatpush1.msra.mxu0 0.0
      %876 = vmatprep.subr.mxu0 0.0
      %877 = vmatpush1.msra.mxu0 0.0
      %878 = vmatprep.subr.mxu0 0.0
      %879 = vmatpush1.msra.mxu0 0.0
      %880 = vmatprep.subr.mxu0 0.0
      %881 = vmatpush1.msra.mxu0 0.0
      %882 = vmatprep.subr.mxu0 0.0
      %883 = vmatpush1.msra.mxu0 0.0
      %884 = vmatprep.subr.mxu0 0.0
      %885 = vmatpush1.msra.mxu0 0.0
      %886 = vmatprep.mubr.f32.mxu0 0.0
      %887 = vmatmul.mubr.f32.gmra.mrb[0].mxu0 %v803
      %v888 = vpop.f32.mrb[0].mxu0
      %v889 = vadd.f32 0.0, %v888
      %v890 = vpop.f32.mrb[0].mxu0
      %v891 = vadd.f32 0.0, %v890
      %892 = vdwg.mxu0
      %893 = vmatprep.subr.mxu0 %v812
      %894 = vmatpush1.msra.mxu0 %v810
      %895 = vmatprep.subr.mxu0 0.0
      %896 = vmatpush1.msra.mxu0 0.0
      %897 = vmatprep.subr.mxu0 0.0
      %898 = vmatpush1.msra.mxu0 0.0
      %899 = vmatprep.subr.mxu0 0.0
      %900 = vmatpush1.msra.mxu0 0.0
      %901 = vmatprep.subr.mxu0 0.0
      %902 = vmatpush1.msra.mxu0 0.0
      %903 = vmatprep.subr.mxu0 0.0
      %904 = vmatpush1.msra.mxu0 0.0
      %905 = vmatprep.subr.mxu0 0.0
      %906 = vmatpush1.msra.mxu0 0.0
      %907 = vmatprep.subr.mxu0 0.0
      %908 = vmatpush1.msra.mxu0 0.0
      %909 = vmatprep.subr.mxu0 0.0
      %910 = vmatpush1.msra.mxu0 0.0
      %911 = vmatprep.subr.mxu0 0.0
      %912 = vmatpush1.msra.mxu0 0.0
      %913 = vmatprep.subr.mxu0 0.0
      %914 = vmatpush1.msra.mxu0 0.0
      %915 = vmatprep.subr.mxu0 0.0
      %916 = vmatpush1.msra.mxu0 0.0
      %917 = vmatprep.subr.mxu0 0.0
      %918 = vmatpush1.msra.mxu0 0.0
      %919 = vmatprep.subr.mxu0 0.0
      %920 = vmatpush1.msra.mxu0 0.0
      %921 = vmatprep.subr.mxu0 0.0
      %922 = vmatpush1.msra.mxu0 0.0
      %923 = vmatprep.subr.mxu0 0.0
      %924 = vmatpush1.msra.mxu0 0.0
      %925 = vmatprep.subr.mxu0 0.0
      %926 = vmatpush1.msra.mxu0 0.0
      %927 = vmatprep.subr.mxu0 0.0
      %928 = vmatpush1.msra.mxu0 0.0
      %929 = vmatprep.subr.mxu0 0.0
      %930 = vmatpush1.msra.mxu0 0.0
      %931 = vmatprep.subr.mxu0 0.0
      %932 = vmatpush1.msra.mxu0 0.0
      %933 = vmatprep.subr.mxu0 0.0
      %934 = vmatpush1.msra.mxu0 0.0
      %935 = vmatprep.subr.mxu0 0.0
      %936 = vmatpush1.msra.mxu0 0.0
      %937 = vmatprep.subr.mxu0 0.0
      %938 = vmatpush1.msra.mxu0 0.0
      %939 = vmatprep.subr.mxu0 0.0
      %940 = vmatpush1.msra.mxu0 0.0
      %941 = vmatprep.subr.mxu0 0.0
      %942 = vmatpush1.msra.mxu0 0.0
      %943 = vmatprep.subr.mxu0 0.0
      %944 = vmatpush1.msra.mxu0 0.0
      %945 = vmatprep.subr.mxu0 0.0
      %946 = vmatpush1.msra.mxu0 0.0
      %947 = vmatprep.subr.mxu0 0.0
      %948 = vmatpush1.msra.mxu0 0.0
      %949 = vmatprep.subr.mxu0 0.0
      %950 = vmatpush1.msra.mxu0 0.0
      %951 = vmatprep.subr.mxu0 0.0
      %952 = vmatpush1.msra.mxu0 0.0
      %953 = vmatprep.subr.mxu0 0.0
      %954 = vmatpush1.msra.mxu0 0.0
      %955 = vmatprep.subr.mxu0 0.0
      %956 = vmatpush1.msra.mxu0 0.0
      %957 = vmatprep.mubr.f32.mxu0 0.0
      %958 = vmatmul.mubr.f32.gmra.mrb[0].mxu0 %v803
      %v959 = vpop.f32.mrb[0].mxu0
      %v960 = vadd.f32 0.0, %v959
      %v961 = vpop.f32.mrb[0].mxu0
      %v962 = vadd.f32 0.0, %v961
      %963 = vdwg.mxu0
      %964 = vmatprep.subr.mxu0 %v816
      %965 = vmatpush1.msra.mxu0 %v814
      %966 = vmatprep.subr.mxu0 0.0
      %967 = vmatpush1.msra.mxu0 0.0
      %968 = vmatprep.subr.mxu0 0.0
      %969 = vmatpush1.msra.mxu0 0.0
      %970 = vmatprep.subr.mxu0 0.0
      %971 = vmatpush1.msra.mxu0 0.0
      %972 = vmatprep.subr.mxu0 0.0
      %973 = vmatpush1.msra.mxu0 0.0
      %974 = vmatprep.subr.mxu0 0.0
      %975 = vmatpush1.msra.mxu0 0.0
      %976 = vmatprep.subr.mxu0 0.0
      %977 = vmatpush1.msra.mxu0 0.0
      %978 = vmatprep.subr.mxu0 0.0
      %979 = vmatpush1.msra.mxu0 0.0
      %980 = vmatprep.subr.mxu0 0.0
      %981 = vmatpush1.msra.mxu0 0.0
      %982 = vmatprep.subr.mxu0 0.0
      %983 = vmatpush1.msra.mxu0 0.0
      %984 = vmatprep.subr.mxu0 0.0
      %985 = vmatpush1.msra.mxu0 0.0
      %986 = vmatprep.subr.mxu0 0.0
      %987 = vmatpush1.msra.mxu0 0.0
      %988 = vmatprep.subr.mxu0 0.0
      %989 = vmatpush1.msra.mxu0 0.0
      %990 = vmatprep.subr.mxu0 0.0
      %991 = vmatpush1.msra.mxu0 0.0
      %992 = vmatprep.subr.mxu0 0.0
      %993 = vmatpush1.msra.mxu0 0.0
      %994 = vmatprep.subr.mxu0 0.0
      %995 = vmatpush1.msra.mxu0 0.0
      %996 = vmatprep.subr.mxu0 0.0
      %997 = vmatpush1.msra.mxu0 0.0
      %998 = vmatprep.subr.mxu0 0.0
      %999 = vmatpush1.msra.mxu0 0.0
      %1000 = vmatprep.subr.mxu0 0.0
      %1001 = vmatpush1.msra.mxu0 0.0
      %1002 = vmatprep.subr.mxu0 0.0
      %1003 = vmatpush1.msra.mxu0 0.0
      %1004 = vmatprep.subr.mxu0 0.0
      %1005 = vmatpush1.msra.mxu0 0.0
      %1006 = vmatprep.subr.mxu0 0.0
      %1007 = vmatpush1.msra.mxu0 0.0
      %1008 = vmatprep.subr.mxu0 0.0
      %1009 = vmatpush1.msra.mxu0 0.0
      %1010 = vmatprep.subr.mxu0 0.0
      %1011 = vmatpush1.msra.mxu0 0.0
      %1012 = vmatprep.subr.mxu0 0.0
      %1013 = vmatpush1.msra.mxu0 0.0
      %1014 = vmatprep.subr.mxu0 0.0
      %1015 = vmatpush1.msra.mxu0 0.0
      %1016 = vmatprep.subr.mxu0 0.0
      %1017 = vmatpush1.msra.mxu0 0.0
      %1018 = vmatprep.subr.mxu0 0.0
      %1019 = vmatpush1.msra.mxu0 0.0
      %1020 = vmatprep.subr.mxu0 0.0
      %1021 = vmatpush1.msra.mxu0 0.0
      %1022 = vmatprep.subr.mxu0 0.0
      %1023 = vmatpush1.msra.mxu0 0.0
      %1024 = vmatprep.subr.mxu0 0.0
      %1025 = vmatpush1.msra.mxu0 0.0
      %1026 = vmatprep.subr.mxu0 0.0
      %1027 = vmatpush1.msra.mxu0 0.0
      %1028 = vmatprep.mubr.f32.mxu0 0.0
      %1029 = vmatmul.mubr.f32.gmra.mrb[0].mxu0 %v803
      %v1030 = vpop.f32.mrb[0].mxu0
      %v1031 = vadd.f32 0.0, %v1030
      %v1032 = vpop.f32.mrb[0].mxu0
      %v1033 = vadd.f32 0.0, %v1032
      %1034 = vdwg.mxu0
      %1035 = vmatprep.subr.mxu0 %v820
      %1036 = vmatpush1.msra.mxu0 %v818
      %1037 = vmatprep.subr.mxu0 0.0
      %1038 = vmatpush1.msra.mxu0 0.0
      %1039 = vmatprep.subr.mxu0 0.0
      %1040 = vmatpush1.msra.mxu0 0.0
      %1041 = vmatprep.subr.mxu0 0.0
      %1042 = vmatpush1.msra.mxu0 0.0
      %1043 = vmatprep.subr.mxu0 0.0
      %1044 = vmatpush1.msra.mxu0 0.0
      %1045 = vmatprep.subr.mxu0 0.0
      %1046 = vmatpush1.msra.mxu0 0.0
      %1047 = vmatprep.subr.mxu0 0.0
      %1048 = vmatpush1.msra.mxu0 0.0
      %1049 = vmatprep.subr.mxu0 0.0
      %1050 = vmatpush1.msra.mxu0 0.0
      %1051 = vmatprep.subr.mxu0 0.0
      %1052 = vmatpush1.msra.mxu0 0.0
      %1053 = vmatprep.subr.mxu0 0.0
      %1054 = vmatpush1.msra.mxu0 0.0
      %1055 = vmatprep.subr.mxu0 0.0
      %1056 = vmatpush1.msra.mxu0 0.0
      %1057 = vmatprep.subr.mxu0 0.0
      %1058 = vmatpush1.msra.mxu0 0.0
      %1059 = vmatprep.subr.mxu0 0.0
      %1060 = vmatpush1.msra.mxu0 0.0
      %1061 = vmatprep.subr.mxu0 0.0
      %1062 = vmatpush1.msra.mxu0 0.0
      %1063 = vmatprep.subr.mxu0 0.0
      %1064 = vmatpush1.msra.mxu0 0.0
      %1065 = vmatprep.subr.mxu0 0.0
      %1066 = vmatpush1.msra.mxu0 0.0
      %1067 = vmatprep.subr.mxu0 0.0
      %1068 = vmatpush1.msra.mxu0 0.0
      %1069 = vmatprep.subr.mxu0 0.0
      %1070 = vmatpush1.msra.mxu0 0.0
      %1071 = vmatprep.subr.mxu0 0.0
      %1072 = vmatpush1.msra.mxu0 0.0
      %1073 = vmatprep.subr.mxu0 0.0
      %1074 = vmatpush1.msra.mxu0 0.0
      %1075 = vmatprep.subr.mxu0 0.0
      %1076 = vmatpush1.msra.mxu0 0.0
      %1077 = vmatprep.subr.mxu0 0.0
      %1078 = vmatpush1.msra.mxu0 0.0
      %1079 = vmatprep.subr.mxu0 0.0
      %1080 = vmatpush1.msra.mxu0 0.0
      %1081 = vmatprep.subr.mxu0 0.0
      %1082 = vmatpush1.msra.mxu0 0.0
      %1083 = vmatprep.subr.mxu0 0.0
      %1084 = vmatpush1.msra.mxu0 0.0
      %1085 = vmatprep.subr.mxu0 0.0
      %1086 = vmatpush1.msra.mxu0 0.0
      %1087 = vmatprep.subr.mxu0 0.0
      %1088 = vmatpush1.msra.mxu0 0.0
      %1089 = vmatprep.subr.mxu0 0.0
      %1090 = vmatpush1.msra.mxu0 0.0
      %1091 = vmatprep.subr.mxu0 0.0
      %1092 = vmatpush1.msra.mxu0 0.0
      %1093 = vmatprep.subr.mxu0 0.0
      %1094 = vmatpush1.msra.mxu0 0.0
      %1095 = vmatprep.subr.mxu0 0.0
      %1096 = vmatpush1.msra.mxu0 0.0
      %1097 = vmatprep.subr.mxu0 0.0
      %1098 = vmatpush1.msra.mxu0 0.0
      %1099 = vmatprep.mubr.f32.mxu0 0.0
      %1100 = vmatmul.mubr.f32.gmra.mrb[0].mxu0 %v803
      %v1101 = vpop.f32.mrb[0].mxu0
      %v1102 = vadd.f32 0.0, %v1101
      %v1103 = vpop.f32.mrb[0].mxu0
      %v1104 = vadd.f32 0.0, %v1103
      %1105 = vdwg.mxu0
      %v1106 = vadd.f32 %v780, %v889
      %v1107 = vadd.f32 %v781, %v891
      %v1108 = vadd.f32 %v782, %v960
      %v1109 = vadd.f32 %v783, %v962
      %v1110 = vadd.f32 %v784, %v1031
      %v1111 = vadd.f32 %v785, %v1033
      %v1112 = vadd.f32 %v786, %v1102
      %v1113 = vadd.f32 %v787, %v1104
      %v1114 = vld [vmem:[%s5] sm:$0x7]
      %1116 = vset.pattern.permute.xlu0 0
      %1117 = vperm.xlu0 %1116, %v1114
      %v1118 = vpop.permute.xlu0 %1117
      %v1120 = vadd.f32 %v1106, %v1118
      %v1121 = vadd.f32 %v1107, %v1118
      %v1122 = vadd.f32 %v1108, %v1118
      %v1123 = vadd.f32 %v1109, %v1118
      %v1124 = vadd.f32 %v1110, %v1118
      %v1125 = vadd.f32 %v1111, %v1118
      %v1126 = vadd.f32 %v1112, %v1118
      %v1127 = vadd.f32 %v1113, %v1118
      %v1128 = vld [vmem:[%s409] sm:$0x77]
      %v1129 = vld [vmem:[%s409 + $0x8] sm:$0x77]
      %v1130 = vld [vmem:[%s409 + $0x10] sm:$0x77]
      %v1131 = vld [vmem:[%s409 + $0x18] sm:$0x77]
      %v1132 = vld [vmem:[%s414] sm:$0x77]
      %v1133 = vld [vmem:[%s414 + $0x8] sm:$0x77]
      %v1134 = vld [vmem:[%s414 + $0x10] sm:$0x77]
      %v1135 = vld [vmem:[%s414 + $0x18] sm:$0x77]
      %v1136 = vsel %vm805, %v1120, 0.0
      %v1137 = vsel %vm805, %v1121, 0.0
      %v1138 = vadd.f32 %v1136, %v1137
      %v1139 = vsel %vm805, %v1122, 0.0
      %v1140 = vadd.f32 %v1138, %v1139
      %v1141 = vsel %vm805, %v1123, 0.0
      %v1142 = vadd.f32 %v1140, %v1141
      %v1143 = vsel %vm805, %v1124, 0.0
      %v1144 = vadd.f32 %v1142, %v1143
      %v1145 = vsel %vm805, %v1125, 0.0
      %v1146 = vadd.f32 %v1144, %v1145
      %v1147 = vsel %vm805, %v1126, 0.0
      %v1148 = vadd.f32 %v1146, %v1147
      %v1149 = vsel %vm805, %v1127, 0.0
      %v1150 = vadd.f32 %v1148, %v1149
      %1151 = vadd.xlane.f32.xlu0 %v1150
      %v1152 = vpop.xlane.xlu0 %1151
      %v1153 = vrcp.pop 1024.0
      %v1154 = vmul.f32 %v1152, %v1153
      %v1155 = vsub.f32 %v1120, %v1154
      %v1156 = vsub.f32 %v1121, %v1154
      %v1157 = vsub.f32 %v1122, %v1154
      %v1158 = vsub.f32 %v1123, %v1154
      %v1159 = vsub.f32 %v1124, %v1154
      %v1160 = vsub.f32 %v1125, %v1154
      %v1161 = vsub.f32 %v1126, %v1154
      %v1162 = vsub.f32 %v1127, %v1154
      %v1163 = vmul.f32 %v1155, %v1155
      %v1164 = vmul.f32 %v1156, %v1156
      %v1165 = vmul.f32 %v1157, %v1157
      %v1166 = vmul.f32 %v1158, %v1158
      %v1167 = vmul.f32 %v1159, %v1159
      %v1168 = vmul.f32 %v1160, %v1160
      %v1169 = vmul.f32 %v1161, %v1161
      %v1170 = vmul.f32 %v1162, %v1162
      %v1171 = vsel %vm805, %v1163, 0.0
      %v1172 = vsel %vm805, %v1164, 0.0
      %v1173 = vadd.f32 %v1171, %v1172
      %v1174 = vsel %vm805, %v1165, 0.0
      %v1175 = vadd.f32 %v1173, %v1174
      %v1176 = vsel %vm805, %v1166, 0.0
      %v1177 = vadd.f32 %v1175, %v1176
      %v1178 = vsel %vm805, %v1167, 0.0
      %v1179 = vadd.f32 %v1177, %v1178
      %v1180 = vsel %vm805, %v1168, 0.0
      %v1181 = vadd.f32 %v1179, %v1180
      %v1182 = vsel %vm805, %v1169, 0.0
      %v1183 = vadd.f32 %v1181, %v1182
      %v1184 = vsel %vm805, %v1170, 0.0
      %v1185 = vadd.f32 %v1183, %v1184
      %1186 = vadd.xlane.f32.xlu0 %v1185
      %v1187 = vpop.xlane.xlu0 %1186
      %v1188 = vmul.f32 %v1187, %v1153
      %v1189 = vadd.f32 %v1188, 1e-05
      %v1190 = vrsqrt.pop %v1189
      %v1191 = vmul.f32 %v1155, %v1190
      %v1192 = vmul.f32 %v1156, %v1190
      %v1193 = vmul.f32 %v1157, %v1190
      %v1194 = vmul.f32 %v1158, %v1190
      %v1195 = vmul.f32 %v1159, %v1190
      %v1196 = vmul.f32 %v1160, %v1190
      %v1197 = vmul.f32 %v1161, %v1190
      %v1198 = vmul.f32 %v1162, %v1190
      %v1207 = vcombine.low %v1191, %v1192
      %v1208 = vcombine.low %v1193, %v1194
      %v1209 = vcombine.low %v1195, %v1196
      %v1210 = vcombine.low %v1197, %v1198
      %v1215 = vmul.f32 %v1128, %v1207
      %v1216 = vmul.f32 %v1129, %v1208
      %v1217 = vmul.f32 %v1130, %v1209
      %v1218 = vmul.f32 %v1131, %v1210
      %v1219 = vadd.f32 %v1215, %v1132
      %v1220 = vadd.f32 %v1216, %v1133
      %v1221 = vadd.f32 %v1217, %v1134
      %v1222 = vadd.f32 %v1218, %v1135
      %v1223 = vld [vmem:[%s8] sm:$0x7]
      %v1224 = vld [vmem:[%s9] sm:$0x7]
      %1226 = vset.pattern.permute.xlu0 0
      %1227 = vperm.xlu0 %1226, %v1224
      %v1228 = vpop.permute.xlu0 %1227
      %v1234 = vcombine.high %v1219, %v1219
      %v1235 = vcombine.high %v1220, %v1220
      %v1236 = vcombine.high %v1221, %v1221
      %v1237 = vcombine.high %v1222, %v1222
      %v1239 = vsel %vm801, %v1223, 0
      %v1241 = vsel %vm805, %v1219, 0
      %v1243 = vsel %vm805, %v1234, 0
      %v1245 = vsel %vm805, %v1220, 0
      %v1247 = vsel %vm805, %v1235, 0
      %v1249 = vsel %vm805, %v1221, 0
      %v1251 = vsel %vm805, %v1236, 0
      %v1253 = vsel %vm805, %v1222, 0
      %v1255 = vsel %vm805, %v1237, 0
      %1257 = vmatprep.subr.mxu0 %v1243
      %1258 = vmatpush1.msra.mxu0 %v1241
      %1259 = vmatprep.subr.mxu0 0.0
      %1260 = vmatpush1.msra.mxu0 0.0
      %1261 = vmatprep.subr.mxu0 0.0
      %1262 = vmatpush1.msra.mxu0 0.0
      %1263 = vmatprep.subr.mxu0 0.0
      %1264 = vmatpush1.msra.mxu0 0.0
      %1265 = vmatprep.subr.mxu0 0.0
      %1266 = vmatpush1.msra.mxu0 0.0
      %1267 = vmatprep.subr.mxu0 0.0
      %1268 = vmatpush1.msra.mxu0 0.0
      %1269 = vmatprep.subr.mxu0 0.0
      %1270 = vmatpush1.msra.mxu0 0.0
      %1271 = vmatprep.subr.mxu0 0.0
      %1272 = vmatpush1.msra.mxu0 0.0
      %1273 = vmatprep.subr.mxu0 0.0
      %1274 = vmatpush1.msra.mxu0 0.0
      %1275 = vmatprep.subr.mxu0 0.0
      %1276 = vmatpush1.msra.mxu0 0.0
      %1277 = vmatprep.subr.mxu0 0.0
      %1278 = vmatpush1.msra.mxu0 0.0
      %1279 = vmatprep.subr.mxu0 0.0
      %1280 = vmatpush1.msra.mxu0 0.0
      %1281 = vmatprep.subr.mxu0 0.0
      %1282 = vmatpush1.msra.mxu0 0.0
      %1283 = vmatprep.subr.mxu0 0.0
      %1284 = vmatpush1.msra.mxu0 0.0
      %1285 = vmatprep.subr.mxu0 0.0
      %1286 = vmatpush1.msra.mxu0 0.0
      %1287 = vmatprep.subr.mxu0 0.0
      %1288 = vmatpush1.msra.mxu0 0.0
      %1289 = vmatprep.subr.mxu0 0.0
      %1290 = vmatpush1.msra.mxu0 0.0
      %1291 = vmatprep.subr.mxu0 0.0
      %1292 = vmatpush1.msra.mxu0 0.0
      %1293 = vmatprep.subr.mxu0 0.0
      %1294 = vmatpush1.msra.mxu0 0.0
      %1295 = vmatprep.subr.mxu0 0.0
      %1296 = vmatpush1.msra.mxu0 0.0
      %1297 = vmatprep.subr.mxu0 0.0
      %1298 = vmatpush1.msra.mxu0 0.0
      %1299 = vmatprep.subr.mxu0 0.0
      %1300 = vmatpush1.msra.mxu0 0.0
      %1301 = vmatprep.subr.mxu0 0.0
      %1302 = vmatpush1.msra.mxu0 0.0
      %1303 = vmatprep.subr.mxu0 0.0
      %1304 = vmatpush1.msra.mxu0 0.0
      %1305 = vmatprep.subr.mxu0 0.0
      %1306 = vmatpush1.msra.mxu0 0.0
      %1307 = vmatprep.subr.mxu0 0.0
      %1308 = vmatpush1.msra.mxu0 0.0
      %1309 = vmatprep.subr.mxu0 0.0
      %1310 = vmatpush1.msra.mxu0 0.0
      %1311 = vmatprep.subr.mxu0 0.0
      %1312 = vmatpush1.msra.mxu0 0.0
      %1313 = vmatprep.subr.mxu0 0.0
      %1314 = vmatpush1.msra.mxu0 0.0
      %1315 = vmatprep.subr.mxu0 0.0
      %1316 = vmatpush1.msra.mxu0 0.0
      %1317 = vmatprep.subr.mxu0 0.0
      %1318 = vmatpush1.msra.mxu0 0.0
      %1319 = vmatprep.subr.mxu0 0.0
      %1320 = vmatpush1.msra.mxu0 0.0
      %1321 = vmatprep.mubr.f32.mxu0 0.0
      %1322 = vmatmul.mubr.f32.gmra.mrb[0].mxu0 %v1239
      %v1323 = vpop.f32.mrb[0].mxu0
      %v1324 = vadd.f32 %v1228, %v1323
      %v1325 = vpop.f32.mrb[0].mxu0
      %v1326 = vadd.f32 %v1228, %v1325
      %1327 = vdwg.mxu0
      %1328 = vmatprep.subr.mxu0 %v1247
      %1329 = vmatpush1.msra.mxu0 %v1245
      %1330 = vmatprep.subr.mxu0 0.0
      %1331 = vmatpush1.msra.mxu0 0.0
      %1332 = vmatprep.subr.mxu0 0.0
      %1333 = vmatpush1.msra.mxu0 0.0
      %1334 = vmatprep.subr.mxu0 0.0
      %1335 = vmatpush1.msra.mxu0 0.0
      %1336 = vmatprep.subr.mxu0 0.0
      %1337 = vmatpush1.msra.mxu0 0.0
      %1338 = vmatprep.subr.mxu0 0.0
      %1339 = vmatpush1.msra.mxu0 0.0
      %1340 = vmatprep.subr.mxu0 0.0
      %1341 = vmatpush1.msra.mxu0 0.0
      %1342 = vmatprep.subr.mxu0 0.0
      %1343 = vmatpush1.msra.mxu0 0.0
      %1344 = vmatprep.subr.mxu0 0.0
      %1345 = vmatpush1.msra.mxu0 0.0
      %1346 = vmatprep.subr.mxu0 0.0
      %1347 = vmatpush1.msra.mxu0 0.0
      %1348 = vmatprep.subr.mxu0 0.0
      %1349 = vmatpush1.msra.mxu0 0.0
      %1350 = vmatprep.subr.mxu0 0.0
      %1351 = vmatpush1.msra.mxu0 0.0
      %1352 = vmatprep.subr.mxu0 0.0
      %1353 = vmatpush1.msra.mxu0 0.0
      %1354 = vmatprep.subr.mxu0 0.0
      %1355 = vmatpush1.msra.mxu0 0.0
      %1356 = vmatprep.subr.mxu0 0.0
      %1357 = vmatpush1.msra.mxu0 0.0
      %1358 = vmatprep.subr.mxu0 0.0
      %1359 = vmatpush1.msra.mxu0 0.0
      %1360 = vmatprep.subr.mxu0 0.0
      %1361 = vmatpush1.msra.mxu0 0.0
      %1362 = vmatprep.subr.mxu0 0.0
      %1363 = vmatpush1.msra.mxu0 0.0
      %1364 = vmatprep.subr.mxu0 0.0
      %1365 = vmatpush1.msra.mxu0 0.0
      %1366 = vmatprep.subr.mxu0 0.0
      %1367 = vmatpush1.msra.mxu0 0.0
      %1368 = vmatprep.subr.mxu0 0.0
      %1369 = vmatpush1.msra.mxu0 0.0
      %1370 = vmatprep.subr.mxu0 0.0
      %1371 = vmatpush1.msra.mxu0 0.0
      %1372 = vmatprep.subr.mxu0 0.0
      %1373 = vmatpush1.msra.mxu0 0.0
      %1374 = vmatprep.subr.mxu0 0.0
      %1375 = vmatpush1.msra.mxu0 0.0
      %1376 = vmatprep.subr.mxu0 0.0
      %1377 = vmatpush1.msra.mxu0 0.0
      %1378 = vmatprep.subr.mxu0 0.0
      %1379 = vmatpush1.msra.mxu0 0.0
      %1380 = vmatprep.subr.mxu0 0.0
      %1381 = vmatpush1.msra.mxu0 0.0
      %1382 = vmatprep.subr.mxu0 0.0
      %1383 = vmatpush1.msra.mxu0 0.0
      %1384 = vmatprep.subr.mxu0 0.0
      %1385 = vmatpush1.msra.mxu0 0.0
      %1386 = vmatprep.subr.mxu0 0.0
      %1387 = vmatpush1.msra.mxu0 0.0
      %1388 = vmatprep.subr.mxu0 0.0
      %1389 = vmatpush1.msra.mxu0 0.0
      %1390 = vmatprep.subr.mxu0 0.0
      %1391 = vmatpush1.msra.mxu0 0.0
      %1392 = vmatprep.mubr.f32.mxu0 0.0
      %1393 = vmatmul.mubr.f32.gmra.mrb[0].mxu0 %v1239
      %v1394 = vpop.f32.mrb[0].mxu0
      %v1395 = vadd.f32 %v1228, %v1394
      %v1396 = vpop.f32.mrb[0].mxu0
      %v1397 = vadd.f32 %v1228, %v1396
      %1398 = vdwg.mxu0
      %1399 = vmatprep.subr.mxu0 %v1251
      %1400 = vmatpush1.msra.mxu0 %v1249
      %1401 = vmatprep.subr.mxu0 0.0
      %1402 = vmatpush1.msra.mxu0 0.0
      %1403 = vmatprep.subr.mxu0 0.0
      %1404 = vmatpush1.msra.mxu0 0.0
      %1405 = vmatprep.subr.mxu0 0.0
      %1406 = vmatpush1.msra.mxu0 0.0
      %1407 = vmatprep.subr.mxu0 0.0
      %1408 = vmatpush1.msra.mxu0 0.0
      %1409 = vmatprep.subr.mxu0 0.0
      %1410 = vmatpush1.msra.mxu0 0.0
      %1411 = vmatprep.subr.mxu0 0.0
      %1412 = vmatpush1.msra.mxu0 0.0
      %1413 = vmatprep.subr.mxu0 0.0
      %1414 = vmatpush1.msra.mxu0 0.0
      %1415 = vmatprep.subr.mxu0 0.0
      %1416 = vmatpush1.msra.mxu0 0.0
      %1417 = vmatprep.subr.mxu0 0.0
      %1418 = vmatpush1.msra.mxu0 0.0
      %1419 = vmatprep.subr.mxu0 0.0
      %1420 = vmatpush1.msra.mxu0 0.0
      %1421 = vmatprep.subr.mxu0 0.0
      %1422 = vmatpush1.msra.mxu0 0.0
      %1423 = vmatprep.subr.mxu0 0.0
      %1424 = vmatpush1.msra.mxu0 0.0
      %1425 = vmatprep.subr.mxu0 0.0
      %1426 = vmatpush1.msra.mxu0 0.0
      %1427 = vmatprep.subr.mxu0 0.0
      %1428 = vmatpush1.msra.mxu0 0.0
      %1429 = vmatprep.subr.mxu0 0.0
      %1430 = vmatpush1.msra.mxu0 0.0
      %1431 = vmatprep.subr.mxu0 0.0
      %1432 = vmatpush1.msra.mxu0 0.0
      %1433 = vmatprep.subr.mxu0 0.0
      %1434 = vmatpush1.msra.mxu0 0.0
      %1435 = vmatprep.subr.mxu0 0.0
      %1436 = vmatpush1.msra.mxu0 0.0
      %1437 = vmatprep.subr.mxu0 0.0
      %1438 = vmatpush1.msra.mxu0 0.0
      %1439 = vmatprep.subr.mxu0 0.0
      %1440 = vmatpush1.msra.mxu0 0.0
      %1441 = vmatprep.subr.mxu0 0.0
      %1442 = vmatpush1.msra.mxu0 0.0
      %1443 = vmatprep.subr.mxu0 0.0
      %1444 = vmatpush1.msra.mxu0 0.0
      %1445 = vmatprep.subr.mxu0 0.0
      %1446 = vmatpush1.msra.mxu0 0.0
      %1447 = vmatprep.subr.mxu0 0.0
      %1448 = vmatpush1.msra.mxu0 0.0
      %1449 = vmatprep.subr.mxu0 0.0
      %1450 = vmatpush1.msra.mxu0 0.0
      %1451 = vmatprep.subr.mxu0 0.0
      %1452 = vmatpush1.msra.mxu0 0.0
      %1453 = vmatprep.subr.mxu0 0.0
      %1454 = vmatpush1.msra.mxu0 0.0
      %1455 = vmatprep.subr.mxu0 0.0
      %1456 = vmatpush1.msra.mxu0 0.0
      %1457 = vmatprep.subr.mxu0 0.0
      %1458 = vmatpush1.msra.mxu0 0.0
      %1459 = vmatprep.subr.mxu0 0.0
      %1460 = vmatpush1.msra.mxu0 0.0
      %1461 = vmatprep.subr.mxu0 0.0
      %1462 = vmatpush1.msra.mxu0 0.0
      %1463 = vmatprep.mubr.f32.mxu0 0.0
      %1464 = vmatmul.mubr.f32.gmra.mrb[0].mxu0 %v1239
      %v1465 = vpop.f32.mrb[0].mxu0
      %v1466 = vadd.f32 %v1228, %v1465
      %v1467 = vpop.f32.mrb[0].mxu0
      %v1468 = vadd.f32 %v1228, %v1467
      %1469 = vdwg.mxu0
      %1470 = vmatprep.subr.mxu0 %v1255
      %1471 = vmatpush1.msra.mxu0 %v1253
      %1472 = vmatprep.subr.mxu0 0.0
      %1473 = vmatpush1.msra.mxu0 0.0
      %1474 = vmatprep.subr.mxu0 0.0
      %1475 = vmatpush1.msra.mxu0 0.0
      %1476 = vmatprep.subr.mxu0 0.0
      %1477 = vmatpush1.msra.mxu0 0.0
      %1478 = vmatprep.subr.mxu0 0.0
      %1479 = vmatpush1.msra.mxu0 0.0
      %1480 = vmatprep.subr.mxu0 0.0
      %1481 = vmatpush1.msra.mxu0 0.0
      %1482 = vmatprep.subr.mxu0 0.0
      %1483 = vmatpush1.msra.mxu0 0.0
      %1484 = vmatprep.subr.mxu0 0.0
      %1485 = vmatpush1.msra.mxu0 0.0
      %1486 = vmatprep.subr.mxu0 0.0
      %1487 = vmatpush1.msra.mxu0 0.0
      %1488 = vmatprep.subr.mxu0 0.0
      %1489 = vmatpush1.msra.mxu0 0.0
      %1490 = vmatprep.subr.mxu0 0.0
      %1491 = vmatpush1.msra.mxu0 0.0
      %1492 = vmatprep.subr.mxu0 0.0
      %1493 = vmatpush1.msra.mxu0 0.0
      %1494 = vmatprep.subr.mxu0 0.0
      %1495 = vmatpush1.msra.mxu0 0.0
      %1496 = vmatprep.subr.mxu0 0.0
      %1497 = vmatpush1.msra.mxu0 0.0
      %1498 = vmatprep.subr.mxu0 0.0
      %1499 = vmatpush1.msra.mxu0 0.0
      %1500 = vmatprep.subr.mxu0 0.0
      %1501 = vmatpush1.msra.mxu0 0.0
      %1502 = vmatprep.subr.mxu0 0.0
      %1503 = vmatpush1.msra.mxu0 0.0
      %1504 = vmatprep.subr.mxu0 0.0
      %1505 = vmatpush1.msra.mxu0 0.0
      %1506 = vmatprep.subr.mxu0 0.0
      %1507 = vmatpush1.msra.mxu0 0.0
      %1508 = vmatprep.subr.mxu0 0.0
      %1509 = vmatpush1.msra.mxu0 0.0
      %1510 = vmatprep.subr.mxu0 0.0
      %1511 = vmatpush1.msra.mxu0 0.0
      %1512 = vmatprep.subr.mxu0 0.0
      %1513 = vmatpush1.msra.mxu0 0.0
      %1514 = vmatprep.subr.mxu0 0.0
      %1515 = vmatpush1.msra.mxu0 0.0
      %1516 = vmatprep.subr.mxu0 0.0
      %1517 = vmatpush1.msra.mxu0 0.0
      %1518 = vmatprep.subr.mxu0 0.0
      %1519 = vmatpush1.msra.mxu0 0.0
      %1520 = vmatprep.subr.mxu0 0.0
      %1521 = vmatpush1.msra.mxu0 0.0
      %1522 = vmatprep.subr.mxu0 0.0
      %1523 = vmatpush1.msra.mxu0 0.0
      %1524 = vmatprep.subr.mxu0 0.0
      %1525 = vmatpush1.msra.mxu0 0.0
      %1526 = vmatprep.subr.mxu0 0.0
      %1527 = vmatpush1.msra.mxu0 0.0
      %1528 = vmatprep.subr.mxu0 0.0
      %1529 = vmatpush1.msra.mxu0 0.0
      %1530 = vmatprep.subr.mxu0 0.0
      %1531 = vmatpush1.msra.mxu0 0.0
      %1532 = vmatprep.subr.mxu0 0.0
      %1533 = vmatpush1.msra.mxu0 0.0
      %1534 = vmatprep.mubr.f32.mxu0 0.0
      %1535 = vmatmul.mubr.f32.gmra.mrb[0].mxu0 %v1239
      %v1536 = vpop.f32.mrb[0].mxu0
      %v1537 = vadd.f32 %v1228, %v1536
      %v1538 = vpop.f32.mrb[0].mxu0
      %v1539 = vadd.f32 %v1228, %v1538
      %1540 = vdwg.mxu0
      %v1541 = vxor.u32 %v1324, 2147483648
      %v1542 = vxor.u32 %v1326, 2147483648
      %v1543 = vxor.u32 %v1395, 2147483648
      %v1544 = vxor.u32 %v1397, 2147483648
      %v1545 = vxor.u32 %v1466, 2147483648
      %v1546 = vxor.u32 %v1468, 2147483648
      %v1547 = vxor.u32 %v1537, 2147483648
      %v1548 = vxor.u32 %v1539, 2147483648
      %v1549 = vmul.f32 %v1541, 1.442695
      %v1550 = vpow.pop %v1549
      %v1551 = vmul.f32 %v1542, 1.442695
      %v1552 = vpow.pop %v1551
      %v1553 = vmul.f32 %v1543, 1.442695
      %v1554 = vpow.pop %v1553
      %v1555 = vmul.f32 %v1544, 1.442695
      %v1556 = vpow.pop %v1555
      %v1557 = vmul.f32 %v1545, 1.442695
      %v1558 = vpow.pop %v1557
      %v1559 = vmul.f32 %v1546, 1.442695
      %v1560 = vpow.pop %v1559
      %v1561 = vmul.f32 %v1547, 1.442695
      %v1562 = vpow.pop %v1561
      %v1563 = vmul.f32 %v1548, 1.442695
      %v1564 = vpow.pop %v1563
      %v1565 = vadd.f32 %v1550, 1.0
      %v1566 = vadd.f32 %v1552, 1.0
      %v1567 = vadd.f32 %v1554, 1.0
      %v1568 = vadd.f32 %v1556, 1.0
      %v1569 = vadd.f32 %v1558, 1.0
      %v1570 = vadd.f32 %v1560, 1.0
      %v1571 = vadd.f32 %v1562, 1.0
      %v1572 = vadd.f32 %v1564, 1.0
      %v1573 = vrcp.pop %v1565
      %v1574 = vmul.f32 1.0, %v1573
      %v1575 = vrcp.pop %v1566
      %v1576 = vmul.f32 1.0, %v1575
      %v1577 = vrcp.pop %v1567
      %v1578 = vmul.f32 1.0, %v1577
      %v1579 = vrcp.pop %v1568
      %v1580 = vmul.f32 1.0, %v1579
      %v1581 = vrcp.pop %v1569
      %v1582 = vmul.f32 1.0, %v1581
      %v1583 = vrcp.pop %v1570
      %v1584 = vmul.f32 1.0, %v1583
      %v1585 = vrcp.pop %v1571
      %v1586 = vmul.f32 1.0, %v1585
      %v1587 = vrcp.pop %v1572
      %v1588 = vmul.f32 1.0, %v1587
      %v1597 = vcombine.low %v1574, %v1576
      %v1598 = vcombine.low %v1578, %v1580
      %v1599 = vcombine.low %v1582, %v1584
      %v1600 = vcombine.low %v1586, %v1588
      %1605 = vst [vmem:[%s419] sm:$0x77] %v1597
      %1606 = vst [vmem:[%s419 + $0x8] sm:$0x77] %v1598
      %1607 = vst [vmem:[%s419 + $0x10] sm:$0x77] %v1599
      %1608 = vst [vmem:[%s419 + $0x18] sm:$0x77] %v1600
      %p1609 = scmp.lt.s32.totalorder %s21, 1
      %s1610 = scalar_select %p1609, %s21, 1
      %s1611 = smul.addr %s1610, 8
      %s1612 = smul.addr %s1611, 4
      %s1613 = scalar_lea.vmem %s10, %s1612
      // Predicated region
      $region61: #{style_decoder_forward.13} parent=59 // pred_check
        %p1614 = pneg %p269
      $region62: #{style_decoder_forward.13} parent=59 // pred_check_branch
        %1616 = sbr.rel (%p1614) target = $region64
      $region63: #{style_decoder_forward.13} parent=59 // pred_region
        _
      $region64: #{style_decoder_forward.13} parent=59 // pred_fallthru
        _
    $region60: #{style_decoder_forward.13} parent=5 // pred_fallthru
      _
    %p1617 = scmp.le.s32.totalorder 2, %s16
    // Predicated region
    $region65: #{style_decoder_forward.13} parent=5 // pred_check
      %p1618 = pneg %p1617
    $region66: #{style_decoder_forward.13} parent=5 // pred_check_branch
      %1620 = sbr.rel (%p1618) target = $region68
    $region67: #{style_decoder_forward.13} parent=5 // pred_region
      %s1621 = ssub.s32 %s16, 2
      // Predicated region
      $region69: #{style_decoder_forward.13} parent=67 // pred_check
        %p1622 = pneg %p275
      $region70: #{style_decoder_forward.13} parent=67 // pred_check_branch
        %1624 = sbr.rel (%p1622) target = $region72
      $region71: #{style_decoder_forward.13} parent=67 // pred_region
        %p1625 = scmp.lt.s32.totalorder %s22, 1
        %s1626 = scalar_select %p1625, %s22, 1
        %s1627 = smul.addr %s1626, 8
        %s1628 = smul.addr %s1627, 4
        %s1629 = scalar_lea.vmem %s10, %s1628
      $region72: #{style_decoder_forward.13} parent=67 // pred_fallthru
        _
    $region68: #{style_decoder_forward.13} parent=5 // pred_fallthru
      _
  $region6: #{style_decoder_forward.13} parent=0 // loop_footer
    %s20 = sadd.s32 1, %s16
  $region7: #{style_decoder_forward.13} parent=0 // loop_footer_branch
    %15 = sbr.rel target = $region3
  $region8: #{style_decoder_forward.13} parent=0 // loop_exit
    _

</llo_original>
